<compile_context>
chip_gen: v7x
topology: tpu7x:2x2x1
jax: 0.10.0
libtpu: 0.0.40
codegen_flags: <defaults>
</compile_context>

<pallas_src>
import jax
import jax.numpy as jnp
from jax.experimental import pallas as pl
from jax.experimental.pallas import tpu as pltpu

# ---- dimensions implied by the module --------------------------------------
D_IN   = 2 * 2 * 48    # 192
D_E1   = 2 * 2 * 24    # 96
D_E2   = 2 * 2 * 12    # 48   (bottleneck)
D_D1   = 2 * 2 * 24    # 96
D_D2   = 2 * 2 * 48    # 192
D_D3   = 2 * 2 * 96    # 384
D_OUT  = 2 * 14 * 96   # 2688

_LAYER_DIMS = [(D_IN, D_E1), (D_E1, D_E2),                               # encoder
               (D_E2, D_D1), (D_D1, D_D2), (D_D2, D_D3), (D_D3, D_OUT)]  # decoder

_SQRT1_2 = 0.7071067811865476  # 1/sqrt(2)


def _gelu_exact(v):
    # nn.GELU() default = exact erf-based GELU (kept in f32).
    return 0.5 * v * (1.0 + jax.lax.erf(v * _SQRT1_2))


# ---- kernel -----------------------------------------------------------------
def autoencoder_kernel(x_ref,
                       w1, b1, w2, b2,                    # encoder
                       w3, b3, w4, b4, w5, b5, w6, b6,    # decoder
                       o_ref):
    def dense(h_f32, w_ref, b_ref):
        # bf16 x bf16 MXU matmul with f32 accumulation; f32 bias add.
        return jnp.dot(h_f32.astype(jnp.bfloat16), w_ref[...],
                       preferred_element_type=jnp.float32) + b_ref[...]

    h = x_ref[...]                               # (TILE_B, 192) f32
    # encoder
    h = _gelu_exact(dense(h, w1, b1))
    h = _gelu_exact(dense(h, w2, b2))
    # decoder
    h = _gelu_exact(dense(h, w3, b3))
    h = _gelu_exact(dense(h, w4, b4))
    h = _gelu_exact(dense(h, w5, b5))
    # final Linear has no GELU after it
    o_ref[...] = dense(h, w6, b6).astype(o_ref.dtype)


# ---- params -----------------------------------------------------------------
def init_params(key):
    """PyTorch-Linear-style init U(-1/sqrt(fan_in), 1/sqrt(fan_in)).
    Weights stored transposed as (in, out) and cast to bf16 for the MXU;
    biases stay f32 and are shaped (1, out) for broadcasting."""
    params = []
    for (din, dout) in _LAYER_DIMS:
        key, kw, kb = jax.random.split(key, 3)
        bound = 1.0 / jnp.sqrt(jnp.float32(din))
        w = jax.random.uniform(kw, (din, dout), jnp.float32, -bound, bound)
        b = jax.random.uniform(kb, (1, dout), jnp.float32, -bound, bound)
        params += [w.astype(jnp.bfloat16), b]
    return params


# ---- tiling / chip-gen heuristics -------------------------------------------
def _cdiv(a, b):
    return (a + b - 1) // b


def _round_up(n, m):
    return ((n + m - 1) // m) * m


def _chip_gen():
    try:
        kind = jax.devices()[0].device_kind.lower()
    except Exception:  # pragma: no cover - defensive
        return "unknown"
    if "v5" in kind:
        return "v5"
    if "v6" in kind:
        return "v6"
    if "v7" in kind or "7x" in kind:
        return "v7"
    return "unknown"


def _tile_and_vmem(B):
    """Pick (tile_b, vmem_limit_bytes) per generation.
    v7x: base 256, force >=2 grid steps (2 TensorCores), 24 MiB scoped VMEM.
    v5e/v6e: base 1024 (128 MiB VMEM parts), 64 MiB scoped VMEM.
    Tile is balanced over the grid to keep batch padding < 8 rows/step."""
    gen = _chip_gen()
    if gen == "v7":
        base, min_steps, vmem = 256, 2, 24 << 20
    elif gen in ("v5", "v6"):
        base, min_steps, vmem = 1024, 1, 64 << 20
    else:
        base, min_steps, vmem = 256, 1, 32 << 20
    g = max(min_steps, _cdiv(B, base))
    tile_b = _round_up(_cdiv(B, g), 8)
    return tile_b, vmem


def _cost_estimate(b_rows, params):
    flops = 2 * b_rows * sum(din * dout for (din, dout) in _LAYER_DIMS)
    transcendentals = b_rows * (D_E1 + D_E2 + D_D1 + D_D2 + D_D3)  # one erf/elem
    weight_bytes = sum(int(p.size) * p.dtype.itemsize for p in params)
    bytes_accessed = b_rows * (D_IN + D_OUT) * 4 + weight_bytes
    return pl.CostEstimate(flops=flops,
                           transcendentals=transcendentals,
                           bytes_accessed=bytes_accessed)


# ---- pallas_call builder ----------------------------------------------------
def _build_call(tile_b, B_pad, params, vmem_limit, single_buffer_weights):
    grid = (B_pad // tile_b,)
    x_spec = pl.BlockSpec((tile_b, D_IN), lambda i: (i, 0))
    out_spec = pl.BlockSpec((tile_b, D_OUT), lambda i: (i, 0))
    if single_buffer_weights:
        # Grid-invariant (constant index_map) -> one resident VMEM buffer each.
        param_specs = [pl.BlockSpec(p.shape, lambda i: (0, 0),
                                    pipeline_mode=pl.Buffered(1))
                       for p in params]
    else:
        param_specs = [pl.BlockSpec(p.shape, lambda i: (0, 0)) for p in params]
    return pl.pallas_call(
        autoencoder_kernel,
        out_shape=jax.ShapeDtypeStruct((B_pad, D_OUT), jnp.float32),
        grid=grid,
        in_specs=[x_spec] + param_specs,
        out_specs=out_spec,
        compiler_params=pltpu.CompilerParams(
            dimension_semantics=("parallel",),
            vmem_limit_bytes=vmem_limit,
        ),
        cost_estimate=_cost_estimate(B_pad, params),
    )


# ---- forward ----------------------------------------------------------------
def autoencoder_forward(x, snr, params, *, tile_b=None):
    """x: any shape whose trailing dims flatten to multiples of 192
    (e.g. (B, 2, 2, 48)).  snr is accepted but unused, as in the reference."""
    del snr
    xf = x.reshape(-1, D_IN).astype(jnp.float32)
    B = xf.shape[0]

    auto_tile, vmem_limit = _tile_and_vmem(B)
    if tile_b is None:
        tile_b = auto_tile
    tile_b = max(8, _round_up(tile_b, 8))

    B_pad = _round_up(B, tile_b)
    if B_pad != B:
        xf = jnp.pad(xf, ((0, B_pad - B), (0, 0)))

    try:
        out = _build_call(tile_b, B_pad, params, vmem_limit, True)(xf, *params)
    except Exception:
        # Fallback if pipeline_mode=pl.Buffered(1) is unsupported on this jax.
        out = _build_call(tile_b, B_pad, params, vmem_limit, False)(xf, *params)

    if B_pad != B:
        out = out[:B]
    return out.reshape(-1, 2, 14, 96)


# ---- self-test --------------------------------------------------------------
if __name__ == "__main__":
    key = jax.random.PRNGKey(0)
    k_params, k_x, k_snr = jax.random.split(key, 3)

    params = init_params(k_params)

    # small deterministic input: batch=2, shaped like (B, 2, 2, 48)
    x = jax.random.normal(k_x, (2, 2, 2, 48), jnp.float32)
    snr = jax.random.uniform(k_snr, (2,), jnp.float32)  # unused by forward

    y = autoencoder_forward(x, snr, params)
    jax.block_until_ready(y)

    assert y.shape == (2, 2, 14, 96), y.shape
    assert y.dtype == jnp.float32

    # Pure-JAX reference using the SAME bf16-input / f32-accumulate matmuls.
    def _ref(xv):
        h = xv.reshape(-1, D_IN).astype(jnp.float32)
        for li in range(6):
            w, b = params[2 * li], params[2 * li + 1]
            h = jnp.dot(h.astype(jnp.bfloat16), w,
                        preferred_element_type=jnp.float32) + b
            if li != 5:
                h = _gelu_exact(h)
        return h.reshape(-1, 2, 14, 96)

    y_ref = _ref(x)
    err = float(jnp.max(jnp.abs(y - y_ref)))
    assert jnp.allclose(y, y_ref, atol=1e-2, rtol=1e-2), err

    print("KERNEL_OK")
</pallas_src>

<mosaic_0001>
module attributes {stable_mosaic.version = 11 : i64} {
  func.func @autoencoder_kernel(%arg0: i32, %arg1: memref<8x192xf32, #tpu.memory_space<vmem>>, %arg2: memref<192x96xbf16, #tpu.memory_space<vmem>>, %arg3: memref<1x96xf32, #tpu.memory_space<vmem>>, %arg4: memref<96x48xbf16, #tpu.memory_space<vmem>>, %arg5: memref<1x48xf32, #tpu.memory_space<vmem>>, %arg6: memref<48x96xbf16, #tpu.memory_space<vmem>>, %arg7: memref<1x96xf32, #tpu.memory_space<vmem>>, %arg8: memref<96x192xbf16, #tpu.memory_space<vmem>>, %arg9: memref<1x192xf32, #tpu.memory_space<vmem>>, %arg10: memref<192x384xbf16, #tpu.memory_space<vmem>>, %arg11: memref<1x384xf32, #tpu.memory_space<vmem>>, %arg12: memref<384x2688xbf16, #tpu.memory_space<vmem>>, %arg13: memref<1x2688xf32, #tpu.memory_space<vmem>>, %arg14: memref<8x2688xf32, #tpu.memory_space<vmem>>) attributes {dimension_semantics = [#tpu.dimension_semantics<parallel>], iteration_bounds = array<i64: 1>, scalar_prefetch = 0 : i64, scratch_operands = 0 : i64, tpu.core_type = #tpu.core_type<tc>, window_params = [{transform_indices = @transform_0, window_bounds = array<i64: 8, 192>}, {pipeline_mode = #tpu.pipeline_mode<synchronous>, transform_indices = @transform_1, window_bounds = array<i64: 192, 96>}, {pipeline_mode = #tpu.pipeline_mode<synchronous>, transform_indices = @transform_2, window_bounds = array<i64: 1, 96>}, {pipeline_mode = #tpu.pipeline_mode<synchronous>, transform_indices = @transform_3, window_bounds = array<i64: 96, 48>}, {pipeline_mode = #tpu.pipeline_mode<synchronous>, transform_indices = @transform_4, window_bounds = array<i64: 1, 48>}, {pipeline_mode = #tpu.pipeline_mode<synchronous>, transform_indices = @transform_5, window_bounds = array<i64: 48, 96>}, {pipeline_mode = #tpu.pipeline_mode<synchronous>, transform_indices = @transform_6, window_bounds = array<i64: 1, 96>}, {pipeline_mode = #tpu.pipeline_mode<synchronous>, transform_indices = @transform_7, window_bounds = array<i64: 96, 192>}, {pipeline_mode = #tpu.pipeline_mode<synchronous>, transform_indices = @transform_8, window_bounds = array<i64: 1, 192>}, {pipeline_mode = #tpu.pipeline_mode<synchronous>, transform_indices = @transform_9, window_bounds = array<i64: 192, 384>}, {pipeline_mode = #tpu.pipeline_mode<synchronous>, transform_indices = @transform_10, window_bounds = array<i64: 1, 384>}, {pipeline_mode = #tpu.pipeline_mode<synchronous>, transform_indices = @transform_11, window_bounds = array<i64: 384, 2688>}, {pipeline_mode = #tpu.pipeline_mode<synchronous>, transform_indices = @transform_12, window_bounds = array<i64: 1, 2688>}, {transform_indices = @transform_13, window_bounds = array<i64: 8, 2688>}]} {
    %c0 = arith.constant 0 : index
    %c0_0 = arith.constant 0 : index
    %0 = vector.load %arg1[%c0, %c0_0] : memref<8x192xf32, #tpu.memory_space<vmem>>, vector<8x192xf32>
    %1 = arith.truncf %0 : vector<8x192xf32> to vector<8x192xbf16>
    %c0_1 = arith.constant 0 : index
    %c0_2 = arith.constant 0 : index
    %2 = vector.load %arg2[%c0_1, %c0_2] : memref<192x96xbf16, #tpu.memory_space<vmem>>, vector<192x96xbf16>
    %cst = arith.constant dense<0.000000e+00> : vector<8x96xf32>
    %3 = tpu.matmul %1, %2, %cst {dimension_numbers = #tpu.dot_dimension_numbers<[1], [0], [0], [1], [0, 0, 1, 1], [], []>} : vector<8x192xbf16>, vector<192x96xbf16>, vector<8x96xf32> -> vector<8x96xf32>
    %c0_3 = arith.constant 0 : index
    %c0_4 = arith.constant 0 : index
    %4 = vector.load %arg3[%c0_3, %c0_4] : memref<1x96xf32, #tpu.memory_space<vmem>>, vector<1x96xf32>
    %5 = vector.broadcast %4 : vector<1x96xf32> to vector<8x96xf32>
    %6 = arith.addf %3, %5 : vector<8x96xf32>
    %cst_5 = arith.constant 5.000000e-01 : f32
    %7 = vector.broadcast %cst_5 : f32 to vector<8x96xf32>
    %8 = arith.mulf %7, %6 : vector<8x96xf32>
    %cst_6 = arith.constant 0.707106769 : f32
    %9 = vector.broadcast %cst_6 : f32 to vector<8x96xf32>
    %10 = arith.mulf %6, %9 : vector<8x96xf32>
    %11 = math.erf %10 : vector<8x96xf32>
    %cst_7 = arith.constant 1.000000e+00 : f32
    %12 = vector.broadcast %cst_7 : f32 to vector<8x96xf32>
    %13 = arith.addf %12, %11 : vector<8x96xf32>
    %14 = arith.mulf %8, %13 : vector<8x96xf32>
    %15 = arith.truncf %14 : vector<8x96xf32> to vector<8x96xbf16>
    %c0_8 = arith.constant 0 : index
    %c0_9 = arith.constant 0 : index
    %16 = vector.load %arg4[%c0_8, %c0_9] : memref<96x48xbf16, #tpu.memory_space<vmem>>, vector<96x48xbf16>
    %cst_10 = arith.constant dense<0.000000e+00> : vector<8x48xf32>
    %17 = tpu.matmul %15, %16, %cst_10 {dimension_numbers = #tpu.dot_dimension_numbers<[1], [0], [0], [1], [0, 0, 1, 1], [], []>} : vector<8x96xbf16>, vector<96x48xbf16>, vector<8x48xf32> -> vector<8x48xf32>
    %c0_11 = arith.constant 0 : index
    %c0_12 = arith.constant 0 : index
    %18 = vector.load %arg5[%c0_11, %c0_12] : memref<1x48xf32, #tpu.memory_space<vmem>>, vector<1x48xf32>
    %19 = vector.broadcast %18 : vector<1x48xf32> to vector<8x48xf32>
    %20 = arith.addf %17, %19 : vector<8x48xf32>
    %cst_13 = arith.constant 5.000000e-01 : f32
    %21 = vector.broadcast %cst_13 : f32 to vector<8x48xf32>
    %22 = arith.mulf %21, %20 : vector<8x48xf32>
    %cst_14 = arith.constant 0.707106769 : f32
    %23 = vector.broadcast %cst_14 : f32 to vector<8x48xf32>
    %24 = arith.mulf %20, %23 : vector<8x48xf32>
    %25 = math.erf %24 : vector<8x48xf32>
    %cst_15 = arith.constant 1.000000e+00 : f32
    %26 = vector.broadcast %cst_15 : f32 to vector<8x48xf32>
    %27 = arith.addf %26, %25 : vector<8x48xf32>
    %28 = arith.mulf %22, %27 : vector<8x48xf32>
    %29 = arith.truncf %28 : vector<8x48xf32> to vector<8x48xbf16>
    %c0_16 = arith.constant 0 : index
    %c0_17 = arith.constant 0 : index
    %30 = vector.load %arg6[%c0_16, %c0_17] : memref<48x96xbf16, #tpu.memory_space<vmem>>, vector<48x96xbf16>
    %cst_18 = arith.constant dense<0.000000e+00> : vector<8x96xf32>
    %31 = tpu.matmul %29, %30, %cst_18 {dimension_numbers = #tpu.dot_dimension_numbers<[1], [0], [0], [1], [0, 0, 1, 1], [], []>} : vector<8x48xbf16>, vector<48x96xbf16>, vector<8x96xf32> -> vector<8x96xf32>
    %c0_19 = arith.constant 0 : index
    %c0_20 = arith.constant 0 : index
    %32 = vector.load %arg7[%c0_19, %c0_20] : memref<1x96xf32, #tpu.memory_space<vmem>>, vector<1x96xf32>
    %33 = vector.broadcast %32 : vector<1x96xf32> to vector<8x96xf32>
    %34 = arith.addf %31, %33 : vector<8x96xf32>
    %cst_21 = arith.constant 5.000000e-01 : f32
    %35 = vector.broadcast %cst_21 : f32 to vector<8x96xf32>
    %36 = arith.mulf %35, %34 : vector<8x96xf32>
    %cst_22 = arith.constant 0.707106769 : f32
    %37 = vector.broadcast %cst_22 : f32 to vector<8x96xf32>
    %38 = arith.mulf %34, %37 : vector<8x96xf32>
    %39 = math.erf %38 : vector<8x96xf32>
    %cst_23 = arith.constant 1.000000e+00 : f32
    %40 = vector.broadcast %cst_23 : f32 to vector<8x96xf32>
    %41 = arith.addf %40, %39 : vector<8x96xf32>
    %42 = arith.mulf %36, %41 : vector<8x96xf32>
    %43 = arith.truncf %42 : vector<8x96xf32> to vector<8x96xbf16>
    %c0_24 = arith.constant 0 : index
    %c0_25 = arith.constant 0 : index
    %44 = vector.load %arg8[%c0_24, %c0_25] : memref<96x192xbf16, #tpu.memory_space<vmem>>, vector<96x192xbf16>
    %cst_26 = arith.constant dense<0.000000e+00> : vector<8x192xf32>
    %45 = tpu.matmul %43, %44, %cst_26 {dimension_numbers = #tpu.dot_dimension_numbers<[1], [0], [0], [1], [0, 0, 1, 1], [], []>} : vector<8x96xbf16>, vector<96x192xbf16>, vector<8x192xf32> -> vector<8x192xf32>
    %c0_27 = arith.constant 0 : index
    %c0_28 = arith.constant 0 : index
    %46 = vector.load %arg9[%c0_27, %c0_28] : memref<1x192xf32, #tpu.memory_space<vmem>>, vector<1x192xf32>
    %47 = vector.broadcast %46 : vector<1x192xf32> to vector<8x192xf32>
    %48 = arith.addf %45, %47 : vector<8x192xf32>
    %cst_29 = arith.constant 5.000000e-01 : f32
    %49 = vector.broadcast %cst_29 : f32 to vector<8x192xf32>
    %50 = arith.mulf %49, %48 : vector<8x192xf32>
    %cst_30 = arith.constant 0.707106769 : f32
    %51 = vector.broadcast %cst_30 : f32 to vector<8x192xf32>
    %52 = arith.mulf %48, %51 : vector<8x192xf32>
    %53 = math.erf %52 : vector<8x192xf32>
    %cst_31 = arith.constant 1.000000e+00 : f32
    %54 = vector.broadcast %cst_31 : f32 to vector<8x192xf32>
    %55 = arith.addf %54, %53 : vector<8x192xf32>
    %56 = arith.mulf %50, %55 : vector<8x192xf32>
    %57 = arith.truncf %56 : vector<8x192xf32> to vector<8x192xbf16>
    %c0_32 = arith.constant 0 : index
    %c0_33 = arith.constant 0 : index
    %58 = vector.load %arg10[%c0_32, %c0_33] : memref<192x384xbf16, #tpu.memory_space<vmem>>, vector<192x384xbf16>
    %cst_34 = arith.constant dense<0.000000e+00> : vector<8x384xf32>
    %59 = tpu.matmul %57, %58, %cst_34 {dimension_numbers = #tpu.dot_dimension_numbers<[1], [0], [0], [1], [0, 0, 1, 1], [], []>} : vector<8x192xbf16>, vector<192x384xbf16>, vector<8x384xf32> -> vector<8x384xf32>
    %c0_35 = arith.constant 0 : index
    %c0_36 = arith.constant 0 : index
    %60 = vector.load %arg11[%c0_35, %c0_36] : memref<1x384xf32, #tpu.memory_space<vmem>>, vector<1x384xf32>
    %61 = vector.broadcast %60 : vector<1x384xf32> to vector<8x384xf32>
    %62 = arith.addf %59, %61 : vector<8x384xf32>
    %cst_37 = arith.constant 5.000000e-01 : f32
    %63 = vector.broadcast %cst_37 : f32 to vector<8x384xf32>
    %64 = arith.mulf %63, %62 : vector<8x384xf32>
    %cst_38 = arith.constant 0.707106769 : f32
    %65 = vector.broadcast %cst_38 : f32 to vector<8x384xf32>
    %66 = arith.mulf %62, %65 : vector<8x384xf32>
    %67 = math.erf %66 : vector<8x384xf32>
    %cst_39 = arith.constant 1.000000e+00 : f32
    %68 = vector.broadcast %cst_39 : f32 to vector<8x384xf32>
    %69 = arith.addf %68, %67 : vector<8x384xf32>
    %70 = arith.mulf %64, %69 : vector<8x384xf32>
    %71 = arith.truncf %70 : vector<8x384xf32> to vector<8x384xbf16>
    %c0_40 = arith.constant 0 : index
    %c0_41 = arith.constant 0 : index
    %72 = vector.load %arg12[%c0_40, %c0_41] : memref<384x2688xbf16, #tpu.memory_space<vmem>>, vector<384x2688xbf16>
    %cst_42 = arith.constant dense<0.000000e+00> : vector<8x2688xf32>
    %73 = tpu.matmul %71, %72, %cst_42 {dimension_numbers = #tpu.dot_dimension_numbers<[1], [0], [0], [1], [0, 0, 1, 1], [], []>} : vector<8x384xbf16>, vector<384x2688xbf16>, vector<8x2688xf32> -> vector<8x2688xf32>
    %c0_43 = arith.constant 0 : index
    %c0_44 = arith.constant 0 : index
    %74 = vector.load %arg13[%c0_43, %c0_44] : memref<1x2688xf32, #tpu.memory_space<vmem>>, vector<1x2688xf32>
    %75 = vector.broadcast %74 : vector<1x2688xf32> to vector<8x2688xf32>
    %76 = arith.addf %73, %75 : vector<8x2688xf32>
    %c0_45 = arith.constant 0 : index
    %c0_46 = arith.constant 0 : index
    %77 = vector.load %arg14[%c0_45, %c0_46] : memref<8x2688xf32, #tpu.memory_space<vmem>>, vector<8x2688xf32>
    tpu.vector_store %arg14[%c0_45, %c0_46], %76 {strides = array<i32>} : memref<8x2688xf32, #tpu.memory_space<vmem>>, vector<8x2688xf32>,
    return
  }
  func.func @transform_0(%arg0: i32) -> (i32, i32) {
    %c0_i32 = arith.constant 0 : i32
    %c0_i32_0 = arith.constant 0 : i32
    return %arg0, %c0_i32 : i32, i32
  }
  func.func @transform_1(%arg0: i32) -> (i32, i32) {
    %c0_i32 = arith.constant 0 : i32
    %c0_i32_0 = arith.constant 0 : i32
    %c0_i32_1 = arith.constant 0 : i32
    return %c0_i32, %c0_i32_0 : i32, i32
  }
  func.func @transform_2(%arg0: i32) -> (i32, i32) {
    %c0_i32 = arith.constant 0 : i32
    %c0_i32_0 = arith.constant 0 : i32
    %c0_i32_1 = arith.constant 0 : i32
    return %c0_i32, %c0_i32_0 : i32, i32
  }
  func.func @transform_3(%arg0: i32) -> (i32, i32) {
    %c0_i32 = arith.constant 0 : i32
    %c0_i32_0 = arith.constant 0 : i32
    %c0_i32_1 = arith.constant 0 : i32
    return %c0_i32, %c0_i32_0 : i32, i32
  }
  func.func @transform_4(%arg0: i32) -> (i32, i32) {
    %c0_i32 = arith.constant 0 : i32
    %c0_i32_0 = arith.constant 0 : i32
    %c0_i32_1 = arith.constant 0 : i32
    return %c0_i32, %c0_i32_0 : i32, i32
  }
  func.func @transform_5(%arg0: i32) -> (i32, i32) {
    %c0_i32 = arith.constant 0 : i32
    %c0_i32_0 = arith.constant 0 : i32
    %c0_i32_1 = arith.constant 0 : i32
    return %c0_i32, %c0_i32_0 : i32, i32
  }
  func.func @transform_6(%arg0: i32) -> (i32, i32) {
    %c0_i32 = arith.constant 0 : i32
    %c0_i32_0 = arith.constant 0 : i32
    %c0_i32_1 = arith.constant 0 : i32
    return %c0_i32, %c0_i32_0 : i32, i32
  }
  func.func @transform_7(%arg0: i32) -> (i32, i32) {
    %c0_i32 = arith.constant 0 : i32
    %c0_i32_0 = arith.constant 0 : i32
    %c0_i32_1 = arith.constant 0 : i32
    return %c0_i32, %c0_i32_0 : i32, i32
  }
  func.func @transform_8(%arg0: i32) -> (i32, i32) {
    %c0_i32 = arith.constant 0 : i32
    %c0_i32_0 = arith.constant 0 : i32
    %c0_i32_1 = arith.constant 0 : i32
    return %c0_i32, %c0_i32_0 : i32, i32
  }
  func.func @transform_9(%arg0: i32) -> (i32, i32) {
    %c0_i32 = arith.constant 0 : i32
    %c0_i32_0 = arith.constant 0 : i32
    %c0_i32_1 = arith.constant 0 : i32
    return %c0_i32, %c0_i32_0 : i32, i32
  }
  func.func @transform_10(%arg0: i32) -> (i32, i32) {
    %c0_i32 = arith.constant 0 : i32
    %c0_i32_0 = arith.constant 0 : i32
    %c0_i32_1 = arith.constant 0 : i32
    return %c0_i32, %c0_i32_0 : i32, i32
  }
  func.func @transform_11(%arg0: i32) -> (i32, i32) {
    %c0_i32 = arith.constant 0 : i32
    %c0_i32_0 = arith.constant 0 : i32
    %c0_i32_1 = arith.constant 0 : i32
    return %c0_i32, %c0_i32_0 : i32, i32
  }
  func.func @transform_12(%arg0: i32) -> (i32, i32) {
    %c0_i32 = arith.constant 0 : i32
    %c0_i32_0 = arith.constant 0 : i32
    %c0_i32_1 = arith.constant 0 : i32
    return %c0_i32, %c0_i32_0 : i32, i32
  }
  func.func @transform_13(%arg0: i32) -> (i32, i32) {
    %c0_i32 = arith.constant 0 : i32
    %c0_i32_0 = arith.constant 0 : i32
    return %arg0, %c0_i32 : i32, i32
  }
}

module attributes {stable_mosaic.version = 11 : i64} {
  func.func @autoencoder_kernel(%arg0: i32, %arg1: memref<8x192xf32, #tpu.memory_space<vmem>>, %arg2: memref<192x96xbf16, #tpu.memory_space<vmem>>, %arg3: memref<1x96xf32, #tpu.memory_space<vmem>>, %arg4: memref<96x48xbf16, #tpu.memory_space<vmem>>, %arg5: memref<1x48xf32, #tpu.memory_space<vmem>>, %arg6: memref<48x96xbf16, #tpu.memory_space<vmem>>, %arg7: memref<1x96xf32, #tpu.memory_space<vmem>>, %arg8: memref<96x192xbf16, #tpu.memory_space<vmem>>, %arg9: memref<1x192xf32, #tpu.memory_space<vmem>>, %arg10: memref<192x384xbf16, #tpu.memory_space<vmem>>, %arg11: memref<1x384xf32, #tpu.memory_space<vmem>>, %arg12: memref<384x2688xbf16, #tpu.memory_space<vmem>>, %arg13: memref<1x2688xf32, #tpu.memory_space<vmem>>, %arg14: memref<8x2688xf32, #tpu.memory_space<vmem>>) attributes {dimension_semantics = [#tpu.dimension_semantics<parallel>], iteration_bounds = array<i64: 1>, scalar_prefetch = 0 : i64, scratch_operands = 0 : i64, tpu.core_type = #tpu.core_type<tc>, window_params = [{transform_indices = @transform_0, window_bounds = array<i64: 8, 192>}, {pipeline_mode = #tpu.pipeline_mode<synchronous>, transform_indices = @transform_1, window_bounds = array<i64: 192, 96>}, {pipeline_mode = #tpu.pipeline_mode<synchronous>, transform_indices = @transform_2, window_bounds = array<i64: 1, 96>}, {pipeline_mode = #tpu.pipeline_mode<synchronous>, transform_indices = @transform_3, window_bounds = array<i64: 96, 48>}, {pipeline_mode = #tpu.pipeline_mode<synchronous>, transform_indices = @transform_4, window_bounds = array<i64: 1, 48>}, {pipeline_mode = #tpu.pipeline_mode<synchronous>, transform_indices = @transform_5, window_bounds = array<i64: 48, 96>}, {pipeline_mode = #tpu.pipeline_mode<synchronous>, transform_indices = @transform_6, window_bounds = array<i64: 1, 96>}, {pipeline_mode = #tpu.pipeline_mode<synchronous>, transform_indices = @transform_7, window_bounds = array<i64: 96, 192>}, {pipeline_mode = #tpu.pipeline_mode<synchronous>, transform_indices = @transform_8, window_bounds = array<i64: 1, 192>}, {pipeline_mode = #tpu.pipeline_mode<synchronous>, transform_indices = @transform_9, window_bounds = array<i64: 192, 384>}, {pipeline_mode = #tpu.pipeline_mode<synchronous>, transform_indices = @transform_10, window_bounds = array<i64: 1, 384>}, {pipeline_mode = #tpu.pipeline_mode<synchronous>, transform_indices = @transform_11, window_bounds = array<i64: 384, 2688>}, {pipeline_mode = #tpu.pipeline_mode<synchronous>, transform_indices = @transform_12, window_bounds = array<i64: 1, 2688>}, {transform_indices = @transform_13, window_bounds = array<i64: 8, 2688>}]} {
    %c0 = arith.constant 0 : index
    %c0_0 = arith.constant 0 : index
    %0 = vector.load %arg1[%c0, %c0_0] : memref<8x192xf32, #tpu.memory_space<vmem>>, vector<8x192xf32>
    %1 = arith.truncf %0 : vector<8x192xf32> to vector<8x192xbf16>
    %c0_1 = arith.constant 0 : index
    %c0_2 = arith.constant 0 : index
    %2 = vector.load %arg2[%c0_1, %c0_2] : memref<192x96xbf16, #tpu.memory_space<vmem>>, vector<192x96xbf16>
    %cst = arith.constant dense<0.000000e+00> : vector<8x96xf32>
    %3 = tpu.matmul %1, %2, %cst {dimension_numbers = #tpu.dot_dimension_numbers<[1], [0], [0], [1], [0, 0, 1, 1], [], []>} : vector<8x192xbf16>, vector<192x96xbf16>, vector<8x96xf32> -> vector<8x96xf32>
    %c0_3 = arith.constant 0 : index
    %c0_4 = arith.constant 0 : index
    %4 = vector.load %arg3[%c0_3, %c0_4] : memref<1x96xf32, #tpu.memory_space<vmem>>, vector<1x96xf32>
    %5 = vector.broadcast %4 : vector<1x96xf32> to vector<8x96xf32>
    %6 = arith.addf %3, %5 : vector<8x96xf32>
    %cst_5 = arith.constant 5.000000e-01 : f32
    %7 = vector.broadcast %cst_5 : f32 to vector<8x96xf32>
    %8 = arith.mulf %7, %6 : vector<8x96xf32>
    %cst_6 = arith.constant 0.707106769 : f32
    %9 = vector.broadcast %cst_6 : f32 to vector<8x96xf32>
    %10 = arith.mulf %6, %9 : vector<8x96xf32>
    %11 = math.erf %10 : vector<8x96xf32>
    %cst_7 = arith.constant 1.000000e+00 : f32
    %12 = vector.broadcast %cst_7 : f32 to vector<8x96xf32>
    %13 = arith.addf %12, %11 : vector<8x96xf32>
    %14 = arith.mulf %8, %13 : vector<8x96xf32>
    %15 = arith.truncf %14 : vector<8x96xf32> to vector<8x96xbf16>
    %c0_8 = arith.constant 0 : index
    %c0_9 = arith.constant 0 : index
    %16 = vector.load %arg4[%c0_8, %c0_9] : memref<96x48xbf16, #tpu.memory_space<vmem>>, vector<96x48xbf16>
    %cst_10 = arith.constant dense<0.000000e+00> : vector<8x48xf32>
    %17 = tpu.matmul %15, %16, %cst_10 {dimension_numbers = #tpu.dot_dimension_numbers<[1], [0], [0], [1], [0, 0, 1, 1], [], []>} : vector<8x96xbf16>, vector<96x48xbf16>, vector<8x48xf32> -> vector<8x48xf32>
    %c0_11 = arith.constant 0 : index
    %c0_12 = arith.constant 0 : index
    %18 = vector.load %arg5[%c0_11, %c0_12] : memref<1x48xf32, #tpu.memory_space<vmem>>, vector<1x48xf32>
    %19 = vector.broadcast %18 : vector<1x48xf32> to vector<8x48xf32>
    %20 = arith.addf %17, %19 : vector<8x48xf32>
    %cst_13 = arith.constant 5.000000e-01 : f32
    %21 = vector.broadcast %cst_13 : f32 to vector<8x48xf32>
    %22 = arith.mulf %21, %20 : vector<8x48xf32>
    %cst_14 = arith.constant 0.707106769 : f32
    %23 = vector.broadcast %cst_14 : f32 to vector<8x48xf32>
    %24 = arith.mulf %20, %23 : vector<8x48xf32>
    %25 = math.erf %24 : vector<8x48xf32>
    %cst_15 = arith.constant 1.000000e+00 : f32
    %26 = vector.broadcast %cst_15 : f32 to vector<8x48xf32>
    %27 = arith.addf %26, %25 : vector<8x48xf32>
    %28 = arith.mulf %22, %27 : vector<8x48xf32>
    %29 = arith.truncf %28 : vector<8x48xf32> to vector<8x48xbf16>
    %c0_16 = arith.constant 0 : index
    %c0_17 = arith.constant 0 : index
    %30 = vector.load %arg6[%c0_16, %c0_17] : memref<48x96xbf16, #tpu.memory_space<vmem>>, vector<48x96xbf16>
    %cst_18 = arith.constant dense<0.000000e+00> : vector<8x96xf32>
    %31 = tpu.matmul %29, %30, %cst_18 {dimension_numbers = #tpu.dot_dimension_numbers<[1], [0], [0], [1], [0, 0, 1, 1], [], []>} : vector<8x48xbf16>, vector<48x96xbf16>, vector<8x96xf32> -> vector<8x96xf32>
    %c0_19 = arith.constant 0 : index
    %c0_20 = arith.constant 0 : index
    %32 = vector.load %arg7[%c0_19, %c0_20] : memref<1x96xf32, #tpu.memory_space<vmem>>, vector<1x96xf32>
    %33 = vector.broadcast %32 : vector<1x96xf32> to vector<8x96xf32>
    %34 = arith.addf %31, %33 : vector<8x96xf32>
    %cst_21 = arith.constant 5.000000e-01 : f32
    %35 = vector.broadcast %cst_21 : f32 to vector<8x96xf32>
    %36 = arith.mulf %35, %34 : vector<8x96xf32>
    %cst_22 = arith.constant 0.707106769 : f32
    %37 = vector.broadcast %cst_22 : f32 to vector<8x96xf32>
    %38 = arith.mulf %34, %37 : vector<8x96xf32>
    %39 = math.erf %38 : vector<8x96xf32>
    %cst_23 = arith.constant 1.000000e+00 : f32
    %40 = vector.broadcast %cst_23 : f32 to vector<8x96xf32>
    %41 = arith.addf %40, %39 : vector<8x96xf32>
    %42 = arith.mulf %36, %41 : vector<8x96xf32>
    %43 = arith.truncf %42 : vector<8x96xf32> to vector<8x96xbf16>
    %c0_24 = arith.constant 0 : index
    %c0_25 = arith.constant 0 : index
    %44 = vector.load %arg8[%c0_24, %c0_25] : memref<96x192xbf16, #tpu.memory_space<vmem>>, vector<96x192xbf16>
    %cst_26 = arith.constant dense<0.000000e+00> : vector<8x192xf32>
    %45 = tpu.matmul %43, %44, %cst_26 {dimension_numbers = #tpu.dot_dimension_numbers<[1], [0], [0], [1], [0, 0, 1, 1], [], []>} : vector<8x96xbf16>, vector<96x192xbf16>, vector<8x192xf32> -> vector<8x192xf32>
    %c0_27 = arith.constant 0 : index
    %c0_28 = arith.constant 0 : index
    %46 = vector.load %arg9[%c0_27, %c0_28] : memref<1x192xf32, #tpu.memory_space<vmem>>, vector<1x192xf32>
    %47 = vector.broadcast %46 : vector<1x192xf32> to vector<8x192xf32>
    %48 = arith.addf %45, %47 : vector<8x192xf32>
    %cst_29 = arith.constant 5.000000e-01 : f32
    %49 = vector.broadcast %cst_29 : f32 to vector<8x192xf32>
    %50 = arith.mulf %49, %48 : vector<8x192xf32>
    %cst_30 = arith.constant 0.707106769 : f32
    %51 = vector.broadcast %cst_30 : f32 to vector<8x192xf32>
    %52 = arith.mulf %48, %51 : vector<8x192xf32>
    %53 = math.erf %52 : vector<8x192xf32>
    %cst_31 = arith.constant 1.000000e+00 : f32
    %54 = vector.broadcast %cst_31 : f32 to vector<8x192xf32>
    %55 = arith.addf %54, %53 : vector<8x192xf32>
    %56 = arith.mulf %50, %55 : vector<8x192xf32>
    %57 = arith.truncf %56 : vector<8x192xf32> to vector<8x192xbf16>
    %c0_32 = arith.constant 0 : index
    %c0_33 = arith.constant 0 : index
    %58 = vector.load %arg10[%c0_32, %c0_33] : memref<192x384xbf16, #tpu.memory_space<vmem>>, vector<192x384xbf16>
    %cst_34 = arith.constant dense<0.000000e+00> : vector<8x384xf32>
    %59 = tpu.matmul %57, %58, %cst_34 {dimension_numbers = #tpu.dot_dimension_numbers<[1], [0], [0], [1], [0, 0, 1, 1], [], []>} : vector<8x192xbf16>, vector<192x384xbf16>, vector<8x384xf32> -> vector<8x384xf32>
    %c0_35 = arith.constant 0 : index
    %c0_36 = arith.constant 0 : index
    %60 = vector.load %arg11[%c0_35, %c0_36] : memref<1x384xf32, #tpu.memory_space<vmem>>, vector<1x384xf32>
    %61 = vector.broadcast %60 : vector<1x384xf32> to vector<8x384xf32>
    %62 = arith.addf %59, %61 : vector<8x384xf32>
    %cst_37 = arith.constant 5.000000e-01 : f32
    %63 = vector.broadcast %cst_37 : f32 to vector<8x384xf32>
    %64 = arith.mulf %63, %62 : vector<8x384xf32>
    %cst_38 = arith.constant 0.707106769 : f32
    %65 = vector.broadcast %cst_38 : f32 to vector<8x384xf32>
    %66 = arith.mulf %62, %65 : vector<8x384xf32>
    %67 = math.erf %66 : vector<8x384xf32>
    %cst_39 = arith.constant 1.000000e+00 : f32
    %68 = vector.broadcast %cst_39 : f32 to vector<8x384xf32>
    %69 = arith.addf %68, %67 : vector<8x384xf32>
    %70 = arith.mulf %64, %69 : vector<8x384xf32>
    %71 = arith.truncf %70 : vector<8x384xf32> to vector<8x384xbf16>
    %c0_40 = arith.constant 0 : index
    %c0_41 = arith.constant 0 : index
    %72 = vector.load %arg12[%c0_40, %c0_41] : memref<384x2688xbf16, #tpu.memory_space<vmem>>, vector<384x2688xbf16>
    %cst_42 = arith.constant dense<0.000000e+00> : vector<8x2688xf32>
    %73 = tpu.matmul %71, %72, %cst_42 {dimension_numbers = #tpu.dot_dimension_numbers<[1], [0], [0], [1], [0, 0, 1, 1], [], []>} : vector<8x384xbf16>, vector<384x2688xbf16>, vector<8x2688xf32> -> vector<8x2688xf32>
    %c0_43 = arith.constant 0 : index
    %c0_44 = arith.constant 0 : index
    %74 = vector.load %arg13[%c0_43, %c0_44] : memref<1x2688xf32, #tpu.memory_space<vmem>>, vector<1x2688xf32>
    %75 = vector.broadcast %74 : vector<1x2688xf32> to vector<8x2688xf32>
    %76 = arith.addf %73, %75 : vector<8x2688xf32>
    %c0_45 = arith.constant 0 : index
    %c0_46 = arith.constant 0 : index
    %77 = vector.load %arg14[%c0_45, %c0_46] : memref<8x2688xf32, #tpu.memory_space<vmem>>, vector<8x2688xf32>
    tpu.vector_store %arg14[%c0_45, %c0_46], %76 {strides = array<i32>} : memref<8x2688xf32, #tpu.memory_space<vmem>>, vector<8x2688xf32>,
    return
  }
  func.func @transform_0(%arg0: i32) -> (i32, i32) {
    %c0_i32 = arith.constant 0 : i32
    %c0_i32_0 = arith.constant 0 : i32
    return %arg0, %c0_i32 : i32, i32
  }
  func.func @transform_1(%arg0: i32) -> (i32, i32) {
    %c0_i32 = arith.constant 0 : i32
    %c0_i32_0 = arith.constant 0 : i32
    %c0_i32_1 = arith.constant 0 : i32
    return %c0_i32, %c0_i32_0 : i32, i32
  }
  func.func @transform_2(%arg0: i32) -> (i32, i32) {
    %c0_i32 = arith.constant 0 : i32
    %c0_i32_0 = arith.constant 0 : i32
    %c0_i32_1 = arith.constant 0 : i32
    return %c0_i32, %c0_i32_0 : i32, i32
  }
  func.func @transform_3(%arg0: i32) -> (i32, i32) {
    %c0_i32 = arith.constant 0 : i32
    %c0_i32_0 = arith.constant 0 : i32
    %c0_i32_1 = arith.constant 0 : i32
    return %c0_i32, %c0_i32_0 : i32, i32
  }
  func.func @transform_4(%arg0: i32) -> (i32, i32) {
    %c0_i32 = arith.constant 0 : i32
    %c0_i32_0 = arith.constant 0 : i32
    %c0_i32_1 = arith.constant 0 : i32
    return %c0_i32, %c0_i32_0 : i32, i32
  }
  func.func @transform_5(%arg0: i32) -> (i32, i32) {
    %c0_i32 = arith.constant 0 : i32
    %c0_i32_0 = arith.constant 0 : i32
    %c0_i32_1 = arith.constant 0 : i32
    return %c0_i32, %c0_i32_0 : i32, i32
  }
  func.func @transform_6(%arg0: i32) -> (i32, i32) {
    %c0_i32 = arith.constant 0 : i32
    %c0_i32_0 = arith.constant 0 : i32
    %c0_i32_1 = arith.constant 0 : i32
    return %c0_i32, %c0_i32_0 : i32, i32
  }
  func.func @transform_7(%arg0: i32) -> (i32, i32) {
    %c0_i32 = arith.constant 0 : i32
    %c0_i32_0 = arith.constant 0 : i32
    %c0_i32_1 = arith.constant 0 : i32
    return %c0_i32, %c0_i32_0 : i32, i32
  }
  func.func @transform_8(%arg0: i32) -> (i32, i32) {
    %c0_i32 = arith.constant 0 : i32
    %c0_i32_0 = arith.constant 0 : i32
    %c0_i32_1 = arith.constant 0 : i32
    return %c0_i32, %c0_i32_0 : i32, i32
  }
  func.func @transform_9(%arg0: i32) -> (i32, i32) {
    %c0_i32 = arith.constant 0 : i32
    %c0_i32_0 = arith.constant 0 : i32
    %c0_i32_1 = arith.constant 0 : i32
    return %c0_i32, %c0_i32_0 : i32, i32
  }
  func.func @transform_10(%arg0: i32) -> (i32, i32) {
    %c0_i32 = arith.constant 0 : i32
    %c0_i32_0 = arith.constant 0 : i32
    %c0_i32_1 = arith.constant 0 : i32
    return %c0_i32, %c0_i32_0 : i32, i32
  }
  func.func @transform_11(%arg0: i32) -> (i32, i32) {
    %c0_i32 = arith.constant 0 : i32
    %c0_i32_0 = arith.constant 0 : i32
    %c0_i32_1 = arith.constant 0 : i32
    return %c0_i32, %c0_i32_0 : i32, i32
  }
  func.func @transform_12(%arg0: i32) -> (i32, i32) {
    %c0_i32 = arith.constant 0 : i32
    %c0_i32_0 = arith.constant 0 : i32
    %c0_i32_1 = arith.constant 0 : i32
    return %c0_i32, %c0_i32_0 : i32, i32
  }
  func.func @transform_13(%arg0: i32) -> (i32, i32) {
    %c0_i32 = arith.constant 0 : i32
    %c0_i32_0 = arith.constant 0 : i32
    return %arg0, %c0_i32 : i32, i32
  }
}

</mosaic_0001>

<llo_original>
// kernel: tpu_custom_call.1
$region0: #{tpu_custom_call.1}
  #allocation0 [shape = 'u32[]', space=smem, size = 0x4, offset = 0x4, fixed_abs, tag = 'smem constant byte address 0x4 - core index']
  #allocation1 [shape = 'u32[144,128]{1,0:T(1,128)}', space=vmem, size = 0x12000, scoped, tag = 'internal scratch']
  %s0 = inlined_call_operand.hbm [shape: f32[8,192], index: 0, kind: input, shape index: {}]
  %s1 = inlined_call_operand.hbm [shape: bf16[192,96], index: 1, kind: input, shape index: {}]
  %s2 = inlined_call_operand.hbm [shape: f32[1,96], index: 2, kind: input, shape index: {}]
  %s3 = inlined_call_operand.vmem [shape: bf16[96,48], index: 3, kind: input, shape index: {}]
  %s4 = inlined_call_operand.hbm [shape: f32[1,48], index: 4, kind: input, shape index: {}]
  %s5 = inlined_call_operand.hbm [shape: bf16[48,96], index: 5, kind: input, shape index: {}]
  %s6 = inlined_call_operand.hbm [shape: f32[1,96], index: 6, kind: input, shape index: {}]
  %s7 = inlined_call_operand.hbm [shape: bf16[96,192], index: 7, kind: input, shape index: {}]
  %s8 = inlined_call_operand.hbm [shape: f32[1,192], index: 8, kind: input, shape index: {}]
  %s9 = inlined_call_operand.hbm [shape: bf16[192,384], index: 9, kind: input, shape index: {}]
  %s10 = inlined_call_operand.hbm [shape: f32[1,384], index: 10, kind: input, shape index: {}]
  %s11 = inlined_call_operand.hbm [shape: bf16[384,2688], index: 11, kind: input, shape index: {}]
  %s12 = inlined_call_operand.hbm [shape: f32[1,2688], index: 12, kind: input, shape index: {}]
  %s13 = inlined_call_operand.hbm [shape: f32[8,2688], index: 13, kind: output, shape index: {}]
  %s14 = sld [smem:[#allocation0]]
  $region110: #{tpu_custom_call.1} parent=0
    _
  %s16 = ssub.s32 1, %s14
  %s17 = scalar_select 0, %s16, %s14
  $region1: #{tpu_custom_call.1} parent=0
    #allocation2 [shape = 'u8[8192]{0}', space=vmem, size = 0x2000, scoped, tag = 'input window, operand 0, single buffered']
    #allocation3 [shape = 's32[1]{0}', space=sflag, size = 0x4, scoped, tag = 'scoped memory for tpu_custom_call.1']
    #allocation4 [shape = 's32[1]{0}', space=sflag, size = 0x4, scoped, tag = 'scoped memory for tpu_custom_call.1']
    #allocation5 [shape = 'u8[49152]{0}', space=vmem, size = 0xc000, scoped, tag = 'input window, operand 1, single buffered']
    #allocation6 [shape = 's32[1]{0}', space=sflag, size = 0x4, scoped, tag = 'scoped memory for tpu_custom_call.1']
    #allocation7 [shape = 'u8[512]{0}', space=vmem, size = 0x400, scoped, tag = 'input window, operand 2, single buffered']
    #allocation8 [shape = 'u8[512]{0}', space=vmem, size = 0x400, scoped, tag = 'input window, operand 4, single buffered']
    #allocation9 [shape = 's32[1]{0}', space=sflag, size = 0x4, scoped, tag = 'scoped memory for tpu_custom_call.1']
    #allocation10 [shape = 'u8[12288]{0}', space=vmem, size = 0x3000, scoped, tag = 'input window, operand 5, single buffered']
    #allocation11 [shape = 'u8[512]{0}', space=vmem, size = 0x400, scoped, tag = 'input window, operand 6, single buffered']
    #allocation12 [shape = 's32[1]{0}', space=sflag, size = 0x4, scoped, tag = 'scoped memory for tpu_custom_call.1']
    #allocation13 [shape = 'u8[49152]{0}', space=vmem, size = 0xc000, scoped, tag = 'input window, operand 7, single buffered']
    #allocation14 [shape = 'u8[1024]{0}', space=vmem, size = 0x400, scoped, tag = 'input window, operand 8, single buffered']
    #allocation15 [shape = 's32[1]{0}', space=sflag, size = 0x4, scoped, tag = 'scoped memory for tpu_custom_call.1']
    #allocation16 [shape = 'u8[147456]{0}', space=vmem, size = 0x24000, scoped, tag = 'input window, operand 9, single buffered']
    #allocation17 [shape = 'u8[1536]{0}', space=vmem, size = 0x800, scoped, tag = 'input window, operand 10, single buffered']
    #allocation18 [shape = 's32[1]{0}', space=sflag, size = 0x4, scoped, tag = 'scoped memory for tpu_custom_call.1']
    #allocation19 [shape = 'u8[2064384]{0}', space=vmem, size = 0x1f8000, scoped, tag = 'input window, operand 11, single buffered']
    #allocation20 [shape = 'u8[10752]{0}', space=vmem, size = 0x2c00, scoped, tag = 'input window, operand 12, single buffered']
    #allocation21 [shape = 's32[1]{0}', space=sflag, size = 0x4, scoped, tag = 'scoped memory for tpu_custom_call.1']
    #allocation22 [shape = 'u8[86016]{0}', space=vmem, size = 0x15000, scoped, tag = 'output window, operand 0, single buffered']
    %18 = vsyncpa [#allocation3], 0
    %19 = vsyncpa [#allocation6], 0
    %20 = vsyncpa [#allocation9], 0
    %21 = vsyncpa [#allocation12], 0
    %22 = vsyncpa [#allocation15], 0
    %23 = vsyncpa [#allocation18], 0
    %24 = vsyncpa [#allocation21], 0
    %25 = vsyncpa [#allocation4], 0
    // Predicated region
    $region2: #{tpu_custom_call.1} parent=1 // pred_check
      _
    $region3: #{tpu_custom_call.1} parent=1 // pred_check_branch
      %27 = sbr.rel (0) target = $region5
    $region4: #{tpu_custom_call.1} parent=1 // pred_region
      %s29 = ssub.s32 256, 256
      %30 = vsyncadd [#allocation3], %s29
      %s32 = sshll.u32 [#allocation2], 4
      %s33 = int_to_ptr.vmem [resolvable:$true] %s32
      %35 = dma.hbm_to_vmem [thread:$0]  %s0, 256, %s33, [#allocation3]
    $region5: #{tpu_custom_call.1} parent=1 // pred_fallthru
      _
    // Predicated region
    $region6: #{tpu_custom_call.1} parent=1 // pred_check
      _
    $region7: #{tpu_custom_call.1} parent=1 // pred_check_branch
      %37 = sbr.rel (0) target = $region9
    $region8: #{tpu_custom_call.1} parent=1 // pred_region
      %s39 = ssub.s32 1536, 1536
      %40 = vsyncadd [#allocation6], %s39
      %s41 = sshll.u32 [#allocation5], 4
      %s42 = int_to_ptr.vmem [resolvable:$true] %s41
      %47 = dma.hbm_to_vmem [thread:$0]  %s1, 1536, %s42, [#allocation6], 64, 64, 4
    $region9: #{tpu_custom_call.1} parent=1 // pred_fallthru
      _
    // Predicated region
    $region10: #{tpu_custom_call.1} parent=1 // pred_check
      _
    $region11: #{tpu_custom_call.1} parent=1 // pred_check_branch
      %49 = sbr.rel (0) target = $region13
    $region12: #{tpu_custom_call.1} parent=1 // pred_region
      %s51 = ssub.s32 16, 16
      %52 = vsyncadd [#allocation6], %s51
      %s54 = sshll.u32 [#allocation7], 4
      %s55 = int_to_ptr.vmem [resolvable:$true] %s54
      %57 = dma.hbm_to_vmem [thread:$0]  %s2, 16, %s55, [#allocation6]
    $region13: #{tpu_custom_call.1} parent=1 // pred_fallthru
      _
    // Predicated region
    $region14: #{tpu_custom_call.1} parent=1 // pred_check
      _
    $region15: #{tpu_custom_call.1} parent=1 // pred_check_branch
      %59 = sbr.rel (0) target = $region17
    $region16: #{tpu_custom_call.1} parent=1 // pred_region
      _
    $region17: #{tpu_custom_call.1} parent=1 // pred_fallthru
      _
    // Predicated region
    $region18: #{tpu_custom_call.1} parent=1 // pred_check
      _
    $region19: #{tpu_custom_call.1} parent=1 // pred_check_branch
      %61 = sbr.rel (0) target = $region21
    $region20: #{tpu_custom_call.1} parent=1 // pred_region
      %s63 = ssub.s32 16, 16
      %64 = vsyncadd [#allocation9], %s63
      %s66 = sshll.u32 [#allocation8], 4
      %s67 = int_to_ptr.vmem [resolvable:$true] %s66
      %69 = dma.hbm_to_vmem [thread:$0]  %s4, 16, %s67, [#allocation9]
    $region21: #{tpu_custom_call.1} parent=1 // pred_fallthru
      _
    // Predicated region
    $region22: #{tpu_custom_call.1} parent=1 // pred_check
      _
    $region23: #{tpu_custom_call.1} parent=1 // pred_check_branch
      %71 = sbr.rel (0) target = $region25
    $region24: #{tpu_custom_call.1} parent=1 // pred_region
      %s73 = ssub.s32 384, 384
      %74 = vsyncadd [#allocation9], %s73
      %s75 = sshll.u32 [#allocation10], 4
      %s76 = int_to_ptr.vmem [resolvable:$true] %s75
      %81 = dma.hbm_to_vmem [thread:$0]  %s5, 384, %s76, [#allocation9], 64, 64, 4
    $region25: #{tpu_custom_call.1} parent=1 // pred_fallthru
      _
    // Predicated region
    $region26: #{tpu_custom_call.1} parent=1 // pred_check
      _
    $region27: #{tpu_custom_call.1} parent=1 // pred_check_branch
      %83 = sbr.rel (0) target = $region29
    $region28: #{tpu_custom_call.1} parent=1 // pred_region
      %s85 = ssub.s32 16, 16
      %86 = vsyncadd [#allocation12], %s85
      %s88 = sshll.u32 [#allocation11], 4
      %s89 = int_to_ptr.vmem [resolvable:$true] %s88
      %91 = dma.hbm_to_vmem [thread:$0]  %s6, 16, %s89, [#allocation12]
    $region29: #{tpu_custom_call.1} parent=1 // pred_fallthru
      _
    // Predicated region
    $region30: #{tpu_custom_call.1} parent=1 // pred_check
      _
    $region31: #{tpu_custom_call.1} parent=1 // pred_check_branch
      %93 = sbr.rel (0) target = $region33
    $region32: #{tpu_custom_call.1} parent=1 // pred_region
      %s95 = ssub.s32 1536, 1536
      %96 = vsyncadd [#allocation12], %s95
      %s97 = sshll.u32 [#allocation13], 4
      %s98 = int_to_ptr.vmem [resolvable:$true] %s97
      %103 = dma.hbm_to_vmem [thread:$0]  %s7, 1536, %s98, [#allocation12], 128, 128, 8
    $region33: #{tpu_custom_call.1} parent=1 // pred_fallthru
      _
    // Predicated region
    $region34: #{tpu_custom_call.1} parent=1 // pred_check
      _
    $region35: #{tpu_custom_call.1} parent=1 // pred_check_branch
      %105 = sbr.rel (0) target = $region37
    $region36: #{tpu_custom_call.1} parent=1 // pred_region
      %s107 = ssub.s32 32, 32
      %108 = vsyncadd [#allocation15], %s107
      %s110 = sshll.u32 [#allocation14], 4
      %s111 = int_to_ptr.vmem [resolvable:$true] %s110
      %113 = dma.hbm_to_vmem [thread:$0]  %s8, 32, %s111, [#allocation15]
    $region37: #{tpu_custom_call.1} parent=1 // pred_fallthru
      _
    // Predicated region
    $region38: #{tpu_custom_call.1} parent=1 // pred_check
      _
    $region39: #{tpu_custom_call.1} parent=1 // pred_check_branch
      %115 = sbr.rel (0) target = $region41
    $region40: #{tpu_custom_call.1} parent=1 // pred_region
      %s117 = ssub.s32 4608, 4608
      %118 = vsyncadd [#allocation15], %s117
      %s119 = sshll.u32 [#allocation16], 4
      %s120 = int_to_ptr.vmem [resolvable:$true] %s119
      %125 = dma.hbm_to_vmem [thread:$0]  %s9, 4608, %s120, [#allocation15], 192, 192, 12
    $region41: #{tpu_custom_call.1} parent=1 // pred_fallthru
      _
    // Predicated region
    $region42: #{tpu_custom_call.1} parent=1 // pred_check
      _
    $region43: #{tpu_custom_call.1} parent=1 // pred_check_branch
      %127 = sbr.rel (0) target = $region45
    $region44: #{tpu_custom_call.1} parent=1 // pred_region
      %s129 = ssub.s32 48, 48
      %130 = vsyncadd [#allocation18], %s129
      %s132 = sshll.u32 [#allocation17], 4
      %s133 = int_to_ptr.vmem [resolvable:$true] %s132
      %135 = dma.hbm_to_vmem [thread:$0]  %s10, 48, %s133, [#allocation18]
    $region45: #{tpu_custom_call.1} parent=1 // pred_fallthru
      _
    // Predicated region
    $region46: #{tpu_custom_call.1} parent=1 // pred_check
      _
    $region47: #{tpu_custom_call.1} parent=1 // pred_check_branch
      %137 = sbr.rel (0) target = $region49
    $region48: #{tpu_custom_call.1} parent=1 // pred_region
      %s139 = ssub.s32 64512, 64512
      %140 = vsyncadd [#allocation18], %s139
      %s141 = sshll.u32 [#allocation19], 4
      %s142 = int_to_ptr.vmem [resolvable:$true] %s141
      %147 = dma.hbm_to_vmem [thread:$0]  %s11, 64512, %s142, [#allocation18], 1344, 1344, 84
    $region49: #{tpu_custom_call.1} parent=1 // pred_fallthru
      _
    // Predicated region
    $region50: #{tpu_custom_call.1} parent=1 // pred_check
      _
    $region51: #{tpu_custom_call.1} parent=1 // pred_check_branch
      %149 = sbr.rel (0) target = $region53
    $region52: #{tpu_custom_call.1} parent=1 // pred_region
      %s151 = ssub.s32 336, 336
      %152 = vsyncadd [#allocation21], %s151
      %s154 = sshll.u32 [#allocation20], 4
      %s155 = int_to_ptr.vmem [resolvable:$true] %s154
      %157 = dma.hbm_to_vmem [thread:$0]  %s12, 336, %s155, [#allocation21]
    $region53: #{tpu_custom_call.1} parent=1 // pred_fallthru
      _
    // Predicated region
    $region54: #{tpu_custom_call.1} parent=1 // pred_check
      _
    $region55: #{tpu_custom_call.1} parent=1 // pred_check_branch
      %159 = sbr.rel (0) target = $region57
    $region56: #{tpu_custom_call.1} parent=1 // pred_region
      %160 = dma.done [#allocation3], 256
    $region57: #{tpu_custom_call.1} parent=1 // pred_fallthru
      _
    // Predicated region
    $region58: #{tpu_custom_call.1} parent=1 // pred_check
      _
    $region59: #{tpu_custom_call.1} parent=1 // pred_check_branch
      %162 = sbr.rel (0) target = $region61
    $region60: #{tpu_custom_call.1} parent=1 // pred_region
      %163 = dma.done [#allocation6], 1536
    $region61: #{tpu_custom_call.1} parent=1 // pred_fallthru
      _
    // Predicated region
    $region62: #{tpu_custom_call.1} parent=1 // pred_check
      _
    $region63: #{tpu_custom_call.1} parent=1 // pred_check_branch
      %165 = sbr.rel (0) target = $region65
    $region64: #{tpu_custom_call.1} parent=1 // pred_region
      %166 = dma.done [#allocation6], 16
    $region65: #{tpu_custom_call.1} parent=1 // pred_fallthru
      _
    // Predicated region
    $region66: #{tpu_custom_call.1} parent=1 // pred_check
      _
    $region67: #{tpu_custom_call.1} parent=1 // pred_check_branch
      %168 = sbr.rel (0) target = $region69
    $region68: #{tpu_custom_call.1} parent=1 // pred_region
      %169 = dma.done [#allocation9], 16
    $region69: #{tpu_custom_call.1} parent=1 // pred_fallthru
      _
    // Predicated region
    $region70: #{tpu_custom_call.1} parent=1 // pred_check
      _
    $region71: #{tpu_custom_call.1} parent=1 // pred_check_branch
      %171 = sbr.rel (0) target = $region73
    $region72: #{tpu_custom_call.1} parent=1 // pred_region
      %172 = dma.done [#allocation9], 384
    $region73: #{tpu_custom_call.1} parent=1 // pred_fallthru
      _
    // Predicated region
    $region74: #{tpu_custom_call.1} parent=1 // pred_check
      _
    $region75: #{tpu_custom_call.1} parent=1 // pred_check_branch
      %174 = sbr.rel (0) target = $region77
    $region76: #{tpu_custom_call.1} parent=1 // pred_region
      %175 = dma.done [#allocation12], 16
    $region77: #{tpu_custom_call.1} parent=1 // pred_fallthru
      _
    // Predicated region
    $region78: #{tpu_custom_call.1} parent=1 // pred_check
      _
    $region79: #{tpu_custom_call.1} parent=1 // pred_check_branch
      %177 = sbr.rel (0) target = $region81
    $region80: #{tpu_custom_call.1} parent=1 // pred_region
      %178 = dma.done [#allocation12], 1536
    $region81: #{tpu_custom_call.1} parent=1 // pred_fallthru
      _
    // Predicated region
    $region82: #{tpu_custom_call.1} parent=1 // pred_check
      _
    $region83: #{tpu_custom_call.1} parent=1 // pred_check_branch
      %180 = sbr.rel (0) target = $region85
    $region84: #{tpu_custom_call.1} parent=1 // pred_region
      %181 = dma.done [#allocation15], 32
    $region85: #{tpu_custom_call.1} parent=1 // pred_fallthru
      _
    // Predicated region
    $region86: #{tpu_custom_call.1} parent=1 // pred_check
      _
    $region87: #{tpu_custom_call.1} parent=1 // pred_check_branch
      %183 = sbr.rel (0) target = $region89
    $region88: #{tpu_custom_call.1} parent=1 // pred_region
      %184 = dma.done [#allocation15], 4608
    $region89: #{tpu_custom_call.1} parent=1 // pred_fallthru
      _
    // Predicated region
    $region90: #{tpu_custom_call.1} parent=1 // pred_check
      _
    $region91: #{tpu_custom_call.1} parent=1 // pred_check_branch
      %186 = sbr.rel (0) target = $region93
    $region92: #{tpu_custom_call.1} parent=1 // pred_region
      %187 = dma.done [#allocation18], 48
    $region93: #{tpu_custom_call.1} parent=1 // pred_fallthru
      _
    // Predicated region
    $region94: #{tpu_custom_call.1} parent=1 // pred_check
      _
    $region95: #{tpu_custom_call.1} parent=1 // pred_check_branch
      %189 = sbr.rel (0) target = $region97
    $region96: #{tpu_custom_call.1} parent=1 // pred_region
      %190 = dma.done [#allocation18], 64512
    $region97: #{tpu_custom_call.1} parent=1 // pred_fallthru
      _
    // Predicated region
    $region98: #{tpu_custom_call.1} parent=1 // pred_check
      _
    $region99: #{tpu_custom_call.1} parent=1 // pred_check_branch
      %192 = sbr.rel (0) target = $region101
    $region100: #{tpu_custom_call.1} parent=1 // pred_region
      %193 = dma.done [#allocation21], 336
    $region101: #{tpu_custom_call.1} parent=1 // pred_fallthru
      _
    %v195 = vld [vmem:[#allocation2] sm:$0xff]
    %v196 = vld [vmem:[#allocation2 + $0x8] sm:$0xff]
    %v197 = vpack.c.bf16 %v195, %v195
    %v198 = vpack.c.bf16 %v196, %v196
    %v199 = vld [vmem:[#allocation5] sm:$0xf]
    %v200 = vld [vmem:[#allocation5 + $0x4] sm:$0xf]
    %v201 = vld [vmem:[#allocation5 + $0x8] sm:$0xf]
    %v202 = vld [vmem:[#allocation5 + $0xc] sm:$0xf]
    %v203 = vld [vmem:[#allocation5 + $0x10] sm:$0xf]
    %v204 = vld [vmem:[#allocation5 + $0x14] sm:$0xf]
    %v205 = vld [vmem:[#allocation5 + $0x18] sm:$0xf]
    %v206 = vld [vmem:[#allocation5 + $0x1c] sm:$0xf]
    %v207 = vld [vmem:[#allocation5 + $0x20] sm:$0xf]
    %v208 = vld [vmem:[#allocation5 + $0x24] sm:$0xf]
    %v209 = vld [vmem:[#allocation5 + $0x28] sm:$0xf]
    %v210 = vld [vmem:[#allocation5 + $0x2c] sm:$0xf]
    %v211 = vld [vmem:[#allocation5 + $0x30] sm:$0xf]
    %v212 = vld [vmem:[#allocation5 + $0x34] sm:$0xf]
    %v213 = vld [vmem:[#allocation5 + $0x38] sm:$0xf]
    %v214 = vld [vmem:[#allocation5 + $0x3c] sm:$0xf]
    %v215 = vld [vmem:[#allocation5 + $0x40] sm:$0xf]
    %v216 = vld [vmem:[#allocation5 + $0x44] sm:$0xf]
    %v217 = vld [vmem:[#allocation5 + $0x48] sm:$0xf]
    %v218 = vld [vmem:[#allocation5 + $0x4c] sm:$0xf]
    %v219 = vld [vmem:[#allocation5 + $0x50] sm:$0xf]
    %v220 = vld [vmem:[#allocation5 + $0x54] sm:$0xf]
    %v221 = vld [vmem:[#allocation5 + $0x58] sm:$0xf]
    %v222 = vld [vmem:[#allocation5 + $0x5c] sm:$0xf]
    %v223 = vld [vmem:[#allocation7] sm:$0x1]
    %v225 = vlaneseq
    %v226 = vshrl.u32 %v225, 7
    %v227 = vsub.s32 0, %v226
    %v228 = vrot.slane %v223, %v227
    %v254 = vunpack.c.l.b16 %v199
    %v255 = vunpack.c.l.b16 %v200
    %v256 = vunpack.c.l.b16 %v201
    %v257 = vunpack.c.l.b16 %v202
    %v258 = vunpack.c.l.b16 %v203
    %v259 = vunpack.c.l.b16 %v204
    %v260 = vunpack.c.l.b16 %v205
    %v261 = vunpack.c.l.b16 %v206
    %v262 = vunpack.c.l.b16 %v207
    %v263 = vunpack.c.l.b16 %v208
    %v264 = vunpack.c.l.b16 %v209
    %v265 = vunpack.c.l.b16 %v210
    %v266 = vunpack.c.l.b16 %v211
    %v267 = vunpack.c.l.b16 %v212
    %v268 = vunpack.c.l.b16 %v213
    %v269 = vunpack.c.l.b16 %v214
    %v270 = vunpack.c.l.b16 %v215
    %v271 = vunpack.c.l.b16 %v216
    %v272 = vunpack.c.l.b16 %v217
    %v273 = vunpack.c.l.b16 %v218
    %v274 = vunpack.c.l.b16 %v219
    %v275 = vunpack.c.l.b16 %v220
    %v276 = vunpack.c.l.b16 %v221
    %v277 = vunpack.c.l.b16 %v222
    %v278 = vpack.c.b16 %v255, %v254
    %v279 = vpack.c.b16 %v257, %v256
    %v280 = vpack.c.b16 %v259, %v258
    %v281 = vpack.c.b16 %v261, %v260
    %v282 = vpack.c.b16 %v263, %v262
    %v283 = vpack.c.b16 %v265, %v264
    %v284 = vpack.c.b16 %v267, %v266
    %v285 = vpack.c.b16 %v269, %v268
    %v286 = vpack.c.b16 %v271, %v270
    %v287 = vpack.c.b16 %v273, %v272
    %v288 = vpack.c.b16 %v275, %v274
    %v289 = vpack.c.b16 %v277, %v276
    %vm302 = vcmask 523264
    %v304 = vsel %vm302, %v198, 0
    %306 = vmatprep.subr.bf16.mxu0 0
    %307 = vmatpush1.bf16.msra.mxu0 %v278
    %308 = vmatprep.subr.bf16.mxu0 0
    %309 = vmatpush1.bf16.msra.mxu0 %v279
    %310 = vmatprep.subr.bf16.mxu0 0
    %311 = vmatpush1.bf16.msra.mxu0 %v280
    %312 = vmatprep.subr.bf16.mxu0 0
    %313 = vmatpush1.bf16.msra.mxu0 %v281
    %314 = vmatprep.subr.bf16.mxu0 0
    %315 = vmatpush1.bf16.msra.mxu0 %v282
    %316 = vmatprep.subr.bf16.mxu0 0
    %317 = vmatpush1.bf16.msra.mxu0 %v283
    %318 = vmatprep.subr.bf16.mxu0 0
    %319 = vmatpush1.bf16.msra.mxu0 %v284
    %320 = vmatprep.subr.bf16.mxu0 0
    %321 = vmatpush1.bf16.msra.mxu0 %v285
    %322 = vmatprep.subr.bf16.mxu0 0
    %323 = vmatpush1.bf16.msra.mxu0 %v286
    %324 = vmatprep.subr.bf16.mxu0 0
    %325 = vmatpush1.bf16.msra.mxu0 %v287
    %326 = vmatprep.subr.bf16.mxu0 0
    %327 = vmatpush1.bf16.msra.mxu0 %v288
    %328 = vmatprep.subr.bf16.mxu0 0
    %329 = vmatpush1.bf16.msra.mxu0 %v289
    %330 = vmatprep.subr.bf16.mxu0 0
    %331 = vmatpush1.bf16.msra.mxu0 0
    %332 = vmatprep.subr.bf16.mxu0 0
    %333 = vmatpush1.bf16.msra.mxu0 0
    %334 = vmatprep.subr.bf16.mxu0 0
    %335 = vmatpush1.bf16.msra.mxu0 0
    %336 = vmatprep.subr.bf16.mxu0 0
    %337 = vmatpush1.bf16.msra.mxu0 0
    %338 = vmatprep.mubr.bf16.mxu0 %v304
    %339 = vmatmul.mubr.bf16.gmra.mrb[0].mxu0 %v197
    %v340 = vpop.f32.mrb[0].mxu0
    %v341 = vadd.f32 %v228, %v340
    %v342 = vpop.f32.mrb[0].mxu0
    %v343 = vpop.f32.mrb[0].mxu0
    %v344 = vpop.f32.mrb[0].mxu0
    %345 = vdwg.mxu0
    %v346 = vmul.f32 %v341, 0.5
    %v347 = vmul.f32 %v341, 0.70710677
    %v348 = verf.f32.pop %v347
    %v349 = vadd.f32 %v348, 1.0
    %v350 = vmul.f32 %v346, %v349
    %v351 = vpack.c.bf16 %v350, %v350
    %v352 = vld [vmem:[%s3] sm:$0xf]
    %v353 = vld [vmem:[%s3 + $0x4] sm:$0xf]
    %v354 = vld [vmem:[%s3 + $0x8] sm:$0xf]
    %v355 = vld [vmem:[%s3 + $0xc] sm:$0xf]
    %v356 = vld [vmem:[%s3 + $0x10] sm:$0xf]
    %v357 = vld [vmem:[%s3 + $0x14] sm:$0xf]
    %v358 = vld [vmem:[%s3 + $0x18] sm:$0xf]
    %v359 = vld [vmem:[%s3 + $0x1c] sm:$0xf]
    %v360 = vld [vmem:[%s3 + $0x20] sm:$0xf]
    %v361 = vld [vmem:[%s3 + $0x24] sm:$0xf]
    %v362 = vld [vmem:[%s3 + $0x28] sm:$0xf]
    %v363 = vld [vmem:[%s3 + $0x2c] sm:$0xf]
    %v364 = vld [vmem:[#allocation8] sm:$0x1]
    %v366 = vlaneseq
    %v367 = vshrl.u32 %v366, 7
    %v368 = vsub.s32 0, %v367
    %v369 = vrot.slane %v364, %v368
    %v383 = vunpack.c.l.b16 %v352
    %v384 = vunpack.c.l.b16 %v353
    %v385 = vunpack.c.l.b16 %v354
    %v386 = vunpack.c.l.b16 %v355
    %v387 = vunpack.c.l.b16 %v356
    %v388 = vunpack.c.l.b16 %v357
    %v389 = vunpack.c.l.b16 %v358
    %v390 = vunpack.c.l.b16 %v359
    %v391 = vunpack.c.l.b16 %v360
    %v392 = vunpack.c.l.b16 %v361
    %v393 = vunpack.c.l.b16 %v362
    %v394 = vunpack.c.l.b16 %v363
    %v395 = vpack.c.b16 %v384, %v383
    %v396 = vpack.c.b16 %v386, %v385
    %v397 = vpack.c.b16 %v388, %v387
    %v398 = vpack.c.b16 %v390, %v389
    %v399 = vpack.c.b16 %v392, %v391
    %v400 = vpack.c.b16 %v394, %v393
    %vm407 = vcmask 785408
    %v409 = vsel %vm407, %v351, 0
    %411 = vmatprep.subr.bf16.mxu0 0
    %412 = vmatpush1.bf16.msra.mxu0 %v395
    %413 = vmatprep.subr.bf16.mxu0 0
    %414 = vmatpush1.bf16.msra.mxu0 %v396
    %415 = vmatprep.subr.bf16.mxu0 0
    %416 = vmatpush1.bf16.msra.mxu0 %v397
    %417 = vmatprep.subr.bf16.mxu0 0
    %418 = vmatpush1.bf16.msra.mxu0 %v398
    %419 = vmatprep.subr.bf16.mxu0 0
    %420 = vmatpush1.bf16.msra.mxu0 %v399
    %421 = vmatprep.subr.bf16.mxu0 0
    %422 = vmatpush1.bf16.msra.mxu0 %v400
    %423 = vmatprep.subr.bf16.mxu0 0
    %424 = vmatpush1.bf16.msra.mxu0 0
    %425 = vmatprep.subr.bf16.mxu0 0
    %426 = vmatpush1.bf16.msra.mxu0 0
    %427 = vmatprep.subr.bf16.mxu0 0
    %428 = vmatpush1.bf16.msra.mxu0 0
    %429 = vmatprep.subr.bf16.mxu0 0
    %430 = vmatpush1.bf16.msra.mxu0 0
    %431 = vmatprep.subr.bf16.mxu0 0
    %432 = vmatpush1.bf16.msra.mxu0 0
    %433 = vmatprep.subr.bf16.mxu0 0
    %434 = vmatpush1.bf16.msra.mxu0 0
    %435 = vmatprep.subr.bf16.mxu0 0
    %436 = vmatpush1.bf16.msra.mxu0 0
    %437 = vmatprep.subr.bf16.mxu0 0
    %438 = vmatpush1.bf16.msra.mxu0 0
    %439 = vmatprep.subr.bf16.mxu0 0
    %440 = vmatpush1.bf16.msra.mxu0 0
    %441 = vmatprep.subr.bf16.mxu0 0
    %442 = vmatpush1.bf16.msra.mxu0 0
    %443 = vmatprep.mubr.bf16.mxu0 0
    %444 = vmatmul.mubr.bf16.gmra.mrb[0].mxu0 %v409
    %v445 = vpop.f32.mrb[0].mxu0
    %v446 = vadd.f32 %v369, %v445
    %v447 = vpop.f32.mrb[0].mxu0
    %v448 = vpop.f32.mrb[0].mxu0
    %v449 = vpop.f32.mrb[0].mxu0
    %450 = vdwg.mxu0
    %v451 = vmul.f32 %v446, 0.5
    %v452 = vmul.f32 %v446, 0.70710677
    %v453 = verf.f32.pop %v452
    %v454 = vadd.f32 %v453, 1.0
    %v455 = vmul.f32 %v451, %v454
    %v456 = vpack.c.bf16 %v455, %v455
    %v457 = vld [vmem:[#allocation10] sm:$0xf]
    %v458 = vld [vmem:[#allocation10 + $0x4] sm:$0xf]
    %v459 = vld [vmem:[#allocation10 + $0x8] sm:$0xf]
    %v460 = vld [vmem:[#allocation10 + $0xc] sm:$0xf]
    %v461 = vld [vmem:[#allocation10 + $0x10] sm:$0xf]
    %v462 = vld [vmem:[#allocation10 + $0x14] sm:$0xf]
    %v463 = vld [vmem:[#allocation11] sm:$0x1]
    %v465 = vlaneseq
    %v466 = vshrl.u32 %v465, 7
    %v467 = vsub.s32 0, %v466
    %v468 = vrot.slane %v463, %v467
    %v476 = vunpack.c.l.b16 %v457
    %v477 = vunpack.c.l.b16 %v458
    %v478 = vunpack.c.l.b16 %v459
    %v479 = vunpack.c.l.b16 %v460
    %v480 = vunpack.c.l.b16 %v461
    %v481 = vunpack.c.l.b16 %v462
    %v482 = vpack.c.b16 %v477, %v476
    %v483 = vpack.c.b16 %v479, %v478
    %v484 = vpack.c.b16 %v481, %v480
    %vm488 = vcmask 392192
    %v490 = vsel %vm488, %v456, 0
    %492 = vmatprep.subr.bf16.mxu0 0
    %493 = vmatpush1.bf16.msra.mxu0 %v482
    %494 = vmatprep.subr.bf16.mxu0 0
    %495 = vmatpush1.bf16.msra.mxu0 %v483
    %496 = vmatprep.subr.bf16.mxu0 0
    %497 = vmatpush1.bf16.msra.mxu0 %v484
    %498 = vmatprep.subr.bf16.mxu0 0
    %499 = vmatpush1.bf16.msra.mxu0 0
    %500 = vmatprep.subr.bf16.mxu0 0
    %501 = vmatpush1.bf16.msra.mxu0 0
    %502 = vmatprep.subr.bf16.mxu0 0
    %503 = vmatpush1.bf16.msra.mxu0 0
    %504 = vmatprep.subr.bf16.mxu0 0
    %505 = vmatpush1.bf16.msra.mxu0 0
    %506 = vmatprep.subr.bf16.mxu0 0
    %507 = vmatpush1.bf16.msra.mxu0 0
    %508 = vmatprep.subr.bf16.mxu0 0
    %509 = vmatpush1.bf16.msra.mxu0 0
    %510 = vmatprep.subr.bf16.mxu0 0
    %511 = vmatpush1.bf16.msra.mxu0 0
    %512 = vmatprep.subr.bf16.mxu0 0
    %513 = vmatpush1.bf16.msra.mxu0 0
    %514 = vmatprep.subr.bf16.mxu0 0
    %515 = vmatpush1.bf16.msra.mxu0 0
    %516 = vmatprep.subr.bf16.mxu0 0
    %517 = vmatpush1.bf16.msra.mxu0 0
    %518 = vmatprep.subr.bf16.mxu0 0
    %519 = vmatpush1.bf16.msra.mxu0 0
    %520 = vmatprep.subr.bf16.mxu0 0
    %521 = vmatpush1.bf16.msra.mxu0 0
    %522 = vmatprep.subr.bf16.mxu0 0
    %523 = vmatpush1.bf16.msra.mxu0 0
    %524 = vmatprep.mubr.bf16.mxu0 0
    %525 = vmatmul.mubr.bf16.gmra.mrb[0].mxu0 %v490
    %v526 = vpop.f32.mrb[0].mxu0
    %v527 = vadd.f32 %v468, %v526
    %v528 = vpop.f32.mrb[0].mxu0
    %v529 = vpop.f32.mrb[0].mxu0
    %v530 = vpop.f32.mrb[0].mxu0
    %531 = vdwg.mxu0
    %v532 = vmul.f32 %v527, 0.5
    %v533 = vmul.f32 %v527, 0.70710677
    %v534 = verf.f32.pop %v533
    %v535 = vadd.f32 %v534, 1.0
    %v536 = vmul.f32 %v532, %v535
    %v537 = vpack.c.bf16 %v536, %v536
    %v538 = vld [vmem:[#allocation13] sm:$0xff]
    %v539 = vld [vmem:[#allocation13 + $0x8] sm:$0xff]
    %v540 = vld [vmem:[#allocation13 + $0x10] sm:$0xff]
    %v541 = vld [vmem:[#allocation13 + $0x18] sm:$0xff]
    %v542 = vld [vmem:[#allocation13 + $0x20] sm:$0xff]
    %v543 = vld [vmem:[#allocation13 + $0x28] sm:$0xff]
    %v544 = vld [vmem:[#allocation13 + $0x30] sm:$0xff]
    %v545 = vld [vmem:[#allocation13 + $0x38] sm:$0xff]
    %v546 = vld [vmem:[#allocation13 + $0x40] sm:$0xff]
    %v547 = vld [vmem:[#allocation13 + $0x48] sm:$0xff]
    %v548 = vld [vmem:[#allocation13 + $0x50] sm:$0xff]
    %v549 = vld [vmem:[#allocation13 + $0x58] sm:$0xff]
    %v550 = vld [vmem:[#allocation14] sm:$0x3]
    %v552 = vlaneseq
    %v553 = vshrl.u32 %v552, 7
    %v554 = vsub.s32 0, %v553
    %v555 = vrot.slane %v550, %v554
    %v556 = vlaneseq
    %v557 = vshrl.u32 %v556, 7
    %v558 = vsub.s32 1, %v557
    %v559 = vrot.slane %v550, %v558
    %v574 = vunpack.c.l.b16 %v538
    %v575 = vunpack.c.h.b16 %v538
    %v576 = vunpack.c.l.b16 %v539
    %v577 = vunpack.c.h.b16 %v539
    %v578 = vunpack.c.l.b16 %v540
    %v579 = vunpack.c.h.b16 %v540
    %v580 = vunpack.c.l.b16 %v541
    %v581 = vunpack.c.h.b16 %v541
    %v582 = vunpack.c.l.b16 %v542
    %v583 = vunpack.c.h.b16 %v542
    %v584 = vunpack.c.l.b16 %v543
    %v585 = vunpack.c.h.b16 %v543
    %v586 = vunpack.c.l.b16 %v544
    %v587 = vunpack.c.h.b16 %v544
    %v588 = vunpack.c.l.b16 %v545
    %v589 = vunpack.c.h.b16 %v545
    %v590 = vunpack.c.l.b16 %v546
    %v591 = vunpack.c.h.b16 %v546
    %v592 = vunpack.c.l.b16 %v547
    %v593 = vunpack.c.h.b16 %v547
    %v594 = vunpack.c.l.b16 %v548
    %v595 = vunpack.c.h.b16 %v548
    %v596 = vunpack.c.l.b16 %v549
    %v597 = vunpack.c.h.b16 %v549
    %v598 = vpack.c.b16 %v576, %v574
    %v599 = vpack.c.b16 %v577, %v575
    %v600 = vpack.c.b16 %v580, %v578
    %v601 = vpack.c.b16 %v581, %v579
    %v602 = vpack.c.b16 %v584, %v582
    %v603 = vpack.c.b16 %v585, %v583
    %v604 = vpack.c.b16 %v588, %v586
    %v605 = vpack.c.b16 %v589, %v587
    %v606 = vpack.c.b16 %v592, %v590
    %v607 = vpack.c.b16 %v593, %v591
    %v608 = vpack.c.b16 %v596, %v594
    %v609 = vpack.c.b16 %v597, %v595
    %v623 = vsel %vm407, %v537, 0
    %625 = vmatprep.subr.bf16.mxu0 %v599
    %626 = vmatpush1.bf16.msra.mxu0 %v598
    %627 = vmatprep.subr.bf16.mxu0 %v601
    %628 = vmatpush1.bf16.msra.mxu0 %v600
    %629 = vmatprep.subr.bf16.mxu0 %v603
    %630 = vmatpush1.bf16.msra.mxu0 %v602
    %631 = vmatprep.subr.bf16.mxu0 %v605
    %632 = vmatpush1.bf16.msra.mxu0 %v604
    %633 = vmatprep.subr.bf16.mxu0 %v607
    %634 = vmatpush1.bf16.msra.mxu0 %v606
    %635 = vmatprep.subr.bf16.mxu0 %v609
    %636 = vmatpush1.bf16.msra.mxu0 %v608
    %637 = vmatprep.subr.bf16.mxu0 0
    %638 = vmatpush1.bf16.msra.mxu0 0
    %639 = vmatprep.subr.bf16.mxu0 0
    %640 = vmatpush1.bf16.msra.mxu0 0
    %641 = vmatprep.subr.bf16.mxu0 0
    %642 = vmatpush1.bf16.msra.mxu0 0
    %643 = vmatprep.subr.bf16.mxu0 0
    %644 = vmatpush1.bf16.msra.mxu0 0
    %645 = vmatprep.subr.bf16.mxu0 0
    %646 = vmatpush1.bf16.msra.mxu0 0
    %647 = vmatprep.subr.bf16.mxu0 0
    %648 = vmatpush1.bf16.msra.mxu0 0
    %649 = vmatprep.subr.bf16.mxu0 0
    %650 = vmatpush1.bf16.msra.mxu0 0
    %651 = vmatprep.subr.bf16.mxu0 0
    %652 = vmatpush1.bf16.msra.mxu0 0
    %653 = vmatprep.subr.bf16.mxu0 0
    %654 = vmatpush1.bf16.msra.mxu0 0
    %655 = vmatprep.subr.bf16.mxu0 0
    %656 = vmatpush1.bf16.msra.mxu0 0
    %657 = vmatprep.mubr.bf16.mxu0 0
    %658 = vmatmul.mubr.bf16.gmra.mrb[0].mxu0 %v623
    %v659 = vpop.f32.mrb[0].mxu0
    %v660 = vadd.f32 %v555, %v659
    %v661 = vpop.f32.mrb[0].mxu0
    %v662 = vadd.f32 %v559, %v661
    %v663 = vpop.f32.mrb[0].mxu0
    %v664 = vpop.f32.mrb[0].mxu0
    %665 = vdwg.mxu0
    %v666 = vmul.f32 %v660, 0.5
    %v667 = vmul.f32 %v662, 0.5
    %v668 = vmul.f32 %v660, 0.70710677
    %v669 = vmul.f32 %v662, 0.70710677
    %v670 = verf.f32.pop %v668
    %v671 = verf.f32.pop %v669
    %v672 = vadd.f32 %v670, 1.0
    %v673 = vadd.f32 %v671, 1.0
    %v674 = vmul.f32 %v666, %v672
    %v675 = vmul.f32 %v667, %v673
    %v676 = vpack.c.bf16 %v674, %v674
    %v677 = vpack.c.bf16 %v675, %v675
    %v678 = vld [vmem:[#allocation16] sm:$0xff]
    %v679 = vld [vmem:[#allocation16 + $0x8] sm:$0xf]
    %v680 = vld [vmem:[#allocation16 + $0xc] sm:$0xff]
    %v681 = vld [vmem:[#allocation16 + $0x14] sm:$0xf]
    %v682 = vld [vmem:[#allocation16 + $0x18] sm:$0xff]
    %v683 = vld [vmem:[#allocation16 + $0x20] sm:$0xf]
    %v684 = vld [vmem:[#allocation16 + $0x24] sm:$0xff]
    %v685 = vld [vmem:[#allocation16 + $0x2c] sm:$0xf]
    %v686 = vld [vmem:[#allocation16 + $0x30] sm:$0xff]
    %v687 = vld [vmem:[#allocation16 + $0x38] sm:$0xf]
    %v688 = vld [vmem:[#allocation16 + $0x3c] sm:$0xff]
    %v689 = vld [vmem:[#allocation16 + $0x44] sm:$0xf]
    %v690 = vld [vmem:[#allocation16 + $0x48] sm:$0xff]
    %v691 = vld [vmem:[#allocation16 + $0x50] sm:$0xf]
    %v692 = vld [vmem:[#allocation16 + $0x54] sm:$0xff]
    %v693 = vld [vmem:[#allocation16 + $0x5c] sm:$0xf]
    %v694 = vld [vmem:[#allocation16 + $0x60] sm:$0xff]
    %v695 = vld [vmem:[#allocation16 + $0x68] sm:$0xf]
    %v696 = vld [vmem:[#allocation16 + $0x6c] sm:$0xff]
    %v697 = vld [vmem:[#allocation16 + $0x74] sm:$0xf]
    %v698 = vld [vmem:[#allocation16 + $0x78] sm:$0xff]
    %v699 = vld [vmem:[#allocation16 + $0x80] sm:$0xf]
    %v700 = vld [vmem:[#allocation16 + $0x84] sm:$0xff]
    %v701 = vld [vmem:[#allocation16 + $0x8c] sm:$0xf]
    %v702 = vld [vmem:[#allocation16 + $0x90] sm:$0xff]
    %v703 = vld [vmem:[#allocation16 + $0x98] sm:$0xf]
    %v704 = vld [vmem:[#allocation16 + $0x9c] sm:$0xff]
    %v705 = vld [vmem:[#allocation16 + $0xa4] sm:$0xf]
    %v706 = vld [vmem:[#allocation16 + $0xa8] sm:$0xff]
    %v707 = vld [vmem:[#allocation16 + $0xb0] sm:$0xf]
    %v708 = vld [vmem:[#allocation16 + $0xb4] sm:$0xff]
    %v709 = vld [vmem:[#allocation16 + $0xbc] sm:$0xf]
    %v710 = vld [vmem:[#allocation16 + $0xc0] sm:$0xff]
    %v711 = vld [vmem:[#allocation16 + $0xc8] sm:$0xf]
    %v712 = vld [vmem:[#allocation16 + $0xcc] sm:$0xff]
    %v713 = vld [vmem:[#allocation16 + $0xd4] sm:$0xf]
    %v714 = vld [vmem:[#allocation16 + $0xd8] sm:$0xff]
    %v715 = vld [vmem:[#allocation16 + $0xe0] sm:$0xf]
    %v716 = vld [vmem:[#allocation16 + $0xe4] sm:$0xff]
    %v717 = vld [vmem:[#allocation16 + $0xec] sm:$0xf]
    %v718 = vld [vmem:[#allocation16 + $0xf0] sm:$0xff]
    %v719 = vld [vmem:[#allocation16 + $0xf8] sm:$0xf]
    %v720 = vld [vmem:[#allocation16 + $0xfc] sm:$0xff]
    %v721 = vld [vmem:[#allocation16 + $0x104] sm:$0xf]
    %v722 = vld [vmem:[#allocation16 + $0x108] sm:$0xff]
    %v723 = vld [vmem:[#allocation16 + $0x110] sm:$0xf]
    %v724 = vld [vmem:[#allocation16 + $0x114] sm:$0xff]
    %v725 = vld [vmem:[#allocation16 + $0x11c] sm:$0xf]
    %v726 = vld [vmem:[#allocation17] sm:$0x7]
    %v728 = vlaneseq
    %v729 = vshrl.u32 %v728, 7
    %v730 = vsub.s32 0, %v729
    %v731 = vrot.slane %v726, %v730
    %v732 = vlaneseq
    %v733 = vshrl.u32 %v732, 7
    %v734 = vsub.s32 1, %v733
    %v735 = vrot.slane %v726, %v734
    %v736 = vlaneseq
    %v737 = vshrl.u32 %v736, 7
    %v738 = vsub.s32 2, %v737
    %v739 = vrot.slane %v726, %v738
    %v791 = vunpack.c.l.b16 %v678
    %v792 = vunpack.c.h.b16 %v678
    %v793 = vunpack.c.l.b16 %v679
    %v794 = vunpack.c.l.b16 %v680
    %v795 = vunpack.c.h.b16 %v680
    %v796 = vunpack.c.l.b16 %v681
    %v797 = vunpack.c.l.b16 %v682
    %v798 = vunpack.c.h.b16 %v682
    %v799 = vunpack.c.l.b16 %v683
    %v800 = vunpack.c.l.b16 %v684
    %v801 = vunpack.c.h.b16 %v684
    %v802 = vunpack.c.l.b16 %v685
    %v803 = vunpack.c.l.b16 %v686
    %v804 = vunpack.c.h.b16 %v686
    %v805 = vunpack.c.l.b16 %v687
    %v806 = vunpack.c.l.b16 %v688
    %v807 = vunpack.c.h.b16 %v688
    %v808 = vunpack.c.l.b16 %v689
    %v809 = vunpack.c.l.b16 %v690
    %v810 = vunpack.c.h.b16 %v690
    %v811 = vunpack.c.l.b16 %v691
    %v812 = vunpack.c.l.b16 %v692
    %v813 = vunpack.c.h.b16 %v692
    %v814 = vunpack.c.l.b16 %v693
    %v815 = vunpack.c.l.b16 %v694
    %v816 = vunpack.c.h.b16 %v694
    %v817 = vunpack.c.l.b16 %v695
    %v818 = vunpack.c.l.b16 %v696
    %v819 = vunpack.c.h.b16 %v696
    %v820 = vunpack.c.l.b16 %v697
    %v821 = vunpack.c.l.b16 %v698
    %v822 = vunpack.c.h.b16 %v698
    %v823 = vunpack.c.l.b16 %v699
    %v824 = vunpack.c.l.b16 %v700
    %v825 = vunpack.c.h.b16 %v700
    %v826 = vunpack.c.l.b16 %v701
    %v827 = vunpack.c.l.b16 %v702
    %v828 = vunpack.c.h.b16 %v702
    %v829 = vunpack.c.l.b16 %v703
    %v830 = vunpack.c.l.b16 %v704
    %v831 = vunpack.c.h.b16 %v704
    %v832 = vunpack.c.l.b16 %v705
    %v833 = vunpack.c.l.b16 %v706
    %v834 = vunpack.c.h.b16 %v706
    %v835 = vunpack.c.l.b16 %v707
    %v836 = vunpack.c.l.b16 %v708
    %v837 = vunpack.c.h.b16 %v708
    %v838 = vunpack.c.l.b16 %v709
    %v839 = vunpack.c.l.b16 %v710
    %v840 = vunpack.c.h.b16 %v710
    %v841 = vunpack.c.l.b16 %v711
    %v842 = vunpack.c.l.b16 %v712
    %v843 = vunpack.c.h.b16 %v712
    %v844 = vunpack.c.l.b16 %v713
    %v845 = vunpack.c.l.b16 %v714
    %v846 = vunpack.c.h.b16 %v714
    %v847 = vunpack.c.l.b16 %v715
    %v848 = vunpack.c.l.b16 %v716
    %v849 = vunpack.c.h.b16 %v716
    %v850 = vunpack.c.l.b16 %v717
    %v851 = vunpack.c.l.b16 %v718
    %v852 = vunpack.c.h.b16 %v718
    %v853 = vunpack.c.l.b16 %v719
    %v854 = vunpack.c.l.b16 %v720
    %v855 = vunpack.c.h.b16 %v720
    %v856 = vunpack.c.l.b16 %v721
    %v857 = vunpack.c.l.b16 %v722
    %v858 = vunpack.c.h.b16 %v722
    %v859 = vunpack.c.l.b16 %v723
    %v860 = vunpack.c.l.b16 %v724
    %v861 = vunpack.c.h.b16 %v724
    %v862 = vunpack.c.l.b16 %v725
    %v863 = vpack.c.b16 %v794, %v791
    %v864 = vpack.c.b16 %v795, %v792
    %v865 = vpack.c.b16 %v796, %v793
    %v866 = vpack.c.b16 %v800, %v797
    %v867 = vpack.c.b16 %v801, %v798
    %v868 = vpack.c.b16 %v802, %v799
    %v869 = vpack.c.b16 %v806, %v803
    %v870 = vpack.c.b16 %v807, %v804
    %v871 = vpack.c.b16 %v808, %v805
    %v872 = vpack.c.b16 %v812, %v809
    %v873 = vpack.c.b16 %v813, %v810
    %v874 = vpack.c.b16 %v814, %v811
    %v875 = vpack.c.b16 %v818, %v815
    %v876 = vpack.c.b16 %v819, %v816
    %v877 = vpack.c.b16 %v820, %v817
    %v878 = vpack.c.b16 %v824, %v821
    %v879 = vpack.c.b16 %v825, %v822
    %v880 = vpack.c.b16 %v826, %v823
    %v881 = vpack.c.b16 %v830, %v827
    %v882 = vpack.c.b16 %v831, %v828
    %v883 = vpack.c.b16 %v832, %v829
    %v884 = vpack.c.b16 %v836, %v833
    %v885 = vpack.c.b16 %v837, %v834
    %v886 = vpack.c.b16 %v838, %v835
    %v887 = vpack.c.b16 %v842, %v839
    %v888 = vpack.c.b16 %v843, %v840
    %v889 = vpack.c.b16 %v844, %v841
    %v890 = vpack.c.b16 %v848, %v845
    %v891 = vpack.c.b16 %v849, %v846
    %v892 = vpack.c.b16 %v850, %v847
    %v893 = vpack.c.b16 %v854, %v851
    %v894 = vpack.c.b16 %v855, %v852
    %v895 = vpack.c.b16 %v856, %v853
    %v896 = vpack.c.b16 %v860, %v857
    %v897 = vpack.c.b16 %v861, %v858
    %v898 = vpack.c.b16 %v862, %v859
    %v936 = vsel %vm302, %v677, 0
    %938 = vmatprep.subr.bf16.mxu0 %v864
    %939 = vmatpush1.bf16.msra.mxu0 %v863
    %940 = vmatprep.subr.bf16.mxu0 %v867
    %941 = vmatpush1.bf16.msra.mxu0 %v866
    %942 = vmatprep.subr.bf16.mxu0 %v870
    %943 = vmatpush1.bf16.msra.mxu0 %v869
    %944 = vmatprep.subr.bf16.mxu0 %v873
    %945 = vmatpush1.bf16.msra.mxu0 %v872
    %946 = vmatprep.subr.bf16.mxu0 %v876
    %947 = vmatpush1.bf16.msra.mxu0 %v875
    %948 = vmatprep.subr.bf16.mxu0 %v879
    %949 = vmatpush1.bf16.msra.mxu0 %v878
    %950 = vmatprep.subr.bf16.mxu0 %v882
    %951 = vmatpush1.bf16.msra.mxu0 %v881
    %952 = vmatprep.subr.bf16.mxu0 %v885
    %953 = vmatpush1.bf16.msra.mxu0 %v884
    %954 = vmatprep.subr.bf16.mxu0 %v888
    %955 = vmatpush1.bf16.msra.mxu0 %v887
    %956 = vmatprep.subr.bf16.mxu0 %v891
    %957 = vmatpush1.bf16.msra.mxu0 %v890
    %958 = vmatprep.subr.bf16.mxu0 %v894
    %959 = vmatpush1.bf16.msra.mxu0 %v893
    %960 = vmatprep.subr.bf16.mxu0 %v897
    %961 = vmatpush1.bf16.msra.mxu0 %v896
    %962 = vmatprep.subr.bf16.mxu0 0
    %963 = vmatpush1.bf16.msra.mxu0 0
    %964 = vmatprep.subr.bf16.mxu0 0
    %965 = vmatpush1.bf16.msra.mxu0 0
    %966 = vmatprep.subr.bf16.mxu0 0
    %967 = vmatpush1.bf16.msra.mxu0 0
    %968 = vmatprep.subr.bf16.mxu0 0
    %969 = vmatpush1.bf16.msra.mxu0 0
    %970 = vmatprep.mubr.bf16.mxu0 %v936
    %971 = vmatmul.mubr.bf16.gmra.mrb[0].mxu0 %v676
    %v972 = vpop.f32.mrb[0].mxu0
    %v973 = vadd.f32 %v731, %v972
    %v974 = vpop.f32.mrb[0].mxu0
    %v975 = vadd.f32 %v735, %v974
    %v976 = vpop.f32.mrb[0].mxu0
    %v977 = vpop.f32.mrb[0].mxu0
    %978 = vdwg.mxu0
    %979 = vmatprep.subr.bf16.mxu0 0
    %980 = vmatpush1.bf16.msra.mxu0 %v865
    %981 = vmatprep.subr.bf16.mxu0 0
    %982 = vmatpush1.bf16.msra.mxu0 %v868
    %983 = vmatprep.subr.bf16.mxu0 0
    %984 = vmatpush1.bf16.msra.mxu0 %v871
    %985 = vmatprep.subr.bf16.mxu0 0
    %986 = vmatpush1.bf16.msra.mxu0 %v874
    %987 = vmatprep.subr.bf16.mxu0 0
    %988 = vmatpush1.bf16.msra.mxu0 %v877
    %989 = vmatprep.subr.bf16.mxu0 0
    %990 = vmatpush1.bf16.msra.mxu0 %v880
    %991 = vmatprep.subr.bf16.mxu0 0
    %992 = vmatpush1.bf16.msra.mxu0 %v883
    %993 = vmatprep.subr.bf16.mxu0 0
    %994 = vmatpush1.bf16.msra.mxu0 %v886
    %995 = vmatprep.subr.bf16.mxu0 0
    %996 = vmatpush1.bf16.msra.mxu0 %v889
    %997 = vmatprep.subr.bf16.mxu0 0
    %998 = vmatpush1.bf16.msra.mxu0 %v892
    %999 = vmatprep.subr.bf16.mxu0 0
    %1000 = vmatpush1.bf16.msra.mxu0 %v895
    %1001 = vmatprep.subr.bf16.mxu0 0
    %1002 = vmatpush1.bf16.msra.mxu0 %v898
    %1003 = vmatprep.subr.bf16.mxu0 0
    %1004 = vmatpush1.bf16.msra.mxu0 0
    %1005 = vmatprep.subr.bf16.mxu0 0
    %1006 = vmatpush1.bf16.msra.mxu0 0
    %1007 = vmatprep.subr.bf16.mxu0 0
    %1008 = vmatpush1.bf16.msra.mxu0 0
    %1009 = vmatprep.subr.bf16.mxu0 0
    %1010 = vmatpush1.bf16.msra.mxu0 0
    %1011 = vmatprep.mubr.bf16.mxu0 %v936
    %1012 = vmatmul.mubr.bf16.gmra.mrb[0].mxu0 %v676
    %v1013 = vpop.f32.mrb[0].mxu0
    %v1014 = vadd.f32 %v739, %v1013
    %v1015 = vpop.f32.mrb[0].mxu0
    %v1016 = vpop.f32.mrb[0].mxu0
    %v1017 = vpop.f32.mrb[0].mxu0
    %1018 = vdwg.mxu0
    %v1019 = vmul.f32 %v973, 0.5
    %v1020 = vmul.f32 %v975, 0.5
    %v1021 = vmul.f32 %v1014, 0.5
    %v1022 = vmul.f32 %v973, 0.70710677
    %v1023 = vmul.f32 %v975, 0.70710677
    %v1024 = vmul.f32 %v1014, 0.70710677
    %v1025 = verf.f32.pop %v1022
    %v1026 = verf.f32.pop %v1023
    %v1027 = verf.f32.pop %v1024
    %v1028 = vadd.f32 %v1025, 1.0
    %v1029 = vadd.f32 %v1026, 1.0
    %v1030 = vadd.f32 %v1027, 1.0
    %v1031 = vmul.f32 %v1019, %v1028
    %v1032 = vmul.f32 %v1020, %v1029
    %v1033 = vmul.f32 %v1021, %v1030
    %v1034 = vpack.c.bf16 %v1031, %v1031
    %v1035 = vpack.c.bf16 %v1032, %v1032
    %v1036 = vpack.c.bf16 %v1033, %v1033
    %v1037 = vld [vmem:[#allocation19] sm:$0xff]
    %v1038 = vld [vmem:[#allocation19 + $0x8] sm:$0xff]
    %v1039 = vld [vmem:[#allocation19 + $0x10] sm:$0xff]
    %v1040 = vld [vmem:[#allocation19 + $0x18] sm:$0xff]
    %v1041 = vld [vmem:[#allocation19 + $0x20] sm:$0xff]
    %v1042 = vld [vmem:[#allocation19 + $0x28] sm:$0xff]
    %v1043 = vld [vmem:[#allocation19 + $0x30] sm:$0xff]
    %v1044 = vld [vmem:[#allocation19 + $0x38] sm:$0xff]
    %v1045 = vld [vmem:[#allocation19 + $0x40] sm:$0xff]
    %v1046 = vld [vmem:[#allocation19 + $0x48] sm:$0xff]
    %v1047 = vld [vmem:[#allocation19 + $0x50] sm:$0xf]
    %v1048 = vld [vmem:[#allocation19 + $0x54] sm:$0xff]
    %v1049 = vld [vmem:[#allocation19 + $0x5c] sm:$0xff]
    %v1050 = vld [vmem:[#allocation19 + $0x64] sm:$0xff]
    %v1051 = vld [vmem:[#allocation19 + $0x6c] sm:$0xff]
    %v1052 = vld [vmem:[#allocation19 + $0x74] sm:$0xff]
    %v1053 = vld [vmem:[#allocation19 + $0x7c] sm:$0xff]
    %v1054 = vld [vmem:[#allocation19 + $0x84] sm:$0xff]
    %v1055 = vld [vmem:[#allocation19 + $0x8c] sm:$0xff]
    %v1056 = vld [vmem:[#allocation19 + $0x94] sm:$0xff]
    %v1057 = vld [vmem:[#allocation19 + $0x9c] sm:$0xff]
    %v1058 = vld [vmem:[#allocation19 + $0xa4] sm:$0xf]
    %v1059 = vld [vmem:[#allocation19 + $0xa8] sm:$0xff]
    %v1060 = vld [vmem:[#allocation19 + $0xb0] sm:$0xff]
    %v1061 = vld [vmem:[#allocation19 + $0xb8] sm:$0xff]
    %v1062 = vld [vmem:[#allocation19 + $0xc0] sm:$0xff]
    %v1063 = vld [vmem:[#allocation19 + $0xc8] sm:$0xff]
    %v1064 = vld [vmem:[#allocation19 + $0xd0] sm:$0xff]
    %v1065 = vld [vmem:[#allocation19 + $0xd8] sm:$0xff]
    %v1066 = vld [vmem:[#allocation19 + $0xe0] sm:$0xff]
    %v1067 = vld [vmem:[#allocation19 + $0xe8] sm:$0xff]
    %v1068 = vld [vmem:[#allocation19 + $0xf0] sm:$0xff]
    %v1069 = vld [vmem:[#allocation19 + $0xf8] sm:$0xf]
    %v1070 = vld [vmem:[#allocation19 + $0xfc] sm:$0xff]
    %v1071 = vld [vmem:[#allocation19 + $0x104] sm:$0xff]
    %v1072 = vld [vmem:[#allocation19 + $0x10c] sm:$0xff]
    %v1073 = vld [vmem:[#allocation19 + $0x114] sm:$0xff]
    %v1074 = vld [vmem:[#allocation19 + $0x11c] sm:$0xff]
    %v1075 = vld [vmem:[#allocation19 + $0x124] sm:$0xff]
    %v1076 = vld [vmem:[#allocation19 + $0x12c] sm:$0xff]
    %v1077 = vld [vmem:[#allocation19 + $0x134] sm:$0xff]
    %v1078 = vld [vmem:[#allocation19 + $0x13c] sm:$0xff]
    %v1079 = vld [vmem:[#allocation19 + $0x144] sm:$0xff]
    %v1080 = vld [vmem:[#allocation19 + $0x14c] sm:$0xf]
    %v1081 = vld [vmem:[#allocation19 + $0x150] sm:$0xff]
    %v1082 = vld [vmem:[#allocation19 + $0x158] sm:$0xff]
    %v1083 = vld [vmem:[#allocation19 + $0x160] sm:$0xff]
    %v1084 = vld [vmem:[#allocation19 + $0x168] sm:$0xff]
    %v1085 = vld [vmem:[#allocation19 + $0x170] sm:$0xff]
    %v1086 = vld [vmem:[#allocation19 + $0x178] sm:$0xff]
    %v1087 = vld [vmem:[#allocation19 + $0x180] sm:$0xff]
    %v1088 = vld [vmem:[#allocation19 + $0x188] sm:$0xff]
    %v1089 = vld [vmem:[#allocation19 + $0x190] sm:$0xff]
    %v1090 = vld [vmem:[#allocation19 + $0x198] sm:$0xff]
    %v1091 = vld [vmem:[#allocation19 + $0x1a0] sm:$0xf]
    %v1092 = vld [vmem:[#allocation19 + $0x1a4] sm:$0xff]
    %v1093 = vld [vmem:[#allocation19 + $0x1ac] sm:$0xff]
    %v1094 = vld [vmem:[#allocation19 + $0x1b4] sm:$0xff]
    %v1095 = vld [vmem:[#allocation19 + $0x1bc] sm:$0xff]
    %v1096 = vld [vmem:[#allocation19 + $0x1c4] sm:$0xff]
    %v1097 = vld [vmem:[#allocation19 + $0x1cc] sm:$0xff]
    %v1098 = vld [vmem:[#allocation19 + $0x1d4] sm:$0xff]
    %v1099 = vld [vmem:[#allocation19 + $0x1dc] sm:$0xff]
    %v1100 = vld [vmem:[#allocation19 + $0x1e4] sm:$0xff]
    %v1101 = vld [vmem:[#allocation19 + $0x1ec] sm:$0xff]
    %v1102 = vld [vmem:[#allocation19 + $0x1f4] sm:$0xf]
    %v1103 = vld [vmem:[#allocation19 + $0x1f8] sm:$0xff]
    %v1104 = vld [vmem:[#allocation19 + $0x200] sm:$0xff]
    %v1105 = vld [vmem:[#allocation19 + $0x208] sm:$0xff]
    %v1106 = vld [vmem:[#allocation19 + $0x210] sm:$0xff]
    %v1107 = vld [vmem:[#allocation19 + $0x218] sm:$0xff]
    %v1108 = vld [vmem:[#allocation19 + $0x220] sm:$0xff]
    %v1109 = vld [vmem:[#allocation19 + $0x228] sm:$0xff]
    %v1110 = vld [vmem:[#allocation19 + $0x230] sm:$0xff]
    %v1111 = vld [vmem:[#allocation19 + $0x238] sm:$0xff]
    %v1112 = vld [vmem:[#allocation19 + $0x240] sm:$0xff]
    %v1113 = vld [vmem:[#allocation19 + $0x248] sm:$0xf]
    %v1114 = vld [vmem:[#allocation19 + $0x24c] sm:$0xff]
    %v1115 = vld [vmem:[#allocation19 + $0x254] sm:$0xff]
    %v1116 = vld [vmem:[#allocation19 + $0x25c] sm:$0xff]
    %v1117 = vld [vmem:[#allocation19 + $0x264] sm:$0xff]
    %v1118 = vld [vmem:[#allocation19 + $0x26c] sm:$0xff]
    %v1119 = vld [vmem:[#allocation19 + $0x274] sm:$0xff]
    %v1120 = vld [vmem:[#allocation19 + $0x27c] sm:$0xff]
    %v1121 = vld [vmem:[#allocation19 + $0x284] sm:$0xff]
    %v1122 = vld [vmem:[#allocation19 + $0x28c] sm:$0xff]
    %v1123 = vld [vmem:[#allocation19 + $0x294] sm:$0xff]
    %v1124 = vld [vmem:[#allocation19 + $0x29c] sm:$0xf]
    %v1125 = vld [vmem:[#allocation19 + $0x2a0] sm:$0xff]
    %v1126 = vld [vmem:[#allocation19 + $0x2a8] sm:$0xff]
    %v1127 = vld [vmem:[#allocation19 + $0x2b0] sm:$0xff]
    %v1128 = vld [vmem:[#allocation19 + $0x2b8] sm:$0xff]
    %v1129 = vld [vmem:[#allocation19 + $0x2c0] sm:$0xff]
    %v1130 = vld [vmem:[#allocation19 + $0x2c8] sm:$0xff]
    %v1131 = vld [vmem:[#allocation19 + $0x2d0] sm:$0xff]
    %v1132 = vld [vmem:[#allocation19 + $0x2d8] sm:$0xff]
    %v1133 = vld [vmem:[#allocation19 + $0x2e0] sm:$0xff]
    %v1134 = vld [vmem:[#allocation19 + $0x2e8] sm:$0xff]
    %v1135 = vld [vmem:[#allocation19 + $0x2f0] sm:$0xf]
    %v1136 = vld [vmem:[#allocation19 + $0x2f4] sm:$0xff]
    %v1137 = vld [vmem:[#allocation19 + $0x2fc] sm:$0xff]
    %v1138 = vld [vmem:[#allocation19 + $0x304] sm:$0xff]
    %v1139 = vld [vmem:[#allocation19 + $0x30c] sm:$0xff]
    %v1140 = vld [vmem:[#allocation19 + $0x314] sm:$0xff]
    %v1141 = vld [vmem:[#allocation19 + $0x31c] sm:$0xff]
    %v1142 = vld [vmem:[#allocation19 + $0x324] sm:$0xff]
    %v1143 = vld [vmem:[#allocation19 + $0x32c] sm:$0xff]
    %v1144 = vld [vmem:[#allocation19 + $0x334] sm:$0xff]
    %v1145 = vld [vmem:[#allocation19 + $0x33c] sm:$0xff]
    %v1146 = vld [vmem:[#allocation19 + $0x344] sm:$0xf]
    %v1147 = vld [vmem:[#allocation19 + $0x348] sm:$0xff]
    %v1148 = vld [vmem:[#allocation19 + $0x350] sm:$0xff]
    %v1149 = vld [vmem:[#allocation19 + $0x358] sm:$0xff]
    %v1150 = vld [vmem:[#allocation19 + $0x360] sm:$0xff]
    %v1151 = vld [vmem:[#allocation19 + $0x368] sm:$0xff]
    %v1152 = vld [vmem:[#allocation19 + $0x370] sm:$0xff]
    %v1153 = vld [vmem:[#allocation19 + $0x378] sm:$0xff]
    %v1154 = vld [vmem:[#allocation19 + $0x380] sm:$0xff]
    %v1155 = vld [vmem:[#allocation19 + $0x388] sm:$0xff]
    %v1156 = vld [vmem:[#allocation19 + $0x390] sm:$0xff]
    %v1157 = vld [vmem:[#allocation19 + $0x398] sm:$0xf]
    %v1158 = vld [vmem:[#allocation19 + $0x39c] sm:$0xff]
    %v1159 = vld [vmem:[#allocation19 + $0x3a4] sm:$0xff]
    %v1160 = vld [vmem:[#allocation19 + $0x3ac] sm:$0xff]
    %v1161 = vld [vmem:[#allocation19 + $0x3b4] sm:$0xff]
    %v1162 = vld [vmem:[#allocation19 + $0x3bc] sm:$0xff]
    %v1163 = vld [vmem:[#allocation19 + $0x3c4] sm:$0xff]
    %v1164 = vld [vmem:[#allocation19 + $0x3cc] sm:$0xff]
    %v1165 = vld [vmem:[#allocation19 + $0x3d4] sm:$0xff]
    %v1166 = vld [vmem:[#allocation19 + $0x3dc] sm:$0xff]
    %v1167 = vld [vmem:[#allocation19 + $0x3e4] sm:$0xff]
    %v1168 = vld [vmem:[#allocation19 + $0x3ec] sm:$0xf]
    %v1169 = vld [vmem:[#allocation19 + $0x3f0] sm:$0xff]
    %v1170 = vld [vmem:[#allocation19 + $0x3f8] sm:$0xff]
    %v1171 = vld [vmem:[#allocation19 + $0x400] sm:$0xff]
    %v1172 = vld [vmem:[#allocation19 + $0x408] sm:$0xff]
    %v1173 = vld [vmem:[#allocation19 + $0x410] sm:$0xff]
    %v1174 = vld [vmem:[#allocation19 + $0x418] sm:$0xff]
    %v1175 = vld [vmem:[#allocation19 + $0x420] sm:$0xff]
    %v1176 = vld [vmem:[#allocation19 + $0x428] sm:$0xff]
    %v1177 = vld [vmem:[#allocation19 + $0x430] sm:$0xff]
    %v1178 = vld [vmem:[#allocation19 + $0x438] sm:$0xff]
    %v1179 = vld [vmem:[#allocation19 + $0x440] sm:$0xf]
    %v1180 = vld [vmem:[#allocation19 + $0x444] sm:$0xff]
    %v1181 = vld [vmem:[#allocation19 + $0x44c] sm:$0xff]
    %v1182 = vld [vmem:[#allocation19 + $0x454] sm:$0xff]
    %v1183 = vld [vmem:[#allocation19 + $0x45c] sm:$0xff]
    %v1184 = vld [vmem:[#allocation19 + $0x464] sm:$0xff]
    %v1185 = vld [vmem:[#allocation19 + $0x46c] sm:$0xff]
    %v1186 = vld [vmem:[#allocation19 + $0x474] sm:$0xff]
    %v1187 = vld [vmem:[#allocation19 + $0x47c] sm:$0xff]
    %v1188 = vld [vmem:[#allocation19 + $0x484] sm:$0xff]
    %v1189 = vld [vmem:[#allocation19 + $0x48c] sm:$0xff]
    %v1190 = vld [vmem:[#allocation19 + $0x494] sm:$0xf]
    %v1191 = vld [vmem:[#allocation19 + $0x498] sm:$0xff]
    %v1192 = vld [vmem:[#allocation19 + $0x4a0] sm:$0xff]
    %v1193 = vld [vmem:[#allocation19 + $0x4a8] sm:$0xff]
    %v1194 = vld [vmem:[#allocation19 + $0x4b0] sm:$0xff]
    %v1195 = vld [vmem:[#allocation19 + $0x4b8] sm:$0xff]
    %v1196 = vld [vmem:[#allocation19 + $0x4c0] sm:$0xff]
    %v1197 = vld [vmem:[#allocation19 + $0x4c8] sm:$0xff]
    %v1198 = vld [vmem:[#allocation19 + $0x4d0] sm:$0xff]
    %v1199 = vld [vmem:[#allocation19 + $0x4d8] sm:$0xff]
    %v1200 = vld [vmem:[#allocation19 + $0x4e0] sm:$0xff]
    %v1201 = vld [vmem:[#allocation19 + $0x4e8] sm:$0xf]
    %v1202 = vld [vmem:[#allocation19 + $0x4ec] sm:$0xff]
    %v1203 = vld [vmem:[#allocation19 + $0x4f4] sm:$0xff]
    %v1204 = vld [vmem:[#allocation19 + $0x4fc] sm:$0xff]
    %v1205 = vld [vmem:[#allocation19 + $0x504] sm:$0xff]
    %v1206 = vld [vmem:[#allocation19 + $0x50c] sm:$0xff]
    %v1207 = vld [vmem:[#allocation19 + $0x514] sm:$0xff]
    %v1208 = vld [vmem:[#allocation19 + $0x51c] sm:$0xff]
    %v1209 = vld [vmem:[#allocation19 + $0x524] sm:$0xff]
    %v1210 = vld [vmem:[#allocation19 + $0x52c] sm:$0xff]
    %v1211 = vld [vmem:[#allocation19 + $0x534] sm:$0xff]
    %v1212 = vld [vmem:[#allocation19 + $0x53c] sm:$0xf]
    %v1213 = vld [vmem:[#allocation19 + $0x540] sm:$0xff]
    %v1214 = vld [vmem:[#allocation19 + $0x548] sm:$0xff]
    %v1215 = vld [vmem:[#allocation19 + $0x550] sm:$0xff]
    %v1216 = vld [vmem:[#allocation19 + $0x558] sm:$0xff]
    %v1217 = vld [vmem:[#allocation19 + $0x560] sm:$0xff]
    %v1218 = vld [vmem:[#allocation19 + $0x568] sm:$0xff]
    %v1219 = vld [vmem:[#allocation19 + $0x570] sm:$0xff]
    %v1220 = vld [vmem:[#allocation19 + $0x578] sm:$0xff]
    %v1221 = vld [vmem:[#allocation19 + $0x580] sm:$0xff]
    %v1222 = vld [vmem:[#allocation19 + $0x588] sm:$0xff]
    %v1223 = vld [vmem:[#allocation19 + $0x590] sm:$0xf]
    %v1224 = vld [vmem:[#allocation19 + $0x594] sm:$0xff]
    %v1225 = vld [vmem:[#allocation19 + $0x59c] sm:$0xff]
    %v1226 = vld [vmem:[#allocation19 + $0x5a4] sm:$0xff]
    %v1227 = vld [vmem:[#allocation19 + $0x5ac] sm:$0xff]
    %v1228 = vld [vmem:[#allocation19 + $0x5b4] sm:$0xff]
    %v1229 = vld [vmem:[#allocation19 + $0x5bc] sm:$0xff]
    %v1230 = vld [vmem:[#allocation19 + $0x5c4] sm:$0xff]
    %v1231 = vld [vmem:[#allocation19 + $0x5cc] sm:$0xff]
    %v1232 = vld [vmem:[#allocation19 + $0x5d4] sm:$0xff]
    %v1233 = vld [vmem:[#allocation19 + $0x5dc] sm:$0xff]
    %v1234 = vld [vmem:[#allocation19 + $0x5e4] sm:$0xf]
    %v1235 = vld [vmem:[#allocation19 + $0x5e8] sm:$0xff]
    %v1236 = vld [vmem:[#allocation19 + $0x5f0] sm:$0xff]
    %v1237 = vld [vmem:[#allocation19 + $0x5f8] sm:$0xff]
    %v1238 = vld [vmem:[#allocation19 + $0x600] sm:$0xff]
    %v1239 = vld [vmem:[#allocation19 + $0x608] sm:$0xff]
    %v1240 = vld [vmem:[#allocation19 + $0x610] sm:$0xff]
    %v1241 = vld [vmem:[#allocation19 + $0x618] sm:$0xff]
    %v1242 = vld [vmem:[#allocation19 + $0x620] sm:$0xff]
    %v1243 = vld [vmem:[#allocation19 + $0x628] sm:$0xff]
    %v1244 = vld [vmem:[#allocation19 + $0x630] sm:$0xff]
    %v1245 = vld [vmem:[#allocation19 + $0x638] sm:$0xf]
    %v1246 = vld [vmem:[#allocation19 + $0x63c] sm:$0xff]
    %v1247 = vld [vmem:[#allocation19 + $0x644] sm:$0xff]
    %v1248 = vld [vmem:[#allocation19 + $0x64c] sm:$0xff]
    %v1249 = vld [vmem:[#allocation19 + $0x654] sm:$0xff]
    %v1250 = vld [vmem:[#allocation19 + $0x65c] sm:$0xff]
    %v1251 = vld [vmem:[#allocation19 + $0x664] sm:$0xff]
    %v1252 = vld [vmem:[#allocation19 + $0x66c] sm:$0xff]
    %v1253 = vld [vmem:[#allocation19 + $0x674] sm:$0xff]
    %v1254 = vld [vmem:[#allocation19 + $0x67c] sm:$0xff]
    %v1255 = vld [vmem:[#allocation19 + $0x684] sm:$0xff]
    %v1256 = vld [vmem:[#allocation19 + $0x68c] sm:$0xf]
    %v1257 = vld [vmem:[#allocation19 + $0x690] sm:$0xff]
    %v1258 = vld [vmem:[#allocation19 + $0x698] sm:$0xff]
    %v1259 = vld [vmem:[#allocation19 + $0x6a0] sm:$0xff]
    %v1260 = vld [vmem:[#allocation19 + $0x6a8] sm:$0xff]
    %v1261 = vld [vmem:[#allocation19 + $0x6b0] sm:$0xff]
    %v1262 = vld [vmem:[#allocation19 + $0x6b8] sm:$0xff]
    %v1263 = vld [vmem:[#allocation19 + $0x6c0] sm:$0xff]
    %v1264 = vld [vmem:[#allocation19 + $0x6c8] sm:$0xff]
    %v1265 = vld [vmem:[#allocation19 + $0x6d0] sm:$0xff]
    %v1266 = vld [vmem:[#allocation19 + $0x6d8] sm:$0xff]
    %v1267 = vld [vmem:[#allocation19 + $0x6e0] sm:$0xf]
    %v1268 = vld [vmem:[#allocation19 + $0x6e4] sm:$0xff]
    %v1269 = vld [vmem:[#allocation19 + $0x6ec] sm:$0xff]
    %v1270 = vld [vmem:[#allocation19 + $0x6f4] sm:$0xff]
    %v1271 = vld [vmem:[#allocation19 + $0x6fc] sm:$0xff]
    %v1272 = vld [vmem:[#allocation19 + $0x704] sm:$0xff]
    %v1273 = vld [vmem:[#allocation19 + $0x70c] sm:$0xff]
    %v1274 = vld [vmem:[#allocation19 + $0x714] sm:$0xff]
    %v1275 = vld [vmem:[#allocation19 + $0x71c] sm:$0xff]
    %v1276 = vld [vmem:[#allocation19 + $0x724] sm:$0xff]
    %v1277 = vld [vmem:[#allocation19 + $0x72c] sm:$0xff]
    %v1278 = vld [vmem:[#allocation19 + $0x734] sm:$0xf]
    %v1279 = vld [vmem:[#allocation19 + $0x738] sm:$0xff]
    %v1280 = vld [vmem:[#allocation19 + $0x740] sm:$0xff]
    %v1281 = vld [vmem:[#allocation19 + $0x748] sm:$0xff]
    %v1282 = vld [vmem:[#allocation19 + $0x750] sm:$0xff]
    %v1283 = vld [vmem:[#allocation19 + $0x758] sm:$0xff]
    %v1284 = vld [vmem:[#allocation19 + $0x760] sm:$0xff]
    %v1285 = vld [vmem:[#allocation19 + $0x768] sm:$0xff]
    %v1286 = vld [vmem:[#allocation19 + $0x770] sm:$0xff]
    %v1287 = vld [vmem:[#allocation19 + $0x778] sm:$0xff]
    %v1288 = vld [vmem:[#allocation19 + $0x780] sm:$0xff]
    %v1289 = vld [vmem:[#allocation19 + $0x788] sm:$0xf]
    %v1290 = vld [vmem:[#allocation19 + $0x78c] sm:$0xff]
    %v1291 = vld [vmem:[#allocation19 + $0x794] sm:$0xff]
    %v1292 = vld [vmem:[#allocation19 + $0x79c] sm:$0xff]
    %v1293 = vld [vmem:[#allocation19 + $0x7a4] sm:$0xff]
    %v1294 = vld [vmem:[#allocation19 + $0x7ac] sm:$0xff]
    %v1295 = vld [vmem:[#allocation19 + $0x7b4] sm:$0xff]
    %v1296 = vld [vmem:[#allocation19 + $0x7bc] sm:$0xff]
    %v1297 = vld [vmem:[#allocation19 + $0x7c4] sm:$0xff]
    %v1298 = vld [vmem:[#allocation19 + $0x7cc] sm:$0xff]
    %v1299 = vld [vmem:[#allocation19 + $0x7d4] sm:$0xff]
    %v1300 = vld [vmem:[#allocation19 + $0x7dc] sm:$0xf]
    %v1301 = vld [vmem:[#allocation19 + $0x7e0] sm:$0xff]
    %v1302 = vld [vmem:[#allocation19 + $0x7e8] sm:$0xff]
    %v1303 = vld [vmem:[#allocation19 + $0x7f0] sm:$0xff]
    %v1304 = vld [vmem:[#allocation19 + $0x7f8] sm:$0xff]
    %v1305 = vld [vmem:[#allocation19 + $0x800] sm:$0xff]
    %v1306 = vld [vmem:[#allocation19 + $0x808] sm:$0xff]
    %v1307 = vld [vmem:[#allocation19 + $0x810] sm:$0xff]
    %v1308 = vld [vmem:[#allocation19 + $0x818] sm:$0xff]
    %v1309 = vld [vmem:[#allocation19 + $0x820] sm:$0xff]
    %v1310 = vld [vmem:[#allocation19 + $0x828] sm:$0xff]
    %v1311 = vld [vmem:[#allocation19 + $0x830] sm:$0xf]
    %v1312 = vld [vmem:[#allocation19 + $0x834] sm:$0xff]
    %v1313 = vld [vmem:[#allocation19 + $0x83c] sm:$0xff]
    %v1314 = vld [vmem:[#allocation19 + $0x844] sm:$0xff]
    %v1315 = vld [vmem:[#allocation19 + $0x84c] sm:$0xff]
    %v1316 = vld [vmem:[#allocation19 + $0x854] sm:$0xff]
    %v1317 = vld [vmem:[#allocation19 + $0x85c] sm:$0xff]
    %v1318 = vld [vmem:[#allocation19 + $0x864] sm:$0xff]
    %v1319 = vld [vmem:[#allocation19 + $0x86c] sm:$0xff]
    %v1320 = vld [vmem:[#allocation19 + $0x874] sm:$0xff]
    %v1321 = vld [vmem:[#allocation19 + $0x87c] sm:$0xff]
    %v1322 = vld [vmem:[#allocation19 + $0x884] sm:$0xf]
    %v1323 = vld [vmem:[#allocation19 + $0x888] sm:$0xff]
    %v1324 = vld [vmem:[#allocation19 + $0x890] sm:$0xff]
    %v1325 = vld [vmem:[#allocation19 + $0x898] sm:$0xff]
    %v1326 = vld [vmem:[#allocation19 + $0x8a0] sm:$0xff]
    %v1327 = vld [vmem:[#allocation19 + $0x8a8] sm:$0xff]
    %v1328 = vld [vmem:[#allocation19 + $0x8b0] sm:$0xff]
    %v1329 = vld [vmem:[#allocation19 + $0x8b8] sm:$0xff]
    %v1330 = vld [vmem:[#allocation19 + $0x8c0] sm:$0xff]
    %v1331 = vld [vmem:[#allocation19 + $0x8c8] sm:$0xff]
    %v1332 = vld [vmem:[#allocation19 + $0x8d0] sm:$0xff]
    %v1333 = vld [vmem:[#allocation19 + $0x8d8] sm:$0xf]
    %v1334 = vld [vmem:[#allocation19 + $0x8dc] sm:$0xff]
    %v1335 = vld [vmem:[#allocation19 + $0x8e4] sm:$0xff]
    %v1336 = vld [vmem:[#allocation19 + $0x8ec] sm:$0xff]
    %v1337 = vld [vmem:[#allocation19 + $0x8f4] sm:$0xff]
    %v1338 = vld [vmem:[#allocation19 + $0x8fc] sm:$0xff]
    %v1339 = vld [vmem:[#allocation19 + $0x904] sm:$0xff]
    %v1340 = vld [vmem:[#allocation19 + $0x90c] sm:$0xff]
    %v1341 = vld [vmem:[#allocation19 + $0x914] sm:$0xff]
    %v1342 = vld [vmem:[#allocation19 + $0x91c] sm:$0xff]
    %v1343 = vld [vmem:[#allocation19 + $0x924] sm:$0xff]
    %v1344 = vld [vmem:[#allocation19 + $0x92c] sm:$0xf]
    %v1345 = vld [vmem:[#allocation19 + $0x930] sm:$0xff]
    %v1346 = vld [vmem:[#allocation19 + $0x938] sm:$0xff]
    %v1347 = vld [vmem:[#allocation19 + $0x940] sm:$0xff]
    %v1348 = vld [vmem:[#allocation19 + $0x948] sm:$0xff]
    %v1349 = vld [vmem:[#allocation19 + $0x950] sm:$0xff]
    %v1350 = vld [vmem:[#allocation19 + $0x958] sm:$0xff]
    %v1351 = vld [vmem:[#allocation19 + $0x960] sm:$0xff]
    %v1352 = vld [vmem:[#allocation19 + $0x968] sm:$0xff]
    %v1353 = vld [vmem:[#allocation19 + $0x970] sm:$0xff]
    %v1354 = vld [vmem:[#allocation19 + $0x978] sm:$0xff]
    %v1355 = vld [vmem:[#allocation19 + $0x980] sm:$0xf]
    %v1356 = vld [vmem:[#allocation19 + $0x984] sm:$0xff]
    %v1357 = vld [vmem:[#allocation19 + $0x98c] sm:$0xff]
    %v1358 = vld [vmem:[#allocation19 + $0x994] sm:$0xff]
    %v1359 = vld [vmem:[#allocation19 + $0x99c] sm:$0xff]
    %v1360 = vld [vmem:[#allocation19 + $0x9a4] sm:$0xff]
    %v1361 = vld [vmem:[#allocation19 + $0x9ac] sm:$0xff]
    %v1362 = vld [vmem:[#allocation19 + $0x9b4] sm:$0xff]
    %v1363 = vld [vmem:[#allocation19 + $0x9bc] sm:$0xff]
    %v1364 = vld [vmem:[#allocation19 + $0x9c4] sm:$0xff]
    %v1365 = vld [vmem:[#allocation19 + $0x9cc] sm:$0xff]
    %v1366 = vld [vmem:[#allocation19 + $0x9d4] sm:$0xf]
    %v1367 = vld [vmem:[#allocation19 + $0x9d8] sm:$0xff]
    %v1368 = vld [vmem:[#allocation19 + $0x9e0] sm:$0xff]
    %v1369 = vld [vmem:[#allocation19 + $0x9e8] sm:$0xff]
    %v1370 = vld [vmem:[#allocation19 + $0x9f0] sm:$0xff]
    %v1371 = vld [vmem:[#allocation19 + $0x9f8] sm:$0xff]
    %v1372 = vld [vmem:[#allocation19 + $0xa00] sm:$0xff]
    %v1373 = vld [vmem:[#allocation19 + $0xa08] sm:$0xff]
    %v1374 = vld [vmem:[#allocation19 + $0xa10] sm:$0xff]
    %v1375 = vld [vmem:[#allocation19 + $0xa18] sm:$0xff]
    %v1376 = vld [vmem:[#allocation19 + $0xa20] sm:$0xff]
    %v1377 = vld [vmem:[#allocation19 + $0xa28] sm:$0xf]
    %v1378 = vld [vmem:[#allocation19 + $0xa2c] sm:$0xff]
    %v1379 = vld [vmem:[#allocation19 + $0xa34] sm:$0xff]
    %v1380 = vld [vmem:[#allocation19 + $0xa3c] sm:$0xff]
    %v1381 = vld [vmem:[#allocation19 + $0xa44] sm:$0xff]
    %v1382 = vld [vmem:[#allocation19 + $0xa4c] sm:$0xff]
    %v1383 = vld [vmem:[#allocation19 + $0xa54] sm:$0xff]
    %v1384 = vld [vmem:[#allocation19 + $0xa5c] sm:$0xff]
    %v1385 = vld [vmem:[#allocation19 + $0xa64] sm:$0xff]
    %v1386 = vld [vmem:[#allocation19 + $0xa6c] sm:$0xff]
    %v1387 = vld [vmem:[#allocation19 + $0xa74] sm:$0xff]
    %v1388 = vld [vmem:[#allocation19 + $0xa7c] sm:$0xf]
    %v1389 = vld [vmem:[#allocation19 + $0xa80] sm:$0xff]
    %v1390 = vld [vmem:[#allocation19 + $0xa88] sm:$0xff]
    %v1391 = vld [vmem:[#allocation19 + $0xa90] sm:$0xff]
    %v1392 = vld [vmem:[#allocation19 + $0xa98] sm:$0xff]
    %v1393 = vld [vmem:[#allocation19 + $0xaa0] sm:$0xff]
    %v1394 = vld [vmem:[#allocation19 + $0xaa8] sm:$0xff]
    %v1395 = vld [vmem:[#allocation19 + $0xab0] sm:$0xff]
    %v1396 = vld [vmem:[#allocation19 + $0xab8] sm:$0xff]
    %v1397 = vld [vmem:[#allocation19 + $0xac0] sm:$0xff]
    %v1398 = vld [vmem:[#allocation19 + $0xac8] sm:$0xff]
    %v1399 = vld [vmem:[#allocation19 + $0xad0] sm:$0xf]
    %v1400 = vld [vmem:[#allocation19 + $0xad4] sm:$0xff]
    %v1401 = vld [vmem:[#allocation19 + $0xadc] sm:$0xff]
    %v1402 = vld [vmem:[#allocation19 + $0xae4] sm:$0xff]
    %v1403 = vld [vmem:[#allocation19 + $0xaec] sm:$0xff]
    %v1404 = vld [vmem:[#allocation19 + $0xaf4] sm:$0xff]
    %v1405 = vld [vmem:[#allocation19 + $0xafc] sm:$0xff]
    %v1406 = vld [vmem:[#allocation19 + $0xb04] sm:$0xff]
    %v1407 = vld [vmem:[#allocation19 + $0xb0c] sm:$0xff]
    %v1408 = vld [vmem:[#allocation19 + $0xb14] sm:$0xff]
    %v1409 = vld [vmem:[#allocation19 + $0xb1c] sm:$0xff]
    %v1410 = vld [vmem:[#allocation19 + $0xb24] sm:$0xf]
    %v1411 = vld [vmem:[#allocation19 + $0xb28] sm:$0xff]
    %v1412 = vld [vmem:[#allocation19 + $0xb30] sm:$0xff]
    %v1413 = vld [vmem:[#allocation19 + $0xb38] sm:$0xff]
    %v1414 = vld [vmem:[#allocation19 + $0xb40] sm:$0xff]
    %v1415 = vld [vmem:[#allocation19 + $0xb48] sm:$0xff]
    %v1416 = vld [vmem:[#allocation19 + $0xb50] sm:$0xff]
    %v1417 = vld [vmem:[#allocation19 + $0xb58] sm:$0xff]
    %v1418 = vld [vmem:[#allocation19 + $0xb60] sm:$0xff]
    %v1419 = vld [vmem:[#allocation19 + $0xb68] sm:$0xff]
    %v1420 = vld [vmem:[#allocation19 + $0xb70] sm:$0xff]
    %v1421 = vld [vmem:[#allocation19 + $0xb78] sm:$0xf]
    %v1422 = vld [vmem:[#allocation19 + $0xb7c] sm:$0xff]
    %v1423 = vld [vmem:[#allocation19 + $0xb84] sm:$0xff]
    %v1424 = vld [vmem:[#allocation19 + $0xb8c] sm:$0xff]
    %v1425 = vld [vmem:[#allocation19 + $0xb94] sm:$0xff]
    %v1426 = vld [vmem:[#allocation19 + $0xb9c] sm:$0xff]
    %v1427 = vld [vmem:[#allocation19 + $0xba4] sm:$0xff]
    %v1428 = vld [vmem:[#allocation19 + $0xbac] sm:$0xff]
    %v1429 = vld [vmem:[#allocation19 + $0xbb4] sm:$0xff]
    %v1430 = vld [vmem:[#allocation19 + $0xbbc] sm:$0xff]
    %v1431 = vld [vmem:[#allocation19 + $0xbc4] sm:$0xff]
    %v1432 = vld [vmem:[#allocation19 + $0xbcc] sm:$0xf]
    %v1433 = vld [vmem:[#allocation19 + $0xbd0] sm:$0xff]
    %v1434 = vld [vmem:[#allocation19 + $0xbd8] sm:$0xff]
    %v1435 = vld [vmem:[#allocation19 + $0xbe0] sm:$0xff]
    %v1436 = vld [vmem:[#allocation19 + $0xbe8] sm:$0xff]
    %v1437 = vld [vmem:[#allocation19 + $0xbf0] sm:$0xff]
    %v1438 = vld [vmem:[#allocation19 + $0xbf8] sm:$0xff]
    %v1439 = vld [vmem:[#allocation19 + $0xc00] sm:$0xff]
    %v1440 = vld [vmem:[#allocation19 + $0xc08] sm:$0xff]
    %v1441 = vld [vmem:[#allocation19 + $0xc10] sm:$0xff]
    %v1442 = vld [vmem:[#allocation19 + $0xc18] sm:$0xff]
    %v1443 = vld [vmem:[#allocation19 + $0xc20] sm:$0xf]
    %v1444 = vld [vmem:[#allocation19 + $0xc24] sm:$0xff]
    %v1445 = vld [vmem:[#allocation19 + $0xc2c] sm:$0xff]
    %v1446 = vld [vmem:[#allocation19 + $0xc34] sm:$0xff]
    %v1447 = vld [vmem:[#allocation19 + $0xc3c] sm:$0xff]
    %v1448 = vld [vmem:[#allocation19 + $0xc44] sm:$0xff]
    %v1449 = vld [vmem:[#allocation19 + $0xc4c] sm:$0xff]
    %v1450 = vld [vmem:[#allocation19 + $0xc54] sm:$0xff]
    %v1451 = vld [vmem:[#allocation19 + $0xc5c] sm:$0xff]
    %v1452 = vld [vmem:[#allocation19 + $0xc64] sm:$0xff]
    %v1453 = vld [vmem:[#allocation19 + $0xc6c] sm:$0xff]
    %v1454 = vld [vmem:[#allocation19 + $0xc74] sm:$0xf]
    %v1455 = vld [vmem:[#allocation19 + $0xc78] sm:$0xff]
    %v1456 = vld [vmem:[#allocation19 + $0xc80] sm:$0xff]
    %v1457 = vld [vmem:[#allocation19 + $0xc88] sm:$0xff]
    %v1458 = vld [vmem:[#allocation19 + $0xc90] sm:$0xff]
    %v1459 = vld [vmem:[#allocation19 + $0xc98] sm:$0xff]
    %v1460 = vld [vmem:[#allocation19 + $0xca0] sm:$0xff]
    %v1461 = vld [vmem:[#allocation19 + $0xca8] sm:$0xff]
    %v1462 = vld [vmem:[#allocation19 + $0xcb0] sm:$0xff]
    %v1463 = vld [vmem:[#allocation19 + $0xcb8] sm:$0xff]
    %v1464 = vld [vmem:[#allocation19 + $0xcc0] sm:$0xff]
    %v1465 = vld [vmem:[#allocation19 + $0xcc8] sm:$0xf]
    %v1466 = vld [vmem:[#allocation19 + $0xccc] sm:$0xff]
    %v1467 = vld [vmem:[#allocation19 + $0xcd4] sm:$0xff]
    %v1468 = vld [vmem:[#allocation19 + $0xcdc] sm:$0xff]
    %v1469 = vld [vmem:[#allocation19 + $0xce4] sm:$0xff]
    %v1470 = vld [vmem:[#allocation19 + $0xcec] sm:$0xff]
    %v1471 = vld [vmem:[#allocation19 + $0xcf4] sm:$0xff]
    %v1472 = vld [vmem:[#allocation19 + $0xcfc] sm:$0xff]
    %v1473 = vld [vmem:[#allocation19 + $0xd04] sm:$0xff]
    %v1474 = vld [vmem:[#allocation19 + $0xd0c] sm:$0xff]
    %v1475 = vld [vmem:[#allocation19 + $0xd14] sm:$0xff]
    %v1476 = vld [vmem:[#allocation19 + $0xd1c] sm:$0xf]
    %v1477 = vld [vmem:[#allocation19 + $0xd20] sm:$0xff]
    %v1478 = vld [vmem:[#allocation19 + $0xd28] sm:$0xff]
    %v1479 = vld [vmem:[#allocation19 + $0xd30] sm:$0xff]
    %v1480 = vld [vmem:[#allocation19 + $0xd38] sm:$0xff]
    %v1481 = vld [vmem:[#allocation19 + $0xd40] sm:$0xff]
    %v1482 = vld [vmem:[#allocation19 + $0xd48] sm:$0xff]
    %v1483 = vld [vmem:[#allocation19 + $0xd50] sm:$0xff]
    %v1484 = vld [vmem:[#allocation19 + $0xd58] sm:$0xff]
    %v1485 = vld [vmem:[#allocation19 + $0xd60] sm:$0xff]
    %v1486 = vld [vmem:[#allocation19 + $0xd68] sm:$0xff]
    %v1487 = vld [vmem:[#allocation19 + $0xd70] sm:$0xf]
    %v1488 = vld [vmem:[#allocation19 + $0xd74] sm:$0xff]
    %v1489 = vld [vmem:[#allocation19 + $0xd7c] sm:$0xff]
    %v1490 = vld [vmem:[#allocation19 + $0xd84] sm:$0xff]
    %v1491 = vld [vmem:[#allocation19 + $0xd8c] sm:$0xff]
    %v1492 = vld [vmem:[#allocation19 + $0xd94] sm:$0xff]
    %v1493 = vld [vmem:[#allocation19 + $0xd9c] sm:$0xff]
    %v1494 = vld [vmem:[#allocation19 + $0xda4] sm:$0xff]
    %v1495 = vld [vmem:[#allocation19 + $0xdac] sm:$0xff]
    %v1496 = vld [vmem:[#allocation19 + $0xdb4] sm:$0xff]
    %v1497 = vld [vmem:[#allocation19 + $0xdbc] sm:$0xff]
    %v1498 = vld [vmem:[#allocation19 + $0xdc4] sm:$0xf]
    %v1499 = vld [vmem:[#allocation19 + $0xdc8] sm:$0xff]
    %v1500 = vld [vmem:[#allocation19 + $0xdd0] sm:$0xff]
    %v1501 = vld [vmem:[#allocation19 + $0xdd8] sm:$0xff]
    %v1502 = vld [vmem:[#allocation19 + $0xde0] sm:$0xff]
    %v1503 = vld [vmem:[#allocation19 + $0xde8] sm:$0xff]
    %v1504 = vld [vmem:[#allocation19 + $0xdf0] sm:$0xff]
    %v1505 = vld [vmem:[#allocation19 + $0xdf8] sm:$0xff]
    %v1506 = vld [vmem:[#allocation19 + $0xe00] sm:$0xff]
    %v1507 = vld [vmem:[#allocation19 + $0xe08] sm:$0xff]
    %v1508 = vld [vmem:[#allocation19 + $0xe10] sm:$0xff]
    %v1509 = vld [vmem:[#allocation19 + $0xe18] sm:$0xf]
    %v1510 = vld [vmem:[#allocation19 + $0xe1c] sm:$0xff]
    %v1511 = vld [vmem:[#allocation19 + $0xe24] sm:$0xff]
    %v1512 = vld [vmem:[#allocation19 + $0xe2c] sm:$0xff]
    %v1513 = vld [vmem:[#allocation19 + $0xe34] sm:$0xff]
    %v1514 = vld [vmem:[#allocation19 + $0xe3c] sm:$0xff]
    %v1515 = vld [vmem:[#allocation19 + $0xe44] sm:$0xff]
    %v1516 = vld [vmem:[#allocation19 + $0xe4c] sm:$0xff]
    %v1517 = vld [vmem:[#allocation19 + $0xe54] sm:$0xff]
    %v1518 = vld [vmem:[#allocation19 + $0xe5c] sm:$0xff]
    %v1519 = vld [vmem:[#allocation19 + $0xe64] sm:$0xff]
    %v1520 = vld [vmem:[#allocation19 + $0xe6c] sm:$0xf]
    %v1521 = vld [vmem:[#allocation19 + $0xe70] sm:$0xff]
    %v1522 = vld [vmem:[#allocation19 + $0xe78] sm:$0xff]
    %v1523 = vld [vmem:[#allocation19 + $0xe80] sm:$0xff]
    %v1524 = vld [vmem:[#allocation19 + $0xe88] sm:$0xff]
    %v1525 = vld [vmem:[#allocation19 + $0xe90] sm:$0xff]
    %v1526 = vld [vmem:[#allocation19 + $0xe98] sm:$0xff]
    %v1527 = vld [vmem:[#allocation19 + $0xea0] sm:$0xff]
    %v1528 = vld [vmem:[#allocation19 + $0xea8] sm:$0xff]
    %v1529 = vld [vmem:[#allocation19 + $0xeb0] sm:$0xff]
    %v1530 = vld [vmem:[#allocation19 + $0xeb8] sm:$0xff]
    %v1531 = vld [vmem:[#allocation19 + $0xec0] sm:$0xf]
    %v1532 = vld [vmem:[#allocation19 + $0xec4] sm:$0xff]
    %v1533 = vld [vmem:[#allocation19 + $0xecc] sm:$0xff]
    %v1534 = vld [vmem:[#allocation19 + $0xed4] sm:$0xff]
    %v1535 = vld [vmem:[#allocation19 + $0xedc] sm:$0xff]
    %v1536 = vld [vmem:[#allocation19 + $0xee4] sm:$0xff]
    %v1537 = vld [vmem:[#allocation19 + $0xeec] sm:$0xff]
    %v1538 = vld [vmem:[#allocation19 + $0xef4] sm:$0xff]
    %v1539 = vld [vmem:[#allocation19 + $0xefc] sm:$0xff]
    %v1540 = vld [vmem:[#allocation19 + $0xf04] sm:$0xff]
    %v1541 = vld [vmem:[#allocation19 + $0xf0c] sm:$0xff]
    %v1542 = vld [vmem:[#allocation19 + $0xf14] sm:$0xf]
    %v1543 = vld [vmem:[#allocation19 + $0xf18] sm:$0xff]
    %v1544 = vld [vmem:[#allocation19 + $0xf20] sm:$0xff]
    %v1545 = vld [vmem:[#allocation19 + $0xf28] sm:$0xff]
    %v1546 = vld [vmem:[#allocation19 + $0xf30] sm:$0xff]
    %v1547 = vld [vmem:[#allocation19 + $0xf38] sm:$0xff]
    %v1548 = vld [vmem:[#allocation19 + $0xf40] sm:$0xff]
    %v1549 = vld [vmem:[#allocation19 + $0xf48] sm:$0xff]
    %v1550 = vld [vmem:[#allocation19 + $0xf50] sm:$0xff]
    %v1551 = vld [vmem:[#allocation19 + $0xf58] sm:$0xff]
    %v1552 = vld [vmem:[#allocation19 + $0xf60] sm:$0xff]
    %v1553 = vld [vmem:[#allocation19 + $0xf68] sm:$0xf]
    %v1554 = vld [vmem:[#allocation19 + $0xf6c] sm:$0xff]
    %v1555 = vld [vmem:[#allocation19 + $0xf74] sm:$0xff]
    %v1556 = vld [vmem:[#allocation19 + $0xf7c] sm:$0xff]
    %v1557 = vld [vmem:[#allocation19 + $0xf84] sm:$0xff]
    %v1558 = vld [vmem:[#allocation19 + $0xf8c] sm:$0xff]
    %v1559 = vld [vmem:[#allocation19 + $0xf94] sm:$0xff]
    %v1560 = vld [vmem:[#allocation19 + $0xf9c] sm:$0xff]
    %v1561 = vld [vmem:[#allocation19 + $0xfa4] sm:$0xff]
    %v1562 = vld [vmem:[#allocation19 + $0xfac] sm:$0xff]
    %v1563 = vld [vmem:[#allocation19 + $0xfb4] sm:$0xff]
    %v1564 = vld [vmem:[#allocation19 + $0xfbc] sm:$0xf]
    %v1565 = vld [vmem:[#allocation20] sm:$0xff]
    %v1566 = vld [vmem:[#allocation20 + $0x8] sm:$0xff]
    %v1567 = vld [vmem:[#allocation20 + $0x10] sm:$0x1f]
    %v1571 = vlaneseq
    %v1572 = vshrl.u32 %v1571, 7
    %v1573 = vsub.s32 0, %v1572
    %v1574 = vrot.slane %v1565, %v1573
    %v1575 = vlaneseq
    %v1576 = vshrl.u32 %v1575, 7
    %v1577 = vsub.s32 1, %v1576
    %v1578 = vrot.slane %v1565, %v1577
    %v1579 = vlaneseq
    %v1580 = vshrl.u32 %v1579, 7
    %v1581 = vsub.s32 2, %v1580
    %v1582 = vrot.slane %v1565, %v1581
    %v1583 = vlaneseq
    %v1584 = vshrl.u32 %v1583, 7
    %v1585 = vsub.s32 3, %v1584
    %v1586 = vrot.slane %v1565, %v1585
    %v1587 = vlaneseq
    %v1588 = vshrl.u32 %v1587, 7
    %v1589 = vsub.s32 4, %v1588
    %v1590 = vrot.slane %v1565, %v1589
    %v1591 = vlaneseq
    %v1592 = vshrl.u32 %v1591, 7
    %v1593 = vsub.s32 5, %v1592
    %v1594 = vrot.slane %v1565, %v1593
    %v1595 = vlaneseq
    %v1596 = vshrl.u32 %v1595, 7
    %v1597 = vsub.s32 6, %v1596
    %v1598 = vrot.slane %v1565, %v1597
    %v1599 = vlaneseq
    %v1600 = vshrl.u32 %v1599, 7
    %v1601 = vsub.s32 7, %v1600
    %v1602 = vrot.slane %v1565, %v1601
    %v1603 = vlaneseq
    %v1604 = vshrl.u32 %v1603, 7
    %v1605 = vsub.s32 0, %v1604
    %v1606 = vrot.slane %v1566, %v1605
    %v1607 = vlaneseq
    %v1608 = vshrl.u32 %v1607, 7
    %v1609 = vsub.s32 1, %v1608
    %v1610 = vrot.slane %v1566, %v1609
    %v1611 = vlaneseq
    %v1612 = vshrl.u32 %v1611, 7
    %v1613 = vsub.s32 2, %v1612
    %v1614 = vrot.slane %v1566, %v1613
    %v1615 = vlaneseq
    %v1616 = vshrl.u32 %v1615, 7
    %v1617 = vsub.s32 3, %v1616
    %v1618 = vrot.slane %v1566, %v1617
    %v1619 = vlaneseq
    %v1620 = vshrl.u32 %v1619, 7
    %v1621 = vsub.s32 4, %v1620
    %v1622 = vrot.slane %v1566, %v1621
    %v1623 = vlaneseq
    %v1624 = vshrl.u32 %v1623, 7
    %v1625 = vsub.s32 5, %v1624
    %v1626 = vrot.slane %v1566, %v1625
    %v1627 = vlaneseq
    %v1628 = vshrl.u32 %v1627, 7
    %v1629 = vsub.s32 6, %v1628
    %v1630 = vrot.slane %v1566, %v1629
    %v1631 = vlaneseq
    %v1632 = vshrl.u32 %v1631, 7
    %v1633 = vsub.s32 7, %v1632
    %v1634 = vrot.slane %v1566, %v1633
    %v1635 = vlaneseq
    %v1636 = vshrl.u32 %v1635, 7
    %v1637 = vsub.s32 0, %v1636
    %v1638 = vrot.slane %v1567, %v1637
    %v1639 = vlaneseq
    %v1640 = vshrl.u32 %v1639, 7
    %v1641 = vsub.s32 1, %v1640
    %v1642 = vrot.slane %v1567, %v1641
    %v1643 = vlaneseq
    %v1644 = vshrl.u32 %v1643, 7
    %v1645 = vsub.s32 2, %v1644
    %v1646 = vrot.slane %v1567, %v1645
    %v1647 = vlaneseq
    %v1648 = vshrl.u32 %v1647, 7
    %v1649 = vsub.s32 3, %v1648
    %v1650 = vrot.slane %v1567, %v1649
    %v1651 = vlaneseq
    %v1652 = vshrl.u32 %v1651, 7
    %v1653 = vsub.s32 4, %v1652
    %v1654 = vrot.slane %v1567, %v1653
    %v2204 = vunpack.c.l.b16 %v1037
    %v2205 = vunpack.c.h.b16 %v1037
    %v2206 = vunpack.c.l.b16 %v1038
    %v2207 = vunpack.c.h.b16 %v1038
    %v2208 = vunpack.c.l.b16 %v1039
    %v2209 = vunpack.c.h.b16 %v1039
    %v2210 = vunpack.c.l.b16 %v1040
    %v2211 = vunpack.c.h.b16 %v1040
    %v2212 = vunpack.c.l.b16 %v1041
    %v2213 = vunpack.c.h.b16 %v1041
    %v2214 = vunpack.c.l.b16 %v1042
    %v2215 = vunpack.c.h.b16 %v1042
    %v2216 = vunpack.c.l.b16 %v1043
    %v2217 = vunpack.c.h.b16 %v1043
    %v2218 = vunpack.c.l.b16 %v1044
    %v2219 = vunpack.c.h.b16 %v1044
    %v2220 = vunpack.c.l.b16 %v1045
    %v2221 = vunpack.c.h.b16 %v1045
    %v2222 = vunpack.c.l.b16 %v1046
    %v2223 = vunpack.c.h.b16 %v1046
    %v2224 = vunpack.c.l.b16 %v1047
    %v2225 = vunpack.c.l.b16 %v1048
    %v2226 = vunpack.c.h.b16 %v1048
    %v2227 = vunpack.c.l.b16 %v1049
    %v2228 = vunpack.c.h.b16 %v1049
    %v2229 = vunpack.c.l.b16 %v1050
    %v2230 = vunpack.c.h.b16 %v1050
    %v2231 = vunpack.c.l.b16 %v1051
    %v2232 = vunpack.c.h.b16 %v1051
    %v2233 = vunpack.c.l.b16 %v1052
    %v2234 = vunpack.c.h.b16 %v1052
    %v2235 = vunpack.c.l.b16 %v1053
    %v2236 = vunpack.c.h.b16 %v1053
    %v2237 = vunpack.c.l.b16 %v1054
    %v2238 = vunpack.c.h.b16 %v1054
    %v2239 = vunpack.c.l.b16 %v1055
    %v2240 = vunpack.c.h.b16 %v1055
    %v2241 = vunpack.c.l.b16 %v1056
    %v2242 = vunpack.c.h.b16 %v1056
    %v2243 = vunpack.c.l.b16 %v1057
    %v2244 = vunpack.c.h.b16 %v1057
    %v2245 = vunpack.c.l.b16 %v1058
    %v2246 = vunpack.c.l.b16 %v1059
    %v2247 = vunpack.c.h.b16 %v1059
    %v2248 = vunpack.c.l.b16 %v1060
    %v2249 = vunpack.c.h.b16 %v1060
    %v2250 = vunpack.c.l.b16 %v1061
    %v2251 = vunpack.c.h.b16 %v1061
    %v2252 = vunpack.c.l.b16 %v1062
    %v2253 = vunpack.c.h.b16 %v1062
    %v2254 = vunpack.c.l.b16 %v1063
    %v2255 = vunpack.c.h.b16 %v1063
    %v2256 = vunpack.c.l.b16 %v1064
    %v2257 = vunpack.c.h.b16 %v1064
    %v2258 = vunpack.c.l.b16 %v1065
    %v2259 = vunpack.c.h.b16 %v1065
    %v2260 = vunpack.c.l.b16 %v1066
    %v2261 = vunpack.c.h.b16 %v1066
    %v2262 = vunpack.c.l.b16 %v1067
    %v2263 = vunpack.c.h.b16 %v1067
    %v2264 = vunpack.c.l.b16 %v1068
    %v2265 = vunpack.c.h.b16 %v1068
    %v2266 = vunpack.c.l.b16 %v1069
    %v2267 = vunpack.c.l.b16 %v1070
    %v2268 = vunpack.c.h.b16 %v1070
    %v2269 = vunpack.c.l.b16 %v1071
    %v2270 = vunpack.c.h.b16 %v1071
    %v2271 = vunpack.c.l.b16 %v1072
    %v2272 = vunpack.c.h.b16 %v1072
    %v2273 = vunpack.c.l.b16 %v1073
    %v2274 = vunpack.c.h.b16 %v1073
    %v2275 = vunpack.c.l.b16 %v1074
    %v2276 = vunpack.c.h.b16 %v1074
    %v2277 = vunpack.c.l.b16 %v1075
    %v2278 = vunpack.c.h.b16 %v1075
    %v2279 = vunpack.c.l.b16 %v1076
    %v2280 = vunpack.c.h.b16 %v1076
    %v2281 = vunpack.c.l.b16 %v1077
    %v2282 = vunpack.c.h.b16 %v1077
    %v2283 = vunpack.c.l.b16 %v1078
    %v2284 = vunpack.c.h.b16 %v1078
    %v2285 = vunpack.c.l.b16 %v1079
    %v2286 = vunpack.c.h.b16 %v1079
    %v2287 = vunpack.c.l.b16 %v1080
    %v2288 = vunpack.c.l.b16 %v1081
    %v2289 = vunpack.c.h.b16 %v1081
    %v2290 = vunpack.c.l.b16 %v1082
    %v2291 = vunpack.c.h.b16 %v1082
    %v2292 = vunpack.c.l.b16 %v1083
    %v2293 = vunpack.c.h.b16 %v1083
    %v2294 = vunpack.c.l.b16 %v1084
    %v2295 = vunpack.c.h.b16 %v1084
    %v2296 = vunpack.c.l.b16 %v1085
    %v2297 = vunpack.c.h.b16 %v1085
    %v2298 = vunpack.c.l.b16 %v1086
    %v2299 = vunpack.c.h.b16 %v1086
    %v2300 = vunpack.c.l.b16 %v1087
    %v2301 = vunpack.c.h.b16 %v1087
    %v2302 = vunpack.c.l.b16 %v1088
    %v2303 = vunpack.c.h.b16 %v1088
    %v2304 = vunpack.c.l.b16 %v1089
    %v2305 = vunpack.c.h.b16 %v1089
    %v2306 = vunpack.c.l.b16 %v1090
    %v2307 = vunpack.c.h.b16 %v1090
    %v2308 = vunpack.c.l.b16 %v1091
    %v2309 = vunpack.c.l.b16 %v1092
    %v2310 = vunpack.c.h.b16 %v1092
    %v2311 = vunpack.c.l.b16 %v1093
    %v2312 = vunpack.c.h.b16 %v1093
    %v2313 = vunpack.c.l.b16 %v1094
    %v2314 = vunpack.c.h.b16 %v1094
    %v2315 = vunpack.c.l.b16 %v1095
    %v2316 = vunpack.c.h.b16 %v1095
    %v2317 = vunpack.c.l.b16 %v1096
    %v2318 = vunpack.c.h.b16 %v1096
    %v2319 = vunpack.c.l.b16 %v1097
    %v2320 = vunpack.c.h.b16 %v1097
    %v2321 = vunpack.c.l.b16 %v1098
    %v2322 = vunpack.c.h.b16 %v1098
    %v2323 = vunpack.c.l.b16 %v1099
    %v2324 = vunpack.c.h.b16 %v1099
    %v2325 = vunpack.c.l.b16 %v1100
    %v2326 = vunpack.c.h.b16 %v1100
    %v2327 = vunpack.c.l.b16 %v1101
    %v2328 = vunpack.c.h.b16 %v1101
    %v2329 = vunpack.c.l.b16 %v1102
    %v2330 = vunpack.c.l.b16 %v1103
    %v2331 = vunpack.c.h.b16 %v1103
    %v2332 = vunpack.c.l.b16 %v1104
    %v2333 = vunpack.c.h.b16 %v1104
    %v2334 = vunpack.c.l.b16 %v1105
    %v2335 = vunpack.c.h.b16 %v1105
    %v2336 = vunpack.c.l.b16 %v1106
    %v2337 = vunpack.c.h.b16 %v1106
    %v2338 = vunpack.c.l.b16 %v1107
    %v2339 = vunpack.c.h.b16 %v1107
    %v2340 = vunpack.c.l.b16 %v1108
    %v2341 = vunpack.c.h.b16 %v1108
    %v2342 = vunpack.c.l.b16 %v1109
    %v2343 = vunpack.c.h.b16 %v1109
    %v2344 = vunpack.c.l.b16 %v1110
    %v2345 = vunpack.c.h.b16 %v1110
    %v2346 = vunpack.c.l.b16 %v1111
    %v2347 = vunpack.c.h.b16 %v1111
    %v2348 = vunpack.c.l.b16 %v1112
    %v2349 = vunpack.c.h.b16 %v1112
    %v2350 = vunpack.c.l.b16 %v1113
    %v2351 = vunpack.c.l.b16 %v1114
    %v2352 = vunpack.c.h.b16 %v1114
    %v2353 = vunpack.c.l.b16 %v1115
    %v2354 = vunpack.c.h.b16 %v1115
    %v2355 = vunpack.c.l.b16 %v1116
    %v2356 = vunpack.c.h.b16 %v1116
    %v2357 = vunpack.c.l.b16 %v1117
    %v2358 = vunpack.c.h.b16 %v1117
    %v2359 = vunpack.c.l.b16 %v1118
    %v2360 = vunpack.c.h.b16 %v1118
    %v2361 = vunpack.c.l.b16 %v1119
    %v2362 = vunpack.c.h.b16 %v1119
    %v2363 = vunpack.c.l.b16 %v1120
    %v2364 = vunpack.c.h.b16 %v1120
    %v2365 = vunpack.c.l.b16 %v1121
    %v2366 = vunpack.c.h.b16 %v1121
    %v2367 = vunpack.c.l.b16 %v1122
    %v2368 = vunpack.c.h.b16 %v1122
    %v2369 = vunpack.c.l.b16 %v1123
    %v2370 = vunpack.c.h.b16 %v1123
    %v2371 = vunpack.c.l.b16 %v1124
    %v2372 = vunpack.c.l.b16 %v1125
    %v2373 = vunpack.c.h.b16 %v1125
    %v2374 = vunpack.c.l.b16 %v1126
    %v2375 = vunpack.c.h.b16 %v1126
    %v2376 = vunpack.c.l.b16 %v1127
    %v2377 = vunpack.c.h.b16 %v1127
    %v2378 = vunpack.c.l.b16 %v1128
    %v2379 = vunpack.c.h.b16 %v1128
    %v2380 = vunpack.c.l.b16 %v1129
    %v2381 = vunpack.c.h.b16 %v1129
    %v2382 = vunpack.c.l.b16 %v1130
    %v2383 = vunpack.c.h.b16 %v1130
    %v2384 = vunpack.c.l.b16 %v1131
    %v2385 = vunpack.c.h.b16 %v1131
    %v2386 = vunpack.c.l.b16 %v1132
    %v2387 = vunpack.c.h.b16 %v1132
    %v2388 = vunpack.c.l.b16 %v1133
    %v2389 = vunpack.c.h.b16 %v1133
    %v2390 = vunpack.c.l.b16 %v1134
    %v2391 = vunpack.c.h.b16 %v1134
    %v2392 = vunpack.c.l.b16 %v1135
    %v2393 = vunpack.c.l.b16 %v1136
    %v2394 = vunpack.c.h.b16 %v1136
    %v2395 = vunpack.c.l.b16 %v1137
    %v2396 = vunpack.c.h.b16 %v1137
    %v2397 = vunpack.c.l.b16 %v1138
    %v2398 = vunpack.c.h.b16 %v1138
    %v2399 = vunpack.c.l.b16 %v1139
    %v2400 = vunpack.c.h.b16 %v1139
    %v2401 = vunpack.c.l.b16 %v1140
    %v2402 = vunpack.c.h.b16 %v1140
    %v2403 = vunpack.c.l.b16 %v1141
    %v2404 = vunpack.c.h.b16 %v1141
    %v2405 = vunpack.c.l.b16 %v1142
    %v2406 = vunpack.c.h.b16 %v1142
    %v2407 = vunpack.c.l.b16 %v1143
    %v2408 = vunpack.c.h.b16 %v1143
    %v2409 = vunpack.c.l.b16 %v1144
    %v2410 = vunpack.c.h.b16 %v1144
    %v2411 = vunpack.c.l.b16 %v1145
    %v2412 = vunpack.c.h.b16 %v1145
    %v2413 = vunpack.c.l.b16 %v1146
    %v2414 = vunpack.c.l.b16 %v1147
    %v2415 = vunpack.c.h.b16 %v1147
    %v2416 = vunpack.c.l.b16 %v1148
    %v2417 = vunpack.c.h.b16 %v1148
    %v2418 = vunpack.c.l.b16 %v1149
    %v2419 = vunpack.c.h.b16 %v1149
    %v2420 = vunpack.c.l.b16 %v1150
    %v2421 = vunpack.c.h.b16 %v1150
    %v2422 = vunpack.c.l.b16 %v1151
    %v2423 = vunpack.c.h.b16 %v1151
    %v2424 = vunpack.c.l.b16 %v1152
    %v2425 = vunpack.c.h.b16 %v1152
    %v2426 = vunpack.c.l.b16 %v1153
    %v2427 = vunpack.c.h.b16 %v1153
    %v2428 = vunpack.c.l.b16 %v1154
    %v2429 = vunpack.c.h.b16 %v1154
    %v2430 = vunpack.c.l.b16 %v1155
    %v2431 = vunpack.c.h.b16 %v1155
    %v2432 = vunpack.c.l.b16 %v1156
    %v2433 = vunpack.c.h.b16 %v1156
    %v2434 = vunpack.c.l.b16 %v1157
    %v2435 = vunpack.c.l.b16 %v1158
    %v2436 = vunpack.c.h.b16 %v1158
    %v2437 = vunpack.c.l.b16 %v1159
    %v2438 = vunpack.c.h.b16 %v1159
    %v2439 = vunpack.c.l.b16 %v1160
    %v2440 = vunpack.c.h.b16 %v1160
    %v2441 = vunpack.c.l.b16 %v1161
    %v2442 = vunpack.c.h.b16 %v1161
    %v2443 = vunpack.c.l.b16 %v1162
    %v2444 = vunpack.c.h.b16 %v1162
    %v2445 = vunpack.c.l.b16 %v1163
    %v2446 = vunpack.c.h.b16 %v1163
    %v2447 = vunpack.c.l.b16 %v1164
    %v2448 = vunpack.c.h.b16 %v1164
    %v2449 = vunpack.c.l.b16 %v1165
    %v2450 = vunpack.c.h.b16 %v1165
    %v2451 = vunpack.c.l.b16 %v1166
    %v2452 = vunpack.c.h.b16 %v1166
    %v2453 = vunpack.c.l.b16 %v1167
    %v2454 = vunpack.c.h.b16 %v1167
    %v2455 = vunpack.c.l.b16 %v1168
    %v2456 = vunpack.c.l.b16 %v1169
    %v2457 = vunpack.c.h.b16 %v1169
    %v2458 = vunpack.c.l.b16 %v1170
    %v2459 = vunpack.c.h.b16 %v1170
    %v2460 = vunpack.c.l.b16 %v1171
    %v2461 = vunpack.c.h.b16 %v1171
    %v2462 = vunpack.c.l.b16 %v1172
    %v2463 = vunpack.c.h.b16 %v1172
    %v2464 = vunpack.c.l.b16 %v1173
    %v2465 = vunpack.c.h.b16 %v1173
    %v2466 = vunpack.c.l.b16 %v1174
    %v2467 = vunpack.c.h.b16 %v1174
    %v2468 = vunpack.c.l.b16 %v1175
    %v2469 = vunpack.c.h.b16 %v1175
    %v2470 = vunpack.c.l.b16 %v1176
    %v2471 = vunpack.c.h.b16 %v1176
    %v2472 = vunpack.c.l.b16 %v1177
    %v2473 = vunpack.c.h.b16 %v1177
    %v2474 = vunpack.c.l.b16 %v1178
    %v2475 = vunpack.c.h.b16 %v1178
    %v2476 = vunpack.c.l.b16 %v1179
    %v2477 = vunpack.c.l.b16 %v1180
    %v2478 = vunpack.c.h.b16 %v1180
    %v2479 = vunpack.c.l.b16 %v1181
    %v2480 = vunpack.c.h.b16 %v1181
    %v2481 = vunpack.c.l.b16 %v1182
    %v2482 = vunpack.c.h.b16 %v1182
    %v2483 = vunpack.c.l.b16 %v1183
    %v2484 = vunpack.c.h.b16 %v1183
    %v2485 = vunpack.c.l.b16 %v1184
    %v2486 = vunpack.c.h.b16 %v1184
    %v2487 = vunpack.c.l.b16 %v1185
    %v2488 = vunpack.c.h.b16 %v1185
    %v2489 = vunpack.c.l.b16 %v1186
    %v2490 = vunpack.c.h.b16 %v1186
    %v2491 = vunpack.c.l.b16 %v1187
    %v2492 = vunpack.c.h.b16 %v1187
    %v2493 = vunpack.c.l.b16 %v1188
    %v2494 = vunpack.c.h.b16 %v1188
    %v2495 = vunpack.c.l.b16 %v1189
    %v2496 = vunpack.c.h.b16 %v1189
    %v2497 = vunpack.c.l.b16 %v1190
    %v2498 = vunpack.c.l.b16 %v1191
    %v2499 = vunpack.c.h.b16 %v1191
    %v2500 = vunpack.c.l.b16 %v1192
    %v2501 = vunpack.c.h.b16 %v1192
    %v2502 = vunpack.c.l.b16 %v1193
    %v2503 = vunpack.c.h.b16 %v1193
    %v2504 = vunpack.c.l.b16 %v1194
    %v2505 = vunpack.c.h.b16 %v1194
    %v2506 = vunpack.c.l.b16 %v1195
    %v2507 = vunpack.c.h.b16 %v1195
    %v2508 = vunpack.c.l.b16 %v1196
    %v2509 = vunpack.c.h.b16 %v1196
    %v2510 = vunpack.c.l.b16 %v1197
    %v2511 = vunpack.c.h.b16 %v1197
    %v2512 = vunpack.c.l.b16 %v1198
    %v2513 = vunpack.c.h.b16 %v1198
    %v2514 = vunpack.c.l.b16 %v1199
    %v2515 = vunpack.c.h.b16 %v1199
    %v2516 = vunpack.c.l.b16 %v1200
    %v2517 = vunpack.c.h.b16 %v1200
    %v2518 = vunpack.c.l.b16 %v1201
    %v2519 = vunpack.c.l.b16 %v1202
    %v2520 = vunpack.c.h.b16 %v1202
    %v2521 = vunpack.c.l.b16 %v1203
    %v2522 = vunpack.c.h.b16 %v1203
    %v2523 = vunpack.c.l.b16 %v1204
    %v2524 = vunpack.c.h.b16 %v1204
    %v2525 = vunpack.c.l.b16 %v1205
    %v2526 = vunpack.c.h.b16 %v1205
    %v2527 = vunpack.c.l.b16 %v1206
    %v2528 = vunpack.c.h.b16 %v1206
    %v2529 = vunpack.c.l.b16 %v1207
    %v2530 = vunpack.c.h.b16 %v1207
    %v2531 = vunpack.c.l.b16 %v1208
    %v2532 = vunpack.c.h.b16 %v1208
    %v2533 = vunpack.c.l.b16 %v1209
    %v2534 = vunpack.c.h.b16 %v1209
    %v2535 = vunpack.c.l.b16 %v1210
    %v2536 = vunpack.c.h.b16 %v1210
    %v2537 = vunpack.c.l.b16 %v1211
    %v2538 = vunpack.c.h.b16 %v1211
    %v2539 = vunpack.c.l.b16 %v1212
    %v2540 = vunpack.c.l.b16 %v1213
    %v2541 = vunpack.c.h.b16 %v1213
    %v2542 = vunpack.c.l.b16 %v1214
    %v2543 = vunpack.c.h.b16 %v1214
    %v2544 = vunpack.c.l.b16 %v1215
    %v2545 = vunpack.c.h.b16 %v1215
    %v2546 = vunpack.c.l.b16 %v1216
    %v2547 = vunpack.c.h.b16 %v1216
    %v2548 = vunpack.c.l.b16 %v1217
    %v2549 = vunpack.c.h.b16 %v1217
    %v2550 = vunpack.c.l.b16 %v1218
    %v2551 = vunpack.c.h.b16 %v1218
    %v2552 = vunpack.c.l.b16 %v1219
    %v2553 = vunpack.c.h.b16 %v1219
    %v2554 = vunpack.c.l.b16 %v1220
    %v2555 = vunpack.c.h.b16 %v1220
    %v2556 = vunpack.c.l.b16 %v1221
    %v2557 = vunpack.c.h.b16 %v1221
    %v2558 = vunpack.c.l.b16 %v1222
    %v2559 = vunpack.c.h.b16 %v1222
    %v2560 = vunpack.c.l.b16 %v1223
    %v2561 = vunpack.c.l.b16 %v1224
    %v2562 = vunpack.c.h.b16 %v1224
    %v2563 = vunpack.c.l.b16 %v1225
    %v2564 = vunpack.c.h.b16 %v1225
    %v2565 = vunpack.c.l.b16 %v1226
    %v2566 = vunpack.c.h.b16 %v1226
    %v2567 = vunpack.c.l.b16 %v1227
    %v2568 = vunpack.c.h.b16 %v1227
    %v2569 = vunpack.c.l.b16 %v1228
    %v2570 = vunpack.c.h.b16 %v1228
    %v2571 = vunpack.c.l.b16 %v1229
    %v2572 = vunpack.c.h.b16 %v1229
    %v2573 = vunpack.c.l.b16 %v1230
    %v2574 = vunpack.c.h.b16 %v1230
    %v2575 = vunpack.c.l.b16 %v1231
    %v2576 = vunpack.c.h.b16 %v1231
    %v2577 = vunpack.c.l.b16 %v1232
    %v2578 = vunpack.c.h.b16 %v1232
    %v2579 = vunpack.c.l.b16 %v1233
    %v2580 = vunpack.c.h.b16 %v1233
    %v2581 = vunpack.c.l.b16 %v1234
    %v2582 = vunpack.c.l.b16 %v1235
    %v2583 = vunpack.c.h.b16 %v1235
    %v2584 = vunpack.c.l.b16 %v1236
    %v2585 = vunpack.c.h.b16 %v1236
    %v2586 = vunpack.c.l.b16 %v1237
    %v2587 = vunpack.c.h.b16 %v1237
    %v2588 = vunpack.c.l.b16 %v1238
    %v2589 = vunpack.c.h.b16 %v1238
    %v2590 = vunpack.c.l.b16 %v1239
    %v2591 = vunpack.c.h.b16 %v1239
    %v2592 = vunpack.c.l.b16 %v1240
    %v2593 = vunpack.c.h.b16 %v1240
    %v2594 = vunpack.c.l.b16 %v1241
    %v2595 = vunpack.c.h.b16 %v1241
    %v2596 = vunpack.c.l.b16 %v1242
    %v2597 = vunpack.c.h.b16 %v1242
    %v2598 = vunpack.c.l.b16 %v1243
    %v2599 = vunpack.c.h.b16 %v1243
    %v2600 = vunpack.c.l.b16 %v1244
    %v2601 = vunpack.c.h.b16 %v1244
    %v2602 = vunpack.c.l.b16 %v1245
    %v2603 = vunpack.c.l.b16 %v1246
    %v2604 = vunpack.c.h.b16 %v1246
    %v2605 = vunpack.c.l.b16 %v1247
    %v2606 = vunpack.c.h.b16 %v1247
    %v2607 = vunpack.c.l.b16 %v1248
    %v2608 = vunpack.c.h.b16 %v1248
    %v2609 = vunpack.c.l.b16 %v1249
    %v2610 = vunpack.c.h.b16 %v1249
    %v2611 = vunpack.c.l.b16 %v1250
    %v2612 = vunpack.c.h.b16 %v1250
    %v2613 = vunpack.c.l.b16 %v1251
    %v2614 = vunpack.c.h.b16 %v1251
    %v2615 = vunpack.c.l.b16 %v1252
    %v2616 = vunpack.c.h.b16 %v1252
    %v2617 = vunpack.c.l.b16 %v1253
    %v2618 = vunpack.c.h.b16 %v1253
    %v2619 = vunpack.c.l.b16 %v1254
    %v2620 = vunpack.c.h.b16 %v1254
    %v2621 = vunpack.c.l.b16 %v1255
    %v2622 = vunpack.c.h.b16 %v1255
    %v2623 = vunpack.c.l.b16 %v1256
    %v2624 = vunpack.c.l.b16 %v1257
    %v2625 = vunpack.c.h.b16 %v1257
    %v2626 = vunpack.c.l.b16 %v1258
    %v2627 = vunpack.c.h.b16 %v1258
    %v2628 = vunpack.c.l.b16 %v1259
    %v2629 = vunpack.c.h.b16 %v1259
    %v2630 = vunpack.c.l.b16 %v1260
    %v2631 = vunpack.c.h.b16 %v1260
    %v2632 = vunpack.c.l.b16 %v1261
    %v2633 = vunpack.c.h.b16 %v1261
    %v2634 = vunpack.c.l.b16 %v1262
    %v2635 = vunpack.c.h.b16 %v1262
    %v2636 = vunpack.c.l.b16 %v1263
    %v2637 = vunpack.c.h.b16 %v1263
    %v2638 = vunpack.c.l.b16 %v1264
    %v2639 = vunpack.c.h.b16 %v1264
    %v2640 = vunpack.c.l.b16 %v1265
    %v2641 = vunpack.c.h.b16 %v1265
    %v2642 = vunpack.c.l.b16 %v1266
    %v2643 = vunpack.c.h.b16 %v1266
    %v2644 = vunpack.c.l.b16 %v1267
    %v2645 = vunpack.c.l.b16 %v1268
    %v2646 = vunpack.c.h.b16 %v1268
    %v2647 = vunpack.c.l.b16 %v1269
    %v2648 = vunpack.c.h.b16 %v1269
    %v2649 = vunpack.c.l.b16 %v1270
    %v2650 = vunpack.c.h.b16 %v1270
    %v2651 = vunpack.c.l.b16 %v1271
    %v2652 = vunpack.c.h.b16 %v1271
    %v2653 = vunpack.c.l.b16 %v1272
    %v2654 = vunpack.c.h.b16 %v1272
    %v2655 = vunpack.c.l.b16 %v1273
    %v2656 = vunpack.c.h.b16 %v1273
    %v2657 = vunpack.c.l.b16 %v1274
    %v2658 = vunpack.c.h.b16 %v1274
    %v2659 = vunpack.c.l.b16 %v1275
    %v2660 = vunpack.c.h.b16 %v1275
    %v2661 = vunpack.c.l.b16 %v1276
    %v2662 = vunpack.c.h.b16 %v1276
    %v2663 = vunpack.c.l.b16 %v1277
    %v2664 = vunpack.c.h.b16 %v1277
    %v2665 = vunpack.c.l.b16 %v1278
    %v2666 = vunpack.c.l.b16 %v1279
    %v2667 = vunpack.c.h.b16 %v1279
    %v2668 = vunpack.c.l.b16 %v1280
    %v2669 = vunpack.c.h.b16 %v1280
    %v2670 = vunpack.c.l.b16 %v1281
    %v2671 = vunpack.c.h.b16 %v1281
    %v2672 = vunpack.c.l.b16 %v1282
    %v2673 = vunpack.c.h.b16 %v1282
    %v2674 = vunpack.c.l.b16 %v1283
    %v2675 = vunpack.c.h.b16 %v1283
    %v2676 = vunpack.c.l.b16 %v1284
    %v2677 = vunpack.c.h.b16 %v1284
    %v2678 = vunpack.c.l.b16 %v1285
    %v2679 = vunpack.c.h.b16 %v1285
    %v2680 = vunpack.c.l.b16 %v1286
    %v2681 = vunpack.c.h.b16 %v1286
    %v2682 = vunpack.c.l.b16 %v1287
    %v2683 = vunpack.c.h.b16 %v1287
    %v2684 = vunpack.c.l.b16 %v1288
    %v2685 = vunpack.c.h.b16 %v1288
    %v2686 = vunpack.c.l.b16 %v1289
    %v2687 = vunpack.c.l.b16 %v1290
    %v2688 = vunpack.c.h.b16 %v1290
    %v2689 = vunpack.c.l.b16 %v1291
    %v2690 = vunpack.c.h.b16 %v1291
    %v2691 = vunpack.c.l.b16 %v1292
    %v2692 = vunpack.c.h.b16 %v1292
    %v2693 = vunpack.c.l.b16 %v1293
    %v2694 = vunpack.c.h.b16 %v1293
    %v2695 = vunpack.c.l.b16 %v1294
    %v2696 = vunpack.c.h.b16 %v1294
    %v2697 = vunpack.c.l.b16 %v1295
    %v2698 = vunpack.c.h.b16 %v1295
    %v2699 = vunpack.c.l.b16 %v1296
    %v2700 = vunpack.c.h.b16 %v1296
    %v2701 = vunpack.c.l.b16 %v1297
    %v2702 = vunpack.c.h.b16 %v1297
    %v2703 = vunpack.c.l.b16 %v1298
    %v2704 = vunpack.c.h.b16 %v1298
    %v2705 = vunpack.c.l.b16 %v1299
    %v2706 = vunpack.c.h.b16 %v1299
    %v2707 = vunpack.c.l.b16 %v1300
    %v2708 = vunpack.c.l.b16 %v1301
    %v2709 = vunpack.c.h.b16 %v1301
    %v2710 = vunpack.c.l.b16 %v1302
    %v2711 = vunpack.c.h.b16 %v1302
    %v2712 = vunpack.c.l.b16 %v1303
    %v2713 = vunpack.c.h.b16 %v1303
    %v2714 = vunpack.c.l.b16 %v1304
    %v2715 = vunpack.c.h.b16 %v1304
    %v2716 = vunpack.c.l.b16 %v1305
    %v2717 = vunpack.c.h.b16 %v1305
    %v2718 = vunpack.c.l.b16 %v1306
    %v2719 = vunpack.c.h.b16 %v1306
    %v2720 = vunpack.c.l.b16 %v1307
    %v2721 = vunpack.c.h.b16 %v1307
    %v2722 = vunpack.c.l.b16 %v1308
    %v2723 = vunpack.c.h.b16 %v1308
    %v2724 = vunpack.c.l.b16 %v1309
    %v2725 = vunpack.c.h.b16 %v1309
    %v2726 = vunpack.c.l.b16 %v1310
    %v2727 = vunpack.c.h.b16 %v1310
    %v2728 = vunpack.c.l.b16 %v1311
    %v2729 = vunpack.c.l.b16 %v1312
    %v2730 = vunpack.c.h.b16 %v1312
    %v2731 = vunpack.c.l.b16 %v1313
    %v2732 = vunpack.c.h.b16 %v1313
    %v2733 = vunpack.c.l.b16 %v1314
    %v2734 = vunpack.c.h.b16 %v1314
    %v2735 = vunpack.c.l.b16 %v1315
    %v2736 = vunpack.c.h.b16 %v1315
    %v2737 = vunpack.c.l.b16 %v1316
    %v2738 = vunpack.c.h.b16 %v1316
    %v2739 = vunpack.c.l.b16 %v1317
    %v2740 = vunpack.c.h.b16 %v1317
    %v2741 = vunpack.c.l.b16 %v1318
    %v2742 = vunpack.c.h.b16 %v1318
    %v2743 = vunpack.c.l.b16 %v1319
    %v2744 = vunpack.c.h.b16 %v1319
    %v2745 = vunpack.c.l.b16 %v1320
    %v2746 = vunpack.c.h.b16 %v1320
    %v2747 = vunpack.c.l.b16 %v1321
    %v2748 = vunpack.c.h.b16 %v1321
    %v2749 = vunpack.c.l.b16 %v1322
    %v2750 = vunpack.c.l.b16 %v1323
    %v2751 = vunpack.c.h.b16 %v1323
    %v2752 = vunpack.c.l.b16 %v1324
    %v2753 = vunpack.c.h.b16 %v1324
    %v2754 = vunpack.c.l.b16 %v1325
    %v2755 = vunpack.c.h.b16 %v1325
    %v2756 = vunpack.c.l.b16 %v1326
    %v2757 = vunpack.c.h.b16 %v1326
    %v2758 = vunpack.c.l.b16 %v1327
    %v2759 = vunpack.c.h.b16 %v1327
    %v2760 = vunpack.c.l.b16 %v1328
    %v2761 = vunpack.c.h.b16 %v1328
    %v2762 = vunpack.c.l.b16 %v1329
    %v2763 = vunpack.c.h.b16 %v1329
    %v2764 = vunpack.c.l.b16 %v1330
    %v2765 = vunpack.c.h.b16 %v1330
    %v2766 = vunpack.c.l.b16 %v1331
    %v2767 = vunpack.c.h.b16 %v1331
    %v2768 = vunpack.c.l.b16 %v1332
    %v2769 = vunpack.c.h.b16 %v1332
    %v2770 = vunpack.c.l.b16 %v1333
    %v2771 = vunpack.c.l.b16 %v1334
    %v2772 = vunpack.c.h.b16 %v1334
    %v2773 = vunpack.c.l.b16 %v1335
    %v2774 = vunpack.c.h.b16 %v1335
    %v2775 = vunpack.c.l.b16 %v1336
    %v2776 = vunpack.c.h.b16 %v1336
    %v2777 = vunpack.c.l.b16 %v1337
    %v2778 = vunpack.c.h.b16 %v1337
    %v2779 = vunpack.c.l.b16 %v1338
    %v2780 = vunpack.c.h.b16 %v1338
    %v2781 = vunpack.c.l.b16 %v1339
    %v2782 = vunpack.c.h.b16 %v1339
    %v2783 = vunpack.c.l.b16 %v1340
    %v2784 = vunpack.c.h.b16 %v1340
    %v2785 = vunpack.c.l.b16 %v1341
    %v2786 = vunpack.c.h.b16 %v1341
    %v2787 = vunpack.c.l.b16 %v1342
    %v2788 = vunpack.c.h.b16 %v1342
    %v2789 = vunpack.c.l.b16 %v1343
    %v2790 = vunpack.c.h.b16 %v1343
    %v2791 = vunpack.c.l.b16 %v1344
    %v2792 = vunpack.c.l.b16 %v1345
    %v2793 = vunpack.c.h.b16 %v1345
    %v2794 = vunpack.c.l.b16 %v1346
    %v2795 = vunpack.c.h.b16 %v1346
    %v2796 = vunpack.c.l.b16 %v1347
    %v2797 = vunpack.c.h.b16 %v1347
    %v2798 = vunpack.c.l.b16 %v1348
    %v2799 = vunpack.c.h.b16 %v1348
    %v2800 = vunpack.c.l.b16 %v1349
    %v2801 = vunpack.c.h.b16 %v1349
    %v2802 = vunpack.c.l.b16 %v1350
    %v2803 = vunpack.c.h.b16 %v1350
    %v2804 = vunpack.c.l.b16 %v1351
    %v2805 = vunpack.c.h.b16 %v1351
    %v2806 = vunpack.c.l.b16 %v1352
    %v2807 = vunpack.c.h.b16 %v1352
    %v2808 = vunpack.c.l.b16 %v1353
    %v2809 = vunpack.c.h.b16 %v1353
    %v2810 = vunpack.c.l.b16 %v1354
    %v2811 = vunpack.c.h.b16 %v1354
    %v2812 = vunpack.c.l.b16 %v1355
    %v2813 = vunpack.c.l.b16 %v1356
    %v2814 = vunpack.c.h.b16 %v1356
    %v2815 = vunpack.c.l.b16 %v1357
    %v2816 = vunpack.c.h.b16 %v1357
    %v2817 = vunpack.c.l.b16 %v1358
    %v2818 = vunpack.c.h.b16 %v1358
    %v2819 = vunpack.c.l.b16 %v1359
    %v2820 = vunpack.c.h.b16 %v1359
    %v2821 = vunpack.c.l.b16 %v1360
    %v2822 = vunpack.c.h.b16 %v1360
    %v2823 = vunpack.c.l.b16 %v1361
    %v2824 = vunpack.c.h.b16 %v1361
    %v2825 = vunpack.c.l.b16 %v1362
    %v2826 = vunpack.c.h.b16 %v1362
    %v2827 = vunpack.c.l.b16 %v1363
    %v2828 = vunpack.c.h.b16 %v1363
    %v2829 = vunpack.c.l.b16 %v1364
    %v2830 = vunpack.c.h.b16 %v1364
    %v2831 = vunpack.c.l.b16 %v1365
    %v2832 = vunpack.c.h.b16 %v1365
    %v2833 = vunpack.c.l.b16 %v1366
    %v2834 = vunpack.c.l.b16 %v1367
    %v2835 = vunpack.c.h.b16 %v1367
    %v2836 = vunpack.c.l.b16 %v1368
    %v2837 = vunpack.c.h.b16 %v1368
    %v2838 = vunpack.c.l.b16 %v1369
    %v2839 = vunpack.c.h.b16 %v1369
    %v2840 = vunpack.c.l.b16 %v1370
    %v2841 = vunpack.c.h.b16 %v1370
    %v2842 = vunpack.c.l.b16 %v1371
    %v2843 = vunpack.c.h.b16 %v1371
    %v2844 = vunpack.c.l.b16 %v1372
    %v2845 = vunpack.c.h.b16 %v1372
    %v2846 = vunpack.c.l.b16 %v1373
    %v2847 = vunpack.c.h.b16 %v1373
    %v2848 = vunpack.c.l.b16 %v1374
    %v2849 = vunpack.c.h.b16 %v1374
    %v2850 = vunpack.c.l.b16 %v1375
    %v2851 = vunpack.c.h.b16 %v1375
    %v2852 = vunpack.c.l.b16 %v1376
    %v2853 = vunpack.c.h.b16 %v1376
    %v2854 = vunpack.c.l.b16 %v1377
    %v2855 = vunpack.c.l.b16 %v1378
    %v2856 = vunpack.c.h.b16 %v1378
    %v2857 = vunpack.c.l.b16 %v1379
    %v2858 = vunpack.c.h.b16 %v1379
    %v2859 = vunpack.c.l.b16 %v1380
    %v2860 = vunpack.c.h.b16 %v1380
    %v2861 = vunpack.c.l.b16 %v1381
    %v2862 = vunpack.c.h.b16 %v1381
    %v2863 = vunpack.c.l.b16 %v1382
    %v2864 = vunpack.c.h.b16 %v1382
    %v2865 = vunpack.c.l.b16 %v1383
    %v2866 = vunpack.c.h.b16 %v1383
    %v2867 = vunpack.c.l.b16 %v1384
    %v2868 = vunpack.c.h.b16 %v1384
    %v2869 = vunpack.c.l.b16 %v1385
    %v2870 = vunpack.c.h.b16 %v1385
    %v2871 = vunpack.c.l.b16 %v1386
    %v2872 = vunpack.c.h.b16 %v1386
    %v2873 = vunpack.c.l.b16 %v1387
    %v2874 = vunpack.c.h.b16 %v1387
    %v2875 = vunpack.c.l.b16 %v1388
    %v2876 = vunpack.c.l.b16 %v1389
    %v2877 = vunpack.c.h.b16 %v1389
    %v2878 = vunpack.c.l.b16 %v1390
    %v2879 = vunpack.c.h.b16 %v1390
    %v2880 = vunpack.c.l.b16 %v1391
    %v2881 = vunpack.c.h.b16 %v1391
    %v2882 = vunpack.c.l.b16 %v1392
    %v2883 = vunpack.c.h.b16 %v1392
    %v2884 = vunpack.c.l.b16 %v1393
    %v2885 = vunpack.c.h.b16 %v1393
    %v2886 = vunpack.c.l.b16 %v1394
    %v2887 = vunpack.c.h.b16 %v1394
    %v2888 = vunpack.c.l.b16 %v1395
    %v2889 = vunpack.c.h.b16 %v1395
    %v2890 = vunpack.c.l.b16 %v1396
    %v2891 = vunpack.c.h.b16 %v1396
    %v2892 = vunpack.c.l.b16 %v1397
    %v2893 = vunpack.c.h.b16 %v1397
    %v2894 = vunpack.c.l.b16 %v1398
    %v2895 = vunpack.c.h.b16 %v1398
    %v2896 = vunpack.c.l.b16 %v1399
    %v2897 = vunpack.c.l.b16 %v1400
    %v2898 = vunpack.c.h.b16 %v1400
    %v2899 = vunpack.c.l.b16 %v1401
    %v2900 = vunpack.c.h.b16 %v1401
    %v2901 = vunpack.c.l.b16 %v1402
    %v2902 = vunpack.c.h.b16 %v1402
    %v2903 = vunpack.c.l.b16 %v1403
    %v2904 = vunpack.c.h.b16 %v1403
    %v2905 = vunpack.c.l.b16 %v1404
    %v2906 = vunpack.c.h.b16 %v1404
    %v2907 = vunpack.c.l.b16 %v1405
    %v2908 = vunpack.c.h.b16 %v1405
    %v2909 = vunpack.c.l.b16 %v1406
    %v2910 = vunpack.c.h.b16 %v1406
    %v2911 = vunpack.c.l.b16 %v1407
    %v2912 = vunpack.c.h.b16 %v1407
    %v2913 = vunpack.c.l.b16 %v1408
    %v2914 = vunpack.c.h.b16 %v1408
    %v2915 = vunpack.c.l.b16 %v1409
    %v2916 = vunpack.c.h.b16 %v1409
    %v2917 = vunpack.c.l.b16 %v1410
    %v2918 = vunpack.c.l.b16 %v1411
    %v2919 = vunpack.c.h.b16 %v1411
    %v2920 = vunpack.c.l.b16 %v1412
    %v2921 = vunpack.c.h.b16 %v1412
    %v2922 = vunpack.c.l.b16 %v1413
    %v2923 = vunpack.c.h.b16 %v1413
    %v2924 = vunpack.c.l.b16 %v1414
    %v2925 = vunpack.c.h.b16 %v1414
    %v2926 = vunpack.c.l.b16 %v1415
    %v2927 = vunpack.c.h.b16 %v1415
    %v2928 = vunpack.c.l.b16 %v1416
    %v2929 = vunpack.c.h.b16 %v1416
    %v2930 = vunpack.c.l.b16 %v1417
    %v2931 = vunpack.c.h.b16 %v1417
    %v2932 = vunpack.c.l.b16 %v1418
    %v2933 = vunpack.c.h.b16 %v1418
    %v2934 = vunpack.c.l.b16 %v1419
    %v2935 = vunpack.c.h.b16 %v1419
    %v2936 = vunpack.c.l.b16 %v1420
    %v2937 = vunpack.c.h.b16 %v1420
    %v2938 = vunpack.c.l.b16 %v1421
    %v2939 = vunpack.c.l.b16 %v1422
    %v2940 = vunpack.c.h.b16 %v1422
    %v2941 = vunpack.c.l.b16 %v1423
    %v2942 = vunpack.c.h.b16 %v1423
    %v2943 = vunpack.c.l.b16 %v1424
    %v2944 = vunpack.c.h.b16 %v1424
    %v2945 = vunpack.c.l.b16 %v1425
    %v2946 = vunpack.c.h.b16 %v1425
    %v2947 = vunpack.c.l.b16 %v1426
    %v2948 = vunpack.c.h.b16 %v1426
    %v2949 = vunpack.c.l.b16 %v1427
    %v2950 = vunpack.c.h.b16 %v1427
    %v2951 = vunpack.c.l.b16 %v1428
    %v2952 = vunpack.c.h.b16 %v1428
    %v2953 = vunpack.c.l.b16 %v1429
    %v2954 = vunpack.c.h.b16 %v1429
    %v2955 = vunpack.c.l.b16 %v1430
    %v2956 = vunpack.c.h.b16 %v1430
    %v2957 = vunpack.c.l.b16 %v1431
    %v2958 = vunpack.c.h.b16 %v1431
    %v2959 = vunpack.c.l.b16 %v1432
    %v2960 = vunpack.c.l.b16 %v1433
    %v2961 = vunpack.c.h.b16 %v1433
    %v2962 = vunpack.c.l.b16 %v1434
    %v2963 = vunpack.c.h.b16 %v1434
    %v2964 = vunpack.c.l.b16 %v1435
    %v2965 = vunpack.c.h.b16 %v1435
    %v2966 = vunpack.c.l.b16 %v1436
    %v2967 = vunpack.c.h.b16 %v1436
    %v2968 = vunpack.c.l.b16 %v1437
    %v2969 = vunpack.c.h.b16 %v1437
    %v2970 = vunpack.c.l.b16 %v1438
    %v2971 = vunpack.c.h.b16 %v1438
    %v2972 = vunpack.c.l.b16 %v1439
    %v2973 = vunpack.c.h.b16 %v1439
    %v2974 = vunpack.c.l.b16 %v1440
    %v2975 = vunpack.c.h.b16 %v1440
    %v2976 = vunpack.c.l.b16 %v1441
    %v2977 = vunpack.c.h.b16 %v1441
    %v2978 = vunpack.c.l.b16 %v1442
    %v2979 = vunpack.c.h.b16 %v1442
    %v2980 = vunpack.c.l.b16 %v1443
    %v2981 = vunpack.c.l.b16 %v1444
    %v2982 = vunpack.c.h.b16 %v1444
    %v2983 = vunpack.c.l.b16 %v1445
    %v2984 = vunpack.c.h.b16 %v1445
    %v2985 = vunpack.c.l.b16 %v1446
    %v2986 = vunpack.c.h.b16 %v1446
    %v2987 = vunpack.c.l.b16 %v1447
    %v2988 = vunpack.c.h.b16 %v1447
    %v2989 = vunpack.c.l.b16 %v1448
    %v2990 = vunpack.c.h.b16 %v1448
    %v2991 = vunpack.c.l.b16 %v1449
    %v2992 = vunpack.c.h.b16 %v1449
    %v2993 = vunpack.c.l.b16 %v1450
    %v2994 = vunpack.c.h.b16 %v1450
    %v2995 = vunpack.c.l.b16 %v1451
    %v2996 = vunpack.c.h.b16 %v1451
    %v2997 = vunpack.c.l.b16 %v1452
    %v2998 = vunpack.c.h.b16 %v1452
    %v2999 = vunpack.c.l.b16 %v1453
    %v3000 = vunpack.c.h.b16 %v1453
    %v3001 = vunpack.c.l.b16 %v1454
    %v3002 = vunpack.c.l.b16 %v1455
    %v3003 = vunpack.c.h.b16 %v1455
    %v3004 = vunpack.c.l.b16 %v1456
    %v3005 = vunpack.c.h.b16 %v1456
    %v3006 = vunpack.c.l.b16 %v1457
    %v3007 = vunpack.c.h.b16 %v1457
    %v3008 = vunpack.c.l.b16 %v1458
    %v3009 = vunpack.c.h.b16 %v1458
    %v3010 = vunpack.c.l.b16 %v1459
    %v3011 = vunpack.c.h.b16 %v1459
    %v3012 = vunpack.c.l.b16 %v1460
    %v3013 = vunpack.c.h.b16 %v1460
    %v3014 = vunpack.c.l.b16 %v1461
    %v3015 = vunpack.c.h.b16 %v1461
    %v3016 = vunpack.c.l.b16 %v1462
    %v3017 = vunpack.c.h.b16 %v1462
    %v3018 = vunpack.c.l.b16 %v1463
    %v3019 = vunpack.c.h.b16 %v1463
    %v3020 = vunpack.c.l.b16 %v1464
    %v3021 = vunpack.c.h.b16 %v1464
    %v3022 = vunpack.c.l.b16 %v1465
    %v3023 = vunpack.c.l.b16 %v1466
    %v3024 = vunpack.c.h.b16 %v1466
    %v3025 = vunpack.c.l.b16 %v1467
    %v3026 = vunpack.c.h.b16 %v1467
    %v3027 = vunpack.c.l.b16 %v1468
    %v3028 = vunpack.c.h.b16 %v1468
    %v3029 = vunpack.c.l.b16 %v1469
    %v3030 = vunpack.c.h.b16 %v1469
    %v3031 = vunpack.c.l.b16 %v1470
    %v3032 = vunpack.c.h.b16 %v1470
    %v3033 = vunpack.c.l.b16 %v1471
    %v3034 = vunpack.c.h.b16 %v1471
    %v3035 = vunpack.c.l.b16 %v1472
    %v3036 = vunpack.c.h.b16 %v1472
    %v3037 = vunpack.c.l.b16 %v1473
    %v3038 = vunpack.c.h.b16 %v1473
    %v3039 = vunpack.c.l.b16 %v1474
    %v3040 = vunpack.c.h.b16 %v1474
    %v3041 = vunpack.c.l.b16 %v1475
    %v3042 = vunpack.c.h.b16 %v1475
    %v3043 = vunpack.c.l.b16 %v1476
    %v3044 = vunpack.c.l.b16 %v1477
    %v3045 = vunpack.c.h.b16 %v1477
    %v3046 = vunpack.c.l.b16 %v1478
    %v3047 = vunpack.c.h.b16 %v1478
    %v3048 = vunpack.c.l.b16 %v1479
    %v3049 = vunpack.c.h.b16 %v1479
    %v3050 = vunpack.c.l.b16 %v1480
    %v3051 = vunpack.c.h.b16 %v1480
    %v3052 = vunpack.c.l.b16 %v1481
    %v3053 = vunpack.c.h.b16 %v1481
    %v3054 = vunpack.c.l.b16 %v1482
    %v3055 = vunpack.c.h.b16 %v1482
    %v3056 = vunpack.c.l.b16 %v1483
    %v3057 = vunpack.c.h.b16 %v1483
    %v3058 = vunpack.c.l.b16 %v1484
    %v3059 = vunpack.c.h.b16 %v1484
    %v3060 = vunpack.c.l.b16 %v1485
    %v3061 = vunpack.c.h.b16 %v1485
    %v3062 = vunpack.c.l.b16 %v1486
    %v3063 = vunpack.c.h.b16 %v1486
    %v3064 = vunpack.c.l.b16 %v1487
    %v3065 = vunpack.c.l.b16 %v1488
    %v3066 = vunpack.c.h.b16 %v1488
    %v3067 = vunpack.c.l.b16 %v1489
    %v3068 = vunpack.c.h.b16 %v1489
    %v3069 = vunpack.c.l.b16 %v1490
    %v3070 = vunpack.c.h.b16 %v1490
    %v3071 = vunpack.c.l.b16 %v1491
    %v3072 = vunpack.c.h.b16 %v1491
    %v3073 = vunpack.c.l.b16 %v1492
    %v3074 = vunpack.c.h.b16 %v1492
    %v3075 = vunpack.c.l.b16 %v1493
    %v3076 = vunpack.c.h.b16 %v1493
    %v3077 = vunpack.c.l.b16 %v1494
    %v3078 = vunpack.c.h.b16 %v1494
    %v3079 = vunpack.c.l.b16 %v1495
    %v3080 = vunpack.c.h.b16 %v1495
    %v3081 = vunpack.c.l.b16 %v1496
    %v3082 = vunpack.c.h.b16 %v1496
    %v3083 = vunpack.c.l.b16 %v1497
    %v3084 = vunpack.c.h.b16 %v1497
    %v3085 = vunpack.c.l.b16 %v1498
    %v3086 = vunpack.c.l.b16 %v1499
    %v3087 = vunpack.c.h.b16 %v1499
    %v3088 = vunpack.c.l.b16 %v1500
    %v3089 = vunpack.c.h.b16 %v1500
    %v3090 = vunpack.c.l.b16 %v1501
    %v3091 = vunpack.c.h.b16 %v1501
    %v3092 = vunpack.c.l.b16 %v1502
    %v3093 = vunpack.c.h.b16 %v1502
    %v3094 = vunpack.c.l.b16 %v1503
    %v3095 = vunpack.c.h.b16 %v1503
    %v3096 = vunpack.c.l.b16 %v1504
    %v3097 = vunpack.c.h.b16 %v1504
    %v3098 = vunpack.c.l.b16 %v1505
    %v3099 = vunpack.c.h.b16 %v1505
    %v3100 = vunpack.c.l.b16 %v1506
    %v3101 = vunpack.c.h.b16 %v1506
    %v3102 = vunpack.c.l.b16 %v1507
    %v3103 = vunpack.c.h.b16 %v1507
    %v3104 = vunpack.c.l.b16 %v1508
    %v3105 = vunpack.c.h.b16 %v1508
    %v3106 = vunpack.c.l.b16 %v1509
    %v3107 = vunpack.c.l.b16 %v1510
    %v3108 = vunpack.c.h.b16 %v1510
    %v3109 = vunpack.c.l.b16 %v1511
    %v3110 = vunpack.c.h.b16 %v1511
    %v3111 = vunpack.c.l.b16 %v1512
    %v3112 = vunpack.c.h.b16 %v1512
    %v3113 = vunpack.c.l.b16 %v1513
    %v3114 = vunpack.c.h.b16 %v1513
    %v3115 = vunpack.c.l.b16 %v1514
    %v3116 = vunpack.c.h.b16 %v1514
    %v3117 = vunpack.c.l.b16 %v1515
    %v3118 = vunpack.c.h.b16 %v1515
    %v3119 = vunpack.c.l.b16 %v1516
    %v3120 = vunpack.c.h.b16 %v1516
    %v3121 = vunpack.c.l.b16 %v1517
    %v3122 = vunpack.c.h.b16 %v1517
    %v3123 = vunpack.c.l.b16 %v1518
    %v3124 = vunpack.c.h.b16 %v1518
    %v3125 = vunpack.c.l.b16 %v1519
    %v3126 = vunpack.c.h.b16 %v1519
    %v3127 = vunpack.c.l.b16 %v1520
    %v3128 = vunpack.c.l.b16 %v1521
    %v3129 = vunpack.c.h.b16 %v1521
    %v3130 = vunpack.c.l.b16 %v1522
    %v3131 = vunpack.c.h.b16 %v1522
    %v3132 = vunpack.c.l.b16 %v1523
    %v3133 = vunpack.c.h.b16 %v1523
    %v3134 = vunpack.c.l.b16 %v1524
    %v3135 = vunpack.c.h.b16 %v1524
    %v3136 = vunpack.c.l.b16 %v1525
    %v3137 = vunpack.c.h.b16 %v1525
    %v3138 = vunpack.c.l.b16 %v1526
    %v3139 = vunpack.c.h.b16 %v1526
    %v3140 = vunpack.c.l.b16 %v1527
    %v3141 = vunpack.c.h.b16 %v1527
    %v3142 = vunpack.c.l.b16 %v1528
    %v3143 = vunpack.c.h.b16 %v1528
    %v3144 = vunpack.c.l.b16 %v1529
    %v3145 = vunpack.c.h.b16 %v1529
    %v3146 = vunpack.c.l.b16 %v1530
    %v3147 = vunpack.c.h.b16 %v1530
    %v3148 = vunpack.c.l.b16 %v1531
    %v3149 = vunpack.c.l.b16 %v1532
    %v3150 = vunpack.c.h.b16 %v1532
    %v3151 = vunpack.c.l.b16 %v1533
    %v3152 = vunpack.c.h.b16 %v1533
    %v3153 = vunpack.c.l.b16 %v1534
    %v3154 = vunpack.c.h.b16 %v1534
    %v3155 = vunpack.c.l.b16 %v1535
    %v3156 = vunpack.c.h.b16 %v1535
    %v3157 = vunpack.c.l.b16 %v1536
    %v3158 = vunpack.c.h.b16 %v1536
    %v3159 = vunpack.c.l.b16 %v1537
    %v3160 = vunpack.c.h.b16 %v1537
    %v3161 = vunpack.c.l.b16 %v1538
    %v3162 = vunpack.c.h.b16 %v1538
    %v3163 = vunpack.c.l.b16 %v1539
    %v3164 = vunpack.c.h.b16 %v1539
    %v3165 = vunpack.c.l.b16 %v1540
    %v3166 = vunpack.c.h.b16 %v1540
    %v3167 = vunpack.c.l.b16 %v1541
    %v3168 = vunpack.c.h.b16 %v1541
    %v3169 = vunpack.c.l.b16 %v1542
    %v3170 = vunpack.c.l.b16 %v1543
    %v3171 = vunpack.c.h.b16 %v1543
    %v3172 = vunpack.c.l.b16 %v1544
    %v3173 = vunpack.c.h.b16 %v1544
    %v3174 = vunpack.c.l.b16 %v1545
    %v3175 = vunpack.c.h.b16 %v1545
    %v3176 = vunpack.c.l.b16 %v1546
    %v3177 = vunpack.c.h.b16 %v1546
    %v3178 = vunpack.c.l.b16 %v1547
    %v3179 = vunpack.c.h.b16 %v1547
    %v3180 = vunpack.c.l.b16 %v1548
    %v3181 = vunpack.c.h.b16 %v1548
    %v3182 = vunpack.c.l.b16 %v1549
    %v3183 = vunpack.c.h.b16 %v1549
    %v3184 = vunpack.c.l.b16 %v1550
    %v3185 = vunpack.c.h.b16 %v1550
    %v3186 = vunpack.c.l.b16 %v1551
    %v3187 = vunpack.c.h.b16 %v1551
    %v3188 = vunpack.c.l.b16 %v1552
    %v3189 = vunpack.c.h.b16 %v1552
    %v3190 = vunpack.c.l.b16 %v1553
    %v3191 = vunpack.c.l.b16 %v1554
    %v3192 = vunpack.c.h.b16 %v1554
    %v3193 = vunpack.c.l.b16 %v1555
    %v3194 = vunpack.c.h.b16 %v1555
    %v3195 = vunpack.c.l.b16 %v1556
    %v3196 = vunpack.c.h.b16 %v1556
    %v3197 = vunpack.c.l.b16 %v1557
    %v3198 = vunpack.c.h.b16 %v1557
    %v3199 = vunpack.c.l.b16 %v1558
    %v3200 = vunpack.c.h.b16 %v1558
    %v3201 = vunpack.c.l.b16 %v1559
    %v3202 = vunpack.c.h.b16 %v1559
    %v3203 = vunpack.c.l.b16 %v1560
    %v3204 = vunpack.c.h.b16 %v1560
    %v3205 = vunpack.c.l.b16 %v1561
    %v3206 = vunpack.c.h.b16 %v1561
    %v3207 = vunpack.c.l.b16 %v1562
    %v3208 = vunpack.c.h.b16 %v1562
    %v3209 = vunpack.c.l.b16 %v1563
    %v3210 = vunpack.c.h.b16 %v1563
    %v3211 = vunpack.c.l.b16 %v1564
    %v3212 = vpack.c.b16 %v2225, %v2204
    %v3213 = vpack.c.b16 %v2226, %v2205
    %v3214 = vpack.c.b16 %v2227, %v2206
    %v3215 = vpack.c.b16 %v2228, %v2207
    %v3216 = vpack.c.b16 %v2229, %v2208
    %v3217 = vpack.c.b16 %v2230, %v2209
    %v3218 = vpack.c.b16 %v2231, %v2210
    %v3219 = vpack.c.b16 %v2232, %v2211
    %v3220 = vpack.c.b16 %v2233, %v2212
    %v3221 = vpack.c.b16 %v2234, %v2213
    %v3222 = vpack.c.b16 %v2235, %v2214
    %v3223 = vpack.c.b16 %v2236, %v2215
    %v3224 = vpack.c.b16 %v2237, %v2216
    %v3225 = vpack.c.b16 %v2238, %v2217
    %v3226 = vpack.c.b16 %v2239, %v2218
    %v3227 = vpack.c.b16 %v2240, %v2219
    %v3228 = vpack.c.b16 %v2241, %v2220
    %v3229 = vpack.c.b16 %v2242, %v2221
    %v3230 = vpack.c.b16 %v2243, %v2222
    %v3231 = vpack.c.b16 %v2244, %v2223
    %v3232 = vpack.c.b16 %v2245, %v2224
    %v3233 = vpack.c.b16 %v2267, %v2246
    %v3234 = vpack.c.b16 %v2268, %v2247
    %v3235 = vpack.c.b16 %v2269, %v2248
    %v3236 = vpack.c.b16 %v2270, %v2249
    %v3237 = vpack.c.b16 %v2271, %v2250
    %v3238 = vpack.c.b16 %v2272, %v2251
    %v3239 = vpack.c.b16 %v2273, %v2252
    %v3240 = vpack.c.b16 %v2274, %v2253
    %v3241 = vpack.c.b16 %v2275, %v2254
    %v3242 = vpack.c.b16 %v2276, %v2255
    %v3243 = vpack.c.b16 %v2277, %v2256
    %v3244 = vpack.c.b16 %v2278, %v2257
    %v3245 = vpack.c.b16 %v2279, %v2258
    %v3246 = vpack.c.b16 %v2280, %v2259
    %v3247 = vpack.c.b16 %v2281, %v2260
    %v3248 = vpack.c.b16 %v2282, %v2261
    %v3249 = vpack.c.b16 %v2283, %v2262
    %v3250 = vpack.c.b16 %v2284, %v2263
    %v3251 = vpack.c.b16 %v2285, %v2264
    %v3252 = vpack.c.b16 %v2286, %v2265
    %v3253 = vpack.c.b16 %v2287, %v2266
    %v3254 = vpack.c.b16 %v2309, %v2288
    %v3255 = vpack.c.b16 %v2310, %v2289
    %v3256 = vpack.c.b16 %v2311, %v2290
    %v3257 = vpack.c.b16 %v2312, %v2291
    %v3258 = vpack.c.b16 %v2313, %v2292
    %v3259 = vpack.c.b16 %v2314, %v2293
    %v3260 = vpack.c.b16 %v2315, %v2294
    %v3261 = vpack.c.b16 %v2316, %v2295
    %v3262 = vpack.c.b16 %v2317, %v2296
    %v3263 = vpack.c.b16 %v2318, %v2297
    %v3264 = vpack.c.b16 %v2319, %v2298
    %v3265 = vpack.c.b16 %v2320, %v2299
    %v3266 = vpack.c.b16 %v2321, %v2300
    %v3267 = vpack.c.b16 %v2322, %v2301
    %v3268 = vpack.c.b16 %v2323, %v2302
    %v3269 = vpack.c.b16 %v2324, %v2303
    %v3270 = vpack.c.b16 %v2325, %v2304
    %v3271 = vpack.c.b16 %v2326, %v2305
    %v3272 = vpack.c.b16 %v2327, %v2306
    %v3273 = vpack.c.b16 %v2328, %v2307
    %v3274 = vpack.c.b16 %v2329, %v2308
    %v3275 = vpack.c.b16 %v2351, %v2330
    %v3276 = vpack.c.b16 %v2352, %v2331
    %v3277 = vpack.c.b16 %v2353, %v2332
    %v3278 = vpack.c.b16 %v2354, %v2333
    %v3279 = vpack.c.b16 %v2355, %v2334
    %v3280 = vpack.c.b16 %v2356, %v2335
    %v3281 = vpack.c.b16 %v2357, %v2336
    %v3282 = vpack.c.b16 %v2358, %v2337
    %v3283 = vpack.c.b16 %v2359, %v2338
    %v3284 = vpack.c.b16 %v2360, %v2339
    %v3285 = vpack.c.b16 %v2361, %v2340
    %v3286 = vpack.c.b16 %v2362, %v2341
    %v3287 = vpack.c.b16 %v2363, %v2342
    %v3288 = vpack.c.b16 %v2364, %v2343
    %v3289 = vpack.c.b16 %v2365, %v2344
    %v3290 = vpack.c.b16 %v2366, %v2345
    %v3291 = vpack.c.b16 %v2367, %v2346
    %v3292 = vpack.c.b16 %v2368, %v2347
    %v3293 = vpack.c.b16 %v2369, %v2348
    %v3294 = vpack.c.b16 %v2370, %v2349
    %v3295 = vpack.c.b16 %v2371, %v2350
    %v3296 = vpack.c.b16 %v2393, %v2372
    %v3297 = vpack.c.b16 %v2394, %v2373
    %v3298 = vpack.c.b16 %v2395, %v2374
    %v3299 = vpack.c.b16 %v2396, %v2375
    %v3300 = vpack.c.b16 %v2397, %v2376
    %v3301 = vpack.c.b16 %v2398, %v2377
    %v3302 = vpack.c.b16 %v2399, %v2378
    %v3303 = vpack.c.b16 %v2400, %v2379
    %v3304 = vpack.c.b16 %v2401, %v2380
    %v3305 = vpack.c.b16 %v2402, %v2381
    %v3306 = vpack.c.b16 %v2403, %v2382
    %v3307 = vpack.c.b16 %v2404, %v2383
    %v3308 = vpack.c.b16 %v2405, %v2384
    %v3309 = vpack.c.b16 %v2406, %v2385
    %v3310 = vpack.c.b16 %v2407, %v2386
    %v3311 = vpack.c.b16 %v2408, %v2387
    %v3312 = vpack.c.b16 %v2409, %v2388
    %v3313 = vpack.c.b16 %v2410, %v2389
    %v3314 = vpack.c.b16 %v2411, %v2390
    %v3315 = vpack.c.b16 %v2412, %v2391
    %v3316 = vpack.c.b16 %v2413, %v2392
    %v3317 = vpack.c.b16 %v2435, %v2414
    %v3318 = vpack.c.b16 %v2436, %v2415
    %v3319 = vpack.c.b16 %v2437, %v2416
    %v3320 = vpack.c.b16 %v2438, %v2417
    %v3321 = vpack.c.b16 %v2439, %v2418
    %v3322 = vpack.c.b16 %v2440, %v2419
    %v3323 = vpack.c.b16 %v2441, %v2420
    %v3324 = vpack.c.b16 %v2442, %v2421
    %v3325 = vpack.c.b16 %v2443, %v2422
    %v3326 = vpack.c.b16 %v2444, %v2423
    %v3327 = vpack.c.b16 %v2445, %v2424
    %v3328 = vpack.c.b16 %v2446, %v2425
    %v3329 = vpack.c.b16 %v2447, %v2426
    %v3330 = vpack.c.b16 %v2448, %v2427
    %v3331 = vpack.c.b16 %v2449, %v2428
    %v3332 = vpack.c.b16 %v2450, %v2429
    %v3333 = vpack.c.b16 %v2451, %v2430
    %v3334 = vpack.c.b16 %v2452, %v2431
    %v3335 = vpack.c.b16 %v2453, %v2432
    %v3336 = vpack.c.b16 %v2454, %v2433
    %v3337 = vpack.c.b16 %v2455, %v2434
    %v3338 = vpack.c.b16 %v2477, %v2456
    %v3339 = vpack.c.b16 %v2478, %v2457
    %v3340 = vpack.c.b16 %v2479, %v2458
    %v3341 = vpack.c.b16 %v2480, %v2459
    %v3342 = vpack.c.b16 %v2481, %v2460
    %v3343 = vpack.c.b16 %v2482, %v2461
    %v3344 = vpack.c.b16 %v2483, %v2462
    %v3345 = vpack.c.b16 %v2484, %v2463
    %v3346 = vpack.c.b16 %v2485, %v2464
    %v3347 = vpack.c.b16 %v2486, %v2465
    %v3348 = vpack.c.b16 %v2487, %v2466
    %v3349 = vpack.c.b16 %v2488, %v2467
    %v3350 = vpack.c.b16 %v2489, %v2468
    %v3351 = vpack.c.b16 %v2490, %v2469
    %v3352 = vpack.c.b16 %v2491, %v2470
    %v3353 = vpack.c.b16 %v2492, %v2471
    %v3354 = vpack.c.b16 %v2493, %v2472
    %v3355 = vpack.c.b16 %v2494, %v2473
    %v3356 = vpack.c.b16 %v2495, %v2474
    %v3357 = vpack.c.b16 %v2496, %v2475
    %v3358 = vpack.c.b16 %v2497, %v2476
    %v3359 = vpack.c.b16 %v2519, %v2498
    %v3360 = vpack.c.b16 %v2520, %v2499
    %v3361 = vpack.c.b16 %v2521, %v2500
    %v3362 = vpack.c.b16 %v2522, %v2501
    %v3363 = vpack.c.b16 %v2523, %v2502
    %v3364 = vpack.c.b16 %v2524, %v2503
    %v3365 = vpack.c.b16 %v2525, %v2504
    %v3366 = vpack.c.b16 %v2526, %v2505
    %v3367 = vpack.c.b16 %v2527, %v2506
    %v3368 = vpack.c.b16 %v2528, %v2507
    %v3369 = vpack.c.b16 %v2529, %v2508
    %v3370 = vpack.c.b16 %v2530, %v2509
    %v3371 = vpack.c.b16 %v2531, %v2510
    %v3372 = vpack.c.b16 %v2532, %v2511
    %v3373 = vpack.c.b16 %v2533, %v2512
    %v3374 = vpack.c.b16 %v2534, %v2513
    %v3375 = vpack.c.b16 %v2535, %v2514
    %v3376 = vpack.c.b16 %v2536, %v2515
    %v3377 = vpack.c.b16 %v2537, %v2516
    %v3378 = vpack.c.b16 %v2538, %v2517
    %v3379 = vpack.c.b16 %v2539, %v2518
    %v3380 = vpack.c.b16 %v2561, %v2540
    %v3381 = vpack.c.b16 %v2562, %v2541
    %v3382 = vpack.c.b16 %v2563, %v2542
    %v3383 = vpack.c.b16 %v2564, %v2543
    %v3384 = vpack.c.b16 %v2565, %v2544
    %v3385 = vpack.c.b16 %v2566, %v2545
    %v3386 = vpack.c.b16 %v2567, %v2546
    %v3387 = vpack.c.b16 %v2568, %v2547
    %v3388 = vpack.c.b16 %v2569, %v2548
    %v3389 = vpack.c.b16 %v2570, %v2549
    %v3390 = vpack.c.b16 %v2571, %v2550
    %v3391 = vpack.c.b16 %v2572, %v2551
    %v3392 = vpack.c.b16 %v2573, %v2552
    %v3393 = vpack.c.b16 %v2574, %v2553
    %v3394 = vpack.c.b16 %v2575, %v2554
    %v3395 = vpack.c.b16 %v2576, %v2555
    %v3396 = vpack.c.b16 %v2577, %v2556
    %v3397 = vpack.c.b16 %v2578, %v2557
    %v3398 = vpack.c.b16 %v2579, %v2558
    %v3399 = vpack.c.b16 %v2580, %v2559
    %v3400 = vpack.c.b16 %v2581, %v2560
    %v3401 = vpack.c.b16 %v2603, %v2582
    %v3402 = vpack.c.b16 %v2604, %v2583
    %v3403 = vpack.c.b16 %v2605, %v2584
    %v3404 = vpack.c.b16 %v2606, %v2585
    %v3405 = vpack.c.b16 %v2607, %v2586
    %v3406 = vpack.c.b16 %v2608, %v2587
    %v3407 = vpack.c.b16 %v2609, %v2588
    %v3408 = vpack.c.b16 %v2610, %v2589
    %v3409 = vpack.c.b16 %v2611, %v2590
    %v3410 = vpack.c.b16 %v2612, %v2591
    %v3411 = vpack.c.b16 %v2613, %v2592
    %v3412 = vpack.c.b16 %v2614, %v2593
    %v3413 = vpack.c.b16 %v2615, %v2594
    %v3414 = vpack.c.b16 %v2616, %v2595
    %v3415 = vpack.c.b16 %v2617, %v2596
    %v3416 = vpack.c.b16 %v2618, %v2597
    %v3417 = vpack.c.b16 %v2619, %v2598
    %v3418 = vpack.c.b16 %v2620, %v2599
    %v3419 = vpack.c.b16 %v2621, %v2600
    %v3420 = vpack.c.b16 %v2622, %v2601
    %v3421 = vpack.c.b16 %v2623, %v2602
    %v3422 = vpack.c.b16 %v2645, %v2624
    %v3423 = vpack.c.b16 %v2646, %v2625
    %v3424 = vpack.c.b16 %v2647, %v2626
    %v3425 = vpack.c.b16 %v2648, %v2627
    %v3426 = vpack.c.b16 %v2649, %v2628
    %v3427 = vpack.c.b16 %v2650, %v2629
    %v3428 = vpack.c.b16 %v2651, %v2630
    %v3429 = vpack.c.b16 %v2652, %v2631
    %v3430 = vpack.c.b16 %v2653, %v2632
    %v3431 = vpack.c.b16 %v2654, %v2633
    %v3432 = vpack.c.b16 %v2655, %v2634
    %v3433 = vpack.c.b16 %v2656, %v2635
    %v3434 = vpack.c.b16 %v2657, %v2636
    %v3435 = vpack.c.b16 %v2658, %v2637
    %v3436 = vpack.c.b16 %v2659, %v2638
    %v3437 = vpack.c.b16 %v2660, %v2639
    %v3438 = vpack.c.b16 %v2661, %v2640
    %v3439 = vpack.c.b16 %v2662, %v2641
    %v3440 = vpack.c.b16 %v2663, %v2642
    %v3441 = vpack.c.b16 %v2664, %v2643
    %v3442 = vpack.c.b16 %v2665, %v2644
    %v3443 = vpack.c.b16 %v2687, %v2666
    %v3444 = vpack.c.b16 %v2688, %v2667
    %v3445 = vpack.c.b16 %v2689, %v2668
    %v3446 = vpack.c.b16 %v2690, %v2669
    %v3447 = vpack.c.b16 %v2691, %v2670
    %v3448 = vpack.c.b16 %v2692, %v2671
    %v3449 = vpack.c.b16 %v2693, %v2672
    %v3450 = vpack.c.b16 %v2694, %v2673
    %v3451 = vpack.c.b16 %v2695, %v2674
    %v3452 = vpack.c.b16 %v2696, %v2675
    %v3453 = vpack.c.b16 %v2697, %v2676
    %v3454 = vpack.c.b16 %v2698, %v2677
    %v3455 = vpack.c.b16 %v2699, %v2678
    %v3456 = vpack.c.b16 %v2700, %v2679
    %v3457 = vpack.c.b16 %v2701, %v2680
    %v3458 = vpack.c.b16 %v2702, %v2681
    %v3459 = vpack.c.b16 %v2703, %v2682
    %v3460 = vpack.c.b16 %v2704, %v2683
    %v3461 = vpack.c.b16 %v2705, %v2684
    %v3462 = vpack.c.b16 %v2706, %v2685
    %v3463 = vpack.c.b16 %v2707, %v2686
    %v3464 = vpack.c.b16 %v2729, %v2708
    %v3465 = vpack.c.b16 %v2730, %v2709
    %v3466 = vpack.c.b16 %v2731, %v2710
    %v3467 = vpack.c.b16 %v2732, %v2711
    %v3468 = vpack.c.b16 %v2733, %v2712
    %v3469 = vpack.c.b16 %v2734, %v2713
    %v3470 = vpack.c.b16 %v2735, %v2714
    %v3471 = vpack.c.b16 %v2736, %v2715
    %v3472 = vpack.c.b16 %v2737, %v2716
    %v3473 = vpack.c.b16 %v2738, %v2717
    %v3474 = vpack.c.b16 %v2739, %v2718
    %v3475 = vpack.c.b16 %v2740, %v2719
    %v3476 = vpack.c.b16 %v2741, %v2720
    %v3477 = vpack.c.b16 %v2742, %v2721
    %v3478 = vpack.c.b16 %v2743, %v2722
    %v3479 = vpack.c.b16 %v2744, %v2723
    %v3480 = vpack.c.b16 %v2745, %v2724
    %v3481 = vpack.c.b16 %v2746, %v2725
    %v3482 = vpack.c.b16 %v2747, %v2726
    %v3483 = vpack.c.b16 %v2748, %v2727
    %v3484 = vpack.c.b16 %v2749, %v2728
    %v3485 = vpack.c.b16 %v2771, %v2750
    %v3486 = vpack.c.b16 %v2772, %v2751
    %v3487 = vpack.c.b16 %v2773, %v2752
    %v3488 = vpack.c.b16 %v2774, %v2753
    %v3489 = vpack.c.b16 %v2775, %v2754
    %v3490 = vpack.c.b16 %v2776, %v2755
    %v3491 = vpack.c.b16 %v2777, %v2756
    %v3492 = vpack.c.b16 %v2778, %v2757
    %v3493 = vpack.c.b16 %v2779, %v2758
    %v3494 = vpack.c.b16 %v2780, %v2759
    %v3495 = vpack.c.b16 %v2781, %v2760
    %v3496 = vpack.c.b16 %v2782, %v2761
    %v3497 = vpack.c.b16 %v2783, %v2762
    %v3498 = vpack.c.b16 %v2784, %v2763
    %v3499 = vpack.c.b16 %v2785, %v2764
    %v3500 = vpack.c.b16 %v2786, %v2765
    %v3501 = vpack.c.b16 %v2787, %v2766
    %v3502 = vpack.c.b16 %v2788, %v2767
    %v3503 = vpack.c.b16 %v2789, %v2768
    %v3504 = vpack.c.b16 %v2790, %v2769
    %v3505 = vpack.c.b16 %v2791, %v2770
    %v3506 = vpack.c.b16 %v2813, %v2792
    %v3507 = vpack.c.b16 %v2814, %v2793
    %v3508 = vpack.c.b16 %v2815, %v2794
    %v3509 = vpack.c.b16 %v2816, %v2795
    %v3510 = vpack.c.b16 %v2817, %v2796
    %v3511 = vpack.c.b16 %v2818, %v2797
    %v3512 = vpack.c.b16 %v2819, %v2798
    %v3513 = vpack.c.b16 %v2820, %v2799
    %v3514 = vpack.c.b16 %v2821, %v2800
    %v3515 = vpack.c.b16 %v2822, %v2801
    %v3516 = vpack.c.b16 %v2823, %v2802
    %v3517 = vpack.c.b16 %v2824, %v2803
    %v3518 = vpack.c.b16 %v2825, %v2804
    %v3519 = vpack.c.b16 %v2826, %v2805
    %v3520 = vpack.c.b16 %v2827, %v2806
    %v3521 = vpack.c.b16 %v2828, %v2807
    %v3522 = vpack.c.b16 %v2829, %v2808
    %v3523 = vpack.c.b16 %v2830, %v2809
    %v3524 = vpack.c.b16 %v2831, %v2810
    %v3525 = vpack.c.b16 %v2832, %v2811
    %v3526 = vpack.c.b16 %v2833, %v2812
    %v3527 = vpack.c.b16 %v2855, %v2834
    %v3528 = vpack.c.b16 %v2856, %v2835
    %v3529 = vpack.c.b16 %v2857, %v2836
    %v3530 = vpack.c.b16 %v2858, %v2837
    %v3531 = vpack.c.b16 %v2859, %v2838
    %v3532 = vpack.c.b16 %v2860, %v2839
    %v3533 = vpack.c.b16 %v2861, %v2840
    %v3534 = vpack.c.b16 %v2862, %v2841
    %v3535 = vpack.c.b16 %v2863, %v2842
    %v3536 = vpack.c.b16 %v2864, %v2843
    %v3537 = vpack.c.b16 %v2865, %v2844
    %v3538 = vpack.c.b16 %v2866, %v2845
    %v3539 = vpack.c.b16 %v2867, %v2846
    %v3540 = vpack.c.b16 %v2868, %v2847
    %v3541 = vpack.c.b16 %v2869, %v2848
    %v3542 = vpack.c.b16 %v2870, %v2849
    %v3543 = vpack.c.b16 %v2871, %v2850
    %v3544 = vpack.c.b16 %v2872, %v2851
    %v3545 = vpack.c.b16 %v2873, %v2852
    %v3546 = vpack.c.b16 %v2874, %v2853
    %v3547 = vpack.c.b16 %v2875, %v2854
    %v3548 = vpack.c.b16 %v2897, %v2876
    %v3549 = vpack.c.b16 %v2898, %v2877
    %v3550 = vpack.c.b16 %v2899, %v2878
    %v3551 = vpack.c.b16 %v2900, %v2879
    %v3552 = vpack.c.b16 %v2901, %v2880
    %v3553 = vpack.c.b16 %v2902, %v2881
    %v3554 = vpack.c.b16 %v2903, %v2882
    %v3555 = vpack.c.b16 %v2904, %v2883
    %v3556 = vpack.c.b16 %v2905, %v2884
    %v3557 = vpack.c.b16 %v2906, %v2885
    %v3558 = vpack.c.b16 %v2907, %v2886
    %v3559 = vpack.c.b16 %v2908, %v2887
    %v3560 = vpack.c.b16 %v2909, %v2888
    %v3561 = vpack.c.b16 %v2910, %v2889
    %v3562 = vpack.c.b16 %v2911, %v2890
    %v3563 = vpack.c.b16 %v2912, %v2891
    %v3564 = vpack.c.b16 %v2913, %v2892
    %v3565 = vpack.c.b16 %v2914, %v2893
    %v3566 = vpack.c.b16 %v2915, %v2894
    %v3567 = vpack.c.b16 %v2916, %v2895
    %v3568 = vpack.c.b16 %v2917, %v2896
    %v3569 = vpack.c.b16 %v2939, %v2918
    %v3570 = vpack.c.b16 %v2940, %v2919
    %v3571 = vpack.c.b16 %v2941, %v2920
    %v3572 = vpack.c.b16 %v2942, %v2921
    %v3573 = vpack.c.b16 %v2943, %v2922
    %v3574 = vpack.c.b16 %v2944, %v2923
    %v3575 = vpack.c.b16 %v2945, %v2924
    %v3576 = vpack.c.b16 %v2946, %v2925
    %v3577 = vpack.c.b16 %v2947, %v2926
    %v3578 = vpack.c.b16 %v2948, %v2927
    %v3579 = vpack.c.b16 %v2949, %v2928
    %v3580 = vpack.c.b16 %v2950, %v2929
    %v3581 = vpack.c.b16 %v2951, %v2930
    %v3582 = vpack.c.b16 %v2952, %v2931
    %v3583 = vpack.c.b16 %v2953, %v2932
    %v3584 = vpack.c.b16 %v2954, %v2933
    %v3585 = vpack.c.b16 %v2955, %v2934
    %v3586 = vpack.c.b16 %v2956, %v2935
    %v3587 = vpack.c.b16 %v2957, %v2936
    %v3588 = vpack.c.b16 %v2958, %v2937
    %v3589 = vpack.c.b16 %v2959, %v2938
    %v3590 = vpack.c.b16 %v2981, %v2960
    %v3591 = vpack.c.b16 %v2982, %v2961
    %v3592 = vpack.c.b16 %v2983, %v2962
    %v3593 = vpack.c.b16 %v2984, %v2963
    %v3594 = vpack.c.b16 %v2985, %v2964
    %v3595 = vpack.c.b16 %v2986, %v2965
    %v3596 = vpack.c.b16 %v2987, %v2966
    %v3597 = vpack.c.b16 %v2988, %v2967
    %v3598 = vpack.c.b16 %v2989, %v2968
    %v3599 = vpack.c.b16 %v2990, %v2969
    %v3600 = vpack.c.b16 %v2991, %v2970
    %v3601 = vpack.c.b16 %v2992, %v2971
    %v3602 = vpack.c.b16 %v2993, %v2972
    %v3603 = vpack.c.b16 %v2994, %v2973
    %v3604 = vpack.c.b16 %v2995, %v2974
    %v3605 = vpack.c.b16 %v2996, %v2975
    %v3606 = vpack.c.b16 %v2997, %v2976
    %v3607 = vpack.c.b16 %v2998, %v2977
    %v3608 = vpack.c.b16 %v2999, %v2978
    %v3609 = vpack.c.b16 %v3000, %v2979
    %v3610 = vpack.c.b16 %v3001, %v2980
    %v3611 = vpack.c.b16 %v3023, %v3002
    %v3612 = vpack.c.b16 %v3024, %v3003
    %v3613 = vpack.c.b16 %v3025, %v3004
    %v3614 = vpack.c.b16 %v3026, %v3005
    %v3615 = vpack.c.b16 %v3027, %v3006
    %v3616 = vpack.c.b16 %v3028, %v3007
    %v3617 = vpack.c.b16 %v3029, %v3008
    %v3618 = vpack.c.b16 %v3030, %v3009
    %v3619 = vpack.c.b16 %v3031, %v3010
    %v3620 = vpack.c.b16 %v3032, %v3011
    %v3621 = vpack.c.b16 %v3033, %v3012
    %v3622 = vpack.c.b16 %v3034, %v3013
    %v3623 = vpack.c.b16 %v3035, %v3014
    %v3624 = vpack.c.b16 %v3036, %v3015
    %v3625 = vpack.c.b16 %v3037, %v3016
    %v3626 = vpack.c.b16 %v3038, %v3017
    %v3627 = vpack.c.b16 %v3039, %v3018
    %v3628 = vpack.c.b16 %v3040, %v3019
    %v3629 = vpack.c.b16 %v3041, %v3020
    %v3630 = vpack.c.b16 %v3042, %v3021
    %v3631 = vpack.c.b16 %v3043, %v3022
    %v3632 = vpack.c.b16 %v3065, %v3044
    %v3633 = vpack.c.b16 %v3066, %v3045
    %v3634 = vpack.c.b16 %v3067, %v3046
    %v3635 = vpack.c.b16 %v3068, %v3047
    %v3636 = vpack.c.b16 %v3069, %v3048
    %v3637 = vpack.c.b16 %v3070, %v3049
    %v3638 = vpack.c.b16 %v3071, %v3050
    %v3639 = vpack.c.b16 %v3072, %v3051
    %v3640 = vpack.c.b16 %v3073, %v3052
    %v3641 = vpack.c.b16 %v3074, %v3053
    %v3642 = vpack.c.b16 %v3075, %v3054
    %v3643 = vpack.c.b16 %v3076, %v3055
    %v3644 = vpack.c.b16 %v3077, %v3056
    %v3645 = vpack.c.b16 %v3078, %v3057
    %v3646 = vpack.c.b16 %v3079, %v3058
    %v3647 = vpack.c.b16 %v3080, %v3059
    %v3648 = vpack.c.b16 %v3081, %v3060
    %v3649 = vpack.c.b16 %v3082, %v3061
    %v3650 = vpack.c.b16 %v3083, %v3062
    %v3651 = vpack.c.b16 %v3084, %v3063
    %v3652 = vpack.c.b16 %v3085, %v3064
    %v3653 = vpack.c.b16 %v3107, %v3086
    %v3654 = vpack.c.b16 %v3108, %v3087
    %v3655 = vpack.c.b16 %v3109, %v3088
    %v3656 = vpack.c.b16 %v3110, %v3089
    %v3657 = vpack.c.b16 %v3111, %v3090
    %v3658 = vpack.c.b16 %v3112, %v3091
    %v3659 = vpack.c.b16 %v3113, %v3092
    %v3660 = vpack.c.b16 %v3114, %v3093
    %v3661 = vpack.c.b16 %v3115, %v3094
    %v3662 = vpack.c.b16 %v3116, %v3095
    %v3663 = vpack.c.b16 %v3117, %v3096
    %v3664 = vpack.c.b16 %v3118, %v3097
    %v3665 = vpack.c.b16 %v3119, %v3098
    %v3666 = vpack.c.b16 %v3120, %v3099
    %v3667 = vpack.c.b16 %v3121, %v3100
    %v3668 = vpack.c.b16 %v3122, %v3101
    %v3669 = vpack.c.b16 %v3123, %v3102
    %v3670 = vpack.c.b16 %v3124, %v3103
    %v3671 = vpack.c.b16 %v3125, %v3104
    %v3672 = vpack.c.b16 %v3126, %v3105
    %v3673 = vpack.c.b16 %v3127, %v3106
    %v3674 = vpack.c.b16 %v3149, %v3128
    %v3675 = vpack.c.b16 %v3150, %v3129
    %v3676 = vpack.c.b16 %v3151, %v3130
    %v3677 = vpack.c.b16 %v3152, %v3131
    %v3678 = vpack.c.b16 %v3153, %v3132
    %v3679 = vpack.c.b16 %v3154, %v3133
    %v3680 = vpack.c.b16 %v3155, %v3134
    %v3681 = vpack.c.b16 %v3156, %v3135
    %v3682 = vpack.c.b16 %v3157, %v3136
    %v3683 = vpack.c.b16 %v3158, %v3137
    %v3684 = vpack.c.b16 %v3159, %v3138
    %v3685 = vpack.c.b16 %v3160, %v3139
    %v3686 = vpack.c.b16 %v3161, %v3140
    %v3687 = vpack.c.b16 %v3162, %v3141
    %v3688 = vpack.c.b16 %v3163, %v3142
    %v3689 = vpack.c.b16 %v3164, %v3143
    %v3690 = vpack.c.b16 %v3165, %v3144
    %v3691 = vpack.c.b16 %v3166, %v3145
    %v3692 = vpack.c.b16 %v3167, %v3146
    %v3693 = vpack.c.b16 %v3168, %v3147
    %v3694 = vpack.c.b16 %v3169, %v3148
    %v3695 = vpack.c.b16 %v3191, %v3170
    %v3696 = vpack.c.b16 %v3192, %v3171
    %v3697 = vpack.c.b16 %v3193, %v3172
    %v3698 = vpack.c.b16 %v3194, %v3173
    %v3699 = vpack.c.b16 %v3195, %v3174
    %v3700 = vpack.c.b16 %v3196, %v3175
    %v3701 = vpack.c.b16 %v3197, %v3176
    %v3702 = vpack.c.b16 %v3198, %v3177
    %v3703 = vpack.c.b16 %v3199, %v3178
    %v3704 = vpack.c.b16 %v3200, %v3179
    %v3705 = vpack.c.b16 %v3201, %v3180
    %v3706 = vpack.c.b16 %v3202, %v3181
    %v3707 = vpack.c.b16 %v3203, %v3182
    %v3708 = vpack.c.b16 %v3204, %v3183
    %v3709 = vpack.c.b16 %v3205, %v3184
    %v3710 = vpack.c.b16 %v3206, %v3185
    %v3711 = vpack.c.b16 %v3207, %v3186
    %v3712 = vpack.c.b16 %v3208, %v3187
    %v3713 = vpack.c.b16 %v3209, %v3188
    %v3714 = vpack.c.b16 %v3210, %v3189
    %v3715 = vpack.c.b16 %v3211, %v3190
    %4220 = vmatprep.subr.bf16.mxu0 %v3213
    %4221 = vmatpush1.bf16.msra.mxu0 %v3212
    %4222 = vmatprep.subr.bf16.mxu0 %v3234
    %4223 = vmatpush1.bf16.msra.mxu0 %v3233
    %4224 = vmatprep.subr.bf16.mxu0 %v3255
    %4225 = vmatpush1.bf16.msra.mxu0 %v3254
    %4226 = vmatprep.subr.bf16.mxu0 %v3276
    %4227 = vmatpush1.bf16.msra.mxu0 %v3275
    %4228 = vmatprep.subr.bf16.mxu0 %v3297
    %4229 = vmatpush1.bf16.msra.mxu0 %v3296
    %4230 = vmatprep.subr.bf16.mxu0 %v3318
    %4231 = vmatpush1.bf16.msra.mxu0 %v3317
    %4232 = vmatprep.subr.bf16.mxu0 %v3339
    %4233 = vmatpush1.bf16.msra.mxu0 %v3338
    %4234 = vmatprep.subr.bf16.mxu0 %v3360
    %4235 = vmatpush1.bf16.msra.mxu0 %v3359
    %4236 = vmatprep.subr.bf16.mxu0 %v3381
    %4237 = vmatpush1.bf16.msra.mxu0 %v3380
    %4238 = vmatprep.subr.bf16.mxu0 %v3402
    %4239 = vmatpush1.bf16.msra.mxu0 %v3401
    %4240 = vmatprep.subr.bf16.mxu0 %v3423
    %4241 = vmatpush1.bf16.msra.mxu0 %v3422
    %4242 = vmatprep.subr.bf16.mxu0 %v3444
    %4243 = vmatpush1.bf16.msra.mxu0 %v3443
    %4244 = vmatprep.subr.bf16.mxu0 %v3465
    %4245 = vmatpush1.bf16.msra.mxu0 %v3464
    %4246 = vmatprep.subr.bf16.mxu0 %v3486
    %4247 = vmatpush1.bf16.msra.mxu0 %v3485
    %4248 = vmatprep.subr.bf16.mxu0 %v3507
    %4249 = vmatpush1.bf16.msra.mxu0 %v3506
    %4250 = vmatprep.subr.bf16.mxu0 %v3528
    %4251 = vmatpush1.bf16.msra.mxu0 %v3527
    %4252 = vmatprep.mubr.bf16.mxu0 %v1035
    %4253 = vmatmul.mubr.bf16.gmra.mrb[0].mxu0 %v1034
    %v4254 = vpop.f32.mrb[0].mxu0
    %v4255 = vadd.f32 %v1574, %v4254
    %v4256 = vpop.f32.mrb[0].mxu0
    %v4257 = vadd.f32 %v1578, %v4256
    %v4258 = vpop.f32.mrb[0].mxu0
    %v4259 = vpop.f32.mrb[0].mxu0
    %4260 = vdwg.mxu0
    %4261 = vmatprep.subr.bf16.mxu0 %v3549
    %4262 = vmatpush1.bf16.msra.mxu0 %v3548
    %4263 = vmatprep.subr.bf16.mxu0 %v3570
    %4264 = vmatpush1.bf16.msra.mxu0 %v3569
    %4265 = vmatprep.subr.bf16.mxu0 %v3591
    %4266 = vmatpush1.bf16.msra.mxu0 %v3590
    %4267 = vmatprep.subr.bf16.mxu0 %v3612
    %4268 = vmatpush1.bf16.msra.mxu0 %v3611
    %4269 = vmatprep.subr.bf16.mxu0 %v3633
    %4270 = vmatpush1.bf16.msra.mxu0 %v3632
    %4271 = vmatprep.subr.bf16.mxu0 %v3654
    %4272 = vmatpush1.bf16.msra.mxu0 %v3653
    %4273 = vmatprep.subr.bf16.mxu0 %v3675
    %4274 = vmatpush1.bf16.msra.mxu0 %v3674
    %4275 = vmatprep.subr.bf16.mxu0 %v3696
    %4276 = vmatpush1.bf16.msra.mxu0 %v3695
    %4277 = vmatprep.subr.bf16.mxu0 0
    %4278 = vmatpush1.bf16.msra.mxu0 0
    %4279 = vmatprep.subr.bf16.mxu0 0
    %4280 = vmatpush1.bf16.msra.mxu0 0
    %4281 = vmatprep.subr.bf16.mxu0 0
    %4282 = vmatpush1.bf16.msra.mxu0 0
    %4283 = vmatprep.subr.bf16.mxu0 0
    %4284 = vmatpush1.bf16.msra.mxu0 0
    %4285 = vmatprep.subr.bf16.mxu0 0
    %4286 = vmatpush1.bf16.msra.mxu0 0
    %4287 = vmatprep.subr.bf16.mxu0 0
    %4288 = vmatpush1.bf16.msra.mxu0 0
    %4289 = vmatprep.subr.bf16.mxu0 0
    %4290 = vmatpush1.bf16.msra.mxu0 0
    %4291 = vmatprep.subr.bf16.mxu0 0
    %4292 = vmatpush1.bf16.msra.mxu0 0
    %4293 = vmatprep.mubr.bf16.mxu0 0
    %4294 = vmatmul.mubr.bf16.gmra.mrb[0].mxu0 %v1036
    %v4295 = vpop.f32.mrb[0].mxu0
    %v4296 = vadd.f32 %v4255, %v4295
    %v4297 = vpop.f32.mrb[0].mxu0
    %v4298 = vadd.f32 %v4257, %v4297
    %v4299 = vpop.f32.mrb[0].mxu0
    %v4300 = vpop.f32.mrb[0].mxu0
    %4301 = vdwg.mxu0
    %4302 = vmatprep.subr.bf16.mxu0 %v3215
    %4303 = vmatpush1.bf16.msra.mxu0 %v3214
    %4304 = vmatprep.subr.bf16.mxu0 %v3236
    %4305 = vmatpush1.bf16.msra.mxu0 %v3235
    %4306 = vmatprep.subr.bf16.mxu0 %v3257
    %4307 = vmatpush1.bf16.msra.mxu0 %v3256
    %4308 = vmatprep.subr.bf16.mxu0 %v3278
    %4309 = vmatpush1.bf16.msra.mxu0 %v3277
    %4310 = vmatprep.subr.bf16.mxu0 %v3299
    %4311 = vmatpush1.bf16.msra.mxu0 %v3298
    %4312 = vmatprep.subr.bf16.mxu0 %v3320
    %4313 = vmatpush1.bf16.msra.mxu0 %v3319
    %4314 = vmatprep.subr.bf16.mxu0 %v3341
    %4315 = vmatpush1.bf16.msra.mxu0 %v3340
    %4316 = vmatprep.subr.bf16.mxu0 %v3362
    %4317 = vmatpush1.bf16.msra.mxu0 %v3361
    %4318 = vmatprep.subr.bf16.mxu0 %v3383
    %4319 = vmatpush1.bf16.msra.mxu0 %v3382
    %4320 = vmatprep.subr.bf16.mxu0 %v3404
    %4321 = vmatpush1.bf16.msra.mxu0 %v3403
    %4322 = vmatprep.subr.bf16.mxu0 %v3425
    %4323 = vmatpush1.bf16.msra.mxu0 %v3424
    %4324 = vmatprep.subr.bf16.mxu0 %v3446
    %4325 = vmatpush1.bf16.msra.mxu0 %v3445
    %4326 = vmatprep.subr.bf16.mxu0 %v3467
    %4327 = vmatpush1.bf16.msra.mxu0 %v3466
    %4328 = vmatprep.subr.bf16.mxu0 %v3488
    %4329 = vmatpush1.bf16.msra.mxu0 %v3487
    %4330 = vmatprep.subr.bf16.mxu0 %v3509
    %4331 = vmatpush1.bf16.msra.mxu0 %v3508
    %4332 = vmatprep.subr.bf16.mxu0 %v3530
    %4333 = vmatpush1.bf16.msra.mxu0 %v3529
    %4334 = vmatprep.mubr.bf16.mxu0 %v1035
    %4335 = vmatmul.mubr.bf16.gmra.mrb[0].mxu0 %v1034
    %v4336 = vpop.f32.mrb[0].mxu0
    %v4337 = vadd.f32 %v1582, %v4336
    %v4338 = vpop.f32.mrb[0].mxu0
    %v4339 = vadd.f32 %v1586, %v4338
    %v4340 = vpop.f32.mrb[0].mxu0
    %v4341 = vpop.f32.mrb[0].mxu0
    %4342 = vdwg.mxu0
    %4343 = vmatprep.subr.bf16.mxu0 %v3551
    %4344 = vmatpush1.bf16.msra.mxu0 %v3550
    %4345 = vmatprep.subr.bf16.mxu0 %v3572
    %4346 = vmatpush1.bf16.msra.mxu0 %v3571
    %4347 = vmatprep.subr.bf16.mxu0 %v3593
    %4348 = vmatpush1.bf16.msra.mxu0 %v3592
    %4349 = vmatprep.subr.bf16.mxu0 %v3614
    %4350 = vmatpush1.bf16.msra.mxu0 %v3613
    %4351 = vmatprep.subr.bf16.mxu0 %v3635
    %4352 = vmatpush1.bf16.msra.mxu0 %v3634
    %4353 = vmatprep.subr.bf16.mxu0 %v3656
    %4354 = vmatpush1.bf16.msra.mxu0 %v3655
    %4355 = vmatprep.subr.bf16.mxu0 %v3677
    %4356 = vmatpush1.bf16.msra.mxu0 %v3676
    %4357 = vmatprep.subr.bf16.mxu0 %v3698
    %4358 = vmatpush1.bf16.msra.mxu0 %v3697
    %4359 = vmatprep.subr.bf16.mxu0 0
    %4360 = vmatpush1.bf16.msra.mxu0 0
    %4361 = vmatprep.subr.bf16.mxu0 0
    %4362 = vmatpush1.bf16.msra.mxu0 0
    %4363 = vmatprep.subr.bf16.mxu0 0
    %4364 = vmatpush1.bf16.msra.mxu0 0
    %4365 = vmatprep.subr.bf16.mxu0 0
    %4366 = vmatpush1.bf16.msra.mxu0 0
    %4367 = vmatprep.subr.bf16.mxu0 0
    %4368 = vmatpush1.bf16.msra.mxu0 0
    %4369 = vmatprep.subr.bf16.mxu0 0
    %4370 = vmatpush1.bf16.msra.mxu0 0
    %4371 = vmatprep.subr.bf16.mxu0 0
    %4372 = vmatpush1.bf16.msra.mxu0 0
    %4373 = vmatprep.subr.bf16.mxu0 0
    %4374 = vmatpush1.bf16.msra.mxu0 0
    %4375 = vmatprep.mubr.bf16.mxu0 0
    %4376 = vmatmul.mubr.bf16.gmra.mrb[0].mxu0 %v1036
    %v4377 = vpop.f32.mrb[0].mxu0
    %v4378 = vadd.f32 %v4337, %v4377
    %v4379 = vpop.f32.mrb[0].mxu0
    %v4380 = vadd.f32 %v4339, %v4379
    %v4381 = vpop.f32.mrb[0].mxu0
    %v4382 = vpop.f32.mrb[0].mxu0
    %4383 = vdwg.mxu0
    %4384 = vmatprep.subr.bf16.mxu0 %v3217
    %4385 = vmatpush1.bf16.msra.mxu0 %v3216
    %4386 = vmatprep.subr.bf16.mxu0 %v3238
    %4387 = vmatpush1.bf16.msra.mxu0 %v3237
    %4388 = vmatprep.subr.bf16.mxu0 %v3259
    %4389 = vmatpush1.bf16.msra.mxu0 %v3258
    %4390 = vmatprep.subr.bf16.mxu0 %v3280
    %4391 = vmatpush1.bf16.msra.mxu0 %v3279
    %4392 = vmatprep.subr.bf16.mxu0 %v3301
    %4393 = vmatpush1.bf16.msra.mxu0 %v3300
    %4394 = vmatprep.subr.bf16.mxu0 %v3322
    %4395 = vmatpush1.bf16.msra.mxu0 %v3321
    %4396 = vmatprep.subr.bf16.mxu0 %v3343
    %4397 = vmatpush1.bf16.msra.mxu0 %v3342
    %4398 = vmatprep.subr.bf16.mxu0 %v3364
    %4399 = vmatpush1.bf16.msra.mxu0 %v3363
    %4400 = vmatprep.subr.bf16.mxu0 %v3385
    %4401 = vmatpush1.bf16.msra.mxu0 %v3384
    %4402 = vmatprep.subr.bf16.mxu0 %v3406
    %4403 = vmatpush1.bf16.msra.mxu0 %v3405
    %4404 = vmatprep.subr.bf16.mxu0 %v3427
    %4405 = vmatpush1.bf16.msra.mxu0 %v3426
    %4406 = vmatprep.subr.bf16.mxu0 %v3448
    %4407 = vmatpush1.bf16.msra.mxu0 %v3447
    %4408 = vmatprep.subr.bf16.mxu0 %v3469
    %4409 = vmatpush1.bf16.msra.mxu0 %v3468
    %4410 = vmatprep.subr.bf16.mxu0 %v3490
    %4411 = vmatpush1.bf16.msra.mxu0 %v3489
    %4412 = vmatprep.subr.bf16.mxu0 %v3511
    %4413 = vmatpush1.bf16.msra.mxu0 %v3510
    %4414 = vmatprep.subr.bf16.mxu0 %v3532
    %4415 = vmatpush1.bf16.msra.mxu0 %v3531
    %4416 = vmatprep.mubr.bf16.mxu0 %v1035
    %4417 = vmatmul.mubr.bf16.gmra.mrb[0].mxu0 %v1034
    %v4418 = vpop.f32.mrb[0].mxu0
    %v4419 = vadd.f32 %v1590, %v4418
    %v4420 = vpop.f32.mrb[0].mxu0
    %v4421 = vadd.f32 %v1594, %v4420
    %v4422 = vpop.f32.mrb[0].mxu0
    %v4423 = vpop.f32.mrb[0].mxu0
    %4424 = vdwg.mxu0
    %4425 = vmatprep.subr.bf16.mxu0 %v3553
    %4426 = vmatpush1.bf16.msra.mxu0 %v3552
    %4427 = vmatprep.subr.bf16.mxu0 %v3574
    %4428 = vmatpush1.bf16.msra.mxu0 %v3573
    %4429 = vmatprep.subr.bf16.mxu0 %v3595
    %4430 = vmatpush1.bf16.msra.mxu0 %v3594
    %4431 = vmatprep.subr.bf16.mxu0 %v3616
    %4432 = vmatpush1.bf16.msra.mxu0 %v3615
    %4433 = vmatprep.subr.bf16.mxu0 %v3637
    %4434 = vmatpush1.bf16.msra.mxu0 %v3636
    %4435 = vmatprep.subr.bf16.mxu0 %v3658
    %4436 = vmatpush1.bf16.msra.mxu0 %v3657
    %4437 = vmatprep.subr.bf16.mxu0 %v3679
    %4438 = vmatpush1.bf16.msra.mxu0 %v3678
    %4439 = vmatprep.subr.bf16.mxu0 %v3700
    %4440 = vmatpush1.bf16.msra.mxu0 %v3699
    %4441 = vmatprep.subr.bf16.mxu0 0
    %4442 = vmatpush1.bf16.msra.mxu0 0
    %4443 = vmatprep.subr.bf16.mxu0 0
    %4444 = vmatpush1.bf16.msra.mxu0 0
    %4445 = vmatprep.subr.bf16.mxu0 0
    %4446 = vmatpush1.bf16.msra.mxu0 0
    %4447 = vmatprep.subr.bf16.mxu0 0
    %4448 = vmatpush1.bf16.msra.mxu0 0
    %4449 = vmatprep.subr.bf16.mxu0 0
    %4450 = vmatpush1.bf16.msra.mxu0 0
    %4451 = vmatprep.subr.bf16.mxu0 0
    %4452 = vmatpush1.bf16.msra.mxu0 0
    %4453 = vmatprep.subr.bf16.mxu0 0
    %4454 = vmatpush1.bf16.msra.mxu0 0
    %4455 = vmatprep.subr.bf16.mxu0 0
    %4456 = vmatpush1.bf16.msra.mxu0 0
    %4457 = vmatprep.mubr.bf16.mxu0 0
    %4458 = vmatmul.mubr.bf16.gmra.mrb[0].mxu0 %v1036
    %v4459 = vpop.f32.mrb[0].mxu0
    %v4460 = vadd.f32 %v4419, %v4459
    %v4461 = vpop.f32.mrb[0].mxu0
    %v4462 = vadd.f32 %v4421, %v4461
    %v4463 = vpop.f32.mrb[0].mxu0
    %v4464 = vpop.f32.mrb[0].mxu0
    %4465 = vdwg.mxu0
    %4466 = vmatprep.subr.bf16.mxu0 %v3219
    %4467 = vmatpush1.bf16.msra.mxu0 %v3218
    %4468 = vmatprep.subr.bf16.mxu0 %v3240
    %4469 = vmatpush1.bf16.msra.mxu0 %v3239
    %4470 = vmatprep.subr.bf16.mxu0 %v3261
    %4471 = vmatpush1.bf16.msra.mxu0 %v3260
    %4472 = vmatprep.subr.bf16.mxu0 %v3282
    %4473 = vmatpush1.bf16.msra.mxu0 %v3281
    %4474 = vmatprep.subr.bf16.mxu0 %v3303
    %4475 = vmatpush1.bf16.msra.mxu0 %v3302
    %4476 = vmatprep.subr.bf16.mxu0 %v3324
    %4477 = vmatpush1.bf16.msra.mxu0 %v3323
    %4478 = vmatprep.subr.bf16.mxu0 %v3345
    %4479 = vmatpush1.bf16.msra.mxu0 %v3344
    %4480 = vmatprep.subr.bf16.mxu0 %v3366
    %4481 = vmatpush1.bf16.msra.mxu0 %v3365
    %4482 = vmatprep.subr.bf16.mxu0 %v3387
    %4483 = vmatpush1.bf16.msra.mxu0 %v3386
    %4484 = vmatprep.subr.bf16.mxu0 %v3408
    %4485 = vmatpush1.bf16.msra.mxu0 %v3407
    %4486 = vmatprep.subr.bf16.mxu0 %v3429
    %4487 = vmatpush1.bf16.msra.mxu0 %v3428
    %4488 = vmatprep.subr.bf16.mxu0 %v3450
    %4489 = vmatpush1.bf16.msra.mxu0 %v3449
    %4490 = vmatprep.subr.bf16.mxu0 %v3471
    %4491 = vmatpush1.bf16.msra.mxu0 %v3470
    %4492 = vmatprep.subr.bf16.mxu0 %v3492
    %4493 = vmatpush1.bf16.msra.mxu0 %v3491
    %4494 = vmatprep.subr.bf16.mxu0 %v3513
    %4495 = vmatpush1.bf16.msra.mxu0 %v3512
    %4496 = vmatprep.subr.bf16.mxu0 %v3534
    %4497 = vmatpush1.bf16.msra.mxu0 %v3533
    %4498 = vmatprep.mubr.bf16.mxu0 %v1035
    %4499 = vmatmul.mubr.bf16.gmra.mrb[0].mxu0 %v1034
    %v4500 = vpop.f32.mrb[0].mxu0
    %v4501 = vadd.f32 %v1598, %v4500
    %v4502 = vpop.f32.mrb[0].mxu0
    %v4503 = vadd.f32 %v1602, %v4502
    %v4504 = vpop.f32.mrb[0].mxu0
    %v4505 = vpop.f32.mrb[0].mxu0
    %4506 = vdwg.mxu0
    %4507 = vmatprep.subr.bf16.mxu0 %v3555
    %4508 = vmatpush1.bf16.msra.mxu0 %v3554
    %4509 = vmatprep.subr.bf16.mxu0 %v3576
    %4510 = vmatpush1.bf16.msra.mxu0 %v3575
    %4511 = vmatprep.subr.bf16.mxu0 %v3597
    %4512 = vmatpush1.bf16.msra.mxu0 %v3596
    %4513 = vmatprep.subr.bf16.mxu0 %v3618
    %4514 = vmatpush1.bf16.msra.mxu0 %v3617
    %4515 = vmatprep.subr.bf16.mxu0 %v3639
    %4516 = vmatpush1.bf16.msra.mxu0 %v3638
    %4517 = vmatprep.subr.bf16.mxu0 %v3660
    %4518 = vmatpush1.bf16.msra.mxu0 %v3659
    %4519 = vmatprep.subr.bf16.mxu0 %v3681
    %4520 = vmatpush1.bf16.msra.mxu0 %v3680
    %4521 = vmatprep.subr.bf16.mxu0 %v3702
    %4522 = vmatpush1.bf16.msra.mxu0 %v3701
    %4523 = vmatprep.subr.bf16.mxu0 0
    %4524 = vmatpush1.bf16.msra.mxu0 0
    %4525 = vmatprep.subr.bf16.mxu0 0
    %4526 = vmatpush1.bf16.msra.mxu0 0
    %4527 = vmatprep.subr.bf16.mxu0 0
    %4528 = vmatpush1.bf16.msra.mxu0 0
    %4529 = vmatprep.subr.bf16.mxu0 0
    %4530 = vmatpush1.bf16.msra.mxu0 0
    %4531 = vmatprep.subr.bf16.mxu0 0
    %4532 = vmatpush1.bf16.msra.mxu0 0
    %4533 = vmatprep.subr.bf16.mxu0 0
    %4534 = vmatpush1.bf16.msra.mxu0 0
    %4535 = vmatprep.subr.bf16.mxu0 0
    %4536 = vmatpush1.bf16.msra.mxu0 0
    %4537 = vmatprep.subr.bf16.mxu0 0
    %4538 = vmatpush1.bf16.msra.mxu0 0
    %4539 = vmatprep.mubr.bf16.mxu0 0
    %4540 = vmatmul.mubr.bf16.gmra.mrb[0].mxu0 %v1036
    %v4541 = vpop.f32.mrb[0].mxu0
    %v4542 = vadd.f32 %v4501, %v4541
    %v4543 = vpop.f32.mrb[0].mxu0
    %v4544 = vadd.f32 %v4503, %v4543
    %v4545 = vpop.f32.mrb[0].mxu0
    %v4546 = vpop.f32.mrb[0].mxu0
    %4547 = vdwg.mxu0
    %4548 = vmatprep.subr.bf16.mxu0 %v3221
    %4549 = vmatpush1.bf16.msra.mxu0 %v3220
    %4550 = vmatprep.subr.bf16.mxu0 %v3242
    %4551 = vmatpush1.bf16.msra.mxu0 %v3241
    %4552 = vmatprep.subr.bf16.mxu0 %v3263
    %4553 = vmatpush1.bf16.msra.mxu0 %v3262
    %4554 = vmatprep.subr.bf16.mxu0 %v3284
    %4555 = vmatpush1.bf16.msra.mxu0 %v3283
    %4556 = vmatprep.subr.bf16.mxu0 %v3305
    %4557 = vmatpush1.bf16.msra.mxu0 %v3304
    %4558 = vmatprep.subr.bf16.mxu0 %v3326
    %4559 = vmatpush1.bf16.msra.mxu0 %v3325
    %4560 = vmatprep.subr.bf16.mxu0 %v3347
    %4561 = vmatpush1.bf16.msra.mxu0 %v3346
    %4562 = vmatprep.subr.bf16.mxu0 %v3368
    %4563 = vmatpush1.bf16.msra.mxu0 %v3367
    %4564 = vmatprep.subr.bf16.mxu0 %v3389
    %4565 = vmatpush1.bf16.msra.mxu0 %v3388
    %4566 = vmatprep.subr.bf16.mxu0 %v3410
    %4567 = vmatpush1.bf16.msra.mxu0 %v3409
    %4568 = vmatprep.subr.bf16.mxu0 %v3431
    %4569 = vmatpush1.bf16.msra.mxu0 %v3430
    %4570 = vmatprep.subr.bf16.mxu0 %v3452
    %4571 = vmatpush1.bf16.msra.mxu0 %v3451
    %4572 = vmatprep.subr.bf16.mxu0 %v3473
    %4573 = vmatpush1.bf16.msra.mxu0 %v3472
    %4574 = vmatprep.subr.bf16.mxu0 %v3494
    %4575 = vmatpush1.bf16.msra.mxu0 %v3493
    %4576 = vmatprep.subr.bf16.mxu0 %v3515
    %4577 = vmatpush1.bf16.msra.mxu0 %v3514
    %4578 = vmatprep.subr.bf16.mxu0 %v3536
    %4579 = vmatpush1.bf16.msra.mxu0 %v3535
    %4580 = vmatprep.mubr.bf16.mxu0 %v1035
    %4581 = vmatmul.mubr.bf16.gmra.mrb[0].mxu0 %v1034
    %v4582 = vpop.f32.mrb[0].mxu0
    %v4583 = vadd.f32 %v1606, %v4582
    %v4584 = vpop.f32.mrb[0].mxu0
    %v4585 = vadd.f32 %v1610, %v4584
    %v4586 = vpop.f32.mrb[0].mxu0
    %v4587 = vpop.f32.mrb[0].mxu0
    %4588 = vdwg.mxu0
    %4589 = vmatprep.subr.bf16.mxu0 %v3557
    %4590 = vmatpush1.bf16.msra.mxu0 %v3556
    %4591 = vmatprep.subr.bf16.mxu0 %v3578
    %4592 = vmatpush1.bf16.msra.mxu0 %v3577
    %4593 = vmatprep.subr.bf16.mxu0 %v3599
    %4594 = vmatpush1.bf16.msra.mxu0 %v3598
    %4595 = vmatprep.subr.bf16.mxu0 %v3620
    %4596 = vmatpush1.bf16.msra.mxu0 %v3619
    %4597 = vmatprep.subr.bf16.mxu0 %v3641
    %4598 = vmatpush1.bf16.msra.mxu0 %v3640
    %4599 = vmatprep.subr.bf16.mxu0 %v3662
    %4600 = vmatpush1.bf16.msra.mxu0 %v3661
    %4601 = vmatprep.subr.bf16.mxu0 %v3683
    %4602 = vmatpush1.bf16.msra.mxu0 %v3682
    %4603 = vmatprep.subr.bf16.mxu0 %v3704
    %4604 = vmatpush1.bf16.msra.mxu0 %v3703
    %4605 = vmatprep.subr.bf16.mxu0 0
    %4606 = vmatpush1.bf16.msra.mxu0 0
    %4607 = vmatprep.subr.bf16.mxu0 0
    %4608 = vmatpush1.bf16.msra.mxu0 0
    %4609 = vmatprep.subr.bf16.mxu0 0
    %4610 = vmatpush1.bf16.msra.mxu0 0
    %4611 = vmatprep.subr.bf16.mxu0 0
    %4612 = vmatpush1.bf16.msra.mxu0 0
    %4613 = vmatprep.subr.bf16.mxu0 0
    %4614 = vmatpush1.bf16.msra.mxu0 0
    %4615 = vmatprep.subr.bf16.mxu0 0
    %4616 = vmatpush1.bf16.msra.mxu0 0
    %4617 = vmatprep.subr.bf16.mxu0 0
    %4618 = vmatpush1.bf16.msra.mxu0 0
    %4619 = vmatprep.subr.bf16.mxu0 0
    %4620 = vmatpush1.bf16.msra.mxu0 0
    %4621 = vmatprep.mubr.bf16.mxu0 0
    %4622 = vmatmul.mubr.bf16.gmra.mrb[0].mxu0 %v1036
    %v4623 = vpop.f32.mrb[0].mxu0
    %v4624 = vadd.f32 %v4583, %v4623
    %v4625 = vpop.f32.mrb[0].mxu0
    %v4626 = vadd.f32 %v4585, %v4625
    %v4627 = vpop.f32.mrb[0].mxu0
    %v4628 = vpop.f32.mrb[0].mxu0
    %4629 = vdwg.mxu0
    %4630 = vmatprep.subr.bf16.mxu0 %v3223
    %4631 = vmatpush1.bf16.msra.mxu0 %v3222
    %4632 = vmatprep.subr.bf16.mxu0 %v3244
    %4633 = vmatpush1.bf16.msra.mxu0 %v3243
    %4634 = vmatprep.subr.bf16.mxu0 %v3265
    %4635 = vmatpush1.bf16.msra.mxu0 %v3264
    %4636 = vmatprep.subr.bf16.mxu0 %v3286
    %4637 = vmatpush1.bf16.msra.mxu0 %v3285
    %4638 = vmatprep.subr.bf16.mxu0 %v3307
    %4639 = vmatpush1.bf16.msra.mxu0 %v3306
    %4640 = vmatprep.subr.bf16.mxu0 %v3328
    %4641 = vmatpush1.bf16.msra.mxu0 %v3327
    %4642 = vmatprep.subr.bf16.mxu0 %v3349
    %4643 = vmatpush1.bf16.msra.mxu0 %v3348
    %4644 = vmatprep.subr.bf16.mxu0 %v3370
    %4645 = vmatpush1.bf16.msra.mxu0 %v3369
    %4646 = vmatprep.subr.bf16.mxu0 %v3391
    %4647 = vmatpush1.bf16.msra.mxu0 %v3390
    %4648 = vmatprep.subr.bf16.mxu0 %v3412
    %4649 = vmatpush1.bf16.msra.mxu0 %v3411
    %4650 = vmatprep.subr.bf16.mxu0 %v3433
    %4651 = vmatpush1.bf16.msra.mxu0 %v3432
    %4652 = vmatprep.subr.bf16.mxu0 %v3454
    %4653 = vmatpush1.bf16.msra.mxu0 %v3453
    %4654 = vmatprep.subr.bf16.mxu0 %v3475
    %4655 = vmatpush1.bf16.msra.mxu0 %v3474
    %4656 = vmatprep.subr.bf16.mxu0 %v3496
    %4657 = vmatpush1.bf16.msra.mxu0 %v3495
    %4658 = vmatprep.subr.bf16.mxu0 %v3517
    %4659 = vmatpush1.bf16.msra.mxu0 %v3516
    %4660 = vmatprep.subr.bf16.mxu0 %v3538
    %4661 = vmatpush1.bf16.msra.mxu0 %v3537
    %4662 = vmatprep.mubr.bf16.mxu0 %v1035
    %4663 = vmatmul.mubr.bf16.gmra.mrb[0].mxu0 %v1034
    %v4664 = vpop.f32.mrb[0].mxu0
    %v4665 = vadd.f32 %v1614, %v4664
    %v4666 = vpop.f32.mrb[0].mxu0
    %v4667 = vadd.f32 %v1618, %v4666
    %v4668 = vpop.f32.mrb[0].mxu0
    %v4669 = vpop.f32.mrb[0].mxu0
    %4670 = vdwg.mxu0
    %4671 = vmatprep.subr.bf16.mxu0 %v3559
    %4672 = vmatpush1.bf16.msra.mxu0 %v3558
    %4673 = vmatprep.subr.bf16.mxu0 %v3580
    %4674 = vmatpush1.bf16.msra.mxu0 %v3579
    %4675 = vmatprep.subr.bf16.mxu0 %v3601
    %4676 = vmatpush1.bf16.msra.mxu0 %v3600
    %4677 = vmatprep.subr.bf16.mxu0 %v3622
    %4678 = vmatpush1.bf16.msra.mxu0 %v3621
    %4679 = vmatprep.subr.bf16.mxu0 %v3643
    %4680 = vmatpush1.bf16.msra.mxu0 %v3642
    %4681 = vmatprep.subr.bf16.mxu0 %v3664
    %4682 = vmatpush1.bf16.msra.mxu0 %v3663
    %4683 = vmatprep.subr.bf16.mxu0 %v3685
    %4684 = vmatpush1.bf16.msra.mxu0 %v3684
    %4685 = vmatprep.subr.bf16.mxu0 %v3706
    %4686 = vmatpush1.bf16.msra.mxu0 %v3705
    %4687 = vmatprep.subr.bf16.mxu0 0
    %4688 = vmatpush1.bf16.msra.mxu0 0
    %4689 = vmatprep.subr.bf16.mxu0 0
    %4690 = vmatpush1.bf16.msra.mxu0 0
    %4691 = vmatprep.subr.bf16.mxu0 0
    %4692 = vmatpush1.bf16.msra.mxu0 0
    %4693 = vmatprep.subr.bf16.mxu0 0
    %4694 = vmatpush1.bf16.msra.mxu0 0
    %4695 = vmatprep.subr.bf16.mxu0 0
    %4696 = vmatpush1.bf16.msra.mxu0 0
    %4697 = vmatprep.subr.bf16.mxu0 0
    %4698 = vmatpush1.bf16.msra.mxu0 0
    %4699 = vmatprep.subr.bf16.mxu0 0
    %4700 = vmatpush1.bf16.msra.mxu0 0
    %4701 = vmatprep.subr.bf16.mxu0 0
    %4702 = vmatpush1.bf16.msra.mxu0 0
    %4703 = vmatprep.mubr.bf16.mxu0 0
    %4704 = vmatmul.mubr.bf16.gmra.mrb[0].mxu0 %v1036
    %v4705 = vpop.f32.mrb[0].mxu0
    %v4706 = vadd.f32 %v4665, %v4705
    %v4707 = vpop.f32.mrb[0].mxu0
    %v4708 = vadd.f32 %v4667, %v4707
    %v4709 = vpop.f32.mrb[0].mxu0
    %v4710 = vpop.f32.mrb[0].mxu0
    %4711 = vdwg.mxu0
    %4712 = vmatprep.subr.bf16.mxu0 %v3225
    %4713 = vmatpush1.bf16.msra.mxu0 %v3224
    %4714 = vmatprep.subr.bf16.mxu0 %v3246
    %4715 = vmatpush1.bf16.msra.mxu0 %v3245
    %4716 = vmatprep.subr.bf16.mxu0 %v3267
    %4717 = vmatpush1.bf16.msra.mxu0 %v3266
    %4718 = vmatprep.subr.bf16.mxu0 %v3288
    %4719 = vmatpush1.bf16.msra.mxu0 %v3287
    %4720 = vmatprep.subr.bf16.mxu0 %v3309
    %4721 = vmatpush1.bf16.msra.mxu0 %v3308
    %4722 = vmatprep.subr.bf16.mxu0 %v3330
    %4723 = vmatpush1.bf16.msra.mxu0 %v3329
    %4724 = vmatprep.subr.bf16.mxu0 %v3351
    %4725 = vmatpush1.bf16.msra.mxu0 %v3350
    %4726 = vmatprep.subr.bf16.mxu0 %v3372
    %4727 = vmatpush1.bf16.msra.mxu0 %v3371
    %4728 = vmatprep.subr.bf16.mxu0 %v3393
    %4729 = vmatpush1.bf16.msra.mxu0 %v3392
    %4730 = vmatprep.subr.bf16.mxu0 %v3414
    %4731 = vmatpush1.bf16.msra.mxu0 %v3413
    %4732 = vmatprep.subr.bf16.mxu0 %v3435
    %4733 = vmatpush1.bf16.msra.mxu0 %v3434
    %4734 = vmatprep.subr.bf16.mxu0 %v3456
    %4735 = vmatpush1.bf16.msra.mxu0 %v3455
    %4736 = vmatprep.subr.bf16.mxu0 %v3477
    %4737 = vmatpush1.bf16.msra.mxu0 %v3476
    %4738 = vmatprep.subr.bf16.mxu0 %v3498
    %4739 = vmatpush1.bf16.msra.mxu0 %v3497
    %4740 = vmatprep.subr.bf16.mxu0 %v3519
    %4741 = vmatpush1.bf16.msra.mxu0 %v3518
    %4742 = vmatprep.subr.bf16.mxu0 %v3540
    %4743 = vmatpush1.bf16.msra.mxu0 %v3539
    %4744 = vmatprep.mubr.bf16.mxu0 %v1035
    %4745 = vmatmul.mubr.bf16.gmra.mrb[0].mxu0 %v1034
    %v4746 = vpop.f32.mrb[0].mxu0
    %v4747 = vadd.f32 %v1622, %v4746
    %v4748 = vpop.f32.mrb[0].mxu0
    %v4749 = vadd.f32 %v1626, %v4748
    %v4750 = vpop.f32.mrb[0].mxu0
    %v4751 = vpop.f32.mrb[0].mxu0
    %4752 = vdwg.mxu0
    %4753 = vmatprep.subr.bf16.mxu0 %v3561
    %4754 = vmatpush1.bf16.msra.mxu0 %v3560
    %4755 = vmatprep.subr.bf16.mxu0 %v3582
    %4756 = vmatpush1.bf16.msra.mxu0 %v3581
    %4757 = vmatprep.subr.bf16.mxu0 %v3603
    %4758 = vmatpush1.bf16.msra.mxu0 %v3602
    %4759 = vmatprep.subr.bf16.mxu0 %v3624
    %4760 = vmatpush1.bf16.msra.mxu0 %v3623
    %4761 = vmatprep.subr.bf16.mxu0 %v3645
    %4762 = vmatpush1.bf16.msra.mxu0 %v3644
    %4763 = vmatprep.subr.bf16.mxu0 %v3666
    %4764 = vmatpush1.bf16.msra.mxu0 %v3665
    %4765 = vmatprep.subr.bf16.mxu0 %v3687
    %4766 = vmatpush1.bf16.msra.mxu0 %v3686
    %4767 = vmatprep.subr.bf16.mxu0 %v3708
    %4768 = vmatpush1.bf16.msra.mxu0 %v3707
    %4769 = vmatprep.subr.bf16.mxu0 0
    %4770 = vmatpush1.bf16.msra.mxu0 0
    %4771 = vmatprep.subr.bf16.mxu0 0
    %4772 = vmatpush1.bf16.msra.mxu0 0
    %4773 = vmatprep.subr.bf16.mxu0 0
    %4774 = vmatpush1.bf16.msra.mxu0 0
    %4775 = vmatprep.subr.bf16.mxu0 0
    %4776 = vmatpush1.bf16.msra.mxu0 0
    %4777 = vmatprep.subr.bf16.mxu0 0
    %4778 = vmatpush1.bf16.msra.mxu0 0
    %4779 = vmatprep.subr.bf16.mxu0 0
    %4780 = vmatpush1.bf16.msra.mxu0 0
    %4781 = vmatprep.subr.bf16.mxu0 0
    %4782 = vmatpush1.bf16.msra.mxu0 0
    %4783 = vmatprep.subr.bf16.mxu0 0
    %4784 = vmatpush1.bf16.msra.mxu0 0
    %4785 = vmatprep.mubr.bf16.mxu0 0
    %4786 = vmatmul.mubr.bf16.gmra.mrb[0].mxu0 %v1036
    %v4787 = vpop.f32.mrb[0].mxu0
    %v4788 = vadd.f32 %v4747, %v4787
    %v4789 = vpop.f32.mrb[0].mxu0
    %v4790 = vadd.f32 %v4749, %v4789
    %v4791 = vpop.f32.mrb[0].mxu0
    %v4792 = vpop.f32.mrb[0].mxu0
    %4793 = vdwg.mxu0
    %4794 = vmatprep.subr.bf16.mxu0 %v3227
    %4795 = vmatpush1.bf16.msra.mxu0 %v3226
    %4796 = vmatprep.subr.bf16.mxu0 %v3248
    %4797 = vmatpush1.bf16.msra.mxu0 %v3247
    %4798 = vmatprep.subr.bf16.mxu0 %v3269
    %4799 = vmatpush1.bf16.msra.mxu0 %v3268
    %4800 = vmatprep.subr.bf16.mxu0 %v3290
    %4801 = vmatpush1.bf16.msra.mxu0 %v3289
    %4802 = vmatprep.subr.bf16.mxu0 %v3311
    %4803 = vmatpush1.bf16.msra.mxu0 %v3310
    %4804 = vmatprep.subr.bf16.mxu0 %v3332
    %4805 = vmatpush1.bf16.msra.mxu0 %v3331
    %4806 = vmatprep.subr.bf16.mxu0 %v3353
    %4807 = vmatpush1.bf16.msra.mxu0 %v3352
    %4808 = vmatprep.subr.bf16.mxu0 %v3374
    %4809 = vmatpush1.bf16.msra.mxu0 %v3373
    %4810 = vmatprep.subr.bf16.mxu0 %v3395
    %4811 = vmatpush1.bf16.msra.mxu0 %v3394
    %4812 = vmatprep.subr.bf16.mxu0 %v3416
    %4813 = vmatpush1.bf16.msra.mxu0 %v3415
    %4814 = vmatprep.subr.bf16.mxu0 %v3437
    %4815 = vmatpush1.bf16.msra.mxu0 %v3436
    %4816 = vmatprep.subr.bf16.mxu0 %v3458
    %4817 = vmatpush1.bf16.msra.mxu0 %v3457
    %4818 = vmatprep.subr.bf16.mxu0 %v3479
    %4819 = vmatpush1.bf16.msra.mxu0 %v3478
    %4820 = vmatprep.subr.bf16.mxu0 %v3500
    %4821 = vmatpush1.bf16.msra.mxu0 %v3499
    %4822 = vmatprep.subr.bf16.mxu0 %v3521
    %4823 = vmatpush1.bf16.msra.mxu0 %v3520
    %4824 = vmatprep.subr.bf16.mxu0 %v3542
    %4825 = vmatpush1.bf16.msra.mxu0 %v3541
    %4826 = vmatprep.mubr.bf16.mxu0 %v1035
    %4827 = vmatmul.mubr.bf16.gmra.mrb[0].mxu0 %v1034
    %v4828 = vpop.f32.mrb[0].mxu0
    %v4829 = vadd.f32 %v1630, %v4828
    %v4830 = vpop.f32.mrb[0].mxu0
    %v4831 = vadd.f32 %v1634, %v4830
    %v4832 = vpop.f32.mrb[0].mxu0
    %v4833 = vpop.f32.mrb[0].mxu0
    %4834 = vdwg.mxu0
    %4835 = vmatprep.subr.bf16.mxu0 %v3563
    %4836 = vmatpush1.bf16.msra.mxu0 %v3562
    %4837 = vmatprep.subr.bf16.mxu0 %v3584
    %4838 = vmatpush1.bf16.msra.mxu0 %v3583
    %4839 = vmatprep.subr.bf16.mxu0 %v3605
    %4840 = vmatpush1.bf16.msra.mxu0 %v3604
    %4841 = vmatprep.subr.bf16.mxu0 %v3626
    %4842 = vmatpush1.bf16.msra.mxu0 %v3625
    %4843 = vmatprep.subr.bf16.mxu0 %v3647
    %4844 = vmatpush1.bf16.msra.mxu0 %v3646
    %4845 = vmatprep.subr.bf16.mxu0 %v3668
    %4846 = vmatpush1.bf16.msra.mxu0 %v3667
    %4847 = vmatprep.subr.bf16.mxu0 %v3689
    %4848 = vmatpush1.bf16.msra.mxu0 %v3688
    %4849 = vmatprep.subr.bf16.mxu0 %v3710
    %4850 = vmatpush1.bf16.msra.mxu0 %v3709
    %4851 = vmatprep.subr.bf16.mxu0 0
    %4852 = vmatpush1.bf16.msra.mxu0 0
    %4853 = vmatprep.subr.bf16.mxu0 0
    %4854 = vmatpush1.bf16.msra.mxu0 0
    %4855 = vmatprep.subr.bf16.mxu0 0
    %4856 = vmatpush1.bf16.msra.mxu0 0
    %4857 = vmatprep.subr.bf16.mxu0 0
    %4858 = vmatpush1.bf16.msra.mxu0 0
    %4859 = vmatprep.subr.bf16.mxu0 0
    %4860 = vmatpush1.bf16.msra.mxu0 0
    %4861 = vmatprep.subr.bf16.mxu0 0
    %4862 = vmatpush1.bf16.msra.mxu0 0
    %4863 = vmatprep.subr.bf16.mxu0 0
    %4864 = vmatpush1.bf16.msra.mxu0 0
    %4865 = vmatprep.subr.bf16.mxu0 0
    %4866 = vmatpush1.bf16.msra.mxu0 0
    %4867 = vmatprep.mubr.bf16.mxu0 0
    %4868 = vmatmul.mubr.bf16.gmra.mrb[0].mxu0 %v1036
    %v4869 = vpop.f32.mrb[0].mxu0
    %v4870 = vadd.f32 %v4829, %v4869
    %v4871 = vpop.f32.mrb[0].mxu0
    %v4872 = vadd.f32 %v4831, %v4871
    %v4873 = vpop.f32.mrb[0].mxu0
    %v4874 = vpop.f32.mrb[0].mxu0
    %4875 = vdwg.mxu0
    %4876 = vmatprep.subr.bf16.mxu0 %v3229
    %4877 = vmatpush1.bf16.msra.mxu0 %v3228
    %4878 = vmatprep.subr.bf16.mxu0 %v3250
    %4879 = vmatpush1.bf16.msra.mxu0 %v3249
    %4880 = vmatprep.subr.bf16.mxu0 %v3271
    %4881 = vmatpush1.bf16.msra.mxu0 %v3270
    %4882 = vmatprep.subr.bf16.mxu0 %v3292
    %4883 = vmatpush1.bf16.msra.mxu0 %v3291
    %4884 = vmatprep.subr.bf16.mxu0 %v3313
    %4885 = vmatpush1.bf16.msra.mxu0 %v3312
    %4886 = vmatprep.subr.bf16.mxu0 %v3334
    %4887 = vmatpush1.bf16.msra.mxu0 %v3333
    %4888 = vmatprep.subr.bf16.mxu0 %v3355
    %4889 = vmatpush1.bf16.msra.mxu0 %v3354
    %4890 = vmatprep.subr.bf16.mxu0 %v3376
    %4891 = vmatpush1.bf16.msra.mxu0 %v3375
    %4892 = vmatprep.subr.bf16.mxu0 %v3397
    %4893 = vmatpush1.bf16.msra.mxu0 %v3396
    %4894 = vmatprep.subr.bf16.mxu0 %v3418
    %4895 = vmatpush1.bf16.msra.mxu0 %v3417
    %4896 = vmatprep.subr.bf16.mxu0 %v3439
    %4897 = vmatpush1.bf16.msra.mxu0 %v3438
    %4898 = vmatprep.subr.bf16.mxu0 %v3460
    %4899 = vmatpush1.bf16.msra.mxu0 %v3459
    %4900 = vmatprep.subr.bf16.mxu0 %v3481
    %4901 = vmatpush1.bf16.msra.mxu0 %v3480
    %4902 = vmatprep.subr.bf16.mxu0 %v3502
    %4903 = vmatpush1.bf16.msra.mxu0 %v3501
    %4904 = vmatprep.subr.bf16.mxu0 %v3523
    %4905 = vmatpush1.bf16.msra.mxu0 %v3522
    %4906 = vmatprep.subr.bf16.mxu0 %v3544
    %4907 = vmatpush1.bf16.msra.mxu0 %v3543
    %4908 = vmatprep.mubr.bf16.mxu0 %v1035
    %4909 = vmatmul.mubr.bf16.gmra.mrb[0].mxu0 %v1034
    %v4910 = vpop.f32.mrb[0].mxu0
    %v4911 = vadd.f32 %v1638, %v4910
    %v4912 = vpop.f32.mrb[0].mxu0
    %v4913 = vadd.f32 %v1642, %v4912
    %v4914 = vpop.f32.mrb[0].mxu0
    %v4915 = vpop.f32.mrb[0].mxu0
    %4916 = vdwg.mxu0
    %4917 = vmatprep.subr.bf16.mxu0 %v3565
    %4918 = vmatpush1.bf16.msra.mxu0 %v3564
    %4919 = vmatprep.subr.bf16.mxu0 %v3586
    %4920 = vmatpush1.bf16.msra.mxu0 %v3585
    %4921 = vmatprep.subr.bf16.mxu0 %v3607
    %4922 = vmatpush1.bf16.msra.mxu0 %v3606
    %4923 = vmatprep.subr.bf16.mxu0 %v3628
    %4924 = vmatpush1.bf16.msra.mxu0 %v3627
    %4925 = vmatprep.subr.bf16.mxu0 %v3649
    %4926 = vmatpush1.bf16.msra.mxu0 %v3648
    %4927 = vmatprep.subr.bf16.mxu0 %v3670
    %4928 = vmatpush1.bf16.msra.mxu0 %v3669
    %4929 = vmatprep.subr.bf16.mxu0 %v3691
    %4930 = vmatpush1.bf16.msra.mxu0 %v3690
    %4931 = vmatprep.subr.bf16.mxu0 %v3712
    %4932 = vmatpush1.bf16.msra.mxu0 %v3711
    %4933 = vmatprep.subr.bf16.mxu0 0
    %4934 = vmatpush1.bf16.msra.mxu0 0
    %4935 = vmatprep.subr.bf16.mxu0 0
    %4936 = vmatpush1.bf16.msra.mxu0 0
    %4937 = vmatprep.subr.bf16.mxu0 0
    %4938 = vmatpush1.bf16.msra.mxu0 0
    %4939 = vmatprep.subr.bf16.mxu0 0
    %4940 = vmatpush1.bf16.msra.mxu0 0
    %4941 = vmatprep.subr.bf16.mxu0 0
    %4942 = vmatpush1.bf16.msra.mxu0 0
    %4943 = vmatprep.subr.bf16.mxu0 0
    %4944 = vmatpush1.bf16.msra.mxu0 0
    %4945 = vmatprep.subr.bf16.mxu0 0
    %4946 = vmatpush1.bf16.msra.mxu0 0
    %4947 = vmatprep.subr.bf16.mxu0 0
    %4948 = vmatpush1.bf16.msra.mxu0 0
    %4949 = vmatprep.mubr.bf16.mxu0 0
    %4950 = vmatmul.mubr.bf16.gmra.mrb[0].mxu0 %v1036
    %v4951 = vpop.f32.mrb[0].mxu0
    %v4952 = vadd.f32 %v4911, %v4951
    %v4953 = vpop.f32.mrb[0].mxu0
    %v4954 = vadd.f32 %v4913, %v4953
    %v4955 = vpop.f32.mrb[0].mxu0
    %v4956 = vpop.f32.mrb[0].mxu0
    %4957 = vdwg.mxu0
    %4958 = vmatprep.subr.bf16.mxu0 %v3231
    %4959 = vmatpush1.bf16.msra.mxu0 %v3230
    %4960 = vmatprep.subr.bf16.mxu0 %v3252
    %4961 = vmatpush1.bf16.msra.mxu0 %v3251
    %4962 = vmatprep.subr.bf16.mxu0 %v3273
    %4963 = vmatpush1.bf16.msra.mxu0 %v3272
    %4964 = vmatprep.subr.bf16.mxu0 %v3294
    %4965 = vmatpush1.bf16.msra.mxu0 %v3293
    %4966 = vmatprep.subr.bf16.mxu0 %v3315
    %4967 = vmatpush1.bf16.msra.mxu0 %v3314
    %4968 = vmatprep.subr.bf16.mxu0 %v3336
    %4969 = vmatpush1.bf16.msra.mxu0 %v3335
    %4970 = vmatprep.subr.bf16.mxu0 %v3357
    %4971 = vmatpush1.bf16.msra.mxu0 %v3356
    %4972 = vmatprep.subr.bf16.mxu0 %v3378
    %4973 = vmatpush1.bf16.msra.mxu0 %v3377
    %4974 = vmatprep.subr.bf16.mxu0 %v3399
    %4975 = vmatpush1.bf16.msra.mxu0 %v3398
    %4976 = vmatprep.subr.bf16.mxu0 %v3420
    %4977 = vmatpush1.bf16.msra.mxu0 %v3419
    %4978 = vmatprep.subr.bf16.mxu0 %v3441
    %4979 = vmatpush1.bf16.msra.mxu0 %v3440
    %4980 = vmatprep.subr.bf16.mxu0 %v3462
    %4981 = vmatpush1.bf16.msra.mxu0 %v3461
    %4982 = vmatprep.subr.bf16.mxu0 %v3483
    %4983 = vmatpush1.bf16.msra.mxu0 %v3482
    %4984 = vmatprep.subr.bf16.mxu0 %v3504
    %4985 = vmatpush1.bf16.msra.mxu0 %v3503
    %4986 = vmatprep.subr.bf16.mxu0 %v3525
    %4987 = vmatpush1.bf16.msra.mxu0 %v3524
    %4988 = vmatprep.subr.bf16.mxu0 %v3546
    %4989 = vmatpush1.bf16.msra.mxu0 %v3545
    %4990 = vmatprep.mubr.bf16.mxu0 %v1035
    %4991 = vmatmul.mubr.bf16.gmra.mrb[0].mxu0 %v1034
    %v4992 = vpop.f32.mrb[0].mxu0
    %v4993 = vadd.f32 %v1646, %v4992
    %v4994 = vpop.f32.mrb[0].mxu0
    %v4995 = vadd.f32 %v1650, %v4994
    %v4996 = vpop.f32.mrb[0].mxu0
    %v4997 = vpop.f32.mrb[0].mxu0
    %4998 = vdwg.mxu0
    %4999 = vmatprep.subr.bf16.mxu0 %v3567
    %5000 = vmatpush1.bf16.msra.mxu0 %v3566
    %5001 = vmatprep.subr.bf16.mxu0 %v3588
    %5002 = vmatpush1.bf16.msra.mxu0 %v3587
    %5003 = vmatprep.subr.bf16.mxu0 %v3609
    %5004 = vmatpush1.bf16.msra.mxu0 %v3608
    %5005 = vmatprep.subr.bf16.mxu0 %v3630
    %5006 = vmatpush1.bf16.msra.mxu0 %v3629
    %5007 = vmatprep.subr.bf16.mxu0 %v3651
    %5008 = vmatpush1.bf16.msra.mxu0 %v3650
    %5009 = vmatprep.subr.bf16.mxu0 %v3672
    %5010 = vmatpush1.bf16.msra.mxu0 %v3671
    %5011 = vmatprep.subr.bf16.mxu0 %v3693
    %5012 = vmatpush1.bf16.msra.mxu0 %v3692
    %5013 = vmatprep.subr.bf16.mxu0 %v3714
    %5014 = vmatpush1.bf16.msra.mxu0 %v3713
    %5015 = vmatprep.subr.bf16.mxu0 0
    %5016 = vmatpush1.bf16.msra.mxu0 0
    %5017 = vmatprep.subr.bf16.mxu0 0
    %5018 = vmatpush1.bf16.msra.mxu0 0
    %5019 = vmatprep.subr.bf16.mxu0 0
    %5020 = vmatpush1.bf16.msra.mxu0 0
    %5021 = vmatprep.subr.bf16.mxu0 0
    %5022 = vmatpush1.bf16.msra.mxu0 0
    %5023 = vmatprep.subr.bf16.mxu0 0
    %5024 = vmatpush1.bf16.msra.mxu0 0
    %5025 = vmatprep.subr.bf16.mxu0 0
    %5026 = vmatpush1.bf16.msra.mxu0 0
    %5027 = vmatprep.subr.bf16.mxu0 0
    %5028 = vmatpush1.bf16.msra.mxu0 0
    %5029 = vmatprep.subr.bf16.mxu0 0
    %5030 = vmatpush1.bf16.msra.mxu0 0
    %5031 = vmatprep.mubr.bf16.mxu0 0
    %5032 = vmatmul.mubr.bf16.gmra.mrb[0].mxu0 %v1036
    %v5033 = vpop.f32.mrb[0].mxu0
    %v5034 = vadd.f32 %v4993, %v5033
    %v5035 = vpop.f32.mrb[0].mxu0
    %v5036 = vadd.f32 %v4995, %v5035
    %v5037 = vpop.f32.mrb[0].mxu0
    %v5038 = vpop.f32.mrb[0].mxu0
    %5039 = vdwg.mxu0
    %5040 = vmatprep.subr.bf16.mxu0 0
    %5041 = vmatpush1.bf16.msra.mxu0 %v3232
    %5042 = vmatprep.subr.bf16.mxu0 0
    %5043 = vmatpush1.bf16.msra.mxu0 %v3253
    %5044 = vmatprep.subr.bf16.mxu0 0
    %5045 = vmatpush1.bf16.msra.mxu0 %v3274
    %5046 = vmatprep.subr.bf16.mxu0 0
    %5047 = vmatpush1.bf16.msra.mxu0 %v3295
    %5048 = vmatprep.subr.bf16.mxu0 0
    %5049 = vmatpush1.bf16.msra.mxu0 %v3316
    %5050 = vmatprep.subr.bf16.mxu0 0
    %5051 = vmatpush1.bf16.msra.mxu0 %v3337
    %5052 = vmatprep.subr.bf16.mxu0 0
    %5053 = vmatpush1.bf16.msra.mxu0 %v3358
    %5054 = vmatprep.subr.bf16.mxu0 0
    %5055 = vmatpush1.bf16.msra.mxu0 %v3379
    %5056 = vmatprep.subr.bf16.mxu0 0
    %5057 = vmatpush1.bf16.msra.mxu0 %v3400
    %5058 = vmatprep.subr.bf16.mxu0 0
    %5059 = vmatpush1.bf16.msra.mxu0 %v3421
    %5060 = vmatprep.subr.bf16.mxu0 0
    %5061 = vmatpush1.bf16.msra.mxu0 %v3442
    %5062 = vmatprep.subr.bf16.mxu0 0
    %5063 = vmatpush1.bf16.msra.mxu0 %v3463
    %5064 = vmatprep.subr.bf16.mxu0 0
    %5065 = vmatpush1.bf16.msra.mxu0 %v3484
    %5066 = vmatprep.subr.bf16.mxu0 0
    %5067 = vmatpush1.bf16.msra.mxu0 %v3505
    %5068 = vmatprep.subr.bf16.mxu0 0
    %5069 = vmatpush1.bf16.msra.mxu0 %v3526
    %5070 = vmatprep.subr.bf16.mxu0 0
    %5071 = vmatpush1.bf16.msra.mxu0 %v3547
    %5072 = vmatprep.mubr.bf16.mxu0 %v1035
    %5073 = vmatmul.mubr.bf16.gmra.mrb[0].mxu0 %v1034
    %v5074 = vpop.f32.mrb[0].mxu0
    %v5075 = vadd.f32 %v1654, %v5074
    %v5076 = vpop.f32.mrb[0].mxu0
    %v5077 = vpop.f32.mrb[0].mxu0
    %v5078 = vpop.f32.mrb[0].mxu0
    %5079 = vdwg.mxu0
    %5080 = vmatprep.subr.bf16.mxu0 0
    %5081 = vmatpush1.bf16.msra.mxu0 %v3568
    %5082 = vmatprep.subr.bf16.mxu0 0
    %5083 = vmatpush1.bf16.msra.mxu0 %v3589
    %5084 = vmatprep.subr.bf16.mxu0 0
    %5085 = vmatpush1.bf16.msra.mxu0 %v3610
    %5086 = vmatprep.subr.bf16.mxu0 0
    %5087 = vmatpush1.bf16.msra.mxu0 %v3631
    %5088 = vmatprep.subr.bf16.mxu0 0
    %5089 = vmatpush1.bf16.msra.mxu0 %v3652
    %5090 = vmatprep.subr.bf16.mxu0 0
    %5091 = vmatpush1.bf16.msra.mxu0 %v3673
    %5092 = vmatprep.subr.bf16.mxu0 0
    %5093 = vmatpush1.bf16.msra.mxu0 %v3694
    %5094 = vmatprep.subr.bf16.mxu0 0
    %5095 = vmatpush1.bf16.msra.mxu0 %v3715
    %5096 = vmatprep.subr.bf16.mxu0 0
    %5097 = vmatpush1.bf16.msra.mxu0 0
    %5098 = vmatprep.subr.bf16.mxu0 0
    %5099 = vmatpush1.bf16.msra.mxu0 0
    %5100 = vmatprep.subr.bf16.mxu0 0
    %5101 = vmatpush1.bf16.msra.mxu0 0
    %5102 = vmatprep.subr.bf16.mxu0 0
    %5103 = vmatpush1.bf16.msra.mxu0 0
    %5104 = vmatprep.subr.bf16.mxu0 0
    %5105 = vmatpush1.bf16.msra.mxu0 0
    %5106 = vmatprep.subr.bf16.mxu0 0
    %5107 = vmatpush1.bf16.msra.mxu0 0
    %5108 = vmatprep.subr.bf16.mxu0 0
    %5109 = vmatpush1.bf16.msra.mxu0 0
    %5110 = vmatprep.subr.bf16.mxu0 0
    %5111 = vmatpush1.bf16.msra.mxu0 0
    %5112 = vmatprep.mubr.bf16.mxu0 0
    %5113 = vmatmul.mubr.bf16.gmra.mrb[0].mxu0 %v1036
    %v5114 = vpop.f32.mrb[0].mxu0
    %v5115 = vadd.f32 %v5075, %v5114
    %v5116 = vpop.f32.mrb[0].mxu0
    %v5117 = vpop.f32.mrb[0].mxu0
    %v5118 = vpop.f32.mrb[0].mxu0
    %5119 = vdwg.mxu0
    %5120 = vst [vmem:[#allocation22] sm:$0xff] %v4296
    %5121 = vst [vmem:[#allocation22 + $0x8] sm:$0xff] %v4298
    %5122 = vst [vmem:[#allocation22 + $0x10] sm:$0xff] %v4378
    %5123 = vst [vmem:[#allocation22 + $0x18] sm:$0xff] %v4380
    %5124 = vst [vmem:[#allocation22 + $0x20] sm:$0xff] %v4460
    %5125 = vst [vmem:[#allocation22 + $0x28] sm:$0xff] %v4462
    %5126 = vst [vmem:[#allocation22 + $0x30] sm:$0xff] %v4542
    %5127 = vst [vmem:[#allocation22 + $0x38] sm:$0xff] %v4544
    %5128 = vst [vmem:[#allocation22 + $0x40] sm:$0xff] %v4624
    %5129 = vst [vmem:[#allocation22 + $0x48] sm:$0xff] %v4626
    %5130 = vst [vmem:[#allocation22 + $0x50] sm:$0xff] %v4706
    %5131 = vst [vmem:[#allocation22 + $0x58] sm:$0xff] %v4708
    %5132 = vst [vmem:[#allocation22 + $0x60] sm:$0xff] %v4788
    %5133 = vst [vmem:[#allocation22 + $0x68] sm:$0xff] %v4790
    %5134 = vst [vmem:[#allocation22 + $0x70] sm:$0xff] %v4870
    %5135 = vst [vmem:[#allocation22 + $0x78] sm:$0xff] %v4872
    %5136 = vst [vmem:[#allocation22 + $0x80] sm:$0xff] %v4952
    %5137 = vst [vmem:[#allocation22 + $0x88] sm:$0xff] %v4954
    %5138 = vst [vmem:[#allocation22 + $0x90] sm:$0xff] %v5034
    %5139 = vst [vmem:[#allocation22 + $0x98] sm:$0xff] %v5036
    %5140 = vst [vmem:[#allocation22 + $0xa0] sm:$0xff] %v5115
    // Predicated region
    $region102: #{tpu_custom_call.1} parent=1 // pred_check
      _
    $region103: #{tpu_custom_call.1} parent=1 // pred_check_branch
      %5142 = sbr.rel (0) target = $region105
    $region104: #{tpu_custom_call.1} parent=1 // pred_region
      %s5144 = ssub.s32 2688, 2688
      %5145 = vsyncadd [#allocation4], %s5144
      %s5147 = sshll.u32 [#allocation22], 4
      %s5148 = int_to_ptr.vmem [resolvable:$true] %s5147
      %5150 = dma.vmem_to_hbm [thread:$0]  %s5148, 2688, %s13, [#allocation4]
    $region105: #{tpu_custom_call.1} parent=1 // pred_fallthru
      _
    // Predicated region
    $region106: #{tpu_custom_call.1} parent=1 // pred_check
      _
    $region107: #{tpu_custom_call.1} parent=1 // pred_check_branch
      %5152 = sbr.rel (0) target = $region109
    $region108: #{tpu_custom_call.1} parent=1 // pred_region
      %5153 = dma.done [#allocation4], 2688
    $region109: #{tpu_custom_call.1} parent=1 // pred_fallthru
      _
    %5154 = vsyncpa [#allocation3], 1
    %5155 = vsyncpa [#allocation6], 1
    %5156 = vsyncpa [#allocation9], 1
    %5157 = vsyncpa [#allocation12], 1
    %5158 = vsyncpa [#allocation15], 1
    %5159 = vsyncpa [#allocation18], 1
    %5160 = vsyncpa [#allocation21], 1
    %5161 = vsyncpa [#allocation4], 1

// kernel: tpu_custom_call.1
$region0: #{tpu_custom_call.1}
  #allocation0 [shape = 'u32[]', space=smem, size = 0x4, offset = 0x4, fixed_abs, tag = 'smem constant byte address 0x4 - core index']
  #allocation1 [shape = 'u32[144,128]{1,0:T(1,128)}', space=vmem, size = 0x12000, scoped, tag = 'internal scratch']
  %s0 = inlined_call_operand.hbm [shape: f32[8,192], index: 0, kind: input, shape index: {}]
  %s1 = inlined_call_operand.hbm [shape: bf16[192,96], index: 1, kind: input, shape index: {}]
  %s2 = inlined_call_operand.hbm [shape: f32[1,96], index: 2, kind: input, shape index: {}]
  %s3 = inlined_call_operand.vmem [shape: bf16[96,48], index: 3, kind: input, shape index: {}]
  %s4 = inlined_call_operand.hbm [shape: f32[1,48], index: 4, kind: input, shape index: {}]
  %s5 = inlined_call_operand.hbm [shape: bf16[48,96], index: 5, kind: input, shape index: {}]
  %s6 = inlined_call_operand.hbm [shape: f32[1,96], index: 6, kind: input, shape index: {}]
  %s7 = inlined_call_operand.hbm [shape: bf16[96,192], index: 7, kind: input, shape index: {}]
  %s8 = inlined_call_operand.hbm [shape: f32[1,192], index: 8, kind: input, shape index: {}]
  %s9 = inlined_call_operand.hbm [shape: bf16[192,384], index: 9, kind: input, shape index: {}]
  %s10 = inlined_call_operand.hbm [shape: f32[1,384], index: 10, kind: input, shape index: {}]
  %s11 = inlined_call_operand.hbm [shape: bf16[384,2688], index: 11, kind: input, shape index: {}]
  %s12 = inlined_call_operand.hbm [shape: f32[1,2688], index: 12, kind: input, shape index: {}]
  %s13 = inlined_call_operand.hbm [shape: f32[8,2688], index: 13, kind: output, shape index: {}]
  %s14 = sld [smem:[#allocation0]]
  $region110: #{tpu_custom_call.1} parent=0
    _
  %s16 = ssub.s32 1, %s14
  %s17 = scalar_select 0, %s16, %s14
  $region1: #{tpu_custom_call.1} parent=0
    #allocation2 [shape = 'u8[8192]{0}', space=vmem, size = 0x2000, scoped, tag = 'input window, operand 0, single buffered']
    #allocation3 [shape = 's32[1]{0}', space=sflag, size = 0x4, scoped, tag = 'scoped memory for tpu_custom_call.1']
    #allocation4 [shape = 's32[1]{0}', space=sflag, size = 0x4, scoped, tag = 'scoped memory for tpu_custom_call.1']
    #allocation5 [shape = 'u8[49152]{0}', space=vmem, size = 0xc000, scoped, tag = 'input window, operand 1, single buffered']
    #allocation6 [shape = 's32[1]{0}', space=sflag, size = 0x4, scoped, tag = 'scoped memory for tpu_custom_call.1']
    #allocation7 [shape = 'u8[512]{0}', space=vmem, size = 0x400, scoped, tag = 'input window, operand 2, single buffered']
    #allocation8 [shape = 'u8[512]{0}', space=vmem, size = 0x400, scoped, tag = 'input window, operand 4, single buffered']
    #allocation9 [shape = 's32[1]{0}', space=sflag, size = 0x4, scoped, tag = 'scoped memory for tpu_custom_call.1']
    #allocation10 [shape = 'u8[12288]{0}', space=vmem, size = 0x3000, scoped, tag = 'input window, operand 5, single buffered']
    #allocation11 [shape = 'u8[512]{0}', space=vmem, size = 0x400, scoped, tag = 'input window, operand 6, single buffered']
    #allocation12 [shape = 's32[1]{0}', space=sflag, size = 0x4, scoped, tag = 'scoped memory for tpu_custom_call.1']
    #allocation13 [shape = 'u8[49152]{0}', space=vmem, size = 0xc000, scoped, tag = 'input window, operand 7, single buffered']
    #allocation14 [shape = 'u8[1024]{0}', space=vmem, size = 0x400, scoped, tag = 'input window, operand 8, single buffered']
    #allocation15 [shape = 's32[1]{0}', space=sflag, size = 0x4, scoped, tag = 'scoped memory for tpu_custom_call.1']
    #allocation16 [shape = 'u8[147456]{0}', space=vmem, size = 0x24000, scoped, tag = 'input window, operand 9, single buffered']
    #allocation17 [shape = 'u8[1536]{0}', space=vmem, size = 0x800, scoped, tag = 'input window, operand 10, single buffered']
    #allocation18 [shape = 's32[1]{0}', space=sflag, size = 0x4, scoped, tag = 'scoped memory for tpu_custom_call.1']
    #allocation19 [shape = 'u8[2064384]{0}', space=vmem, size = 0x1f8000, scoped, tag = 'input window, operand 11, single buffered']
    #allocation20 [shape = 'u8[10752]{0}', space=vmem, size = 0x2c00, scoped, tag = 'input window, operand 12, single buffered']
    #allocation21 [shape = 's32[1]{0}', space=sflag, size = 0x4, scoped, tag = 'scoped memory for tpu_custom_call.1']
    #allocation22 [shape = 'u8[86016]{0}', space=vmem, size = 0x15000, scoped, tag = 'output window, operand 0, single buffered']
    %18 = vsyncpa [#allocation3], 0
    %19 = vsyncpa [#allocation6], 0
    %20 = vsyncpa [#allocation9], 0
    %21 = vsyncpa [#allocation12], 0
    %22 = vsyncpa [#allocation15], 0
    %23 = vsyncpa [#allocation18], 0
    %24 = vsyncpa [#allocation21], 0
    %25 = vsyncpa [#allocation4], 0
    // Predicated region
    $region2: #{tpu_custom_call.1} parent=1 // pred_check
      _
    $region3: #{tpu_custom_call.1} parent=1 // pred_check_branch
      %27 = sbr.rel (0) target = $region5
    $region4: #{tpu_custom_call.1} parent=1 // pred_region
      %s29 = ssub.s32 256, 256
      %30 = vsyncadd [#allocation3], %s29
      %s32 = sshll.u32 [#allocation2], 4
      %s33 = int_to_ptr.vmem [resolvable:$true] %s32
      %35 = dma.hbm_to_vmem [thread:$0]  %s0, 256, %s33, [#allocation3]
    $region5: #{tpu_custom_call.1} parent=1 // pred_fallthru
      _
    // Predicated region
    $region6: #{tpu_custom_call.1} parent=1 // pred_check
      _
    $region7: #{tpu_custom_call.1} parent=1 // pred_check_branch
      %37 = sbr.rel (0) target = $region9
    $region8: #{tpu_custom_call.1} parent=1 // pred_region
      %s39 = ssub.s32 1536, 1536
      %40 = vsyncadd [#allocation6], %s39
      %s41 = sshll.u32 [#allocation5], 4
      %s42 = int_to_ptr.vmem [resolvable:$true] %s41
      %47 = dma.hbm_to_vmem [thread:$0]  %s1, 1536, %s42, [#allocation6], 64, 64, 4
    $region9: #{tpu_custom_call.1} parent=1 // pred_fallthru
      _
    // Predicated region
    $region10: #{tpu_custom_call.1} parent=1 // pred_check
      _
    $region11: #{tpu_custom_call.1} parent=1 // pred_check_branch
      %49 = sbr.rel (0) target = $region13
    $region12: #{tpu_custom_call.1} parent=1 // pred_region
      %s51 = ssub.s32 16, 16
      %52 = vsyncadd [#allocation6], %s51
      %s54 = sshll.u32 [#allocation7], 4
      %s55 = int_to_ptr.vmem [resolvable:$true] %s54
      %57 = dma.hbm_to_vmem [thread:$0]  %s2, 16, %s55, [#allocation6]
    $region13: #{tpu_custom_call.1} parent=1 // pred_fallthru
      _
    // Predicated region
    $region14: #{tpu_custom_call.1} parent=1 // pred_check
      _
    $region15: #{tpu_custom_call.1} parent=1 // pred_check_branch
      %59 = sbr.rel (0) target = $region17
    $region16: #{tpu_custom_call.1} parent=1 // pred_region
      _
    $region17: #{tpu_custom_call.1} parent=1 // pred_fallthru
      _
    // Predicated region
    $region18: #{tpu_custom_call.1} parent=1 // pred_check
      _
    $region19: #{tpu_custom_call.1} parent=1 // pred_check_branch
      %61 = sbr.rel (0) target = $region21
    $region20: #{tpu_custom_call.1} parent=1 // pred_region
      %s63 = ssub.s32 16, 16
      %64 = vsyncadd [#allocation9], %s63
      %s66 = sshll.u32 [#allocation8], 4
      %s67 = int_to_ptr.vmem [resolvable:$true] %s66
      %69 = dma.hbm_to_vmem [thread:$0]  %s4, 16, %s67, [#allocation9]
    $region21: #{tpu_custom_call.1} parent=1 // pred_fallthru
      _
    // Predicated region
    $region22: #{tpu_custom_call.1} parent=1 // pred_check
      _
    $region23: #{tpu_custom_call.1} parent=1 // pred_check_branch
      %71 = sbr.rel (0) target = $region25
    $region24: #{tpu_custom_call.1} parent=1 // pred_region
      %s73 = ssub.s32 384, 384
      %74 = vsyncadd [#allocation9], %s73
      %s75 = sshll.u32 [#allocation10], 4
      %s76 = int_to_ptr.vmem [resolvable:$true] %s75
      %81 = dma.hbm_to_vmem [thread:$0]  %s5, 384, %s76, [#allocation9], 64, 64, 4
    $region25: #{tpu_custom_call.1} parent=1 // pred_fallthru
      _
    // Predicated region
    $region26: #{tpu_custom_call.1} parent=1 // pred_check
      _
    $region27: #{tpu_custom_call.1} parent=1 // pred_check_branch
      %83 = sbr.rel (0) target = $region29
    $region28: #{tpu_custom_call.1} parent=1 // pred_region
      %s85 = ssub.s32 16, 16
      %86 = vsyncadd [#allocation12], %s85
      %s88 = sshll.u32 [#allocation11], 4
      %s89 = int_to_ptr.vmem [resolvable:$true] %s88
      %91 = dma.hbm_to_vmem [thread:$0]  %s6, 16, %s89, [#allocation12]
    $region29: #{tpu_custom_call.1} parent=1 // pred_fallthru
      _
    // Predicated region
    $region30: #{tpu_custom_call.1} parent=1 // pred_check
      _
    $region31: #{tpu_custom_call.1} parent=1 // pred_check_branch
      %93 = sbr.rel (0) target = $region33
    $region32: #{tpu_custom_call.1} parent=1 // pred_region
      %s95 = ssub.s32 1536, 1536
      %96 = vsyncadd [#allocation12], %s95
      %s97 = sshll.u32 [#allocation13], 4
      %s98 = int_to_ptr.vmem [resolvable:$true] %s97
      %103 = dma.hbm_to_vmem [thread:$0]  %s7, 1536, %s98, [#allocation12], 128, 128, 8
    $region33: #{tpu_custom_call.1} parent=1 // pred_fallthru
      _
    // Predicated region
    $region34: #{tpu_custom_call.1} parent=1 // pred_check
      _
    $region35: #{tpu_custom_call.1} parent=1 // pred_check_branch
      %105 = sbr.rel (0) target = $region37
    $region36: #{tpu_custom_call.1} parent=1 // pred_region
      %s107 = ssub.s32 32, 32
      %108 = vsyncadd [#allocation15], %s107
      %s110 = sshll.u32 [#allocation14], 4
      %s111 = int_to_ptr.vmem [resolvable:$true] %s110
      %113 = dma.hbm_to_vmem [thread:$0]  %s8, 32, %s111, [#allocation15]
    $region37: #{tpu_custom_call.1} parent=1 // pred_fallthru
      _
    // Predicated region
    $region38: #{tpu_custom_call.1} parent=1 // pred_check
      _
    $region39: #{tpu_custom_call.1} parent=1 // pred_check_branch
      %115 = sbr.rel (0) target = $region41
    $region40: #{tpu_custom_call.1} parent=1 // pred_region
      %s117 = ssub.s32 4608, 4608
      %118 = vsyncadd [#allocation15], %s117
      %s119 = sshll.u32 [#allocation16], 4
      %s120 = int_to_ptr.vmem [resolvable:$true] %s119
      %125 = dma.hbm_to_vmem [thread:$0]  %s9, 4608, %s120, [#allocation15], 192, 192, 12
    $region41: #{tpu_custom_call.1} parent=1 // pred_fallthru
      _
    // Predicated region
    $region42: #{tpu_custom_call.1} parent=1 // pred_check
      _
    $region43: #{tpu_custom_call.1} parent=1 // pred_check_branch
      %127 = sbr.rel (0) target = $region45
    $region44: #{tpu_custom_call.1} parent=1 // pred_region
      %s129 = ssub.s32 48, 48
      %130 = vsyncadd [#allocation18], %s129
      %s132 = sshll.u32 [#allocation17], 4
      %s133 = int_to_ptr.vmem [resolvable:$true] %s132
      %135 = dma.hbm_to_vmem [thread:$0]  %s10, 48, %s133, [#allocation18]
    $region45: #{tpu_custom_call.1} parent=1 // pred_fallthru
      _
    // Predicated region
    $region46: #{tpu_custom_call.1} parent=1 // pred_check
      _
    $region47: #{tpu_custom_call.1} parent=1 // pred_check_branch
      %137 = sbr.rel (0) target = $region49
    $region48: #{tpu_custom_call.1} parent=1 // pred_region
      %s139 = ssub.s32 64512, 64512
      %140 = vsyncadd [#allocation18], %s139
      %s141 = sshll.u32 [#allocation19], 4
      %s142 = int_to_ptr.vmem [resolvable:$true] %s141
      %147 = dma.hbm_to_vmem [thread:$0]  %s11, 64512, %s142, [#allocation18], 1344, 1344, 84
    $region49: #{tpu_custom_call.1} parent=1 // pred_fallthru
      _
    // Predicated region
    $region50: #{tpu_custom_call.1} parent=1 // pred_check
      _
    $region51: #{tpu_custom_call.1} parent=1 // pred_check_branch
      %149 = sbr.rel (0) target = $region53
    $region52: #{tpu_custom_call.1} parent=1 // pred_region
      %s151 = ssub.s32 336, 336
      %152 = vsyncadd [#allocation21], %s151
      %s154 = sshll.u32 [#allocation20], 4
      %s155 = int_to_ptr.vmem [resolvable:$true] %s154
      %157 = dma.hbm_to_vmem [thread:$0]  %s12, 336, %s155, [#allocation21]
    $region53: #{tpu_custom_call.1} parent=1 // pred_fallthru
      _
    // Predicated region
    $region54: #{tpu_custom_call.1} parent=1 // pred_check
      _
    $region55: #{tpu_custom_call.1} parent=1 // pred_check_branch
      %159 = sbr.rel (0) target = $region57
    $region56: #{tpu_custom_call.1} parent=1 // pred_region
      %160 = dma.done [#allocation3], 256
    $region57: #{tpu_custom_call.1} parent=1 // pred_fallthru
      _
    // Predicated region
    $region58: #{tpu_custom_call.1} parent=1 // pred_check
      _
    $region59: #{tpu_custom_call.1} parent=1 // pred_check_branch
      %162 = sbr.rel (0) target = $region61
    $region60: #{tpu_custom_call.1} parent=1 // pred_region
      %163 = dma.done [#allocation6], 1536
    $region61: #{tpu_custom_call.1} parent=1 // pred_fallthru
      _
    // Predicated region
    $region62: #{tpu_custom_call.1} parent=1 // pred_check
      _
    $region63: #{tpu_custom_call.1} parent=1 // pred_check_branch
      %165 = sbr.rel (0) target = $region65
    $region64: #{tpu_custom_call.1} parent=1 // pred_region
      %166 = dma.done [#allocation6], 16
    $region65: #{tpu_custom_call.1} parent=1 // pred_fallthru
      _
    // Predicated region
    $region66: #{tpu_custom_call.1} parent=1 // pred_check
      _
    $region67: #{tpu_custom_call.1} parent=1 // pred_check_branch
      %168 = sbr.rel (0) target = $region69
    $region68: #{tpu_custom_call.1} parent=1 // pred_region
      %169 = dma.done [#allocation9], 16
    $region69: #{tpu_custom_call.1} parent=1 // pred_fallthru
      _
    // Predicated region
    $region70: #{tpu_custom_call.1} parent=1 // pred_check
      _
    $region71: #{tpu_custom_call.1} parent=1 // pred_check_branch
      %171 = sbr.rel (0) target = $region73
    $region72: #{tpu_custom_call.1} parent=1 // pred_region
      %172 = dma.done [#allocation9], 384
    $region73: #{tpu_custom_call.1} parent=1 // pred_fallthru
      _
    // Predicated region
    $region74: #{tpu_custom_call.1} parent=1 // pred_check
      _
    $region75: #{tpu_custom_call.1} parent=1 // pred_check_branch
      %174 = sbr.rel (0) target = $region77
    $region76: #{tpu_custom_call.1} parent=1 // pred_region
      %175 = dma.done [#allocation12], 16
    $region77: #{tpu_custom_call.1} parent=1 // pred_fallthru
      _
    // Predicated region
    $region78: #{tpu_custom_call.1} parent=1 // pred_check
      _
    $region79: #{tpu_custom_call.1} parent=1 // pred_check_branch
      %177 = sbr.rel (0) target = $region81
    $region80: #{tpu_custom_call.1} parent=1 // pred_region
      %178 = dma.done [#allocation12], 1536
    $region81: #{tpu_custom_call.1} parent=1 // pred_fallthru
      _
    // Predicated region
    $region82: #{tpu_custom_call.1} parent=1 // pred_check
      _
    $region83: #{tpu_custom_call.1} parent=1 // pred_check_branch
      %180 = sbr.rel (0) target = $region85
    $region84: #{tpu_custom_call.1} parent=1 // pred_region
      %181 = dma.done [#allocation15], 32
    $region85: #{tpu_custom_call.1} parent=1 // pred_fallthru
      _
    // Predicated region
    $region86: #{tpu_custom_call.1} parent=1 // pred_check
      _
    $region87: #{tpu_custom_call.1} parent=1 // pred_check_branch
      %183 = sbr.rel (0) target = $region89
    $region88: #{tpu_custom_call.1} parent=1 // pred_region
      %184 = dma.done [#allocation15], 4608
    $region89: #{tpu_custom_call.1} parent=1 // pred_fallthru
      _
    // Predicated region
    $region90: #{tpu_custom_call.1} parent=1 // pred_check
      _
    $region91: #{tpu_custom_call.1} parent=1 // pred_check_branch
      %186 = sbr.rel (0) target = $region93
    $region92: #{tpu_custom_call.1} parent=1 // pred_region
      %187 = dma.done [#allocation18], 48
    $region93: #{tpu_custom_call.1} parent=1 // pred_fallthru
      _
    // Predicated region
    $region94: #{tpu_custom_call.1} parent=1 // pred_check
      _
    $region95: #{tpu_custom_call.1} parent=1 // pred_check_branch
      %189 = sbr.rel (0) target = $region97
    $region96: #{tpu_custom_call.1} parent=1 // pred_region
      %190 = dma.done [#allocation18], 64512
    $region97: #{tpu_custom_call.1} parent=1 // pred_fallthru
      _
    // Predicated region
    $region98: #{tpu_custom_call.1} parent=1 // pred_check
      _
    $region99: #{tpu_custom_call.1} parent=1 // pred_check_branch
      %192 = sbr.rel (0) target = $region101
    $region100: #{tpu_custom_call.1} parent=1 // pred_region
      %193 = dma.done [#allocation21], 336
    $region101: #{tpu_custom_call.1} parent=1 // pred_fallthru
      _
    %v195 = vld [vmem:[#allocation2] sm:$0xff]
    %v196 = vld [vmem:[#allocation2 + $0x8] sm:$0xff]
    %v197 = vpack.c.bf16 %v195, %v195
    %v198 = vpack.c.bf16 %v196, %v196
    %v199 = vld [vmem:[#allocation5] sm:$0xf]
    %v200 = vld [vmem:[#allocation5 + $0x4] sm:$0xf]
    %v201 = vld [vmem:[#allocation5 + $0x8] sm:$0xf]
    %v202 = vld [vmem:[#allocation5 + $0xc] sm:$0xf]
    %v203 = vld [vmem:[#allocation5 + $0x10] sm:$0xf]
    %v204 = vld [vmem:[#allocation5 + $0x14] sm:$0xf]
    %v205 = vld [vmem:[#allocation5 + $0x18] sm:$0xf]
    %v206 = vld [vmem:[#allocation5 + $0x1c] sm:$0xf]
    %v207 = vld [vmem:[#allocation5 + $0x20] sm:$0xf]
    %v208 = vld [vmem:[#allocation5 + $0x24] sm:$0xf]
    %v209 = vld [vmem:[#allocation5 + $0x28] sm:$0xf]
    %v210 = vld [vmem:[#allocation5 + $0x2c] sm:$0xf]
    %v211 = vld [vmem:[#allocation5 + $0x30] sm:$0xf]
    %v212 = vld [vmem:[#allocation5 + $0x34] sm:$0xf]
    %v213 = vld [vmem:[#allocation5 + $0x38] sm:$0xf]
    %v214 = vld [vmem:[#allocation5 + $0x3c] sm:$0xf]
    %v215 = vld [vmem:[#allocation5 + $0x40] sm:$0xf]
    %v216 = vld [vmem:[#allocation5 + $0x44] sm:$0xf]
    %v217 = vld [vmem:[#allocation5 + $0x48] sm:$0xf]
    %v218 = vld [vmem:[#allocation5 + $0x4c] sm:$0xf]
    %v219 = vld [vmem:[#allocation5 + $0x50] sm:$0xf]
    %v220 = vld [vmem:[#allocation5 + $0x54] sm:$0xf]
    %v221 = vld [vmem:[#allocation5 + $0x58] sm:$0xf]
    %v222 = vld [vmem:[#allocation5 + $0x5c] sm:$0xf]
    %v223 = vld [vmem:[#allocation7] sm:$0x1]
    %v225 = vlaneseq
    %v226 = vshrl.u32 %v225, 7
    %v227 = vsub.s32 0, %v226
    %v228 = vrot.slane %v223, %v227
    %v254 = vunpack.c.l.b16 %v199
    %v255 = vunpack.c.l.b16 %v200
    %v256 = vunpack.c.l.b16 %v201
    %v257 = vunpack.c.l.b16 %v202
    %v258 = vunpack.c.l.b16 %v203
    %v259 = vunpack.c.l.b16 %v204
    %v260 = vunpack.c.l.b16 %v205
    %v261 = vunpack.c.l.b16 %v206
    %v262 = vunpack.c.l.b16 %v207
    %v263 = vunpack.c.l.b16 %v208
    %v264 = vunpack.c.l.b16 %v209
    %v265 = vunpack.c.l.b16 %v210
    %v266 = vunpack.c.l.b16 %v211
    %v267 = vunpack.c.l.b16 %v212
    %v268 = vunpack.c.l.b16 %v213
    %v269 = vunpack.c.l.b16 %v214
    %v270 = vunpack.c.l.b16 %v215
    %v271 = vunpack.c.l.b16 %v216
    %v272 = vunpack.c.l.b16 %v217
    %v273 = vunpack.c.l.b16 %v218
    %v274 = vunpack.c.l.b16 %v219
    %v275 = vunpack.c.l.b16 %v220
    %v276 = vunpack.c.l.b16 %v221
    %v277 = vunpack.c.l.b16 %v222
    %v278 = vpack.c.b16 %v255, %v254
    %v279 = vpack.c.b16 %v257, %v256
    %v280 = vpack.c.b16 %v259, %v258
    %v281 = vpack.c.b16 %v261, %v260
    %v282 = vpack.c.b16 %v263, %v262
    %v283 = vpack.c.b16 %v265, %v264
    %v284 = vpack.c.b16 %v267, %v266
    %v285 = vpack.c.b16 %v269, %v268
    %v286 = vpack.c.b16 %v271, %v270
    %v287 = vpack.c.b16 %v273, %v272
    %v288 = vpack.c.b16 %v275, %v274
    %v289 = vpack.c.b16 %v277, %v276
    %vm302 = vcmask 523264
    %v304 = vsel %vm302, %v198, 0
    %306 = vmatprep.subr.bf16.mxu0 0
    %307 = vmatpush1.bf16.msra.mxu0 %v278
    %308 = vmatprep.subr.bf16.mxu0 0
    %309 = vmatpush1.bf16.msra.mxu0 %v279
    %310 = vmatprep.subr.bf16.mxu0 0
    %311 = vmatpush1.bf16.msra.mxu0 %v280
    %312 = vmatprep.subr.bf16.mxu0 0
    %313 = vmatpush1.bf16.msra.mxu0 %v281
    %314 = vmatprep.subr.bf16.mxu0 0
    %315 = vmatpush1.bf16.msra.mxu0 %v282
    %316 = vmatprep.subr.bf16.mxu0 0
    %317 = vmatpush1.bf16.msra.mxu0 %v283
    %318 = vmatprep.subr.bf16.mxu0 0
    %319 = vmatpush1.bf16.msra.mxu0 %v284
    %320 = vmatprep.subr.bf16.mxu0 0
    %321 = vmatpush1.bf16.msra.mxu0 %v285
    %322 = vmatprep.subr.bf16.mxu0 0
    %323 = vmatpush1.bf16.msra.mxu0 %v286
    %324 = vmatprep.subr.bf16.mxu0 0
    %325 = vmatpush1.bf16.msra.mxu0 %v287
    %326 = vmatprep.subr.bf16.mxu0 0
    %327 = vmatpush1.bf16.msra.mxu0 %v288
    %328 = vmatprep.subr.bf16.mxu0 0
    %329 = vmatpush1.bf16.msra.mxu0 %v289
    %330 = vmatprep.subr.bf16.mxu0 0
    %331 = vmatpush1.bf16.msra.mxu0 0
    %332 = vmatprep.subr.bf16.mxu0 0
    %333 = vmatpush1.bf16.msra.mxu0 0
    %334 = vmatprep.subr.bf16.mxu0 0
    %335 = vmatpush1.bf16.msra.mxu0 0
    %336 = vmatprep.subr.bf16.mxu0 0
    %337 = vmatpush1.bf16.msra.mxu0 0
    %338 = vmatprep.mubr.bf16.mxu0 %v304
    %339 = vmatmul.mubr.bf16.gmra.mrb[0].mxu0 %v197
    %v340 = vpop.f32.mrb[0].mxu0
    %v341 = vadd.f32 %v228, %v340
    %v342 = vpop.f32.mrb[0].mxu0
    %v343 = vpop.f32.mrb[0].mxu0
    %v344 = vpop.f32.mrb[0].mxu0
    %345 = vdwg.mxu0
    %v346 = vmul.f32 %v341, 0.5
    %v347 = vmul.f32 %v341, 0.70710677
    %v348 = verf.f32.pop %v347
    %v349 = vadd.f32 %v348, 1.0
    %v350 = vmul.f32 %v346, %v349
    %v351 = vpack.c.bf16 %v350, %v350
    %v352 = vld [vmem:[%s3] sm:$0xf]
    %v353 = vld [vmem:[%s3 + $0x4] sm:$0xf]
    %v354 = vld [vmem:[%s3 + $0x8] sm:$0xf]
    %v355 = vld [vmem:[%s3 + $0xc] sm:$0xf]
    %v356 = vld [vmem:[%s3 + $0x10] sm:$0xf]
    %v357 = vld [vmem:[%s3 + $0x14] sm:$0xf]
    %v358 = vld [vmem:[%s3 + $0x18] sm:$0xf]
    %v359 = vld [vmem:[%s3 + $0x1c] sm:$0xf]
    %v360 = vld [vmem:[%s3 + $0x20] sm:$0xf]
    %v361 = vld [vmem:[%s3 + $0x24] sm:$0xf]
    %v362 = vld [vmem:[%s3 + $0x28] sm:$0xf]
    %v363 = vld [vmem:[%s3 + $0x2c] sm:$0xf]
    %v364 = vld [vmem:[#allocation8] sm:$0x1]
    %v366 = vlaneseq
    %v367 = vshrl.u32 %v366, 7
    %v368 = vsub.s32 0, %v367
    %v369 = vrot.slane %v364, %v368
    %v383 = vunpack.c.l.b16 %v352
    %v384 = vunpack.c.l.b16 %v353
    %v385 = vunpack.c.l.b16 %v354
    %v386 = vunpack.c.l.b16 %v355
    %v387 = vunpack.c.l.b16 %v356
    %v388 = vunpack.c.l.b16 %v357
    %v389 = vunpack.c.l.b16 %v358
    %v390 = vunpack.c.l.b16 %v359
    %v391 = vunpack.c.l.b16 %v360
    %v392 = vunpack.c.l.b16 %v361
    %v393 = vunpack.c.l.b16 %v362
    %v394 = vunpack.c.l.b16 %v363
    %v395 = vpack.c.b16 %v384, %v383
    %v396 = vpack.c.b16 %v386, %v385
    %v397 = vpack.c.b16 %v388, %v387
    %v398 = vpack.c.b16 %v390, %v389
    %v399 = vpack.c.b16 %v392, %v391
    %v400 = vpack.c.b16 %v394, %v393
    %vm407 = vcmask 785408
    %v409 = vsel %vm407, %v351, 0
    %411 = vmatprep.subr.bf16.mxu0 0
    %412 = vmatpush1.bf16.msra.mxu0 %v395
    %413 = vmatprep.subr.bf16.mxu0 0
    %414 = vmatpush1.bf16.msra.mxu0 %v396
    %415 = vmatprep.subr.bf16.mxu0 0
    %416 = vmatpush1.bf16.msra.mxu0 %v397
    %417 = vmatprep.subr.bf16.mxu0 0
    %418 = vmatpush1.bf16.msra.mxu0 %v398
    %419 = vmatprep.subr.bf16.mxu0 0
    %420 = vmatpush1.bf16.msra.mxu0 %v399
    %421 = vmatprep.subr.bf16.mxu0 0
    %422 = vmatpush1.bf16.msra.mxu0 %v400
    %423 = vmatprep.subr.bf16.mxu0 0
    %424 = vmatpush1.bf16.msra.mxu0 0
    %425 = vmatprep.subr.bf16.mxu0 0
    %426 = vmatpush1.bf16.msra.mxu0 0
    %427 = vmatprep.subr.bf16.mxu0 0
    %428 = vmatpush1.bf16.msra.mxu0 0
    %429 = vmatprep.subr.bf16.mxu0 0
    %430 = vmatpush1.bf16.msra.mxu0 0
    %431 = vmatprep.subr.bf16.mxu0 0
    %432 = vmatpush1.bf16.msra.mxu0 0
    %433 = vmatprep.subr.bf16.mxu0 0
    %434 = vmatpush1.bf16.msra.mxu0 0
    %435 = vmatprep.subr.bf16.mxu0 0
    %436 = vmatpush1.bf16.msra.mxu0 0
    %437 = vmatprep.subr.bf16.mxu0 0
    %438 = vmatpush1.bf16.msra.mxu0 0
    %439 = vmatprep.subr.bf16.mxu0 0
    %440 = vmatpush1.bf16.msra.mxu0 0
    %441 = vmatprep.subr.bf16.mxu0 0
    %442 = vmatpush1.bf16.msra.mxu0 0
    %443 = vmatprep.mubr.bf16.mxu0 0
    %444 = vmatmul.mubr.bf16.gmra.mrb[0].mxu0 %v409
    %v445 = vpop.f32.mrb[0].mxu0
    %v446 = vadd.f32 %v369, %v445
    %v447 = vpop.f32.mrb[0].mxu0
    %v448 = vpop.f32.mrb[0].mxu0
    %v449 = vpop.f32.mrb[0].mxu0
    %450 = vdwg.mxu0
    %v451 = vmul.f32 %v446, 0.5
    %v452 = vmul.f32 %v446, 0.70710677
    %v453 = verf.f32.pop %v452
    %v454 = vadd.f32 %v453, 1.0
    %v455 = vmul.f32 %v451, %v454
    %v456 = vpack.c.bf16 %v455, %v455
    %v457 = vld [vmem:[#allocation10] sm:$0xf]
    %v458 = vld [vmem:[#allocation10 + $0x4] sm:$0xf]
    %v459 = vld [vmem:[#allocation10 + $0x8] sm:$0xf]
    %v460 = vld [vmem:[#allocation10 + $0xc] sm:$0xf]
    %v461 = vld [vmem:[#allocation10 + $0x10] sm:$0xf]
    %v462 = vld [vmem:[#allocation10 + $0x14] sm:$0xf]
    %v463 = vld [vmem:[#allocation11] sm:$0x1]
    %v465 = vlaneseq
    %v466 = vshrl.u32 %v465, 7
    %v467 = vsub.s32 0, %v466
    %v468 = vrot.slane %v463, %v467
    %v476 = vunpack.c.l.b16 %v457
    %v477 = vunpack.c.l.b16 %v458
    %v478 = vunpack.c.l.b16 %v459
    %v479 = vunpack.c.l.b16 %v460
    %v480 = vunpack.c.l.b16 %v461
    %v481 = vunpack.c.l.b16 %v462
    %v482 = vpack.c.b16 %v477, %v476
    %v483 = vpack.c.b16 %v479, %v478
    %v484 = vpack.c.b16 %v481, %v480
    %vm488 = vcmask 392192
    %v490 = vsel %vm488, %v456, 0
    %492 = vmatprep.subr.bf16.mxu0 0
    %493 = vmatpush1.bf16.msra.mxu0 %v482
    %494 = vmatprep.subr.bf16.mxu0 0
    %495 = vmatpush1.bf16.msra.mxu0 %v483
    %496 = vmatprep.subr.bf16.mxu0 0
    %497 = vmatpush1.bf16.msra.mxu0 %v484
    %498 = vmatprep.subr.bf16.mxu0 0
    %499 = vmatpush1.bf16.msra.mxu0 0
    %500 = vmatprep.subr.bf16.mxu0 0
    %501 = vmatpush1.bf16.msra.mxu0 0
    %502 = vmatprep.subr.bf16.mxu0 0
    %503 = vmatpush1.bf16.msra.mxu0 0
    %504 = vmatprep.subr.bf16.mxu0 0
    %505 = vmatpush1.bf16.msra.mxu0 0
    %506 = vmatprep.subr.bf16.mxu0 0
    %507 = vmatpush1.bf16.msra.mxu0 0
    %508 = vmatprep.subr.bf16.mxu0 0
    %509 = vmatpush1.bf16.msra.mxu0 0
    %510 = vmatprep.subr.bf16.mxu0 0
    %511 = vmatpush1.bf16.msra.mxu0 0
    %512 = vmatprep.subr.bf16.mxu0 0
    %513 = vmatpush1.bf16.msra.mxu0 0
    %514 = vmatprep.subr.bf16.mxu0 0
    %515 = vmatpush1.bf16.msra.mxu0 0
    %516 = vmatprep.subr.bf16.mxu0 0
    %517 = vmatpush1.bf16.msra.mxu0 0
    %518 = vmatprep.subr.bf16.mxu0 0
    %519 = vmatpush1.bf16.msra.mxu0 0
    %520 = vmatprep.subr.bf16.mxu0 0
    %521 = vmatpush1.bf16.msra.mxu0 0
    %522 = vmatprep.subr.bf16.mxu0 0
    %523 = vmatpush1.bf16.msra.mxu0 0
    %524 = vmatprep.mubr.bf16.mxu0 0
    %525 = vmatmul.mubr.bf16.gmra.mrb[0].mxu0 %v490
    %v526 = vpop.f32.mrb[0].mxu0
    %v527 = vadd.f32 %v468, %v526
    %v528 = vpop.f32.mrb[0].mxu0
    %v529 = vpop.f32.mrb[0].mxu0
    %v530 = vpop.f32.mrb[0].mxu0
    %531 = vdwg.mxu0
    %v532 = vmul.f32 %v527, 0.5
    %v533 = vmul.f32 %v527, 0.70710677
    %v534 = verf.f32.pop %v533
    %v535 = vadd.f32 %v534, 1.0
    %v536 = vmul.f32 %v532, %v535
    %v537 = vpack.c.bf16 %v536, %v536
    %v538 = vld [vmem:[#allocation13] sm:$0xff]
    %v539 = vld [vmem:[#allocation13 + $0x8] sm:$0xff]
    %v540 = vld [vmem:[#allocation13 + $0x10] sm:$0xff]
    %v541 = vld [vmem:[#allocation13 + $0x18] sm:$0xff]
    %v542 = vld [vmem:[#allocation13 + $0x20] sm:$0xff]
    %v543 = vld [vmem:[#allocation13 + $0x28] sm:$0xff]
    %v544 = vld [vmem:[#allocation13 + $0x30] sm:$0xff]
    %v545 = vld [vmem:[#allocation13 + $0x38] sm:$0xff]
    %v546 = vld [vmem:[#allocation13 + $0x40] sm:$0xff]
    %v547 = vld [vmem:[#allocation13 + $0x48] sm:$0xff]
    %v548 = vld [vmem:[#allocation13 + $0x50] sm:$0xff]
    %v549 = vld [vmem:[#allocation13 + $0x58] sm:$0xff]
    %v550 = vld [vmem:[#allocation14] sm:$0x3]
    %v552 = vlaneseq
    %v553 = vshrl.u32 %v552, 7
    %v554 = vsub.s32 0, %v553
    %v555 = vrot.slane %v550, %v554
    %v556 = vlaneseq
    %v557 = vshrl.u32 %v556, 7
    %v558 = vsub.s32 1, %v557
    %v559 = vrot.slane %v550, %v558
    %v574 = vunpack.c.l.b16 %v538
    %v575 = vunpack.c.h.b16 %v538
    %v576 = vunpack.c.l.b16 %v539
    %v577 = vunpack.c.h.b16 %v539
    %v578 = vunpack.c.l.b16 %v540
    %v579 = vunpack.c.h.b16 %v540
    %v580 = vunpack.c.l.b16 %v541
    %v581 = vunpack.c.h.b16 %v541
    %v582 = vunpack.c.l.b16 %v542
    %v583 = vunpack.c.h.b16 %v542
    %v584 = vunpack.c.l.b16 %v543
    %v585 = vunpack.c.h.b16 %v543
    %v586 = vunpack.c.l.b16 %v544
    %v587 = vunpack.c.h.b16 %v544
    %v588 = vunpack.c.l.b16 %v545
    %v589 = vunpack.c.h.b16 %v545
    %v590 = vunpack.c.l.b16 %v546
    %v591 = vunpack.c.h.b16 %v546
    %v592 = vunpack.c.l.b16 %v547
    %v593 = vunpack.c.h.b16 %v547
    %v594 = vunpack.c.l.b16 %v548
    %v595 = vunpack.c.h.b16 %v548
    %v596 = vunpack.c.l.b16 %v549
    %v597 = vunpack.c.h.b16 %v549
    %v598 = vpack.c.b16 %v576, %v574
    %v599 = vpack.c.b16 %v577, %v575
    %v600 = vpack.c.b16 %v580, %v578
    %v601 = vpack.c.b16 %v581, %v579
    %v602 = vpack.c.b16 %v584, %v582
    %v603 = vpack.c.b16 %v585, %v583
    %v604 = vpack.c.b16 %v588, %v586
    %v605 = vpack.c.b16 %v589, %v587
    %v606 = vpack.c.b16 %v592, %v590
    %v607 = vpack.c.b16 %v593, %v591
    %v608 = vpack.c.b16 %v596, %v594
    %v609 = vpack.c.b16 %v597, %v595
    %v623 = vsel %vm407, %v537, 0
    %625 = vmatprep.subr.bf16.mxu0 %v599
    %626 = vmatpush1.bf16.msra.mxu0 %v598
    %627 = vmatprep.subr.bf16.mxu0 %v601
    %628 = vmatpush1.bf16.msra.mxu0 %v600
    %629 = vmatprep.subr.bf16.mxu0 %v603
    %630 = vmatpush1.bf16.msra.mxu0 %v602
    %631 = vmatprep.subr.bf16.mxu0 %v605
    %632 = vmatpush1.bf16.msra.mxu0 %v604
    %633 = vmatprep.subr.bf16.mxu0 %v607
    %634 = vmatpush1.bf16.msra.mxu0 %v606
    %635 = vmatprep.subr.bf16.mxu0 %v609
    %636 = vmatpush1.bf16.msra.mxu0 %v608
    %637 = vmatprep.subr.bf16.mxu0 0
    %638 = vmatpush1.bf16.msra.mxu0 0
    %639 = vmatprep.subr.bf16.mxu0 0
    %640 = vmatpush1.bf16.msra.mxu0 0
    %641 = vmatprep.subr.bf16.mxu0 0
    %642 = vmatpush1.bf16.msra.mxu0 0
    %643 = vmatprep.subr.bf16.mxu0 0
    %644 = vmatpush1.bf16.msra.mxu0 0
    %645 = vmatprep.subr.bf16.mxu0 0
    %646 = vmatpush1.bf16.msra.mxu0 0
    %647 = vmatprep.subr.bf16.mxu0 0
    %648 = vmatpush1.bf16.msra.mxu0 0
    %649 = vmatprep.subr.bf16.mxu0 0
    %650 = vmatpush1.bf16.msra.mxu0 0
    %651 = vmatprep.subr.bf16.mxu0 0
    %652 = vmatpush1.bf16.msra.mxu0 0
    %653 = vmatprep.subr.bf16.mxu0 0
    %654 = vmatpush1.bf16.msra.mxu0 0
    %655 = vmatprep.subr.bf16.mxu0 0
    %656 = vmatpush1.bf16.msra.mxu0 0
    %657 = vmatprep.mubr.bf16.mxu0 0
    %658 = vmatmul.mubr.bf16.gmra.mrb[0].mxu0 %v623
    %v659 = vpop.f32.mrb[0].mxu0
    %v660 = vadd.f32 %v555, %v659
    %v661 = vpop.f32.mrb[0].mxu0
    %v662 = vadd.f32 %v559, %v661
    %v663 = vpop.f32.mrb[0].mxu0
    %v664 = vpop.f32.mrb[0].mxu0
    %665 = vdwg.mxu0
    %v666 = vmul.f32 %v660, 0.5
    %v667 = vmul.f32 %v662, 0.5
    %v668 = vmul.f32 %v660, 0.70710677
    %v669 = vmul.f32 %v662, 0.70710677
    %v670 = verf.f32.pop %v668
    %v671 = verf.f32.pop %v669
    %v672 = vadd.f32 %v670, 1.0
    %v673 = vadd.f32 %v671, 1.0
    %v674 = vmul.f32 %v666, %v672
    %v675 = vmul.f32 %v667, %v673
    %v676 = vpack.c.bf16 %v674, %v674
    %v677 = vpack.c.bf16 %v675, %v675
    %v678 = vld [vmem:[#allocation16] sm:$0xff]
    %v679 = vld [vmem:[#allocation16 + $0x8] sm:$0xf]
    %v680 = vld [vmem:[#allocation16 + $0xc] sm:$0xff]
    %v681 = vld [vmem:[#allocation16 + $0x14] sm:$0xf]
    %v682 = vld [vmem:[#allocation16 + $0x18] sm:$0xff]
    %v683 = vld [vmem:[#allocation16 + $0x20] sm:$0xf]
    %v684 = vld [vmem:[#allocation16 + $0x24] sm:$0xff]
    %v685 = vld [vmem:[#allocation16 + $0x2c] sm:$0xf]
    %v686 = vld [vmem:[#allocation16 + $0x30] sm:$0xff]
    %v687 = vld [vmem:[#allocation16 + $0x38] sm:$0xf]
    %v688 = vld [vmem:[#allocation16 + $0x3c] sm:$0xff]
    %v689 = vld [vmem:[#allocation16 + $0x44] sm:$0xf]
    %v690 = vld [vmem:[#allocation16 + $0x48] sm:$0xff]
    %v691 = vld [vmem:[#allocation16 + $0x50] sm:$0xf]
    %v692 = vld [vmem:[#allocation16 + $0x54] sm:$0xff]
    %v693 = vld [vmem:[#allocation16 + $0x5c] sm:$0xf]
    %v694 = vld [vmem:[#allocation16 + $0x60] sm:$0xff]
    %v695 = vld [vmem:[#allocation16 + $0x68] sm:$0xf]
    %v696 = vld [vmem:[#allocation16 + $0x6c] sm:$0xff]
    %v697 = vld [vmem:[#allocation16 + $0x74] sm:$0xf]
    %v698 = vld [vmem:[#allocation16 + $0x78] sm:$0xff]
    %v699 = vld [vmem:[#allocation16 + $0x80] sm:$0xf]
    %v700 = vld [vmem:[#allocation16 + $0x84] sm:$0xff]
    %v701 = vld [vmem:[#allocation16 + $0x8c] sm:$0xf]
    %v702 = vld [vmem:[#allocation16 + $0x90] sm:$0xff]
    %v703 = vld [vmem:[#allocation16 + $0x98] sm:$0xf]
    %v704 = vld [vmem:[#allocation16 + $0x9c] sm:$0xff]
    %v705 = vld [vmem:[#allocation16 + $0xa4] sm:$0xf]
    %v706 = vld [vmem:[#allocation16 + $0xa8] sm:$0xff]
    %v707 = vld [vmem:[#allocation16 + $0xb0] sm:$0xf]
    %v708 = vld [vmem:[#allocation16 + $0xb4] sm:$0xff]
    %v709 = vld [vmem:[#allocation16 + $0xbc] sm:$0xf]
    %v710 = vld [vmem:[#allocation16 + $0xc0] sm:$0xff]
    %v711 = vld [vmem:[#allocation16 + $0xc8] sm:$0xf]
    %v712 = vld [vmem:[#allocation16 + $0xcc] sm:$0xff]
    %v713 = vld [vmem:[#allocation16 + $0xd4] sm:$0xf]
    %v714 = vld [vmem:[#allocation16 + $0xd8] sm:$0xff]
    %v715 = vld [vmem:[#allocation16 + $0xe0] sm:$0xf]
    %v716 = vld [vmem:[#allocation16 + $0xe4] sm:$0xff]
    %v717 = vld [vmem:[#allocation16 + $0xec] sm:$0xf]
    %v718 = vld [vmem:[#allocation16 + $0xf0] sm:$0xff]
    %v719 = vld [vmem:[#allocation16 + $0xf8] sm:$0xf]
    %v720 = vld [vmem:[#allocation16 + $0xfc] sm:$0xff]
    %v721 = vld [vmem:[#allocation16 + $0x104] sm:$0xf]
    %v722 = vld [vmem:[#allocation16 + $0x108] sm:$0xff]
    %v723 = vld [vmem:[#allocation16 + $0x110] sm:$0xf]
    %v724 = vld [vmem:[#allocation16 + $0x114] sm:$0xff]
    %v725 = vld [vmem:[#allocation16 + $0x11c] sm:$0xf]
    %v726 = vld [vmem:[#allocation17] sm:$0x7]
    %v728 = vlaneseq
    %v729 = vshrl.u32 %v728, 7
    %v730 = vsub.s32 0, %v729
    %v731 = vrot.slane %v726, %v730
    %v732 = vlaneseq
    %v733 = vshrl.u32 %v732, 7
    %v734 = vsub.s32 1, %v733
    %v735 = vrot.slane %v726, %v734
    %v736 = vlaneseq
    %v737 = vshrl.u32 %v736, 7
    %v738 = vsub.s32 2, %v737
    %v739 = vrot.slane %v726, %v738
    %v791 = vunpack.c.l.b16 %v678
    %v792 = vunpack.c.h.b16 %v678
    %v793 = vunpack.c.l.b16 %v679
    %v794 = vunpack.c.l.b16 %v680
    %v795 = vunpack.c.h.b16 %v680
    %v796 = vunpack.c.l.b16 %v681
    %v797 = vunpack.c.l.b16 %v682
    %v798 = vunpack.c.h.b16 %v682
    %v799 = vunpack.c.l.b16 %v683
    %v800 = vunpack.c.l.b16 %v684
    %v801 = vunpack.c.h.b16 %v684
    %v802 = vunpack.c.l.b16 %v685
    %v803 = vunpack.c.l.b16 %v686
    %v804 = vunpack.c.h.b16 %v686
    %v805 = vunpack.c.l.b16 %v687
    %v806 = vunpack.c.l.b16 %v688
    %v807 = vunpack.c.h.b16 %v688
    %v808 = vunpack.c.l.b16 %v689
    %v809 = vunpack.c.l.b16 %v690
    %v810 = vunpack.c.h.b16 %v690
    %v811 = vunpack.c.l.b16 %v691
    %v812 = vunpack.c.l.b16 %v692
    %v813 = vunpack.c.h.b16 %v692
    %v814 = vunpack.c.l.b16 %v693
    %v815 = vunpack.c.l.b16 %v694
    %v816 = vunpack.c.h.b16 %v694
    %v817 = vunpack.c.l.b16 %v695
    %v818 = vunpack.c.l.b16 %v696
    %v819 = vunpack.c.h.b16 %v696
    %v820 = vunpack.c.l.b16 %v697
    %v821 = vunpack.c.l.b16 %v698
    %v822 = vunpack.c.h.b16 %v698
    %v823 = vunpack.c.l.b16 %v699
    %v824 = vunpack.c.l.b16 %v700
    %v825 = vunpack.c.h.b16 %v700
    %v826 = vunpack.c.l.b16 %v701
    %v827 = vunpack.c.l.b16 %v702
    %v828 = vunpack.c.h.b16 %v702
    %v829 = vunpack.c.l.b16 %v703
    %v830 = vunpack.c.l.b16 %v704
    %v831 = vunpack.c.h.b16 %v704
    %v832 = vunpack.c.l.b16 %v705
    %v833 = vunpack.c.l.b16 %v706
    %v834 = vunpack.c.h.b16 %v706
    %v835 = vunpack.c.l.b16 %v707
    %v836 = vunpack.c.l.b16 %v708
    %v837 = vunpack.c.h.b16 %v708
    %v838 = vunpack.c.l.b16 %v709
    %v839 = vunpack.c.l.b16 %v710
    %v840 = vunpack.c.h.b16 %v710
    %v841 = vunpack.c.l.b16 %v711
    %v842 = vunpack.c.l.b16 %v712
    %v843 = vunpack.c.h.b16 %v712
    %v844 = vunpack.c.l.b16 %v713
    %v845 = vunpack.c.l.b16 %v714
    %v846 = vunpack.c.h.b16 %v714
    %v847 = vunpack.c.l.b16 %v715
    %v848 = vunpack.c.l.b16 %v716
    %v849 = vunpack.c.h.b16 %v716
    %v850 = vunpack.c.l.b16 %v717
    %v851 = vunpack.c.l.b16 %v718
    %v852 = vunpack.c.h.b16 %v718
    %v853 = vunpack.c.l.b16 %v719
    %v854 = vunpack.c.l.b16 %v720
    %v855 = vunpack.c.h.b16 %v720
    %v856 = vunpack.c.l.b16 %v721
    %v857 = vunpack.c.l.b16 %v722
    %v858 = vunpack.c.h.b16 %v722
    %v859 = vunpack.c.l.b16 %v723
    %v860 = vunpack.c.l.b16 %v724
    %v861 = vunpack.c.h.b16 %v724
    %v862 = vunpack.c.l.b16 %v725
    %v863 = vpack.c.b16 %v794, %v791
    %v864 = vpack.c.b16 %v795, %v792
    %v865 = vpack.c.b16 %v796, %v793
    %v866 = vpack.c.b16 %v800, %v797
    %v867 = vpack.c.b16 %v801, %v798
    %v868 = vpack.c.b16 %v802, %v799
    %v869 = vpack.c.b16 %v806, %v803
    %v870 = vpack.c.b16 %v807, %v804
    %v871 = vpack.c.b16 %v808, %v805
    %v872 = vpack.c.b16 %v812, %v809
    %v873 = vpack.c.b16 %v813, %v810
    %v874 = vpack.c.b16 %v814, %v811
    %v875 = vpack.c.b16 %v818, %v815
    %v876 = vpack.c.b16 %v819, %v816
    %v877 = vpack.c.b16 %v820, %v817
    %v878 = vpack.c.b16 %v824, %v821
    %v879 = vpack.c.b16 %v825, %v822
    %v880 = vpack.c.b16 %v826, %v823
    %v881 = vpack.c.b16 %v830, %v827
    %v882 = vpack.c.b16 %v831, %v828
    %v883 = vpack.c.b16 %v832, %v829
    %v884 = vpack.c.b16 %v836, %v833
    %v885 = vpack.c.b16 %v837, %v834
    %v886 = vpack.c.b16 %v838, %v835
    %v887 = vpack.c.b16 %v842, %v839
    %v888 = vpack.c.b16 %v843, %v840
    %v889 = vpack.c.b16 %v844, %v841
    %v890 = vpack.c.b16 %v848, %v845
    %v891 = vpack.c.b16 %v849, %v846
    %v892 = vpack.c.b16 %v850, %v847
    %v893 = vpack.c.b16 %v854, %v851
    %v894 = vpack.c.b16 %v855, %v852
    %v895 = vpack.c.b16 %v856, %v853
    %v896 = vpack.c.b16 %v860, %v857
    %v897 = vpack.c.b16 %v861, %v858
    %v898 = vpack.c.b16 %v862, %v859
    %v936 = vsel %vm302, %v677, 0
    %938 = vmatprep.subr.bf16.mxu0 %v864
    %939 = vmatpush1.bf16.msra.mxu0 %v863
    %940 = vmatprep.subr.bf16.mxu0 %v867
    %941 = vmatpush1.bf16.msra.mxu0 %v866
    %942 = vmatprep.subr.bf16.mxu0 %v870
    %943 = vmatpush1.bf16.msra.mxu0 %v869
    %944 = vmatprep.subr.bf16.mxu0 %v873
    %945 = vmatpush1.bf16.msra.mxu0 %v872
    %946 = vmatprep.subr.bf16.mxu0 %v876
    %947 = vmatpush1.bf16.msra.mxu0 %v875
    %948 = vmatprep.subr.bf16.mxu0 %v879
    %949 = vmatpush1.bf16.msra.mxu0 %v878
    %950 = vmatprep.subr.bf16.mxu0 %v882
    %951 = vmatpush1.bf16.msra.mxu0 %v881
    %952 = vmatprep.subr.bf16.mxu0 %v885
    %953 = vmatpush1.bf16.msra.mxu0 %v884
    %954 = vmatprep.subr.bf16.mxu0 %v888
    %955 = vmatpush1.bf16.msra.mxu0 %v887
    %956 = vmatprep.subr.bf16.mxu0 %v891
    %957 = vmatpush1.bf16.msra.mxu0 %v890
    %958 = vmatprep.subr.bf16.mxu0 %v894
    %959 = vmatpush1.bf16.msra.mxu0 %v893
    %960 = vmatprep.subr.bf16.mxu0 %v897
    %961 = vmatpush1.bf16.msra.mxu0 %v896
    %962 = vmatprep.subr.bf16.mxu0 0
    %963 = vmatpush1.bf16.msra.mxu0 0
    %964 = vmatprep.subr.bf16.mxu0 0
    %965 = vmatpush1.bf16.msra.mxu0 0
    %966 = vmatprep.subr.bf16.mxu0 0
    %967 = vmatpush1.bf16.msra.mxu0 0
    %968 = vmatprep.subr.bf16.mxu0 0
    %969 = vmatpush1.bf16.msra.mxu0 0
    %970 = vmatprep.mubr.bf16.mxu0 %v936
    %971 = vmatmul.mubr.bf16.gmra.mrb[0].mxu0 %v676
    %v972 = vpop.f32.mrb[0].mxu0
    %v973 = vadd.f32 %v731, %v972
    %v974 = vpop.f32.mrb[0].mxu0
    %v975 = vadd.f32 %v735, %v974
    %v976 = vpop.f32.mrb[0].mxu0
    %v977 = vpop.f32.mrb[0].mxu0
    %978 = vdwg.mxu0
    %979 = vmatprep.subr.bf16.mxu0 0
    %980 = vmatpush1.bf16.msra.mxu0 %v865
    %981 = vmatprep.subr.bf16.mxu0 0
    %982 = vmatpush1.bf16.msra.mxu0 %v868
    %983 = vmatprep.subr.bf16.mxu0 0
    %984 = vmatpush1.bf16.msra.mxu0 %v871
    %985 = vmatprep.subr.bf16.mxu0 0
    %986 = vmatpush1.bf16.msra.mxu0 %v874
    %987 = vmatprep.subr.bf16.mxu0 0
    %988 = vmatpush1.bf16.msra.mxu0 %v877
    %989 = vmatprep.subr.bf16.mxu0 0
    %990 = vmatpush1.bf16.msra.mxu0 %v880
    %991 = vmatprep.subr.bf16.mxu0 0
    %992 = vmatpush1.bf16.msra.mxu0 %v883
    %993 = vmatprep.subr.bf16.mxu0 0
    %994 = vmatpush1.bf16.msra.mxu0 %v886
    %995 = vmatprep.subr.bf16.mxu0 0
    %996 = vmatpush1.bf16.msra.mxu0 %v889
    %997 = vmatprep.subr.bf16.mxu0 0
    %998 = vmatpush1.bf16.msra.mxu0 %v892
    %999 = vmatprep.subr.bf16.mxu0 0
    %1000 = vmatpush1.bf16.msra.mxu0 %v895
    %1001 = vmatprep.subr.bf16.mxu0 0
    %1002 = vmatpush1.bf16.msra.mxu0 %v898
    %1003 = vmatprep.subr.bf16.mxu0 0
    %1004 = vmatpush1.bf16.msra.mxu0 0
    %1005 = vmatprep.subr.bf16.mxu0 0
    %1006 = vmatpush1.bf16.msra.mxu0 0
    %1007 = vmatprep.subr.bf16.mxu0 0
    %1008 = vmatpush1.bf16.msra.mxu0 0
    %1009 = vmatprep.subr.bf16.mxu0 0
    %1010 = vmatpush1.bf16.msra.mxu0 0
    %1011 = vmatprep.mubr.bf16.mxu0 %v936
    %1012 = vmatmul.mubr.bf16.gmra.mrb[0].mxu0 %v676
    %v1013 = vpop.f32.mrb[0].mxu0
    %v1014 = vadd.f32 %v739, %v1013
    %v1015 = vpop.f32.mrb[0].mxu0
    %v1016 = vpop.f32.mrb[0].mxu0
    %v1017 = vpop.f32.mrb[0].mxu0
    %1018 = vdwg.mxu0
    %v1019 = vmul.f32 %v973, 0.5
    %v1020 = vmul.f32 %v975, 0.5
    %v1021 = vmul.f32 %v1014, 0.5
    %v1022 = vmul.f32 %v973, 0.70710677
    %v1023 = vmul.f32 %v975, 0.70710677
    %v1024 = vmul.f32 %v1014, 0.70710677
    %v1025 = verf.f32.pop %v1022
    %v1026 = verf.f32.pop %v1023
    %v1027 = verf.f32.pop %v1024
    %v1028 = vadd.f32 %v1025, 1.0
    %v1029 = vadd.f32 %v1026, 1.0
    %v1030 = vadd.f32 %v1027, 1.0
    %v1031 = vmul.f32 %v1019, %v1028
    %v1032 = vmul.f32 %v1020, %v1029
    %v1033 = vmul.f32 %v1021, %v1030
    %v1034 = vpack.c.bf16 %v1031, %v1031
    %v1035 = vpack.c.bf16 %v1032, %v1032
    %v1036 = vpack.c.bf16 %v1033, %v1033
    %v1037 = vld [vmem:[#allocation19] sm:$0xff]
    %v1038 = vld [vmem:[#allocation19 + $0x8] sm:$0xff]
    %v1039 = vld [vmem:[#allocation19 + $0x10] sm:$0xff]
    %v1040 = vld [vmem:[#allocation19 + $0x18] sm:$0xff]
    %v1041 = vld [vmem:[#allocation19 + $0x20] sm:$0xff]
    %v1042 = vld [vmem:[#allocation19 + $0x28] sm:$0xff]
    %v1043 = vld [vmem:[#allocation19 + $0x30] sm:$0xff]
    %v1044 = vld [vmem:[#allocation19 + $0x38] sm:$0xff]
    %v1045 = vld [vmem:[#allocation19 + $0x40] sm:$0xff]
    %v1046 = vld [vmem:[#allocation19 + $0x48] sm:$0xff]
    %v1047 = vld [vmem:[#allocation19 + $0x50] sm:$0xf]
    %v1048 = vld [vmem:[#allocation19 + $0x54] sm:$0xff]
    %v1049 = vld [vmem:[#allocation19 + $0x5c] sm:$0xff]
    %v1050 = vld [vmem:[#allocation19 + $0x64] sm:$0xff]
    %v1051 = vld [vmem:[#allocation19 + $0x6c] sm:$0xff]
    %v1052 = vld [vmem:[#allocation19 + $0x74] sm:$0xff]
    %v1053 = vld [vmem:[#allocation19 + $0x7c] sm:$0xff]
    %v1054 = vld [vmem:[#allocation19 + $0x84] sm:$0xff]
    %v1055 = vld [vmem:[#allocation19 + $0x8c] sm:$0xff]
    %v1056 = vld [vmem:[#allocation19 + $0x94] sm:$0xff]
    %v1057 = vld [vmem:[#allocation19 + $0x9c] sm:$0xff]
    %v1058 = vld [vmem:[#allocation19 + $0xa4] sm:$0xf]
    %v1059 = vld [vmem:[#allocation19 + $0xa8] sm:$0xff]
    %v1060 = vld [vmem:[#allocation19 + $0xb0] sm:$0xff]
    %v1061 = vld [vmem:[#allocation19 + $0xb8] sm:$0xff]
    %v1062 = vld [vmem:[#allocation19 + $0xc0] sm:$0xff]
    %v1063 = vld [vmem:[#allocation19 + $0xc8] sm:$0xff]
    %v1064 = vld [vmem:[#allocation19 + $0xd0] sm:$0xff]
    %v1065 = vld [vmem:[#allocation19 + $0xd8] sm:$0xff]
    %v1066 = vld [vmem:[#allocation19 + $0xe0] sm:$0xff]
    %v1067 = vld [vmem:[#allocation19 + $0xe8] sm:$0xff]
    %v1068 = vld [vmem:[#allocation19 + $0xf0] sm:$0xff]
    %v1069 = vld [vmem:[#allocation19 + $0xf8] sm:$0xf]
    %v1070 = vld [vmem:[#allocation19 + $0xfc] sm:$0xff]
    %v1071 = vld [vmem:[#allocation19 + $0x104] sm:$0xff]
    %v1072 = vld [vmem:[#allocation19 + $0x10c] sm:$0xff]
    %v1073 = vld [vmem:[#allocation19 + $0x114] sm:$0xff]
    %v1074 = vld [vmem:[#allocation19 + $0x11c] sm:$0xff]
    %v1075 = vld [vmem:[#allocation19 + $0x124] sm:$0xff]
    %v1076 = vld [vmem:[#allocation19 + $0x12c] sm:$0xff]
    %v1077 = vld [vmem:[#allocation19 + $0x134] sm:$0xff]
    %v1078 = vld [vmem:[#allocation19 + $0x13c] sm:$0xff]
    %v1079 = vld [vmem:[#allocation19 + $0x144] sm:$0xff]
    %v1080 = vld [vmem:[#allocation19 + $0x14c] sm:$0xf]
    %v1081 = vld [vmem:[#allocation19 + $0x150] sm:$0xff]
    %v1082 = vld [vmem:[#allocation19 + $0x158] sm:$0xff]
    %v1083 = vld [vmem:[#allocation19 + $0x160] sm:$0xff]
    %v1084 = vld [vmem:[#allocation19 + $0x168] sm:$0xff]
    %v1085 = vld [vmem:[#allocation19 + $0x170] sm:$0xff]
    %v1086 = vld [vmem:[#allocation19 + $0x178] sm:$0xff]
    %v1087 = vld [vmem:[#allocation19 + $0x180] sm:$0xff]
    %v1088 = vld [vmem:[#allocation19 + $0x188] sm:$0xff]
    %v1089 = vld [vmem:[#allocation19 + $0x190] sm:$0xff]
    %v1090 = vld [vmem:[#allocation19 + $0x198] sm:$0xff]
    %v1091 = vld [vmem:[#allocation19 + $0x1a0] sm:$0xf]
    %v1092 = vld [vmem:[#allocation19 + $0x1a4] sm:$0xff]
    %v1093 = vld [vmem:[#allocation19 + $0x1ac] sm:$0xff]
    %v1094 = vld [vmem:[#allocation19 + $0x1b4] sm:$0xff]
    %v1095 = vld [vmem:[#allocation19 + $0x1bc] sm:$0xff]
    %v1096 = vld [vmem:[#allocation19 + $0x1c4] sm:$0xff]
    %v1097 = vld [vmem:[#allocation19 + $0x1cc] sm:$0xff]
    %v1098 = vld [vmem:[#allocation19 + $0x1d4] sm:$0xff]
    %v1099 = vld [vmem:[#allocation19 + $0x1dc] sm:$0xff]
    %v1100 = vld [vmem:[#allocation19 + $0x1e4] sm:$0xff]
    %v1101 = vld [vmem:[#allocation19 + $0x1ec] sm:$0xff]
    %v1102 = vld [vmem:[#allocation19 + $0x1f4] sm:$0xf]
    %v1103 = vld [vmem:[#allocation19 + $0x1f8] sm:$0xff]
    %v1104 = vld [vmem:[#allocation19 + $0x200] sm:$0xff]
    %v1105 = vld [vmem:[#allocation19 + $0x208] sm:$0xff]
    %v1106 = vld [vmem:[#allocation19 + $0x210] sm:$0xff]
    %v1107 = vld [vmem:[#allocation19 + $0x218] sm:$0xff]
    %v1108 = vld [vmem:[#allocation19 + $0x220] sm:$0xff]
    %v1109 = vld [vmem:[#allocation19 + $0x228] sm:$0xff]
    %v1110 = vld [vmem:[#allocation19 + $0x230] sm:$0xff]
    %v1111 = vld [vmem:[#allocation19 + $0x238] sm:$0xff]
    %v1112 = vld [vmem:[#allocation19 + $0x240] sm:$0xff]
    %v1113 = vld [vmem:[#allocation19 + $0x248] sm:$0xf]
    %v1114 = vld [vmem:[#allocation19 + $0x24c] sm:$0xff]
    %v1115 = vld [vmem:[#allocation19 + $0x254] sm:$0xff]
    %v1116 = vld [vmem:[#allocation19 + $0x25c] sm:$0xff]
    %v1117 = vld [vmem:[#allocation19 + $0x264] sm:$0xff]
    %v1118 = vld [vmem:[#allocation19 + $0x26c] sm:$0xff]
    %v1119 = vld [vmem:[#allocation19 + $0x274] sm:$0xff]
    %v1120 = vld [vmem:[#allocation19 + $0x27c] sm:$0xff]
    %v1121 = vld [vmem:[#allocation19 + $0x284] sm:$0xff]
    %v1122 = vld [vmem:[#allocation19 + $0x28c] sm:$0xff]
    %v1123 = vld [vmem:[#allocation19 + $0x294] sm:$0xff]
    %v1124 = vld [vmem:[#allocation19 + $0x29c] sm:$0xf]
    %v1125 = vld [vmem:[#allocation19 + $0x2a0] sm:$0xff]
    %v1126 = vld [vmem:[#allocation19 + $0x2a8] sm:$0xff]
    %v1127 = vld [vmem:[#allocation19 + $0x2b0] sm:$0xff]
    %v1128 = vld [vmem:[#allocation19 + $0x2b8] sm:$0xff]
    %v1129 = vld [vmem:[#allocation19 + $0x2c0] sm:$0xff]
    %v1130 = vld [vmem:[#allocation19 + $0x2c8] sm:$0xff]
    %v1131 = vld [vmem:[#allocation19 + $0x2d0] sm:$0xff]
    %v1132 = vld [vmem:[#allocation19 + $0x2d8] sm:$0xff]
    %v1133 = vld [vmem:[#allocation19 + $0x2e0] sm:$0xff]
    %v1134 = vld [vmem:[#allocation19 + $0x2e8] sm:$0xff]
    %v1135 = vld [vmem:[#allocation19 + $0x2f0] sm:$0xf]
    %v1136 = vld [vmem:[#allocation19 + $0x2f4] sm:$0xff]
    %v1137 = vld [vmem:[#allocation19 + $0x2fc] sm:$0xff]
    %v1138 = vld [vmem:[#allocation19 + $0x304] sm:$0xff]
    %v1139 = vld [vmem:[#allocation19 + $0x30c] sm:$0xff]
    %v1140 = vld [vmem:[#allocation19 + $0x314] sm:$0xff]
    %v1141 = vld [vmem:[#allocation19 + $0x31c] sm:$0xff]
    %v1142 = vld [vmem:[#allocation19 + $0x324] sm:$0xff]
    %v1143 = vld [vmem:[#allocation19 + $0x32c] sm:$0xff]
    %v1144 = vld [vmem:[#allocation19 + $0x334] sm:$0xff]
    %v1145 = vld [vmem:[#allocation19 + $0x33c] sm:$0xff]
    %v1146 = vld [vmem:[#allocation19 + $0x344] sm:$0xf]
    %v1147 = vld [vmem:[#allocation19 + $0x348] sm:$0xff]
    %v1148 = vld [vmem:[#allocation19 + $0x350] sm:$0xff]
    %v1149 = vld [vmem:[#allocation19 + $0x358] sm:$0xff]
    %v1150 = vld [vmem:[#allocation19 + $0x360] sm:$0xff]
    %v1151 = vld [vmem:[#allocation19 + $0x368] sm:$0xff]
    %v1152 = vld [vmem:[#allocation19 + $0x370] sm:$0xff]
    %v1153 = vld [vmem:[#allocation19 + $0x378] sm:$0xff]
    %v1154 = vld [vmem:[#allocation19 + $0x380] sm:$0xff]
    %v1155 = vld [vmem:[#allocation19 + $0x388] sm:$0xff]
    %v1156 = vld [vmem:[#allocation19 + $0x390] sm:$0xff]
    %v1157 = vld [vmem:[#allocation19 + $0x398] sm:$0xf]
    %v1158 = vld [vmem:[#allocation19 + $0x39c] sm:$0xff]
    %v1159 = vld [vmem:[#allocation19 + $0x3a4] sm:$0xff]
    %v1160 = vld [vmem:[#allocation19 + $0x3ac] sm:$0xff]
    %v1161 = vld [vmem:[#allocation19 + $0x3b4] sm:$0xff]
    %v1162 = vld [vmem:[#allocation19 + $0x3bc] sm:$0xff]
    %v1163 = vld [vmem:[#allocation19 + $0x3c4] sm:$0xff]
    %v1164 = vld [vmem:[#allocation19 + $0x3cc] sm:$0xff]
    %v1165 = vld [vmem:[#allocation19 + $0x3d4] sm:$0xff]
    %v1166 = vld [vmem:[#allocation19 + $0x3dc] sm:$0xff]
    %v1167 = vld [vmem:[#allocation19 + $0x3e4] sm:$0xff]
    %v1168 = vld [vmem:[#allocation19 + $0x3ec] sm:$0xf]
    %v1169 = vld [vmem:[#allocation19 + $0x3f0] sm:$0xff]
    %v1170 = vld [vmem:[#allocation19 + $0x3f8] sm:$0xff]
    %v1171 = vld [vmem:[#allocation19 + $0x400] sm:$0xff]
    %v1172 = vld [vmem:[#allocation19 + $0x408] sm:$0xff]
    %v1173 = vld [vmem:[#allocation19 + $0x410] sm:$0xff]
    %v1174 = vld [vmem:[#allocation19 + $0x418] sm:$0xff]
    %v1175 = vld [vmem:[#allocation19 + $0x420] sm:$0xff]
    %v1176 = vld [vmem:[#allocation19 + $0x428] sm:$0xff]
    %v1177 = vld [vmem:[#allocation19 + $0x430] sm:$0xff]
    %v1178 = vld [vmem:[#allocation19 + $0x438] sm:$0xff]
    %v1179 = vld [vmem:[#allocation19 + $0x440] sm:$0xf]
    %v1180 = vld [vmem:[#allocation19 + $0x444] sm:$0xff]
    %v1181 = vld [vmem:[#allocation19 + $0x44c] sm:$0xff]
    %v1182 = vld [vmem:[#allocation19 + $0x454] sm:$0xff]
    %v1183 = vld [vmem:[#allocation19 + $0x45c] sm:$0xff]
    %v1184 = vld [vmem:[#allocation19 + $0x464] sm:$0xff]
    %v1185 = vld [vmem:[#allocation19 + $0x46c] sm:$0xff]
    %v1186 = vld [vmem:[#allocation19 + $0x474] sm:$0xff]
    %v1187 = vld [vmem:[#allocation19 + $0x47c] sm:$0xff]
    %v1188 = vld [vmem:[#allocation19 + $0x484] sm:$0xff]
    %v1189 = vld [vmem:[#allocation19 + $0x48c] sm:$0xff]
    %v1190 = vld [vmem:[#allocation19 + $0x494] sm:$0xf]
    %v1191 = vld [vmem:[#allocation19 + $0x498] sm:$0xff]
    %v1192 = vld [vmem:[#allocation19 + $0x4a0] sm:$0xff]
    %v1193 = vld [vmem:[#allocation19 + $0x4a8] sm:$0xff]
    %v1194 = vld [vmem:[#allocation19 + $0x4b0] sm:$0xff]
    %v1195 = vld [vmem:[#allocation19 + $0x4b8] sm:$0xff]
    %v1196 = vld [vmem:[#allocation19 + $0x4c0] sm:$0xff]
    %v1197 = vld [vmem:[#allocation19 + $0x4c8] sm:$0xff]
    %v1198 = vld [vmem:[#allocation19 + $0x4d0] sm:$0xff]
    %v1199 = vld [vmem:[#allocation19 + $0x4d8] sm:$0xff]
    %v1200 = vld [vmem:[#allocation19 + $0x4e0] sm:$0xff]
    %v1201 = vld [vmem:[#allocation19 + $0x4e8] sm:$0xf]
    %v1202 = vld [vmem:[#allocation19 + $0x4ec] sm:$0xff]
    %v1203 = vld [vmem:[#allocation19 + $0x4f4] sm:$0xff]
    %v1204 = vld [vmem:[#allocation19 + $0x4fc] sm:$0xff]
    %v1205 = vld [vmem:[#allocation19 + $0x504] sm:$0xff]
    %v1206 = vld [vmem:[#allocation19 + $0x50c] sm:$0xff]
    %v1207 = vld [vmem:[#allocation19 + $0x514] sm:$0xff]
    %v1208 = vld [vmem:[#allocation19 + $0x51c] sm:$0xff]
    %v1209 = vld [vmem:[#allocation19 + $0x524] sm:$0xff]
    %v1210 = vld [vmem:[#allocation19 + $0x52c] sm:$0xff]
    %v1211 = vld [vmem:[#allocation19 + $0x534] sm:$0xff]
    %v1212 = vld [vmem:[#allocation19 + $0x53c] sm:$0xf]
    %v1213 = vld [vmem:[#allocation19 + $0x540] sm:$0xff]
    %v1214 = vld [vmem:[#allocation19 + $0x548] sm:$0xff]
    %v1215 = vld [vmem:[#allocation19 + $0x550] sm:$0xff]
    %v1216 = vld [vmem:[#allocation19 + $0x558] sm:$0xff]
    %v1217 = vld [vmem:[#allocation19 + $0x560] sm:$0xff]
    %v1218 = vld [vmem:[#allocation19 + $0x568] sm:$0xff]
    %v1219 = vld [vmem:[#allocation19 + $0x570] sm:$0xff]
    %v1220 = vld [vmem:[#allocation19 + $0x578] sm:$0xff]
    %v1221 = vld [vmem:[#allocation19 + $0x580] sm:$0xff]
    %v1222 = vld [vmem:[#allocation19 + $0x588] sm:$0xff]
    %v1223 = vld [vmem:[#allocation19 + $0x590] sm:$0xf]
    %v1224 = vld [vmem:[#allocation19 + $0x594] sm:$0xff]
    %v1225 = vld [vmem:[#allocation19 + $0x59c] sm:$0xff]
    %v1226 = vld [vmem:[#allocation19 + $0x5a4] sm:$0xff]
    %v1227 = vld [vmem:[#allocation19 + $0x5ac] sm:$0xff]
    %v1228 = vld [vmem:[#allocation19 + $0x5b4] sm:$0xff]
    %v1229 = vld [vmem:[#allocation19 + $0x5bc] sm:$0xff]
    %v1230 = vld [vmem:[#allocation19 + $0x5c4] sm:$0xff]
    %v1231 = vld [vmem:[#allocation19 + $0x5cc] sm:$0xff]
    %v1232 = vld [vmem:[#allocation19 + $0x5d4] sm:$0xff]
    %v1233 = vld [vmem:[#allocation19 + $0x5dc] sm:$0xff]
    %v1234 = vld [vmem:[#allocation19 + $0x5e4] sm:$0xf]
    %v1235 = vld [vmem:[#allocation19 + $0x5e8] sm:$0xff]
    %v1236 = vld [vmem:[#allocation19 + $0x5f0] sm:$0xff]
    %v1237 = vld [vmem:[#allocation19 + $0x5f8] sm:$0xff]
    %v1238 = vld [vmem:[#allocation19 + $0x600] sm:$0xff]
    %v1239 = vld [vmem:[#allocation19 + $0x608] sm:$0xff]
    %v1240 = vld [vmem:[#allocation19 + $0x610] sm:$0xff]
    %v1241 = vld [vmem:[#allocation19 + $0x618] sm:$0xff]
    %v1242 = vld [vmem:[#allocation19 + $0x620] sm:$0xff]
    %v1243 = vld [vmem:[#allocation19 + $0x628] sm:$0xff]
    %v1244 = vld [vmem:[#allocation19 + $0x630] sm:$0xff]
    %v1245 = vld [vmem:[#allocation19 + $0x638] sm:$0xf]
    %v1246 = vld [vmem:[#allocation19 + $0x63c] sm:$0xff]
    %v1247 = vld [vmem:[#allocation19 + $0x644] sm:$0xff]
    %v1248 = vld [vmem:[#allocation19 + $0x64c] sm:$0xff]
    %v1249 = vld [vmem:[#allocation19 + $0x654] sm:$0xff]
    %v1250 = vld [vmem:[#allocation19 + $0x65c] sm:$0xff]
    %v1251 = vld [vmem:[#allocation19 + $0x664] sm:$0xff]
    %v1252 = vld [vmem:[#allocation19 + $0x66c] sm:$0xff]
    %v1253 = vld [vmem:[#allocation19 + $0x674] sm:$0xff]
    %v1254 = vld [vmem:[#allocation19 + $0x67c] sm:$0xff]
    %v1255 = vld [vmem:[#allocation19 + $0x684] sm:$0xff]
    %v1256 = vld [vmem:[#allocation19 + $0x68c] sm:$0xf]
    %v1257 = vld [vmem:[#allocation19 + $0x690] sm:$0xff]
    %v1258 = vld [vmem:[#allocation19 + $0x698] sm:$0xff]
    %v1259 = vld [vmem:[#allocation19 + $0x6a0] sm:$0xff]
    %v1260 = vld [vmem:[#allocation19 + $0x6a8] sm:$0xff]
    %v1261 = vld [vmem:[#allocation19 + $0x6b0] sm:$0xff]
    %v1262 = vld [vmem:[#allocation19 + $0x6b8] sm:$0xff]
    %v1263 = vld [vmem:[#allocation19 + $0x6c0] sm:$0xff]
    %v1264 = vld [vmem:[#allocation19 + $0x6c8] sm:$0xff]
    %v1265 = vld [vmem:[#allocation19 + $0x6d0] sm:$0xff]
    %v1266 = vld [vmem:[#allocation19 + $0x6d8] sm:$0xff]
    %v1267 = vld [vmem:[#allocation19 + $0x6e0] sm:$0xf]
    %v1268 = vld [vmem:[#allocation19 + $0x6e4] sm:$0xff]
    %v1269 = vld [vmem:[#allocation19 + $0x6ec] sm:$0xff]
    %v1270 = vld [vmem:[#allocation19 + $0x6f4] sm:$0xff]
    %v1271 = vld [vmem:[#allocation19 + $0x6fc] sm:$0xff]
    %v1272 = vld [vmem:[#allocation19 + $0x704] sm:$0xff]
    %v1273 = vld [vmem:[#allocation19 + $0x70c] sm:$0xff]
    %v1274 = vld [vmem:[#allocation19 + $0x714] sm:$0xff]
    %v1275 = vld [vmem:[#allocation19 + $0x71c] sm:$0xff]
    %v1276 = vld [vmem:[#allocation19 + $0x724] sm:$0xff]
    %v1277 = vld [vmem:[#allocation19 + $0x72c] sm:$0xff]
    %v1278 = vld [vmem:[#allocation19 + $0x734] sm:$0xf]
    %v1279 = vld [vmem:[#allocation19 + $0x738] sm:$0xff]
    %v1280 = vld [vmem:[#allocation19 + $0x740] sm:$0xff]
    %v1281 = vld [vmem:[#allocation19 + $0x748] sm:$0xff]
    %v1282 = vld [vmem:[#allocation19 + $0x750] sm:$0xff]
    %v1283 = vld [vmem:[#allocation19 + $0x758] sm:$0xff]
    %v1284 = vld [vmem:[#allocation19 + $0x760] sm:$0xff]
    %v1285 = vld [vmem:[#allocation19 + $0x768] sm:$0xff]
    %v1286 = vld [vmem:[#allocation19 + $0x770] sm:$0xff]
    %v1287 = vld [vmem:[#allocation19 + $0x778] sm:$0xff]
    %v1288 = vld [vmem:[#allocation19 + $0x780] sm:$0xff]
    %v1289 = vld [vmem:[#allocation19 + $0x788] sm:$0xf]
    %v1290 = vld [vmem:[#allocation19 + $0x78c] sm:$0xff]
    %v1291 = vld [vmem:[#allocation19 + $0x794] sm:$0xff]
    %v1292 = vld [vmem:[#allocation19 + $0x79c] sm:$0xff]
    %v1293 = vld [vmem:[#allocation19 + $0x7a4] sm:$0xff]
    %v1294 = vld [vmem:[#allocation19 + $0x7ac] sm:$0xff]
    %v1295 = vld [vmem:[#allocation19 + $0x7b4] sm:$0xff]
    %v1296 = vld [vmem:[#allocation19 + $0x7bc] sm:$0xff]
    %v1297 = vld [vmem:[#allocation19 + $0x7c4] sm:$0xff]
    %v1298 = vld [vmem:[#allocation19 + $0x7cc] sm:$0xff]
    %v1299 = vld [vmem:[#allocation19 + $0x7d4] sm:$0xff]
    %v1300 = vld [vmem:[#allocation19 + $0x7dc] sm:$0xf]
    %v1301 = vld [vmem:[#allocation19 + $0x7e0] sm:$0xff]
    %v1302 = vld [vmem:[#allocation19 + $0x7e8] sm:$0xff]
    %v1303 = vld [vmem:[#allocation19 + $0x7f0] sm:$0xff]
    %v1304 = vld [vmem:[#allocation19 + $0x7f8] sm:$0xff]
    %v1305 = vld [vmem:[#allocation19 + $0x800] sm:$0xff]
    %v1306 = vld [vmem:[#allocation19 + $0x808] sm:$0xff]
    %v1307 = vld [vmem:[#allocation19 + $0x810] sm:$0xff]
    %v1308 = vld [vmem:[#allocation19 + $0x818] sm:$0xff]
    %v1309 = vld [vmem:[#allocation19 + $0x820] sm:$0xff]
    %v1310 = vld [vmem:[#allocation19 + $0x828] sm:$0xff]
    %v1311 = vld [vmem:[#allocation19 + $0x830] sm:$0xf]
    %v1312 = vld [vmem:[#allocation19 + $0x834] sm:$0xff]
    %v1313 = vld [vmem:[#allocation19 + $0x83c] sm:$0xff]
    %v1314 = vld [vmem:[#allocation19 + $0x844] sm:$0xff]
    %v1315 = vld [vmem:[#allocation19 + $0x84c] sm:$0xff]
    %v1316 = vld [vmem:[#allocation19 + $0x854] sm:$0xff]
    %v1317 = vld [vmem:[#allocation19 + $0x85c] sm:$0xff]
    %v1318 = vld [vmem:[#allocation19 + $0x864] sm:$0xff]
    %v1319 = vld [vmem:[#allocation19 + $0x86c] sm:$0xff]
    %v1320 = vld [vmem:[#allocation19 + $0x874] sm:$0xff]
    %v1321 = vld [vmem:[#allocation19 + $0x87c] sm:$0xff]
    %v1322 = vld [vmem:[#allocation19 + $0x884] sm:$0xf]
    %v1323 = vld [vmem:[#allocation19 + $0x888] sm:$0xff]
    %v1324 = vld [vmem:[#allocation19 + $0x890] sm:$0xff]
    %v1325 = vld [vmem:[#allocation19 + $0x898] sm:$0xff]
    %v1326 = vld [vmem:[#allocation19 + $0x8a0] sm:$0xff]
    %v1327 = vld [vmem:[#allocation19 + $0x8a8] sm:$0xff]
    %v1328 = vld [vmem:[#allocation19 + $0x8b0] sm:$0xff]
    %v1329 = vld [vmem:[#allocation19 + $0x8b8] sm:$0xff]
    %v1330 = vld [vmem:[#allocation19 + $0x8c0] sm:$0xff]
    %v1331 = vld [vmem:[#allocation19 + $0x8c8] sm:$0xff]
    %v1332 = vld [vmem:[#allocation19 + $0x8d0] sm:$0xff]
    %v1333 = vld [vmem:[#allocation19 + $0x8d8] sm:$0xf]
    %v1334 = vld [vmem:[#allocation19 + $0x8dc] sm:$0xff]
    %v1335 = vld [vmem:[#allocation19 + $0x8e4] sm:$0xff]
    %v1336 = vld [vmem:[#allocation19 + $0x8ec] sm:$0xff]
    %v1337 = vld [vmem:[#allocation19 + $0x8f4] sm:$0xff]
    %v1338 = vld [vmem:[#allocation19 + $0x8fc] sm:$0xff]
    %v1339 = vld [vmem:[#allocation19 + $0x904] sm:$0xff]
    %v1340 = vld [vmem:[#allocation19 + $0x90c] sm:$0xff]
    %v1341 = vld [vmem:[#allocation19 + $0x914] sm:$0xff]
    %v1342 = vld [vmem:[#allocation19 + $0x91c] sm:$0xff]
    %v1343 = vld [vmem:[#allocation19 + $0x924] sm:$0xff]
    %v1344 = vld [vmem:[#allocation19 + $0x92c] sm:$0xf]
    %v1345 = vld [vmem:[#allocation19 + $0x930] sm:$0xff]
    %v1346 = vld [vmem:[#allocation19 + $0x938] sm:$0xff]
    %v1347 = vld [vmem:[#allocation19 + $0x940] sm:$0xff]
    %v1348 = vld [vmem:[#allocation19 + $0x948] sm:$0xff]
    %v1349 = vld [vmem:[#allocation19 + $0x950] sm:$0xff]
    %v1350 = vld [vmem:[#allocation19 + $0x958] sm:$0xff]
    %v1351 = vld [vmem:[#allocation19 + $0x960] sm:$0xff]
    %v1352 = vld [vmem:[#allocation19 + $0x968] sm:$0xff]
    %v1353 = vld [vmem:[#allocation19 + $0x970] sm:$0xff]
    %v1354 = vld [vmem:[#allocation19 + $0x978] sm:$0xff]
    %v1355 = vld [vmem:[#allocation19 + $0x980] sm:$0xf]
    %v1356 = vld [vmem:[#allocation19 + $0x984] sm:$0xff]
    %v1357 = vld [vmem:[#allocation19 + $0x98c] sm:$0xff]
    %v1358 = vld [vmem:[#allocation19 + $0x994] sm:$0xff]
    %v1359 = vld [vmem:[#allocation19 + $0x99c] sm:$0xff]
    %v1360 = vld [vmem:[#allocation19 + $0x9a4] sm:$0xff]
    %v1361 = vld [vmem:[#allocation19 + $0x9ac] sm:$0xff]
    %v1362 = vld [vmem:[#allocation19 + $0x9b4] sm:$0xff]
    %v1363 = vld [vmem:[#allocation19 + $0x9bc] sm:$0xff]
    %v1364 = vld [vmem:[#allocation19 + $0x9c4] sm:$0xff]
    %v1365 = vld [vmem:[#allocation19 + $0x9cc] sm:$0xff]
    %v1366 = vld [vmem:[#allocation19 + $0x9d4] sm:$0xf]
    %v1367 = vld [vmem:[#allocation19 + $0x9d8] sm:$0xff]
    %v1368 = vld [vmem:[#allocation19 + $0x9e0] sm:$0xff]
    %v1369 = vld [vmem:[#allocation19 + $0x9e8] sm:$0xff]
    %v1370 = vld [vmem:[#allocation19 + $0x9f0] sm:$0xff]
    %v1371 = vld [vmem:[#allocation19 + $0x9f8] sm:$0xff]
    %v1372 = vld [vmem:[#allocation19 + $0xa00] sm:$0xff]
    %v1373 = vld [vmem:[#allocation19 + $0xa08] sm:$0xff]
    %v1374 = vld [vmem:[#allocation19 + $0xa10] sm:$0xff]
    %v1375 = vld [vmem:[#allocation19 + $0xa18] sm:$0xff]
    %v1376 = vld [vmem:[#allocation19 + $0xa20] sm:$0xff]
    %v1377 = vld [vmem:[#allocation19 + $0xa28] sm:$0xf]
    %v1378 = vld [vmem:[#allocation19 + $0xa2c] sm:$0xff]
    %v1379 = vld [vmem:[#allocation19 + $0xa34] sm:$0xff]
    %v1380 = vld [vmem:[#allocation19 + $0xa3c] sm:$0xff]
    %v1381 = vld [vmem:[#allocation19 + $0xa44] sm:$0xff]
    %v1382 = vld [vmem:[#allocation19 + $0xa4c] sm:$0xff]
    %v1383 = vld [vmem:[#allocation19 + $0xa54] sm:$0xff]
    %v1384 = vld [vmem:[#allocation19 + $0xa5c] sm:$0xff]
    %v1385 = vld [vmem:[#allocation19 + $0xa64] sm:$0xff]
    %v1386 = vld [vmem:[#allocation19 + $0xa6c] sm:$0xff]
    %v1387 = vld [vmem:[#allocation19 + $0xa74] sm:$0xff]
    %v1388 = vld [vmem:[#allocation19 + $0xa7c] sm:$0xf]
    %v1389 = vld [vmem:[#allocation19 + $0xa80] sm:$0xff]
    %v1390 = vld [vmem:[#allocation19 + $0xa88] sm:$0xff]
    %v1391 = vld [vmem:[#allocation19 + $0xa90] sm:$0xff]
    %v1392 = vld [vmem:[#allocation19 + $0xa98] sm:$0xff]
    %v1393 = vld [vmem:[#allocation19 + $0xaa0] sm:$0xff]
    %v1394 = vld [vmem:[#allocation19 + $0xaa8] sm:$0xff]
    %v1395 = vld [vmem:[#allocation19 + $0xab0] sm:$0xff]
    %v1396 = vld [vmem:[#allocation19 + $0xab8] sm:$0xff]
    %v1397 = vld [vmem:[#allocation19 + $0xac0] sm:$0xff]
    %v1398 = vld [vmem:[#allocation19 + $0xac8] sm:$0xff]
    %v1399 = vld [vmem:[#allocation19 + $0xad0] sm:$0xf]
    %v1400 = vld [vmem:[#allocation19 + $0xad4] sm:$0xff]
    %v1401 = vld [vmem:[#allocation19 + $0xadc] sm:$0xff]
    %v1402 = vld [vmem:[#allocation19 + $0xae4] sm:$0xff]
    %v1403 = vld [vmem:[#allocation19 + $0xaec] sm:$0xff]
    %v1404 = vld [vmem:[#allocation19 + $0xaf4] sm:$0xff]
    %v1405 = vld [vmem:[#allocation19 + $0xafc] sm:$0xff]
    %v1406 = vld [vmem:[#allocation19 + $0xb04] sm:$0xff]
    %v1407 = vld [vmem:[#allocation19 + $0xb0c] sm:$0xff]
    %v1408 = vld [vmem:[#allocation19 + $0xb14] sm:$0xff]
    %v1409 = vld [vmem:[#allocation19 + $0xb1c] sm:$0xff]
    %v1410 = vld [vmem:[#allocation19 + $0xb24] sm:$0xf]
    %v1411 = vld [vmem:[#allocation19 + $0xb28] sm:$0xff]
    %v1412 = vld [vmem:[#allocation19 + $0xb30] sm:$0xff]
    %v1413 = vld [vmem:[#allocation19 + $0xb38] sm:$0xff]
    %v1414 = vld [vmem:[#allocation19 + $0xb40] sm:$0xff]
    %v1415 = vld [vmem:[#allocation19 + $0xb48] sm:$0xff]
    %v1416 = vld [vmem:[#allocation19 + $0xb50] sm:$0xff]
    %v1417 = vld [vmem:[#allocation19 + $0xb58] sm:$0xff]
    %v1418 = vld [vmem:[#allocation19 + $0xb60] sm:$0xff]
    %v1419 = vld [vmem:[#allocation19 + $0xb68] sm:$0xff]
    %v1420 = vld [vmem:[#allocation19 + $0xb70] sm:$0xff]
    %v1421 = vld [vmem:[#allocation19 + $0xb78] sm:$0xf]
    %v1422 = vld [vmem:[#allocation19 + $0xb7c] sm:$0xff]
    %v1423 = vld [vmem:[#allocation19 + $0xb84] sm:$0xff]
    %v1424 = vld [vmem:[#allocation19 + $0xb8c] sm:$0xff]
    %v1425 = vld [vmem:[#allocation19 + $0xb94] sm:$0xff]
    %v1426 = vld [vmem:[#allocation19 + $0xb9c] sm:$0xff]
    %v1427 = vld [vmem:[#allocation19 + $0xba4] sm:$0xff]
    %v1428 = vld [vmem:[#allocation19 + $0xbac] sm:$0xff]
    %v1429 = vld [vmem:[#allocation19 + $0xbb4] sm:$0xff]
    %v1430 = vld [vmem:[#allocation19 + $0xbbc] sm:$0xff]
    %v1431 = vld [vmem:[#allocation19 + $0xbc4] sm:$0xff]
    %v1432 = vld [vmem:[#allocation19 + $0xbcc] sm:$0xf]
    %v1433 = vld [vmem:[#allocation19 + $0xbd0] sm:$0xff]
    %v1434 = vld [vmem:[#allocation19 + $0xbd8] sm:$0xff]
    %v1435 = vld [vmem:[#allocation19 + $0xbe0] sm:$0xff]
    %v1436 = vld [vmem:[#allocation19 + $0xbe8] sm:$0xff]
    %v1437 = vld [vmem:[#allocation19 + $0xbf0] sm:$0xff]
    %v1438 = vld [vmem:[#allocation19 + $0xbf8] sm:$0xff]
    %v1439 = vld [vmem:[#allocation19 + $0xc00] sm:$0xff]
    %v1440 = vld [vmem:[#allocation19 + $0xc08] sm:$0xff]
    %v1441 = vld [vmem:[#allocation19 + $0xc10] sm:$0xff]
    %v1442 = vld [vmem:[#allocation19 + $0xc18] sm:$0xff]
    %v1443 = vld [vmem:[#allocation19 + $0xc20] sm:$0xf]
    %v1444 = vld [vmem:[#allocation19 + $0xc24] sm:$0xff]
    %v1445 = vld [vmem:[#allocation19 + $0xc2c] sm:$0xff]
    %v1446 = vld [vmem:[#allocation19 + $0xc34] sm:$0xff]
    %v1447 = vld [vmem:[#allocation19 + $0xc3c] sm:$0xff]
    %v1448 = vld [vmem:[#allocation19 + $0xc44] sm:$0xff]
    %v1449 = vld [vmem:[#allocation19 + $0xc4c] sm:$0xff]
    %v1450 = vld [vmem:[#allocation19 + $0xc54] sm:$0xff]
    %v1451 = vld [vmem:[#allocation19 + $0xc5c] sm:$0xff]
    %v1452 = vld [vmem:[#allocation19 + $0xc64] sm:$0xff]
    %v1453 = vld [vmem:[#allocation19 + $0xc6c] sm:$0xff]
    %v1454 = vld [vmem:[#allocation19 + $0xc74] sm:$0xf]
    %v1455 = vld [vmem:[#allocation19 + $0xc78] sm:$0xff]
    %v1456 = vld [vmem:[#allocation19 + $0xc80] sm:$0xff]
    %v1457 = vld [vmem:[#allocation19 + $0xc88] sm:$0xff]
    %v1458 = vld [vmem:[#allocation19 + $0xc90] sm:$0xff]
    %v1459 = vld [vmem:[#allocation19 + $0xc98] sm:$0xff]
    %v1460 = vld [vmem:[#allocation19 + $0xca0] sm:$0xff]
    %v1461 = vld [vmem:[#allocation19 + $0xca8] sm:$0xff]
    %v1462 = vld [vmem:[#allocation19 + $0xcb0] sm:$0xff]
    %v1463 = vld [vmem:[#allocation19 + $0xcb8] sm:$0xff]
    %v1464 = vld [vmem:[#allocation19 + $0xcc0] sm:$0xff]
    %v1465 = vld [vmem:[#allocation19 + $0xcc8] sm:$0xf]
    %v1466 = vld [vmem:[#allocation19 + $0xccc] sm:$0xff]
    %v1467 = vld [vmem:[#allocation19 + $0xcd4] sm:$0xff]
    %v1468 = vld [vmem:[#allocation19 + $0xcdc] sm:$0xff]
    %v1469 = vld [vmem:[#allocation19 + $0xce4] sm:$0xff]
    %v1470 = vld [vmem:[#allocation19 + $0xcec] sm:$0xff]
    %v1471 = vld [vmem:[#allocation19 + $0xcf4] sm:$0xff]
    %v1472 = vld [vmem:[#allocation19 + $0xcfc] sm:$0xff]
    %v1473 = vld [vmem:[#allocation19 + $0xd04] sm:$0xff]
    %v1474 = vld [vmem:[#allocation19 + $0xd0c] sm:$0xff]
    %v1475 = vld [vmem:[#allocation19 + $0xd14] sm:$0xff]
    %v1476 = vld [vmem:[#allocation19 + $0xd1c] sm:$0xf]
    %v1477 = vld [vmem:[#allocation19 + $0xd20] sm:$0xff]
    %v1478 = vld [vmem:[#allocation19 + $0xd28] sm:$0xff]
    %v1479 = vld [vmem:[#allocation19 + $0xd30] sm:$0xff]
    %v1480 = vld [vmem:[#allocation19 + $0xd38] sm:$0xff]
    %v1481 = vld [vmem:[#allocation19 + $0xd40] sm:$0xff]
    %v1482 = vld [vmem:[#allocation19 + $0xd48] sm:$0xff]
    %v1483 = vld [vmem:[#allocation19 + $0xd50] sm:$0xff]
    %v1484 = vld [vmem:[#allocation19 + $0xd58] sm:$0xff]
    %v1485 = vld [vmem:[#allocation19 + $0xd60] sm:$0xff]
    %v1486 = vld [vmem:[#allocation19 + $0xd68] sm:$0xff]
    %v1487 = vld [vmem:[#allocation19 + $0xd70] sm:$0xf]
    %v1488 = vld [vmem:[#allocation19 + $0xd74] sm:$0xff]
    %v1489 = vld [vmem:[#allocation19 + $0xd7c] sm:$0xff]
    %v1490 = vld [vmem:[#allocation19 + $0xd84] sm:$0xff]
    %v1491 = vld [vmem:[#allocation19 + $0xd8c] sm:$0xff]
    %v1492 = vld [vmem:[#allocation19 + $0xd94] sm:$0xff]
    %v1493 = vld [vmem:[#allocation19 + $0xd9c] sm:$0xff]
    %v1494 = vld [vmem:[#allocation19 + $0xda4] sm:$0xff]
    %v1495 = vld [vmem:[#allocation19 + $0xdac] sm:$0xff]
    %v1496 = vld [vmem:[#allocation19 + $0xdb4] sm:$0xff]
    %v1497 = vld [vmem:[#allocation19 + $0xdbc] sm:$0xff]
    %v1498 = vld [vmem:[#allocation19 + $0xdc4] sm:$0xf]
    %v1499 = vld [vmem:[#allocation19 + $0xdc8] sm:$0xff]
    %v1500 = vld [vmem:[#allocation19 + $0xdd0] sm:$0xff]
    %v1501 = vld [vmem:[#allocation19 + $0xdd8] sm:$0xff]
    %v1502 = vld [vmem:[#allocation19 + $0xde0] sm:$0xff]
    %v1503 = vld [vmem:[#allocation19 + $0xde8] sm:$0xff]
    %v1504 = vld [vmem:[#allocation19 + $0xdf0] sm:$0xff]
    %v1505 = vld [vmem:[#allocation19 + $0xdf8] sm:$0xff]
    %v1506 = vld [vmem:[#allocation19 + $0xe00] sm:$0xff]
    %v1507 = vld [vmem:[#allocation19 + $0xe08] sm:$0xff]
    %v1508 = vld [vmem:[#allocation19 + $0xe10] sm:$0xff]
    %v1509 = vld [vmem:[#allocation19 + $0xe18] sm:$0xf]
    %v1510 = vld [vmem:[#allocation19 + $0xe1c] sm:$0xff]
    %v1511 = vld [vmem:[#allocation19 + $0xe24] sm:$0xff]
    %v1512 = vld [vmem:[#allocation19 + $0xe2c] sm:$0xff]
    %v1513 = vld [vmem:[#allocation19 + $0xe34] sm:$0xff]
    %v1514 = vld [vmem:[#allocation19 + $0xe3c] sm:$0xff]
    %v1515 = vld [vmem:[#allocation19 + $0xe44] sm:$0xff]
    %v1516 = vld [vmem:[#allocation19 + $0xe4c] sm:$0xff]
    %v1517 = vld [vmem:[#allocation19 + $0xe54] sm:$0xff]
    %v1518 = vld [vmem:[#allocation19 + $0xe5c] sm:$0xff]
    %v1519 = vld [vmem:[#allocation19 + $0xe64] sm:$0xff]
    %v1520 = vld [vmem:[#allocation19 + $0xe6c] sm:$0xf]
    %v1521 = vld [vmem:[#allocation19 + $0xe70] sm:$0xff]
    %v1522 = vld [vmem:[#allocation19 + $0xe78] sm:$0xff]
    %v1523 = vld [vmem:[#allocation19 + $0xe80] sm:$0xff]
    %v1524 = vld [vmem:[#allocation19 + $0xe88] sm:$0xff]
    %v1525 = vld [vmem:[#allocation19 + $0xe90] sm:$0xff]
    %v1526 = vld [vmem:[#allocation19 + $0xe98] sm:$0xff]
    %v1527 = vld [vmem:[#allocation19 + $0xea0] sm:$0xff]
    %v1528 = vld [vmem:[#allocation19 + $0xea8] sm:$0xff]
    %v1529 = vld [vmem:[#allocation19 + $0xeb0] sm:$0xff]
    %v1530 = vld [vmem:[#allocation19 + $0xeb8] sm:$0xff]
    %v1531 = vld [vmem:[#allocation19 + $0xec0] sm:$0xf]
    %v1532 = vld [vmem:[#allocation19 + $0xec4] sm:$0xff]
    %v1533 = vld [vmem:[#allocation19 + $0xecc] sm:$0xff]
    %v1534 = vld [vmem:[#allocation19 + $0xed4] sm:$0xff]
    %v1535 = vld [vmem:[#allocation19 + $0xedc] sm:$0xff]
    %v1536 = vld [vmem:[#allocation19 + $0xee4] sm:$0xff]
    %v1537 = vld [vmem:[#allocation19 + $0xeec] sm:$0xff]
    %v1538 = vld [vmem:[#allocation19 + $0xef4] sm:$0xff]
    %v1539 = vld [vmem:[#allocation19 + $0xefc] sm:$0xff]
    %v1540 = vld [vmem:[#allocation19 + $0xf04] sm:$0xff]
    %v1541 = vld [vmem:[#allocation19 + $0xf0c] sm:$0xff]
    %v1542 = vld [vmem:[#allocation19 + $0xf14] sm:$0xf]
    %v1543 = vld [vmem:[#allocation19 + $0xf18] sm:$0xff]
    %v1544 = vld [vmem:[#allocation19 + $0xf20] sm:$0xff]
    %v1545 = vld [vmem:[#allocation19 + $0xf28] sm:$0xff]
    %v1546 = vld [vmem:[#allocation19 + $0xf30] sm:$0xff]
    %v1547 = vld [vmem:[#allocation19 + $0xf38] sm:$0xff]
    %v1548 = vld [vmem:[#allocation19 + $0xf40] sm:$0xff]
    %v1549 = vld [vmem:[#allocation19 + $0xf48] sm:$0xff]
    %v1550 = vld [vmem:[#allocation19 + $0xf50] sm:$0xff]
    %v1551 = vld [vmem:[#allocation19 + $0xf58] sm:$0xff]
    %v1552 = vld [vmem:[#allocation19 + $0xf60] sm:$0xff]
    %v1553 = vld [vmem:[#allocation19 + $0xf68] sm:$0xf]
    %v1554 = vld [vmem:[#allocation19 + $0xf6c] sm:$0xff]
    %v1555 = vld [vmem:[#allocation19 + $0xf74] sm:$0xff]
    %v1556 = vld [vmem:[#allocation19 + $0xf7c] sm:$0xff]
    %v1557 = vld [vmem:[#allocation19 + $0xf84] sm:$0xff]
    %v1558 = vld [vmem:[#allocation19 + $0xf8c] sm:$0xff]
    %v1559 = vld [vmem:[#allocation19 + $0xf94] sm:$0xff]
    %v1560 = vld [vmem:[#allocation19 + $0xf9c] sm:$0xff]
    %v1561 = vld [vmem:[#allocation19 + $0xfa4] sm:$0xff]
    %v1562 = vld [vmem:[#allocation19 + $0xfac] sm:$0xff]
    %v1563 = vld [vmem:[#allocation19 + $0xfb4] sm:$0xff]
    %v1564 = vld [vmem:[#allocation19 + $0xfbc] sm:$0xf]
    %v1565 = vld [vmem:[#allocation20] sm:$0xff]
    %v1566 = vld [vmem:[#allocation20 + $0x8] sm:$0xff]
    %v1567 = vld [vmem:[#allocation20 + $0x10] sm:$0x1f]
    %v1571 = vlaneseq
    %v1572 = vshrl.u32 %v1571, 7
    %v1573 = vsub.s32 0, %v1572
    %v1574 = vrot.slane %v1565, %v1573
    %v1575 = vlaneseq
    %v1576 = vshrl.u32 %v1575, 7
    %v1577 = vsub.s32 1, %v1576
    %v1578 = vrot.slane %v1565, %v1577
    %v1579 = vlaneseq
    %v1580 = vshrl.u32 %v1579, 7
    %v1581 = vsub.s32 2, %v1580
    %v1582 = vrot.slane %v1565, %v1581
    %v1583 = vlaneseq
    %v1584 = vshrl.u32 %v1583, 7
    %v1585 = vsub.s32 3, %v1584
    %v1586 = vrot.slane %v1565, %v1585
    %v1587 = vlaneseq
    %v1588 = vshrl.u32 %v1587, 7
    %v1589 = vsub.s32 4, %v1588
    %v1590 = vrot.slane %v1565, %v1589
    %v1591 = vlaneseq
    %v1592 = vshrl.u32 %v1591, 7
    %v1593 = vsub.s32 5, %v1592
    %v1594 = vrot.slane %v1565, %v1593
    %v1595 = vlaneseq
    %v1596 = vshrl.u32 %v1595, 7
    %v1597 = vsub.s32 6, %v1596
    %v1598 = vrot.slane %v1565, %v1597
    %v1599 = vlaneseq
    %v1600 = vshrl.u32 %v1599, 7
    %v1601 = vsub.s32 7, %v1600
    %v1602 = vrot.slane %v1565, %v1601
    %v1603 = vlaneseq
    %v1604 = vshrl.u32 %v1603, 7
    %v1605 = vsub.s32 0, %v1604
    %v1606 = vrot.slane %v1566, %v1605
    %v1607 = vlaneseq
    %v1608 = vshrl.u32 %v1607, 7
    %v1609 = vsub.s32 1, %v1608
    %v1610 = vrot.slane %v1566, %v1609
    %v1611 = vlaneseq
    %v1612 = vshrl.u32 %v1611, 7
    %v1613 = vsub.s32 2, %v1612
    %v1614 = vrot.slane %v1566, %v1613
    %v1615 = vlaneseq
    %v1616 = vshrl.u32 %v1615, 7
    %v1617 = vsub.s32 3, %v1616
    %v1618 = vrot.slane %v1566, %v1617
    %v1619 = vlaneseq
    %v1620 = vshrl.u32 %v1619, 7
    %v1621 = vsub.s32 4, %v1620
    %v1622 = vrot.slane %v1566, %v1621
    %v1623 = vlaneseq
    %v1624 = vshrl.u32 %v1623, 7
    %v1625 = vsub.s32 5, %v1624
    %v1626 = vrot.slane %v1566, %v1625
    %v1627 = vlaneseq
    %v1628 = vshrl.u32 %v1627, 7
    %v1629 = vsub.s32 6, %v1628
    %v1630 = vrot.slane %v1566, %v1629
    %v1631 = vlaneseq
    %v1632 = vshrl.u32 %v1631, 7
    %v1633 = vsub.s32 7, %v1632
    %v1634 = vrot.slane %v1566, %v1633
    %v1635 = vlaneseq
    %v1636 = vshrl.u32 %v1635, 7
    %v1637 = vsub.s32 0, %v1636
    %v1638 = vrot.slane %v1567, %v1637
    %v1639 = vlaneseq
    %v1640 = vshrl.u32 %v1639, 7
    %v1641 = vsub.s32 1, %v1640
    %v1642 = vrot.slane %v1567, %v1641
    %v1643 = vlaneseq
    %v1644 = vshrl.u32 %v1643, 7
    %v1645 = vsub.s32 2, %v1644
    %v1646 = vrot.slane %v1567, %v1645
    %v1647 = vlaneseq
    %v1648 = vshrl.u32 %v1647, 7
    %v1649 = vsub.s32 3, %v1648
    %v1650 = vrot.slane %v1567, %v1649
    %v1651 = vlaneseq
    %v1652 = vshrl.u32 %v1651, 7
    %v1653 = vsub.s32 4, %v1652
    %v1654 = vrot.slane %v1567, %v1653
    %v2204 = vunpack.c.l.b16 %v1037
    %v2205 = vunpack.c.h.b16 %v1037
    %v2206 = vunpack.c.l.b16 %v1038
    %v2207 = vunpack.c.h.b16 %v1038
    %v2208 = vunpack.c.l.b16 %v1039
    %v2209 = vunpack.c.h.b16 %v1039
    %v2210 = vunpack.c.l.b16 %v1040
    %v2211 = vunpack.c.h.b16 %v1040
    %v2212 = vunpack.c.l.b16 %v1041
    %v2213 = vunpack.c.h.b16 %v1041
    %v2214 = vunpack.c.l.b16 %v1042
    %v2215 = vunpack.c.h.b16 %v1042
    %v2216 = vunpack.c.l.b16 %v1043
    %v2217 = vunpack.c.h.b16 %v1043
    %v2218 = vunpack.c.l.b16 %v1044
    %v2219 = vunpack.c.h.b16 %v1044
    %v2220 = vunpack.c.l.b16 %v1045
    %v2221 = vunpack.c.h.b16 %v1045
    %v2222 = vunpack.c.l.b16 %v1046
    %v2223 = vunpack.c.h.b16 %v1046
    %v2224 = vunpack.c.l.b16 %v1047
    %v2225 = vunpack.c.l.b16 %v1048
    %v2226 = vunpack.c.h.b16 %v1048
    %v2227 = vunpack.c.l.b16 %v1049
    %v2228 = vunpack.c.h.b16 %v1049
    %v2229 = vunpack.c.l.b16 %v1050
    %v2230 = vunpack.c.h.b16 %v1050
    %v2231 = vunpack.c.l.b16 %v1051
    %v2232 = vunpack.c.h.b16 %v1051
    %v2233 = vunpack.c.l.b16 %v1052
    %v2234 = vunpack.c.h.b16 %v1052
    %v2235 = vunpack.c.l.b16 %v1053
    %v2236 = vunpack.c.h.b16 %v1053
    %v2237 = vunpack.c.l.b16 %v1054
    %v2238 = vunpack.c.h.b16 %v1054
    %v2239 = vunpack.c.l.b16 %v1055
    %v2240 = vunpack.c.h.b16 %v1055
    %v2241 = vunpack.c.l.b16 %v1056
    %v2242 = vunpack.c.h.b16 %v1056
    %v2243 = vunpack.c.l.b16 %v1057
    %v2244 = vunpack.c.h.b16 %v1057
    %v2245 = vunpack.c.l.b16 %v1058
    %v2246 = vunpack.c.l.b16 %v1059
    %v2247 = vunpack.c.h.b16 %v1059
    %v2248 = vunpack.c.l.b16 %v1060
    %v2249 = vunpack.c.h.b16 %v1060
    %v2250 = vunpack.c.l.b16 %v1061
    %v2251 = vunpack.c.h.b16 %v1061
    %v2252 = vunpack.c.l.b16 %v1062
    %v2253 = vunpack.c.h.b16 %v1062
    %v2254 = vunpack.c.l.b16 %v1063
    %v2255 = vunpack.c.h.b16 %v1063
    %v2256 = vunpack.c.l.b16 %v1064
    %v2257 = vunpack.c.h.b16 %v1064
    %v2258 = vunpack.c.l.b16 %v1065
    %v2259 = vunpack.c.h.b16 %v1065
    %v2260 = vunpack.c.l.b16 %v1066
    %v2261 = vunpack.c.h.b16 %v1066
    %v2262 = vunpack.c.l.b16 %v1067
    %v2263 = vunpack.c.h.b16 %v1067
    %v2264 = vunpack.c.l.b16 %v1068
    %v2265 = vunpack.c.h.b16 %v1068
    %v2266 = vunpack.c.l.b16 %v1069
    %v2267 = vunpack.c.l.b16 %v1070
    %v2268 = vunpack.c.h.b16 %v1070
    %v2269 = vunpack.c.l.b16 %v1071
    %v2270 = vunpack.c.h.b16 %v1071
    %v2271 = vunpack.c.l.b16 %v1072
    %v2272 = vunpack.c.h.b16 %v1072
    %v2273 = vunpack.c.l.b16 %v1073
    %v2274 = vunpack.c.h.b16 %v1073
    %v2275 = vunpack.c.l.b16 %v1074
    %v2276 = vunpack.c.h.b16 %v1074
    %v2277 = vunpack.c.l.b16 %v1075
    %v2278 = vunpack.c.h.b16 %v1075
    %v2279 = vunpack.c.l.b16 %v1076
    %v2280 = vunpack.c.h.b16 %v1076
    %v2281 = vunpack.c.l.b16 %v1077
    %v2282 = vunpack.c.h.b16 %v1077
    %v2283 = vunpack.c.l.b16 %v1078
    %v2284 = vunpack.c.h.b16 %v1078
    %v2285 = vunpack.c.l.b16 %v1079
    %v2286 = vunpack.c.h.b16 %v1079
    %v2287 = vunpack.c.l.b16 %v1080
    %v2288 = vunpack.c.l.b16 %v1081
    %v2289 = vunpack.c.h.b16 %v1081
    %v2290 = vunpack.c.l.b16 %v1082
    %v2291 = vunpack.c.h.b16 %v1082
    %v2292 = vunpack.c.l.b16 %v1083
    %v2293 = vunpack.c.h.b16 %v1083
    %v2294 = vunpack.c.l.b16 %v1084
    %v2295 = vunpack.c.h.b16 %v1084
    %v2296 = vunpack.c.l.b16 %v1085
    %v2297 = vunpack.c.h.b16 %v1085
    %v2298 = vunpack.c.l.b16 %v1086
    %v2299 = vunpack.c.h.b16 %v1086
    %v2300 = vunpack.c.l.b16 %v1087
    %v2301 = vunpack.c.h.b16 %v1087
    %v2302 = vunpack.c.l.b16 %v1088
    %v2303 = vunpack.c.h.b16 %v1088
    %v2304 = vunpack.c.l.b16 %v1089
    %v2305 = vunpack.c.h.b16 %v1089
    %v2306 = vunpack.c.l.b16 %v1090
    %v2307 = vunpack.c.h.b16 %v1090
    %v2308 = vunpack.c.l.b16 %v1091
    %v2309 = vunpack.c.l.b16 %v1092
    %v2310 = vunpack.c.h.b16 %v1092
    %v2311 = vunpack.c.l.b16 %v1093
    %v2312 = vunpack.c.h.b16 %v1093
    %v2313 = vunpack.c.l.b16 %v1094
    %v2314 = vunpack.c.h.b16 %v1094
    %v2315 = vunpack.c.l.b16 %v1095
    %v2316 = vunpack.c.h.b16 %v1095
    %v2317 = vunpack.c.l.b16 %v1096
    %v2318 = vunpack.c.h.b16 %v1096
    %v2319 = vunpack.c.l.b16 %v1097
    %v2320 = vunpack.c.h.b16 %v1097
    %v2321 = vunpack.c.l.b16 %v1098
    %v2322 = vunpack.c.h.b16 %v1098
    %v2323 = vunpack.c.l.b16 %v1099
    %v2324 = vunpack.c.h.b16 %v1099
    %v2325 = vunpack.c.l.b16 %v1100
    %v2326 = vunpack.c.h.b16 %v1100
    %v2327 = vunpack.c.l.b16 %v1101
    %v2328 = vunpack.c.h.b16 %v1101
    %v2329 = vunpack.c.l.b16 %v1102
    %v2330 = vunpack.c.l.b16 %v1103
    %v2331 = vunpack.c.h.b16 %v1103
    %v2332 = vunpack.c.l.b16 %v1104
    %v2333 = vunpack.c.h.b16 %v1104
    %v2334 = vunpack.c.l.b16 %v1105
    %v2335 = vunpack.c.h.b16 %v1105
    %v2336 = vunpack.c.l.b16 %v1106
    %v2337 = vunpack.c.h.b16 %v1106
    %v2338 = vunpack.c.l.b16 %v1107
    %v2339 = vunpack.c.h.b16 %v1107
    %v2340 = vunpack.c.l.b16 %v1108
    %v2341 = vunpack.c.h.b16 %v1108
    %v2342 = vunpack.c.l.b16 %v1109
    %v2343 = vunpack.c.h.b16 %v1109
    %v2344 = vunpack.c.l.b16 %v1110
    %v2345 = vunpack.c.h.b16 %v1110
    %v2346 = vunpack.c.l.b16 %v1111
    %v2347 = vunpack.c.h.b16 %v1111
    %v2348 = vunpack.c.l.b16 %v1112
    %v2349 = vunpack.c.h.b16 %v1112
    %v2350 = vunpack.c.l.b16 %v1113
    %v2351 = vunpack.c.l.b16 %v1114
    %v2352 = vunpack.c.h.b16 %v1114
    %v2353 = vunpack.c.l.b16 %v1115
    %v2354 = vunpack.c.h.b16 %v1115
    %v2355 = vunpack.c.l.b16 %v1116
    %v2356 = vunpack.c.h.b16 %v1116
    %v2357 = vunpack.c.l.b16 %v1117
    %v2358 = vunpack.c.h.b16 %v1117
    %v2359 = vunpack.c.l.b16 %v1118
    %v2360 = vunpack.c.h.b16 %v1118
    %v2361 = vunpack.c.l.b16 %v1119
    %v2362 = vunpack.c.h.b16 %v1119
    %v2363 = vunpack.c.l.b16 %v1120
    %v2364 = vunpack.c.h.b16 %v1120
    %v2365 = vunpack.c.l.b16 %v1121
    %v2366 = vunpack.c.h.b16 %v1121
    %v2367 = vunpack.c.l.b16 %v1122
    %v2368 = vunpack.c.h.b16 %v1122
    %v2369 = vunpack.c.l.b16 %v1123
    %v2370 = vunpack.c.h.b16 %v1123
    %v2371 = vunpack.c.l.b16 %v1124
    %v2372 = vunpack.c.l.b16 %v1125
    %v2373 = vunpack.c.h.b16 %v1125
    %v2374 = vunpack.c.l.b16 %v1126
    %v2375 = vunpack.c.h.b16 %v1126
    %v2376 = vunpack.c.l.b16 %v1127
    %v2377 = vunpack.c.h.b16 %v1127
    %v2378 = vunpack.c.l.b16 %v1128
    %v2379 = vunpack.c.h.b16 %v1128
    %v2380 = vunpack.c.l.b16 %v1129
    %v2381 = vunpack.c.h.b16 %v1129
    %v2382 = vunpack.c.l.b16 %v1130
    %v2383 = vunpack.c.h.b16 %v1130
    %v2384 = vunpack.c.l.b16 %v1131
    %v2385 = vunpack.c.h.b16 %v1131
    %v2386 = vunpack.c.l.b16 %v1132
    %v2387 = vunpack.c.h.b16 %v1132
    %v2388 = vunpack.c.l.b16 %v1133
    %v2389 = vunpack.c.h.b16 %v1133
    %v2390 = vunpack.c.l.b16 %v1134
    %v2391 = vunpack.c.h.b16 %v1134
    %v2392 = vunpack.c.l.b16 %v1135
    %v2393 = vunpack.c.l.b16 %v1136
    %v2394 = vunpack.c.h.b16 %v1136
    %v2395 = vunpack.c.l.b16 %v1137
    %v2396 = vunpack.c.h.b16 %v1137
    %v2397 = vunpack.c.l.b16 %v1138
    %v2398 = vunpack.c.h.b16 %v1138
    %v2399 = vunpack.c.l.b16 %v1139
    %v2400 = vunpack.c.h.b16 %v1139
    %v2401 = vunpack.c.l.b16 %v1140
    %v2402 = vunpack.c.h.b16 %v1140
    %v2403 = vunpack.c.l.b16 %v1141
    %v2404 = vunpack.c.h.b16 %v1141
    %v2405 = vunpack.c.l.b16 %v1142
    %v2406 = vunpack.c.h.b16 %v1142
    %v2407 = vunpack.c.l.b16 %v1143
    %v2408 = vunpack.c.h.b16 %v1143
    %v2409 = vunpack.c.l.b16 %v1144
    %v2410 = vunpack.c.h.b16 %v1144
    %v2411 = vunpack.c.l.b16 %v1145
    %v2412 = vunpack.c.h.b16 %v1145
    %v2413 = vunpack.c.l.b16 %v1146
    %v2414 = vunpack.c.l.b16 %v1147
    %v2415 = vunpack.c.h.b16 %v1147
    %v2416 = vunpack.c.l.b16 %v1148
    %v2417 = vunpack.c.h.b16 %v1148
    %v2418 = vunpack.c.l.b16 %v1149
    %v2419 = vunpack.c.h.b16 %v1149
    %v2420 = vunpack.c.l.b16 %v1150
    %v2421 = vunpack.c.h.b16 %v1150
    %v2422 = vunpack.c.l.b16 %v1151
    %v2423 = vunpack.c.h.b16 %v1151
    %v2424 = vunpack.c.l.b16 %v1152
    %v2425 = vunpack.c.h.b16 %v1152
    %v2426 = vunpack.c.l.b16 %v1153
    %v2427 = vunpack.c.h.b16 %v1153
    %v2428 = vunpack.c.l.b16 %v1154
    %v2429 = vunpack.c.h.b16 %v1154
    %v2430 = vunpack.c.l.b16 %v1155
    %v2431 = vunpack.c.h.b16 %v1155
    %v2432 = vunpack.c.l.b16 %v1156
    %v2433 = vunpack.c.h.b16 %v1156
    %v2434 = vunpack.c.l.b16 %v1157
    %v2435 = vunpack.c.l.b16 %v1158
    %v2436 = vunpack.c.h.b16 %v1158
    %v2437 = vunpack.c.l.b16 %v1159
    %v2438 = vunpack.c.h.b16 %v1159
    %v2439 = vunpack.c.l.b16 %v1160
    %v2440 = vunpack.c.h.b16 %v1160
    %v2441 = vunpack.c.l.b16 %v1161
    %v2442 = vunpack.c.h.b16 %v1161
    %v2443 = vunpack.c.l.b16 %v1162
    %v2444 = vunpack.c.h.b16 %v1162
    %v2445 = vunpack.c.l.b16 %v1163
    %v2446 = vunpack.c.h.b16 %v1163
    %v2447 = vunpack.c.l.b16 %v1164
    %v2448 = vunpack.c.h.b16 %v1164
    %v2449 = vunpack.c.l.b16 %v1165
    %v2450 = vunpack.c.h.b16 %v1165
    %v2451 = vunpack.c.l.b16 %v1166
    %v2452 = vunpack.c.h.b16 %v1166
    %v2453 = vunpack.c.l.b16 %v1167
    %v2454 = vunpack.c.h.b16 %v1167
    %v2455 = vunpack.c.l.b16 %v1168
    %v2456 = vunpack.c.l.b16 %v1169
    %v2457 = vunpack.c.h.b16 %v1169
    %v2458 = vunpack.c.l.b16 %v1170
    %v2459 = vunpack.c.h.b16 %v1170
    %v2460 = vunpack.c.l.b16 %v1171
    %v2461 = vunpack.c.h.b16 %v1171
    %v2462 = vunpack.c.l.b16 %v1172
    %v2463 = vunpack.c.h.b16 %v1172
    %v2464 = vunpack.c.l.b16 %v1173
    %v2465 = vunpack.c.h.b16 %v1173
    %v2466 = vunpack.c.l.b16 %v1174
    %v2467 = vunpack.c.h.b16 %v1174
    %v2468 = vunpack.c.l.b16 %v1175
    %v2469 = vunpack.c.h.b16 %v1175
    %v2470 = vunpack.c.l.b16 %v1176
    %v2471 = vunpack.c.h.b16 %v1176
    %v2472 = vunpack.c.l.b16 %v1177
    %v2473 = vunpack.c.h.b16 %v1177
    %v2474 = vunpack.c.l.b16 %v1178
    %v2475 = vunpack.c.h.b16 %v1178
    %v2476 = vunpack.c.l.b16 %v1179
    %v2477 = vunpack.c.l.b16 %v1180
    %v2478 = vunpack.c.h.b16 %v1180
    %v2479 = vunpack.c.l.b16 %v1181
    %v2480 = vunpack.c.h.b16 %v1181
    %v2481 = vunpack.c.l.b16 %v1182
    %v2482 = vunpack.c.h.b16 %v1182
    %v2483 = vunpack.c.l.b16 %v1183
    %v2484 = vunpack.c.h.b16 %v1183
    %v2485 = vunpack.c.l.b16 %v1184
    %v2486 = vunpack.c.h.b16 %v1184
    %v2487 = vunpack.c.l.b16 %v1185
    %v2488 = vunpack.c.h.b16 %v1185
    %v2489 = vunpack.c.l.b16 %v1186
    %v2490 = vunpack.c.h.b16 %v1186
    %v2491 = vunpack.c.l.b16 %v1187
    %v2492 = vunpack.c.h.b16 %v1187
    %v2493 = vunpack.c.l.b16 %v1188
    %v2494 = vunpack.c.h.b16 %v1188
    %v2495 = vunpack.c.l.b16 %v1189
    %v2496 = vunpack.c.h.b16 %v1189
    %v2497 = vunpack.c.l.b16 %v1190
    %v2498 = vunpack.c.l.b16 %v1191
    %v2499 = vunpack.c.h.b16 %v1191
    %v2500 = vunpack.c.l.b16 %v1192
    %v2501 = vunpack.c.h.b16 %v1192
    %v2502 = vunpack.c.l.b16 %v1193
    %v2503 = vunpack.c.h.b16 %v1193
    %v2504 = vunpack.c.l.b16 %v1194
    %v2505 = vunpack.c.h.b16 %v1194
    %v2506 = vunpack.c.l.b16 %v1195
    %v2507 = vunpack.c.h.b16 %v1195
    %v2508 = vunpack.c.l.b16 %v1196
    %v2509 = vunpack.c.h.b16 %v1196
    %v2510 = vunpack.c.l.b16 %v1197
    %v2511 = vunpack.c.h.b16 %v1197
    %v2512 = vunpack.c.l.b16 %v1198
    %v2513 = vunpack.c.h.b16 %v1198
    %v2514 = vunpack.c.l.b16 %v1199
    %v2515 = vunpack.c.h.b16 %v1199
    %v2516 = vunpack.c.l.b16 %v1200
    %v2517 = vunpack.c.h.b16 %v1200
    %v2518 = vunpack.c.l.b16 %v1201
    %v2519 = vunpack.c.l.b16 %v1202
    %v2520 = vunpack.c.h.b16 %v1202
    %v2521 = vunpack.c.l.b16 %v1203
    %v2522 = vunpack.c.h.b16 %v1203
    %v2523 = vunpack.c.l.b16 %v1204
    %v2524 = vunpack.c.h.b16 %v1204
    %v2525 = vunpack.c.l.b16 %v1205
    %v2526 = vunpack.c.h.b16 %v1205
    %v2527 = vunpack.c.l.b16 %v1206
    %v2528 = vunpack.c.h.b16 %v1206
    %v2529 = vunpack.c.l.b16 %v1207
    %v2530 = vunpack.c.h.b16 %v1207
    %v2531 = vunpack.c.l.b16 %v1208
    %v2532 = vunpack.c.h.b16 %v1208
    %v2533 = vunpack.c.l.b16 %v1209
    %v2534 = vunpack.c.h.b16 %v1209
    %v2535 = vunpack.c.l.b16 %v1210
    %v2536 = vunpack.c.h.b16 %v1210
    %v2537 = vunpack.c.l.b16 %v1211
    %v2538 = vunpack.c.h.b16 %v1211
    %v2539 = vunpack.c.l.b16 %v1212
    %v2540 = vunpack.c.l.b16 %v1213
    %v2541 = vunpack.c.h.b16 %v1213
    %v2542 = vunpack.c.l.b16 %v1214
    %v2543 = vunpack.c.h.b16 %v1214
    %v2544 = vunpack.c.l.b16 %v1215
    %v2545 = vunpack.c.h.b16 %v1215
    %v2546 = vunpack.c.l.b16 %v1216
    %v2547 = vunpack.c.h.b16 %v1216
    %v2548 = vunpack.c.l.b16 %v1217
    %v2549 = vunpack.c.h.b16 %v1217
    %v2550 = vunpack.c.l.b16 %v1218
    %v2551 = vunpack.c.h.b16 %v1218
    %v2552 = vunpack.c.l.b16 %v1219
    %v2553 = vunpack.c.h.b16 %v1219
    %v2554 = vunpack.c.l.b16 %v1220
    %v2555 = vunpack.c.h.b16 %v1220
    %v2556 = vunpack.c.l.b16 %v1221
    %v2557 = vunpack.c.h.b16 %v1221
    %v2558 = vunpack.c.l.b16 %v1222
    %v2559 = vunpack.c.h.b16 %v1222
    %v2560 = vunpack.c.l.b16 %v1223
    %v2561 = vunpack.c.l.b16 %v1224
    %v2562 = vunpack.c.h.b16 %v1224
    %v2563 = vunpack.c.l.b16 %v1225
    %v2564 = vunpack.c.h.b16 %v1225
    %v2565 = vunpack.c.l.b16 %v1226
    %v2566 = vunpack.c.h.b16 %v1226
    %v2567 = vunpack.c.l.b16 %v1227
    %v2568 = vunpack.c.h.b16 %v1227
    %v2569 = vunpack.c.l.b16 %v1228
    %v2570 = vunpack.c.h.b16 %v1228
    %v2571 = vunpack.c.l.b16 %v1229
    %v2572 = vunpack.c.h.b16 %v1229
    %v2573 = vunpack.c.l.b16 %v1230
    %v2574 = vunpack.c.h.b16 %v1230
    %v2575 = vunpack.c.l.b16 %v1231
    %v2576 = vunpack.c.h.b16 %v1231
    %v2577 = vunpack.c.l.b16 %v1232
    %v2578 = vunpack.c.h.b16 %v1232
    %v2579 = vunpack.c.l.b16 %v1233
    %v2580 = vunpack.c.h.b16 %v1233
    %v2581 = vunpack.c.l.b16 %v1234
    %v2582 = vunpack.c.l.b16 %v1235
    %v2583 = vunpack.c.h.b16 %v1235
    %v2584 = vunpack.c.l.b16 %v1236
    %v2585 = vunpack.c.h.b16 %v1236
    %v2586 = vunpack.c.l.b16 %v1237
    %v2587 = vunpack.c.h.b16 %v1237
    %v2588 = vunpack.c.l.b16 %v1238
    %v2589 = vunpack.c.h.b16 %v1238
    %v2590 = vunpack.c.l.b16 %v1239
    %v2591 = vunpack.c.h.b16 %v1239
    %v2592 = vunpack.c.l.b16 %v1240
    %v2593 = vunpack.c.h.b16 %v1240
    %v2594 = vunpack.c.l.b16 %v1241
    %v2595 = vunpack.c.h.b16 %v1241
    %v2596 = vunpack.c.l.b16 %v1242
    %v2597 = vunpack.c.h.b16 %v1242
    %v2598 = vunpack.c.l.b16 %v1243
    %v2599 = vunpack.c.h.b16 %v1243
    %v2600 = vunpack.c.l.b16 %v1244
    %v2601 = vunpack.c.h.b16 %v1244
    %v2602 = vunpack.c.l.b16 %v1245
    %v2603 = vunpack.c.l.b16 %v1246
    %v2604 = vunpack.c.h.b16 %v1246
    %v2605 = vunpack.c.l.b16 %v1247
    %v2606 = vunpack.c.h.b16 %v1247
    %v2607 = vunpack.c.l.b16 %v1248
    %v2608 = vunpack.c.h.b16 %v1248
    %v2609 = vunpack.c.l.b16 %v1249
    %v2610 = vunpack.c.h.b16 %v1249
    %v2611 = vunpack.c.l.b16 %v1250
    %v2612 = vunpack.c.h.b16 %v1250
    %v2613 = vunpack.c.l.b16 %v1251
    %v2614 = vunpack.c.h.b16 %v1251
    %v2615 = vunpack.c.l.b16 %v1252
    %v2616 = vunpack.c.h.b16 %v1252
    %v2617 = vunpack.c.l.b16 %v1253
    %v2618 = vunpack.c.h.b16 %v1253
    %v2619 = vunpack.c.l.b16 %v1254
    %v2620 = vunpack.c.h.b16 %v1254
    %v2621 = vunpack.c.l.b16 %v1255
    %v2622 = vunpack.c.h.b16 %v1255
    %v2623 = vunpack.c.l.b16 %v1256
    %v2624 = vunpack.c.l.b16 %v1257
    %v2625 = vunpack.c.h.b16 %v1257
    %v2626 = vunpack.c.l.b16 %v1258
    %v2627 = vunpack.c.h.b16 %v1258
    %v2628 = vunpack.c.l.b16 %v1259
    %v2629 = vunpack.c.h.b16 %v1259
    %v2630 = vunpack.c.l.b16 %v1260
    %v2631 = vunpack.c.h.b16 %v1260
    %v2632 = vunpack.c.l.b16 %v1261
    %v2633 = vunpack.c.h.b16 %v1261
    %v2634 = vunpack.c.l.b16 %v1262
    %v2635 = vunpack.c.h.b16 %v1262
    %v2636 = vunpack.c.l.b16 %v1263
    %v2637 = vunpack.c.h.b16 %v1263
    %v2638 = vunpack.c.l.b16 %v1264
    %v2639 = vunpack.c.h.b16 %v1264
    %v2640 = vunpack.c.l.b16 %v1265
    %v2641 = vunpack.c.h.b16 %v1265
    %v2642 = vunpack.c.l.b16 %v1266
    %v2643 = vunpack.c.h.b16 %v1266
    %v2644 = vunpack.c.l.b16 %v1267
    %v2645 = vunpack.c.l.b16 %v1268
    %v2646 = vunpack.c.h.b16 %v1268
    %v2647 = vunpack.c.l.b16 %v1269
    %v2648 = vunpack.c.h.b16 %v1269
    %v2649 = vunpack.c.l.b16 %v1270
    %v2650 = vunpack.c.h.b16 %v1270
    %v2651 = vunpack.c.l.b16 %v1271
    %v2652 = vunpack.c.h.b16 %v1271
    %v2653 = vunpack.c.l.b16 %v1272
    %v2654 = vunpack.c.h.b16 %v1272
    %v2655 = vunpack.c.l.b16 %v1273
    %v2656 = vunpack.c.h.b16 %v1273
    %v2657 = vunpack.c.l.b16 %v1274
    %v2658 = vunpack.c.h.b16 %v1274
    %v2659 = vunpack.c.l.b16 %v1275
    %v2660 = vunpack.c.h.b16 %v1275
    %v2661 = vunpack.c.l.b16 %v1276
    %v2662 = vunpack.c.h.b16 %v1276
    %v2663 = vunpack.c.l.b16 %v1277
    %v2664 = vunpack.c.h.b16 %v1277
    %v2665 = vunpack.c.l.b16 %v1278
    %v2666 = vunpack.c.l.b16 %v1279
    %v2667 = vunpack.c.h.b16 %v1279
    %v2668 = vunpack.c.l.b16 %v1280
    %v2669 = vunpack.c.h.b16 %v1280
    %v2670 = vunpack.c.l.b16 %v1281
    %v2671 = vunpack.c.h.b16 %v1281
    %v2672 = vunpack.c.l.b16 %v1282
    %v2673 = vunpack.c.h.b16 %v1282
    %v2674 = vunpack.c.l.b16 %v1283
    %v2675 = vunpack.c.h.b16 %v1283
    %v2676 = vunpack.c.l.b16 %v1284
    %v2677 = vunpack.c.h.b16 %v1284
    %v2678 = vunpack.c.l.b16 %v1285
    %v2679 = vunpack.c.h.b16 %v1285
    %v2680 = vunpack.c.l.b16 %v1286
    %v2681 = vunpack.c.h.b16 %v1286
    %v2682 = vunpack.c.l.b16 %v1287
    %v2683 = vunpack.c.h.b16 %v1287
    %v2684 = vunpack.c.l.b16 %v1288
    %v2685 = vunpack.c.h.b16 %v1288
    %v2686 = vunpack.c.l.b16 %v1289
    %v2687 = vunpack.c.l.b16 %v1290
    %v2688 = vunpack.c.h.b16 %v1290
    %v2689 = vunpack.c.l.b16 %v1291
    %v2690 = vunpack.c.h.b16 %v1291
    %v2691 = vunpack.c.l.b16 %v1292
    %v2692 = vunpack.c.h.b16 %v1292
    %v2693 = vunpack.c.l.b16 %v1293
    %v2694 = vunpack.c.h.b16 %v1293
    %v2695 = vunpack.c.l.b16 %v1294
    %v2696 = vunpack.c.h.b16 %v1294
    %v2697 = vunpack.c.l.b16 %v1295
    %v2698 = vunpack.c.h.b16 %v1295
    %v2699 = vunpack.c.l.b16 %v1296
    %v2700 = vunpack.c.h.b16 %v1296
    %v2701 = vunpack.c.l.b16 %v1297
    %v2702 = vunpack.c.h.b16 %v1297
    %v2703 = vunpack.c.l.b16 %v1298
    %v2704 = vunpack.c.h.b16 %v1298
    %v2705 = vunpack.c.l.b16 %v1299
    %v2706 = vunpack.c.h.b16 %v1299
    %v2707 = vunpack.c.l.b16 %v1300
    %v2708 = vunpack.c.l.b16 %v1301
    %v2709 = vunpack.c.h.b16 %v1301
    %v2710 = vunpack.c.l.b16 %v1302
    %v2711 = vunpack.c.h.b16 %v1302
    %v2712 = vunpack.c.l.b16 %v1303
    %v2713 = vunpack.c.h.b16 %v1303
    %v2714 = vunpack.c.l.b16 %v1304
    %v2715 = vunpack.c.h.b16 %v1304
    %v2716 = vunpack.c.l.b16 %v1305
    %v2717 = vunpack.c.h.b16 %v1305
    %v2718 = vunpack.c.l.b16 %v1306
    %v2719 = vunpack.c.h.b16 %v1306
    %v2720 = vunpack.c.l.b16 %v1307
    %v2721 = vunpack.c.h.b16 %v1307
    %v2722 = vunpack.c.l.b16 %v1308
    %v2723 = vunpack.c.h.b16 %v1308
    %v2724 = vunpack.c.l.b16 %v1309
    %v2725 = vunpack.c.h.b16 %v1309
    %v2726 = vunpack.c.l.b16 %v1310
    %v2727 = vunpack.c.h.b16 %v1310
    %v2728 = vunpack.c.l.b16 %v1311
    %v2729 = vunpack.c.l.b16 %v1312
    %v2730 = vunpack.c.h.b16 %v1312
    %v2731 = vunpack.c.l.b16 %v1313
    %v2732 = vunpack.c.h.b16 %v1313
    %v2733 = vunpack.c.l.b16 %v1314
    %v2734 = vunpack.c.h.b16 %v1314
    %v2735 = vunpack.c.l.b16 %v1315
    %v2736 = vunpack.c.h.b16 %v1315
    %v2737 = vunpack.c.l.b16 %v1316
    %v2738 = vunpack.c.h.b16 %v1316
    %v2739 = vunpack.c.l.b16 %v1317
    %v2740 = vunpack.c.h.b16 %v1317
    %v2741 = vunpack.c.l.b16 %v1318
    %v2742 = vunpack.c.h.b16 %v1318
    %v2743 = vunpack.c.l.b16 %v1319
    %v2744 = vunpack.c.h.b16 %v1319
    %v2745 = vunpack.c.l.b16 %v1320
    %v2746 = vunpack.c.h.b16 %v1320
    %v2747 = vunpack.c.l.b16 %v1321
    %v2748 = vunpack.c.h.b16 %v1321
    %v2749 = vunpack.c.l.b16 %v1322
    %v2750 = vunpack.c.l.b16 %v1323
    %v2751 = vunpack.c.h.b16 %v1323
    %v2752 = vunpack.c.l.b16 %v1324
    %v2753 = vunpack.c.h.b16 %v1324
    %v2754 = vunpack.c.l.b16 %v1325
    %v2755 = vunpack.c.h.b16 %v1325
    %v2756 = vunpack.c.l.b16 %v1326
    %v2757 = vunpack.c.h.b16 %v1326
    %v2758 = vunpack.c.l.b16 %v1327
    %v2759 = vunpack.c.h.b16 %v1327
    %v2760 = vunpack.c.l.b16 %v1328
    %v2761 = vunpack.c.h.b16 %v1328
    %v2762 = vunpack.c.l.b16 %v1329
    %v2763 = vunpack.c.h.b16 %v1329
    %v2764 = vunpack.c.l.b16 %v1330
    %v2765 = vunpack.c.h.b16 %v1330
    %v2766 = vunpack.c.l.b16 %v1331
    %v2767 = vunpack.c.h.b16 %v1331
    %v2768 = vunpack.c.l.b16 %v1332
    %v2769 = vunpack.c.h.b16 %v1332
    %v2770 = vunpack.c.l.b16 %v1333
    %v2771 = vunpack.c.l.b16 %v1334
    %v2772 = vunpack.c.h.b16 %v1334
    %v2773 = vunpack.c.l.b16 %v1335
    %v2774 = vunpack.c.h.b16 %v1335
    %v2775 = vunpack.c.l.b16 %v1336
    %v2776 = vunpack.c.h.b16 %v1336
    %v2777 = vunpack.c.l.b16 %v1337
    %v2778 = vunpack.c.h.b16 %v1337
    %v2779 = vunpack.c.l.b16 %v1338
    %v2780 = vunpack.c.h.b16 %v1338
    %v2781 = vunpack.c.l.b16 %v1339
    %v2782 = vunpack.c.h.b16 %v1339
    %v2783 = vunpack.c.l.b16 %v1340
    %v2784 = vunpack.c.h.b16 %v1340
    %v2785 = vunpack.c.l.b16 %v1341
    %v2786 = vunpack.c.h.b16 %v1341
    %v2787 = vunpack.c.l.b16 %v1342
    %v2788 = vunpack.c.h.b16 %v1342
    %v2789 = vunpack.c.l.b16 %v1343
    %v2790 = vunpack.c.h.b16 %v1343
    %v2791 = vunpack.c.l.b16 %v1344
    %v2792 = vunpack.c.l.b16 %v1345
    %v2793 = vunpack.c.h.b16 %v1345
    %v2794 = vunpack.c.l.b16 %v1346
    %v2795 = vunpack.c.h.b16 %v1346
    %v2796 = vunpack.c.l.b16 %v1347
    %v2797 = vunpack.c.h.b16 %v1347
    %v2798 = vunpack.c.l.b16 %v1348
    %v2799 = vunpack.c.h.b16 %v1348
    %v2800 = vunpack.c.l.b16 %v1349
    %v2801 = vunpack.c.h.b16 %v1349
    %v2802 = vunpack.c.l.b16 %v1350
    %v2803 = vunpack.c.h.b16 %v1350
    %v2804 = vunpack.c.l.b16 %v1351
    %v2805 = vunpack.c.h.b16 %v1351
    %v2806 = vunpack.c.l.b16 %v1352
    %v2807 = vunpack.c.h.b16 %v1352
    %v2808 = vunpack.c.l.b16 %v1353
    %v2809 = vunpack.c.h.b16 %v1353
    %v2810 = vunpack.c.l.b16 %v1354
    %v2811 = vunpack.c.h.b16 %v1354
    %v2812 = vunpack.c.l.b16 %v1355
    %v2813 = vunpack.c.l.b16 %v1356
    %v2814 = vunpack.c.h.b16 %v1356
    %v2815 = vunpack.c.l.b16 %v1357
    %v2816 = vunpack.c.h.b16 %v1357
    %v2817 = vunpack.c.l.b16 %v1358
    %v2818 = vunpack.c.h.b16 %v1358
    %v2819 = vunpack.c.l.b16 %v1359
    %v2820 = vunpack.c.h.b16 %v1359
    %v2821 = vunpack.c.l.b16 %v1360
    %v2822 = vunpack.c.h.b16 %v1360
    %v2823 = vunpack.c.l.b16 %v1361
    %v2824 = vunpack.c.h.b16 %v1361
    %v2825 = vunpack.c.l.b16 %v1362
    %v2826 = vunpack.c.h.b16 %v1362
    %v2827 = vunpack.c.l.b16 %v1363
    %v2828 = vunpack.c.h.b16 %v1363
    %v2829 = vunpack.c.l.b16 %v1364
    %v2830 = vunpack.c.h.b16 %v1364
    %v2831 = vunpack.c.l.b16 %v1365
    %v2832 = vunpack.c.h.b16 %v1365
    %v2833 = vunpack.c.l.b16 %v1366
    %v2834 = vunpack.c.l.b16 %v1367
    %v2835 = vunpack.c.h.b16 %v1367
    %v2836 = vunpack.c.l.b16 %v1368
    %v2837 = vunpack.c.h.b16 %v1368
    %v2838 = vunpack.c.l.b16 %v1369
    %v2839 = vunpack.c.h.b16 %v1369
    %v2840 = vunpack.c.l.b16 %v1370
    %v2841 = vunpack.c.h.b16 %v1370
    %v2842 = vunpack.c.l.b16 %v1371
    %v2843 = vunpack.c.h.b16 %v1371
    %v2844 = vunpack.c.l.b16 %v1372
    %v2845 = vunpack.c.h.b16 %v1372
    %v2846 = vunpack.c.l.b16 %v1373
    %v2847 = vunpack.c.h.b16 %v1373
    %v2848 = vunpack.c.l.b16 %v1374
    %v2849 = vunpack.c.h.b16 %v1374
    %v2850 = vunpack.c.l.b16 %v1375
    %v2851 = vunpack.c.h.b16 %v1375
    %v2852 = vunpack.c.l.b16 %v1376
    %v2853 = vunpack.c.h.b16 %v1376
    %v2854 = vunpack.c.l.b16 %v1377
    %v2855 = vunpack.c.l.b16 %v1378
    %v2856 = vunpack.c.h.b16 %v1378
    %v2857 = vunpack.c.l.b16 %v1379
    %v2858 = vunpack.c.h.b16 %v1379
    %v2859 = vunpack.c.l.b16 %v1380
    %v2860 = vunpack.c.h.b16 %v1380
    %v2861 = vunpack.c.l.b16 %v1381
    %v2862 = vunpack.c.h.b16 %v1381
    %v2863 = vunpack.c.l.b16 %v1382
    %v2864 = vunpack.c.h.b16 %v1382
    %v2865 = vunpack.c.l.b16 %v1383
    %v2866 = vunpack.c.h.b16 %v1383
    %v2867 = vunpack.c.l.b16 %v1384
    %v2868 = vunpack.c.h.b16 %v1384
    %v2869 = vunpack.c.l.b16 %v1385
    %v2870 = vunpack.c.h.b16 %v1385
    %v2871 = vunpack.c.l.b16 %v1386
    %v2872 = vunpack.c.h.b16 %v1386
    %v2873 = vunpack.c.l.b16 %v1387
    %v2874 = vunpack.c.h.b16 %v1387
    %v2875 = vunpack.c.l.b16 %v1388
    %v2876 = vunpack.c.l.b16 %v1389
    %v2877 = vunpack.c.h.b16 %v1389
    %v2878 = vunpack.c.l.b16 %v1390
    %v2879 = vunpack.c.h.b16 %v1390
    %v2880 = vunpack.c.l.b16 %v1391
    %v2881 = vunpack.c.h.b16 %v1391
    %v2882 = vunpack.c.l.b16 %v1392
    %v2883 = vunpack.c.h.b16 %v1392
    %v2884 = vunpack.c.l.b16 %v1393
    %v2885 = vunpack.c.h.b16 %v1393
    %v2886 = vunpack.c.l.b16 %v1394
    %v2887 = vunpack.c.h.b16 %v1394
    %v2888 = vunpack.c.l.b16 %v1395
    %v2889 = vunpack.c.h.b16 %v1395
    %v2890 = vunpack.c.l.b16 %v1396
    %v2891 = vunpack.c.h.b16 %v1396
    %v2892 = vunpack.c.l.b16 %v1397
    %v2893 = vunpack.c.h.b16 %v1397
    %v2894 = vunpack.c.l.b16 %v1398
    %v2895 = vunpack.c.h.b16 %v1398
    %v2896 = vunpack.c.l.b16 %v1399
    %v2897 = vunpack.c.l.b16 %v1400
    %v2898 = vunpack.c.h.b16 %v1400
    %v2899 = vunpack.c.l.b16 %v1401
    %v2900 = vunpack.c.h.b16 %v1401
    %v2901 = vunpack.c.l.b16 %v1402
    %v2902 = vunpack.c.h.b16 %v1402
    %v2903 = vunpack.c.l.b16 %v1403
    %v2904 = vunpack.c.h.b16 %v1403
    %v2905 = vunpack.c.l.b16 %v1404
    %v2906 = vunpack.c.h.b16 %v1404
    %v2907 = vunpack.c.l.b16 %v1405
    %v2908 = vunpack.c.h.b16 %v1405
    %v2909 = vunpack.c.l.b16 %v1406
    %v2910 = vunpack.c.h.b16 %v1406
    %v2911 = vunpack.c.l.b16 %v1407
    %v2912 = vunpack.c.h.b16 %v1407
    %v2913 = vunpack.c.l.b16 %v1408
    %v2914 = vunpack.c.h.b16 %v1408
    %v2915 = vunpack.c.l.b16 %v1409
    %v2916 = vunpack.c.h.b16 %v1409
    %v2917 = vunpack.c.l.b16 %v1410
    %v2918 = vunpack.c.l.b16 %v1411
    %v2919 = vunpack.c.h.b16 %v1411
    %v2920 = vunpack.c.l.b16 %v1412
    %v2921 = vunpack.c.h.b16 %v1412
    %v2922 = vunpack.c.l.b16 %v1413
    %v2923 = vunpack.c.h.b16 %v1413
    %v2924 = vunpack.c.l.b16 %v1414
    %v2925 = vunpack.c.h.b16 %v1414
    %v2926 = vunpack.c.l.b16 %v1415
    %v2927 = vunpack.c.h.b16 %v1415
    %v2928 = vunpack.c.l.b16 %v1416
    %v2929 = vunpack.c.h.b16 %v1416
    %v2930 = vunpack.c.l.b16 %v1417
    %v2931 = vunpack.c.h.b16 %v1417
    %v2932 = vunpack.c.l.b16 %v1418
    %v2933 = vunpack.c.h.b16 %v1418
    %v2934 = vunpack.c.l.b16 %v1419
    %v2935 = vunpack.c.h.b16 %v1419
    %v2936 = vunpack.c.l.b16 %v1420
    %v2937 = vunpack.c.h.b16 %v1420
    %v2938 = vunpack.c.l.b16 %v1421
    %v2939 = vunpack.c.l.b16 %v1422
    %v2940 = vunpack.c.h.b16 %v1422
    %v2941 = vunpack.c.l.b16 %v1423
    %v2942 = vunpack.c.h.b16 %v1423
    %v2943 = vunpack.c.l.b16 %v1424
    %v2944 = vunpack.c.h.b16 %v1424
    %v2945 = vunpack.c.l.b16 %v1425
    %v2946 = vunpack.c.h.b16 %v1425
    %v2947 = vunpack.c.l.b16 %v1426
    %v2948 = vunpack.c.h.b16 %v1426
    %v2949 = vunpack.c.l.b16 %v1427
    %v2950 = vunpack.c.h.b16 %v1427
    %v2951 = vunpack.c.l.b16 %v1428
    %v2952 = vunpack.c.h.b16 %v1428
    %v2953 = vunpack.c.l.b16 %v1429
    %v2954 = vunpack.c.h.b16 %v1429
    %v2955 = vunpack.c.l.b16 %v1430
    %v2956 = vunpack.c.h.b16 %v1430
    %v2957 = vunpack.c.l.b16 %v1431
    %v2958 = vunpack.c.h.b16 %v1431
    %v2959 = vunpack.c.l.b16 %v1432
    %v2960 = vunpack.c.l.b16 %v1433
    %v2961 = vunpack.c.h.b16 %v1433
    %v2962 = vunpack.c.l.b16 %v1434
    %v2963 = vunpack.c.h.b16 %v1434
    %v2964 = vunpack.c.l.b16 %v1435
    %v2965 = vunpack.c.h.b16 %v1435
    %v2966 = vunpack.c.l.b16 %v1436
    %v2967 = vunpack.c.h.b16 %v1436
    %v2968 = vunpack.c.l.b16 %v1437
    %v2969 = vunpack.c.h.b16 %v1437
    %v2970 = vunpack.c.l.b16 %v1438
    %v2971 = vunpack.c.h.b16 %v1438
    %v2972 = vunpack.c.l.b16 %v1439
    %v2973 = vunpack.c.h.b16 %v1439
    %v2974 = vunpack.c.l.b16 %v1440
    %v2975 = vunpack.c.h.b16 %v1440
    %v2976 = vunpack.c.l.b16 %v1441
    %v2977 = vunpack.c.h.b16 %v1441
    %v2978 = vunpack.c.l.b16 %v1442
    %v2979 = vunpack.c.h.b16 %v1442
    %v2980 = vunpack.c.l.b16 %v1443
    %v2981 = vunpack.c.l.b16 %v1444
    %v2982 = vunpack.c.h.b16 %v1444
    %v2983 = vunpack.c.l.b16 %v1445
    %v2984 = vunpack.c.h.b16 %v1445
    %v2985 = vunpack.c.l.b16 %v1446
    %v2986 = vunpack.c.h.b16 %v1446
    %v2987 = vunpack.c.l.b16 %v1447
    %v2988 = vunpack.c.h.b16 %v1447
    %v2989 = vunpack.c.l.b16 %v1448
    %v2990 = vunpack.c.h.b16 %v1448
    %v2991 = vunpack.c.l.b16 %v1449
    %v2992 = vunpack.c.h.b16 %v1449
    %v2993 = vunpack.c.l.b16 %v1450
    %v2994 = vunpack.c.h.b16 %v1450
    %v2995 = vunpack.c.l.b16 %v1451
    %v2996 = vunpack.c.h.b16 %v1451
    %v2997 = vunpack.c.l.b16 %v1452
    %v2998 = vunpack.c.h.b16 %v1452
    %v2999 = vunpack.c.l.b16 %v1453
    %v3000 = vunpack.c.h.b16 %v1453
    %v3001 = vunpack.c.l.b16 %v1454
    %v3002 = vunpack.c.l.b16 %v1455
    %v3003 = vunpack.c.h.b16 %v1455
    %v3004 = vunpack.c.l.b16 %v1456
    %v3005 = vunpack.c.h.b16 %v1456
    %v3006 = vunpack.c.l.b16 %v1457
    %v3007 = vunpack.c.h.b16 %v1457
    %v3008 = vunpack.c.l.b16 %v1458
    %v3009 = vunpack.c.h.b16 %v1458
    %v3010 = vunpack.c.l.b16 %v1459
    %v3011 = vunpack.c.h.b16 %v1459
    %v3012 = vunpack.c.l.b16 %v1460
    %v3013 = vunpack.c.h.b16 %v1460
    %v3014 = vunpack.c.l.b16 %v1461
    %v3015 = vunpack.c.h.b16 %v1461
    %v3016 = vunpack.c.l.b16 %v1462
    %v3017 = vunpack.c.h.b16 %v1462
    %v3018 = vunpack.c.l.b16 %v1463
    %v3019 = vunpack.c.h.b16 %v1463
    %v3020 = vunpack.c.l.b16 %v1464
    %v3021 = vunpack.c.h.b16 %v1464
    %v3022 = vunpack.c.l.b16 %v1465
    %v3023 = vunpack.c.l.b16 %v1466
    %v3024 = vunpack.c.h.b16 %v1466
    %v3025 = vunpack.c.l.b16 %v1467
    %v3026 = vunpack.c.h.b16 %v1467
    %v3027 = vunpack.c.l.b16 %v1468
    %v3028 = vunpack.c.h.b16 %v1468
    %v3029 = vunpack.c.l.b16 %v1469
    %v3030 = vunpack.c.h.b16 %v1469
    %v3031 = vunpack.c.l.b16 %v1470
    %v3032 = vunpack.c.h.b16 %v1470
    %v3033 = vunpack.c.l.b16 %v1471
    %v3034 = vunpack.c.h.b16 %v1471
    %v3035 = vunpack.c.l.b16 %v1472
    %v3036 = vunpack.c.h.b16 %v1472
    %v3037 = vunpack.c.l.b16 %v1473
    %v3038 = vunpack.c.h.b16 %v1473
    %v3039 = vunpack.c.l.b16 %v1474
    %v3040 = vunpack.c.h.b16 %v1474
    %v3041 = vunpack.c.l.b16 %v1475
    %v3042 = vunpack.c.h.b16 %v1475
    %v3043 = vunpack.c.l.b16 %v1476
    %v3044 = vunpack.c.l.b16 %v1477
    %v3045 = vunpack.c.h.b16 %v1477
    %v3046 = vunpack.c.l.b16 %v1478
    %v3047 = vunpack.c.h.b16 %v1478
    %v3048 = vunpack.c.l.b16 %v1479
    %v3049 = vunpack.c.h.b16 %v1479
    %v3050 = vunpack.c.l.b16 %v1480
    %v3051 = vunpack.c.h.b16 %v1480
    %v3052 = vunpack.c.l.b16 %v1481
    %v3053 = vunpack.c.h.b16 %v1481
    %v3054 = vunpack.c.l.b16 %v1482
    %v3055 = vunpack.c.h.b16 %v1482
    %v3056 = vunpack.c.l.b16 %v1483
    %v3057 = vunpack.c.h.b16 %v1483
    %v3058 = vunpack.c.l.b16 %v1484
    %v3059 = vunpack.c.h.b16 %v1484
    %v3060 = vunpack.c.l.b16 %v1485
    %v3061 = vunpack.c.h.b16 %v1485
    %v3062 = vunpack.c.l.b16 %v1486
    %v3063 = vunpack.c.h.b16 %v1486
    %v3064 = vunpack.c.l.b16 %v1487
    %v3065 = vunpack.c.l.b16 %v1488
    %v3066 = vunpack.c.h.b16 %v1488
    %v3067 = vunpack.c.l.b16 %v1489
    %v3068 = vunpack.c.h.b16 %v1489
    %v3069 = vunpack.c.l.b16 %v1490
    %v3070 = vunpack.c.h.b16 %v1490
    %v3071 = vunpack.c.l.b16 %v1491
    %v3072 = vunpack.c.h.b16 %v1491
    %v3073 = vunpack.c.l.b16 %v1492
    %v3074 = vunpack.c.h.b16 %v1492
    %v3075 = vunpack.c.l.b16 %v1493
    %v3076 = vunpack.c.h.b16 %v1493
    %v3077 = vunpack.c.l.b16 %v1494
    %v3078 = vunpack.c.h.b16 %v1494
    %v3079 = vunpack.c.l.b16 %v1495
    %v3080 = vunpack.c.h.b16 %v1495
    %v3081 = vunpack.c.l.b16 %v1496
    %v3082 = vunpack.c.h.b16 %v1496
    %v3083 = vunpack.c.l.b16 %v1497
    %v3084 = vunpack.c.h.b16 %v1497
    %v3085 = vunpack.c.l.b16 %v1498
    %v3086 = vunpack.c.l.b16 %v1499
    %v3087 = vunpack.c.h.b16 %v1499
    %v3088 = vunpack.c.l.b16 %v1500
    %v3089 = vunpack.c.h.b16 %v1500
    %v3090 = vunpack.c.l.b16 %v1501
    %v3091 = vunpack.c.h.b16 %v1501
    %v3092 = vunpack.c.l.b16 %v1502
    %v3093 = vunpack.c.h.b16 %v1502
    %v3094 = vunpack.c.l.b16 %v1503
    %v3095 = vunpack.c.h.b16 %v1503
    %v3096 = vunpack.c.l.b16 %v1504
    %v3097 = vunpack.c.h.b16 %v1504
    %v3098 = vunpack.c.l.b16 %v1505
    %v3099 = vunpack.c.h.b16 %v1505
    %v3100 = vunpack.c.l.b16 %v1506
    %v3101 = vunpack.c.h.b16 %v1506
    %v3102 = vunpack.c.l.b16 %v1507
    %v3103 = vunpack.c.h.b16 %v1507
    %v3104 = vunpack.c.l.b16 %v1508
    %v3105 = vunpack.c.h.b16 %v1508
    %v3106 = vunpack.c.l.b16 %v1509
    %v3107 = vunpack.c.l.b16 %v1510
    %v3108 = vunpack.c.h.b16 %v1510
    %v3109 = vunpack.c.l.b16 %v1511
    %v3110 = vunpack.c.h.b16 %v1511
    %v3111 = vunpack.c.l.b16 %v1512
    %v3112 = vunpack.c.h.b16 %v1512
    %v3113 = vunpack.c.l.b16 %v1513
    %v3114 = vunpack.c.h.b16 %v1513
    %v3115 = vunpack.c.l.b16 %v1514
    %v3116 = vunpack.c.h.b16 %v1514
    %v3117 = vunpack.c.l.b16 %v1515
    %v3118 = vunpack.c.h.b16 %v1515
    %v3119 = vunpack.c.l.b16 %v1516
    %v3120 = vunpack.c.h.b16 %v1516
    %v3121 = vunpack.c.l.b16 %v1517
    %v3122 = vunpack.c.h.b16 %v1517
    %v3123 = vunpack.c.l.b16 %v1518
    %v3124 = vunpack.c.h.b16 %v1518
    %v3125 = vunpack.c.l.b16 %v1519
    %v3126 = vunpack.c.h.b16 %v1519
    %v3127 = vunpack.c.l.b16 %v1520
    %v3128 = vunpack.c.l.b16 %v1521
    %v3129 = vunpack.c.h.b16 %v1521
    %v3130 = vunpack.c.l.b16 %v1522
    %v3131 = vunpack.c.h.b16 %v1522
    %v3132 = vunpack.c.l.b16 %v1523
    %v3133 = vunpack.c.h.b16 %v1523
    %v3134 = vunpack.c.l.b16 %v1524
    %v3135 = vunpack.c.h.b16 %v1524
    %v3136 = vunpack.c.l.b16 %v1525
    %v3137 = vunpack.c.h.b16 %v1525
    %v3138 = vunpack.c.l.b16 %v1526
    %v3139 = vunpack.c.h.b16 %v1526
    %v3140 = vunpack.c.l.b16 %v1527
    %v3141 = vunpack.c.h.b16 %v1527
    %v3142 = vunpack.c.l.b16 %v1528
    %v3143 = vunpack.c.h.b16 %v1528
    %v3144 = vunpack.c.l.b16 %v1529
    %v3145 = vunpack.c.h.b16 %v1529
    %v3146 = vunpack.c.l.b16 %v1530
    %v3147 = vunpack.c.h.b16 %v1530
    %v3148 = vunpack.c.l.b16 %v1531
    %v3149 = vunpack.c.l.b16 %v1532
    %v3150 = vunpack.c.h.b16 %v1532
    %v3151 = vunpack.c.l.b16 %v1533
    %v3152 = vunpack.c.h.b16 %v1533
    %v3153 = vunpack.c.l.b16 %v1534
    %v3154 = vunpack.c.h.b16 %v1534
    %v3155 = vunpack.c.l.b16 %v1535
    %v3156 = vunpack.c.h.b16 %v1535
    %v3157 = vunpack.c.l.b16 %v1536
    %v3158 = vunpack.c.h.b16 %v1536
    %v3159 = vunpack.c.l.b16 %v1537
    %v3160 = vunpack.c.h.b16 %v1537
    %v3161 = vunpack.c.l.b16 %v1538
    %v3162 = vunpack.c.h.b16 %v1538
    %v3163 = vunpack.c.l.b16 %v1539
    %v3164 = vunpack.c.h.b16 %v1539
    %v3165 = vunpack.c.l.b16 %v1540
    %v3166 = vunpack.c.h.b16 %v1540
    %v3167 = vunpack.c.l.b16 %v1541
    %v3168 = vunpack.c.h.b16 %v1541
    %v3169 = vunpack.c.l.b16 %v1542
    %v3170 = vunpack.c.l.b16 %v1543
    %v3171 = vunpack.c.h.b16 %v1543
    %v3172 = vunpack.c.l.b16 %v1544
    %v3173 = vunpack.c.h.b16 %v1544
    %v3174 = vunpack.c.l.b16 %v1545
    %v3175 = vunpack.c.h.b16 %v1545
    %v3176 = vunpack.c.l.b16 %v1546
    %v3177 = vunpack.c.h.b16 %v1546
    %v3178 = vunpack.c.l.b16 %v1547
    %v3179 = vunpack.c.h.b16 %v1547
    %v3180 = vunpack.c.l.b16 %v1548
    %v3181 = vunpack.c.h.b16 %v1548
    %v3182 = vunpack.c.l.b16 %v1549
    %v3183 = vunpack.c.h.b16 %v1549
    %v3184 = vunpack.c.l.b16 %v1550
    %v3185 = vunpack.c.h.b16 %v1550
    %v3186 = vunpack.c.l.b16 %v1551
    %v3187 = vunpack.c.h.b16 %v1551
    %v3188 = vunpack.c.l.b16 %v1552
    %v3189 = vunpack.c.h.b16 %v1552
    %v3190 = vunpack.c.l.b16 %v1553
    %v3191 = vunpack.c.l.b16 %v1554
    %v3192 = vunpack.c.h.b16 %v1554
    %v3193 = vunpack.c.l.b16 %v1555
    %v3194 = vunpack.c.h.b16 %v1555
    %v3195 = vunpack.c.l.b16 %v1556
    %v3196 = vunpack.c.h.b16 %v1556
    %v3197 = vunpack.c.l.b16 %v1557
    %v3198 = vunpack.c.h.b16 %v1557
    %v3199 = vunpack.c.l.b16 %v1558
    %v3200 = vunpack.c.h.b16 %v1558
    %v3201 = vunpack.c.l.b16 %v1559
    %v3202 = vunpack.c.h.b16 %v1559
    %v3203 = vunpack.c.l.b16 %v1560
    %v3204 = vunpack.c.h.b16 %v1560
    %v3205 = vunpack.c.l.b16 %v1561
    %v3206 = vunpack.c.h.b16 %v1561
    %v3207 = vunpack.c.l.b16 %v1562
    %v3208 = vunpack.c.h.b16 %v1562
    %v3209 = vunpack.c.l.b16 %v1563
    %v3210 = vunpack.c.h.b16 %v1563
    %v3211 = vunpack.c.l.b16 %v1564
    %v3212 = vpack.c.b16 %v2225, %v2204
    %v3213 = vpack.c.b16 %v2226, %v2205
    %v3214 = vpack.c.b16 %v2227, %v2206
    %v3215 = vpack.c.b16 %v2228, %v2207
    %v3216 = vpack.c.b16 %v2229, %v2208
    %v3217 = vpack.c.b16 %v2230, %v2209
    %v3218 = vpack.c.b16 %v2231, %v2210
    %v3219 = vpack.c.b16 %v2232, %v2211
    %v3220 = vpack.c.b16 %v2233, %v2212
    %v3221 = vpack.c.b16 %v2234, %v2213
    %v3222 = vpack.c.b16 %v2235, %v2214
    %v3223 = vpack.c.b16 %v2236, %v2215
    %v3224 = vpack.c.b16 %v2237, %v2216
    %v3225 = vpack.c.b16 %v2238, %v2217
    %v3226 = vpack.c.b16 %v2239, %v2218
    %v3227 = vpack.c.b16 %v2240, %v2219
    %v3228 = vpack.c.b16 %v2241, %v2220
    %v3229 = vpack.c.b16 %v2242, %v2221
    %v3230 = vpack.c.b16 %v2243, %v2222
    %v3231 = vpack.c.b16 %v2244, %v2223
    %v3232 = vpack.c.b16 %v2245, %v2224
    %v3233 = vpack.c.b16 %v2267, %v2246
    %v3234 = vpack.c.b16 %v2268, %v2247
    %v3235 = vpack.c.b16 %v2269, %v2248
    %v3236 = vpack.c.b16 %v2270, %v2249
    %v3237 = vpack.c.b16 %v2271, %v2250
    %v3238 = vpack.c.b16 %v2272, %v2251
    %v3239 = vpack.c.b16 %v2273, %v2252
    %v3240 = vpack.c.b16 %v2274, %v2253
    %v3241 = vpack.c.b16 %v2275, %v2254
    %v3242 = vpack.c.b16 %v2276, %v2255
    %v3243 = vpack.c.b16 %v2277, %v2256
    %v3244 = vpack.c.b16 %v2278, %v2257
    %v3245 = vpack.c.b16 %v2279, %v2258
    %v3246 = vpack.c.b16 %v2280, %v2259
    %v3247 = vpack.c.b16 %v2281, %v2260
    %v3248 = vpack.c.b16 %v2282, %v2261
    %v3249 = vpack.c.b16 %v2283, %v2262
    %v3250 = vpack.c.b16 %v2284, %v2263
    %v3251 = vpack.c.b16 %v2285, %v2264
    %v3252 = vpack.c.b16 %v2286, %v2265
    %v3253 = vpack.c.b16 %v2287, %v2266
    %v3254 = vpack.c.b16 %v2309, %v2288
    %v3255 = vpack.c.b16 %v2310, %v2289
    %v3256 = vpack.c.b16 %v2311, %v2290
    %v3257 = vpack.c.b16 %v2312, %v2291
    %v3258 = vpack.c.b16 %v2313, %v2292
    %v3259 = vpack.c.b16 %v2314, %v2293
    %v3260 = vpack.c.b16 %v2315, %v2294
    %v3261 = vpack.c.b16 %v2316, %v2295
    %v3262 = vpack.c.b16 %v2317, %v2296
    %v3263 = vpack.c.b16 %v2318, %v2297
    %v3264 = vpack.c.b16 %v2319, %v2298
    %v3265 = vpack.c.b16 %v2320, %v2299
    %v3266 = vpack.c.b16 %v2321, %v2300
    %v3267 = vpack.c.b16 %v2322, %v2301
    %v3268 = vpack.c.b16 %v2323, %v2302
    %v3269 = vpack.c.b16 %v2324, %v2303
    %v3270 = vpack.c.b16 %v2325, %v2304
    %v3271 = vpack.c.b16 %v2326, %v2305
    %v3272 = vpack.c.b16 %v2327, %v2306
    %v3273 = vpack.c.b16 %v2328, %v2307
    %v3274 = vpack.c.b16 %v2329, %v2308
    %v3275 = vpack.c.b16 %v2351, %v2330
    %v3276 = vpack.c.b16 %v2352, %v2331
    %v3277 = vpack.c.b16 %v2353, %v2332
    %v3278 = vpack.c.b16 %v2354, %v2333
    %v3279 = vpack.c.b16 %v2355, %v2334
    %v3280 = vpack.c.b16 %v2356, %v2335
    %v3281 = vpack.c.b16 %v2357, %v2336
    %v3282 = vpack.c.b16 %v2358, %v2337
    %v3283 = vpack.c.b16 %v2359, %v2338
    %v3284 = vpack.c.b16 %v2360, %v2339
    %v3285 = vpack.c.b16 %v2361, %v2340
    %v3286 = vpack.c.b16 %v2362, %v2341
    %v3287 = vpack.c.b16 %v2363, %v2342
    %v3288 = vpack.c.b16 %v2364, %v2343
    %v3289 = vpack.c.b16 %v2365, %v2344
    %v3290 = vpack.c.b16 %v2366, %v2345
    %v3291 = vpack.c.b16 %v2367, %v2346
    %v3292 = vpack.c.b16 %v2368, %v2347
    %v3293 = vpack.c.b16 %v2369, %v2348
    %v3294 = vpack.c.b16 %v2370, %v2349
    %v3295 = vpack.c.b16 %v2371, %v2350
    %v3296 = vpack.c.b16 %v2393, %v2372
    %v3297 = vpack.c.b16 %v2394, %v2373
    %v3298 = vpack.c.b16 %v2395, %v2374
    %v3299 = vpack.c.b16 %v2396, %v2375
    %v3300 = vpack.c.b16 %v2397, %v2376
    %v3301 = vpack.c.b16 %v2398, %v2377
    %v3302 = vpack.c.b16 %v2399, %v2378
    %v3303 = vpack.c.b16 %v2400, %v2379
    %v3304 = vpack.c.b16 %v2401, %v2380
    %v3305 = vpack.c.b16 %v2402, %v2381
    %v3306 = vpack.c.b16 %v2403, %v2382
    %v3307 = vpack.c.b16 %v2404, %v2383
    %v3308 = vpack.c.b16 %v2405, %v2384
    %v3309 = vpack.c.b16 %v2406, %v2385
    %v3310 = vpack.c.b16 %v2407, %v2386
    %v3311 = vpack.c.b16 %v2408, %v2387
    %v3312 = vpack.c.b16 %v2409, %v2388
    %v3313 = vpack.c.b16 %v2410, %v2389
    %v3314 = vpack.c.b16 %v2411, %v2390
    %v3315 = vpack.c.b16 %v2412, %v2391
    %v3316 = vpack.c.b16 %v2413, %v2392
    %v3317 = vpack.c.b16 %v2435, %v2414
    %v3318 = vpack.c.b16 %v2436, %v2415
    %v3319 = vpack.c.b16 %v2437, %v2416
    %v3320 = vpack.c.b16 %v2438, %v2417
    %v3321 = vpack.c.b16 %v2439, %v2418
    %v3322 = vpack.c.b16 %v2440, %v2419
    %v3323 = vpack.c.b16 %v2441, %v2420
    %v3324 = vpack.c.b16 %v2442, %v2421
    %v3325 = vpack.c.b16 %v2443, %v2422
    %v3326 = vpack.c.b16 %v2444, %v2423
    %v3327 = vpack.c.b16 %v2445, %v2424
    %v3328 = vpack.c.b16 %v2446, %v2425
    %v3329 = vpack.c.b16 %v2447, %v2426
    %v3330 = vpack.c.b16 %v2448, %v2427
    %v3331 = vpack.c.b16 %v2449, %v2428
    %v3332 = vpack.c.b16 %v2450, %v2429
    %v3333 = vpack.c.b16 %v2451, %v2430
    %v3334 = vpack.c.b16 %v2452, %v2431
    %v3335 = vpack.c.b16 %v2453, %v2432
    %v3336 = vpack.c.b16 %v2454, %v2433
    %v3337 = vpack.c.b16 %v2455, %v2434
    %v3338 = vpack.c.b16 %v2477, %v2456
    %v3339 = vpack.c.b16 %v2478, %v2457
    %v3340 = vpack.c.b16 %v2479, %v2458
    %v3341 = vpack.c.b16 %v2480, %v2459
    %v3342 = vpack.c.b16 %v2481, %v2460
    %v3343 = vpack.c.b16 %v2482, %v2461
    %v3344 = vpack.c.b16 %v2483, %v2462
    %v3345 = vpack.c.b16 %v2484, %v2463
    %v3346 = vpack.c.b16 %v2485, %v2464
    %v3347 = vpack.c.b16 %v2486, %v2465
    %v3348 = vpack.c.b16 %v2487, %v2466
    %v3349 = vpack.c.b16 %v2488, %v2467
    %v3350 = vpack.c.b16 %v2489, %v2468
    %v3351 = vpack.c.b16 %v2490, %v2469
    %v3352 = vpack.c.b16 %v2491, %v2470
    %v3353 = vpack.c.b16 %v2492, %v2471
    %v3354 = vpack.c.b16 %v2493, %v2472
    %v3355 = vpack.c.b16 %v2494, %v2473
    %v3356 = vpack.c.b16 %v2495, %v2474
    %v3357 = vpack.c.b16 %v2496, %v2475
    %v3358 = vpack.c.b16 %v2497, %v2476
    %v3359 = vpack.c.b16 %v2519, %v2498
    %v3360 = vpack.c.b16 %v2520, %v2499
    %v3361 = vpack.c.b16 %v2521, %v2500
    %v3362 = vpack.c.b16 %v2522, %v2501
    %v3363 = vpack.c.b16 %v2523, %v2502
    %v3364 = vpack.c.b16 %v2524, %v2503
    %v3365 = vpack.c.b16 %v2525, %v2504
    %v3366 = vpack.c.b16 %v2526, %v2505
    %v3367 = vpack.c.b16 %v2527, %v2506
    %v3368 = vpack.c.b16 %v2528, %v2507
    %v3369 = vpack.c.b16 %v2529, %v2508
    %v3370 = vpack.c.b16 %v2530, %v2509
    %v3371 = vpack.c.b16 %v2531, %v2510
    %v3372 = vpack.c.b16 %v2532, %v2511
    %v3373 = vpack.c.b16 %v2533, %v2512
    %v3374 = vpack.c.b16 %v2534, %v2513
    %v3375 = vpack.c.b16 %v2535, %v2514
    %v3376 = vpack.c.b16 %v2536, %v2515
    %v3377 = vpack.c.b16 %v2537, %v2516
    %v3378 = vpack.c.b16 %v2538, %v2517
    %v3379 = vpack.c.b16 %v2539, %v2518
    %v3380 = vpack.c.b16 %v2561, %v2540
    %v3381 = vpack.c.b16 %v2562, %v2541
    %v3382 = vpack.c.b16 %v2563, %v2542
    %v3383 = vpack.c.b16 %v2564, %v2543
    %v3384 = vpack.c.b16 %v2565, %v2544
    %v3385 = vpack.c.b16 %v2566, %v2545
    %v3386 = vpack.c.b16 %v2567, %v2546
    %v3387 = vpack.c.b16 %v2568, %v2547
    %v3388 = vpack.c.b16 %v2569, %v2548
    %v3389 = vpack.c.b16 %v2570, %v2549
    %v3390 = vpack.c.b16 %v2571, %v2550
    %v3391 = vpack.c.b16 %v2572, %v2551
    %v3392 = vpack.c.b16 %v2573, %v2552
    %v3393 = vpack.c.b16 %v2574, %v2553
    %v3394 = vpack.c.b16 %v2575, %v2554
    %v3395 = vpack.c.b16 %v2576, %v2555
    %v3396 = vpack.c.b16 %v2577, %v2556
    %v3397 = vpack.c.b16 %v2578, %v2557
    %v3398 = vpack.c.b16 %v2579, %v2558
    %v3399 = vpack.c.b16 %v2580, %v2559
    %v3400 = vpack.c.b16 %v2581, %v2560
    %v3401 = vpack.c.b16 %v2603, %v2582
    %v3402 = vpack.c.b16 %v2604, %v2583
    %v3403 = vpack.c.b16 %v2605, %v2584
    %v3404 = vpack.c.b16 %v2606, %v2585
    %v3405 = vpack.c.b16 %v2607, %v2586
    %v3406 = vpack.c.b16 %v2608, %v2587
    %v3407 = vpack.c.b16 %v2609, %v2588
    %v3408 = vpack.c.b16 %v2610, %v2589
    %v3409 = vpack.c.b16 %v2611, %v2590
    %v3410 = vpack.c.b16 %v2612, %v2591
    %v3411 = vpack.c.b16 %v2613, %v2592
    %v3412 = vpack.c.b16 %v2614, %v2593
    %v3413 = vpack.c.b16 %v2615, %v2594
    %v3414 = vpack.c.b16 %v2616, %v2595
    %v3415 = vpack.c.b16 %v2617, %v2596
    %v3416 = vpack.c.b16 %v2618, %v2597
    %v3417 = vpack.c.b16 %v2619, %v2598
    %v3418 = vpack.c.b16 %v2620, %v2599
    %v3419 = vpack.c.b16 %v2621, %v2600
    %v3420 = vpack.c.b16 %v2622, %v2601
    %v3421 = vpack.c.b16 %v2623, %v2602
    %v3422 = vpack.c.b16 %v2645, %v2624
    %v3423 = vpack.c.b16 %v2646, %v2625
    %v3424 = vpack.c.b16 %v2647, %v2626
    %v3425 = vpack.c.b16 %v2648, %v2627
    %v3426 = vpack.c.b16 %v2649, %v2628
    %v3427 = vpack.c.b16 %v2650, %v2629
    %v3428 = vpack.c.b16 %v2651, %v2630
    %v3429 = vpack.c.b16 %v2652, %v2631
    %v3430 = vpack.c.b16 %v2653, %v2632
    %v3431 = vpack.c.b16 %v2654, %v2633
    %v3432 = vpack.c.b16 %v2655, %v2634
    %v3433 = vpack.c.b16 %v2656, %v2635
    %v3434 = vpack.c.b16 %v2657, %v2636
    %v3435 = vpack.c.b16 %v2658, %v2637
    %v3436 = vpack.c.b16 %v2659, %v2638
    %v3437 = vpack.c.b16 %v2660, %v2639
    %v3438 = vpack.c.b16 %v2661, %v2640
    %v3439 = vpack.c.b16 %v2662, %v2641
    %v3440 = vpack.c.b16 %v2663, %v2642
    %v3441 = vpack.c.b16 %v2664, %v2643
    %v3442 = vpack.c.b16 %v2665, %v2644
    %v3443 = vpack.c.b16 %v2687, %v2666
    %v3444 = vpack.c.b16 %v2688, %v2667
    %v3445 = vpack.c.b16 %v2689, %v2668
    %v3446 = vpack.c.b16 %v2690, %v2669
    %v3447 = vpack.c.b16 %v2691, %v2670
    %v3448 = vpack.c.b16 %v2692, %v2671
    %v3449 = vpack.c.b16 %v2693, %v2672
    %v3450 = vpack.c.b16 %v2694, %v2673
    %v3451 = vpack.c.b16 %v2695, %v2674
    %v3452 = vpack.c.b16 %v2696, %v2675
    %v3453 = vpack.c.b16 %v2697, %v2676
    %v3454 = vpack.c.b16 %v2698, %v2677
    %v3455 = vpack.c.b16 %v2699, %v2678
    %v3456 = vpack.c.b16 %v2700, %v2679
    %v3457 = vpack.c.b16 %v2701, %v2680
    %v3458 = vpack.c.b16 %v2702, %v2681
    %v3459 = vpack.c.b16 %v2703, %v2682
    %v3460 = vpack.c.b16 %v2704, %v2683
    %v3461 = vpack.c.b16 %v2705, %v2684
    %v3462 = vpack.c.b16 %v2706, %v2685
    %v3463 = vpack.c.b16 %v2707, %v2686
    %v3464 = vpack.c.b16 %v2729, %v2708
    %v3465 = vpack.c.b16 %v2730, %v2709
    %v3466 = vpack.c.b16 %v2731, %v2710
    %v3467 = vpack.c.b16 %v2732, %v2711
    %v3468 = vpack.c.b16 %v2733, %v2712
    %v3469 = vpack.c.b16 %v2734, %v2713
    %v3470 = vpack.c.b16 %v2735, %v2714
    %v3471 = vpack.c.b16 %v2736, %v2715
    %v3472 = vpack.c.b16 %v2737, %v2716
    %v3473 = vpack.c.b16 %v2738, %v2717
    %v3474 = vpack.c.b16 %v2739, %v2718
    %v3475 = vpack.c.b16 %v2740, %v2719
    %v3476 = vpack.c.b16 %v2741, %v2720
    %v3477 = vpack.c.b16 %v2742, %v2721
    %v3478 = vpack.c.b16 %v2743, %v2722
    %v3479 = vpack.c.b16 %v2744, %v2723
    %v3480 = vpack.c.b16 %v2745, %v2724
    %v3481 = vpack.c.b16 %v2746, %v2725
    %v3482 = vpack.c.b16 %v2747, %v2726
    %v3483 = vpack.c.b16 %v2748, %v2727
    %v3484 = vpack.c.b16 %v2749, %v2728
    %v3485 = vpack.c.b16 %v2771, %v2750
    %v3486 = vpack.c.b16 %v2772, %v2751
    %v3487 = vpack.c.b16 %v2773, %v2752
    %v3488 = vpack.c.b16 %v2774, %v2753
    %v3489 = vpack.c.b16 %v2775, %v2754
    %v3490 = vpack.c.b16 %v2776, %v2755
    %v3491 = vpack.c.b16 %v2777, %v2756
    %v3492 = vpack.c.b16 %v2778, %v2757
    %v3493 = vpack.c.b16 %v2779, %v2758
    %v3494 = vpack.c.b16 %v2780, %v2759
    %v3495 = vpack.c.b16 %v2781, %v2760
    %v3496 = vpack.c.b16 %v2782, %v2761
    %v3497 = vpack.c.b16 %v2783, %v2762
    %v3498 = vpack.c.b16 %v2784, %v2763
    %v3499 = vpack.c.b16 %v2785, %v2764
    %v3500 = vpack.c.b16 %v2786, %v2765
    %v3501 = vpack.c.b16 %v2787, %v2766
    %v3502 = vpack.c.b16 %v2788, %v2767
    %v3503 = vpack.c.b16 %v2789, %v2768
    %v3504 = vpack.c.b16 %v2790, %v2769
    %v3505 = vpack.c.b16 %v2791, %v2770
    %v3506 = vpack.c.b16 %v2813, %v2792
    %v3507 = vpack.c.b16 %v2814, %v2793
    %v3508 = vpack.c.b16 %v2815, %v2794
    %v3509 = vpack.c.b16 %v2816, %v2795
    %v3510 = vpack.c.b16 %v2817, %v2796
    %v3511 = vpack.c.b16 %v2818, %v2797
    %v3512 = vpack.c.b16 %v2819, %v2798
    %v3513 = vpack.c.b16 %v2820, %v2799
    %v3514 = vpack.c.b16 %v2821, %v2800
    %v3515 = vpack.c.b16 %v2822, %v2801
    %v3516 = vpack.c.b16 %v2823, %v2802
    %v3517 = vpack.c.b16 %v2824, %v2803
    %v3518 = vpack.c.b16 %v2825, %v2804
    %v3519 = vpack.c.b16 %v2826, %v2805
    %v3520 = vpack.c.b16 %v2827, %v2806
    %v3521 = vpack.c.b16 %v2828, %v2807
    %v3522 = vpack.c.b16 %v2829, %v2808
    %v3523 = vpack.c.b16 %v2830, %v2809
    %v3524 = vpack.c.b16 %v2831, %v2810
    %v3525 = vpack.c.b16 %v2832, %v2811
    %v3526 = vpack.c.b16 %v2833, %v2812
    %v3527 = vpack.c.b16 %v2855, %v2834
    %v3528 = vpack.c.b16 %v2856, %v2835
    %v3529 = vpack.c.b16 %v2857, %v2836
    %v3530 = vpack.c.b16 %v2858, %v2837
    %v3531 = vpack.c.b16 %v2859, %v2838
    %v3532 = vpack.c.b16 %v2860, %v2839
    %v3533 = vpack.c.b16 %v2861, %v2840
    %v3534 = vpack.c.b16 %v2862, %v2841
    %v3535 = vpack.c.b16 %v2863, %v2842
    %v3536 = vpack.c.b16 %v2864, %v2843
    %v3537 = vpack.c.b16 %v2865, %v2844
    %v3538 = vpack.c.b16 %v2866, %v2845
    %v3539 = vpack.c.b16 %v2867, %v2846
    %v3540 = vpack.c.b16 %v2868, %v2847
    %v3541 = vpack.c.b16 %v2869, %v2848
    %v3542 = vpack.c.b16 %v2870, %v2849
    %v3543 = vpack.c.b16 %v2871, %v2850
    %v3544 = vpack.c.b16 %v2872, %v2851
    %v3545 = vpack.c.b16 %v2873, %v2852
    %v3546 = vpack.c.b16 %v2874, %v2853
    %v3547 = vpack.c.b16 %v2875, %v2854
    %v3548 = vpack.c.b16 %v2897, %v2876
    %v3549 = vpack.c.b16 %v2898, %v2877
    %v3550 = vpack.c.b16 %v2899, %v2878
    %v3551 = vpack.c.b16 %v2900, %v2879
    %v3552 = vpack.c.b16 %v2901, %v2880
    %v3553 = vpack.c.b16 %v2902, %v2881
    %v3554 = vpack.c.b16 %v2903, %v2882
    %v3555 = vpack.c.b16 %v2904, %v2883
    %v3556 = vpack.c.b16 %v2905, %v2884
    %v3557 = vpack.c.b16 %v2906, %v2885
    %v3558 = vpack.c.b16 %v2907, %v2886
    %v3559 = vpack.c.b16 %v2908, %v2887
    %v3560 = vpack.c.b16 %v2909, %v2888
    %v3561 = vpack.c.b16 %v2910, %v2889
    %v3562 = vpack.c.b16 %v2911, %v2890
    %v3563 = vpack.c.b16 %v2912, %v2891
    %v3564 = vpack.c.b16 %v2913, %v2892
    %v3565 = vpack.c.b16 %v2914, %v2893
    %v3566 = vpack.c.b16 %v2915, %v2894
    %v3567 = vpack.c.b16 %v2916, %v2895
    %v3568 = vpack.c.b16 %v2917, %v2896
    %v3569 = vpack.c.b16 %v2939, %v2918
    %v3570 = vpack.c.b16 %v2940, %v2919
    %v3571 = vpack.c.b16 %v2941, %v2920
    %v3572 = vpack.c.b16 %v2942, %v2921
    %v3573 = vpack.c.b16 %v2943, %v2922
    %v3574 = vpack.c.b16 %v2944, %v2923
    %v3575 = vpack.c.b16 %v2945, %v2924
    %v3576 = vpack.c.b16 %v2946, %v2925
    %v3577 = vpack.c.b16 %v2947, %v2926
    %v3578 = vpack.c.b16 %v2948, %v2927
    %v3579 = vpack.c.b16 %v2949, %v2928
    %v3580 = vpack.c.b16 %v2950, %v2929
    %v3581 = vpack.c.b16 %v2951, %v2930
    %v3582 = vpack.c.b16 %v2952, %v2931
    %v3583 = vpack.c.b16 %v2953, %v2932
    %v3584 = vpack.c.b16 %v2954, %v2933
    %v3585 = vpack.c.b16 %v2955, %v2934
    %v3586 = vpack.c.b16 %v2956, %v2935
    %v3587 = vpack.c.b16 %v2957, %v2936
    %v3588 = vpack.c.b16 %v2958, %v2937
    %v3589 = vpack.c.b16 %v2959, %v2938
    %v3590 = vpack.c.b16 %v2981, %v2960
    %v3591 = vpack.c.b16 %v2982, %v2961
    %v3592 = vpack.c.b16 %v2983, %v2962
    %v3593 = vpack.c.b16 %v2984, %v2963
    %v3594 = vpack.c.b16 %v2985, %v2964
    %v3595 = vpack.c.b16 %v2986, %v2965
    %v3596 = vpack.c.b16 %v2987, %v2966
    %v3597 = vpack.c.b16 %v2988, %v2967
    %v3598 = vpack.c.b16 %v2989, %v2968
    %v3599 = vpack.c.b16 %v2990, %v2969
    %v3600 = vpack.c.b16 %v2991, %v2970
    %v3601 = vpack.c.b16 %v2992, %v2971
    %v3602 = vpack.c.b16 %v2993, %v2972
    %v3603 = vpack.c.b16 %v2994, %v2973
    %v3604 = vpack.c.b16 %v2995, %v2974
    %v3605 = vpack.c.b16 %v2996, %v2975
    %v3606 = vpack.c.b16 %v2997, %v2976
    %v3607 = vpack.c.b16 %v2998, %v2977
    %v3608 = vpack.c.b16 %v2999, %v2978
    %v3609 = vpack.c.b16 %v3000, %v2979
    %v3610 = vpack.c.b16 %v3001, %v2980
    %v3611 = vpack.c.b16 %v3023, %v3002
    %v3612 = vpack.c.b16 %v3024, %v3003
    %v3613 = vpack.c.b16 %v3025, %v3004
    %v3614 = vpack.c.b16 %v3026, %v3005
    %v3615 = vpack.c.b16 %v3027, %v3006
    %v3616 = vpack.c.b16 %v3028, %v3007
    %v3617 = vpack.c.b16 %v3029, %v3008
    %v3618 = vpack.c.b16 %v3030, %v3009
    %v3619 = vpack.c.b16 %v3031, %v3010
    %v3620 = vpack.c.b16 %v3032, %v3011
    %v3621 = vpack.c.b16 %v3033, %v3012
    %v3622 = vpack.c.b16 %v3034, %v3013
    %v3623 = vpack.c.b16 %v3035, %v3014
    %v3624 = vpack.c.b16 %v3036, %v3015
    %v3625 = vpack.c.b16 %v3037, %v3016
    %v3626 = vpack.c.b16 %v3038, %v3017
    %v3627 = vpack.c.b16 %v3039, %v3018
    %v3628 = vpack.c.b16 %v3040, %v3019
    %v3629 = vpack.c.b16 %v3041, %v3020
    %v3630 = vpack.c.b16 %v3042, %v3021
    %v3631 = vpack.c.b16 %v3043, %v3022
    %v3632 = vpack.c.b16 %v3065, %v3044
    %v3633 = vpack.c.b16 %v3066, %v3045
    %v3634 = vpack.c.b16 %v3067, %v3046
    %v3635 = vpack.c.b16 %v3068, %v3047
    %v3636 = vpack.c.b16 %v3069, %v3048
    %v3637 = vpack.c.b16 %v3070, %v3049
    %v3638 = vpack.c.b16 %v3071, %v3050
    %v3639 = vpack.c.b16 %v3072, %v3051
    %v3640 = vpack.c.b16 %v3073, %v3052
    %v3641 = vpack.c.b16 %v3074, %v3053
    %v3642 = vpack.c.b16 %v3075, %v3054
    %v3643 = vpack.c.b16 %v3076, %v3055
    %v3644 = vpack.c.b16 %v3077, %v3056
    %v3645 = vpack.c.b16 %v3078, %v3057
    %v3646 = vpack.c.b16 %v3079, %v3058
    %v3647 = vpack.c.b16 %v3080, %v3059
    %v3648 = vpack.c.b16 %v3081, %v3060
    %v3649 = vpack.c.b16 %v3082, %v3061
    %v3650 = vpack.c.b16 %v3083, %v3062
    %v3651 = vpack.c.b16 %v3084, %v3063
    %v3652 = vpack.c.b16 %v3085, %v3064
    %v3653 = vpack.c.b16 %v3107, %v3086
    %v3654 = vpack.c.b16 %v3108, %v3087
    %v3655 = vpack.c.b16 %v3109, %v3088
    %v3656 = vpack.c.b16 %v3110, %v3089
    %v3657 = vpack.c.b16 %v3111, %v3090
    %v3658 = vpack.c.b16 %v3112, %v3091
    %v3659 = vpack.c.b16 %v3113, %v3092
    %v3660 = vpack.c.b16 %v3114, %v3093
    %v3661 = vpack.c.b16 %v3115, %v3094
    %v3662 = vpack.c.b16 %v3116, %v3095
    %v3663 = vpack.c.b16 %v3117, %v3096
    %v3664 = vpack.c.b16 %v3118, %v3097
    %v3665 = vpack.c.b16 %v3119, %v3098
    %v3666 = vpack.c.b16 %v3120, %v3099
    %v3667 = vpack.c.b16 %v3121, %v3100
    %v3668 = vpack.c.b16 %v3122, %v3101
    %v3669 = vpack.c.b16 %v3123, %v3102
    %v3670 = vpack.c.b16 %v3124, %v3103
    %v3671 = vpack.c.b16 %v3125, %v3104
    %v3672 = vpack.c.b16 %v3126, %v3105
    %v3673 = vpack.c.b16 %v3127, %v3106
    %v3674 = vpack.c.b16 %v3149, %v3128
    %v3675 = vpack.c.b16 %v3150, %v3129
    %v3676 = vpack.c.b16 %v3151, %v3130
    %v3677 = vpack.c.b16 %v3152, %v3131
    %v3678 = vpack.c.b16 %v3153, %v3132
    %v3679 = vpack.c.b16 %v3154, %v3133
    %v3680 = vpack.c.b16 %v3155, %v3134
    %v3681 = vpack.c.b16 %v3156, %v3135
    %v3682 = vpack.c.b16 %v3157, %v3136
    %v3683 = vpack.c.b16 %v3158, %v3137
    %v3684 = vpack.c.b16 %v3159, %v3138
    %v3685 = vpack.c.b16 %v3160, %v3139
    %v3686 = vpack.c.b16 %v3161, %v3140
    %v3687 = vpack.c.b16 %v3162, %v3141
    %v3688 = vpack.c.b16 %v3163, %v3142
    %v3689 = vpack.c.b16 %v3164, %v3143
    %v3690 = vpack.c.b16 %v3165, %v3144
    %v3691 = vpack.c.b16 %v3166, %v3145
    %v3692 = vpack.c.b16 %v3167, %v3146
    %v3693 = vpack.c.b16 %v3168, %v3147
    %v3694 = vpack.c.b16 %v3169, %v3148
    %v3695 = vpack.c.b16 %v3191, %v3170
    %v3696 = vpack.c.b16 %v3192, %v3171
    %v3697 = vpack.c.b16 %v3193, %v3172
    %v3698 = vpack.c.b16 %v3194, %v3173
    %v3699 = vpack.c.b16 %v3195, %v3174
    %v3700 = vpack.c.b16 %v3196, %v3175
    %v3701 = vpack.c.b16 %v3197, %v3176
    %v3702 = vpack.c.b16 %v3198, %v3177
    %v3703 = vpack.c.b16 %v3199, %v3178
    %v3704 = vpack.c.b16 %v3200, %v3179
    %v3705 = vpack.c.b16 %v3201, %v3180
    %v3706 = vpack.c.b16 %v3202, %v3181
    %v3707 = vpack.c.b16 %v3203, %v3182
    %v3708 = vpack.c.b16 %v3204, %v3183
    %v3709 = vpack.c.b16 %v3205, %v3184
    %v3710 = vpack.c.b16 %v3206, %v3185
    %v3711 = vpack.c.b16 %v3207, %v3186
    %v3712 = vpack.c.b16 %v3208, %v3187
    %v3713 = vpack.c.b16 %v3209, %v3188
    %v3714 = vpack.c.b16 %v3210, %v3189
    %v3715 = vpack.c.b16 %v3211, %v3190
    %4220 = vmatprep.subr.bf16.mxu0 %v3213
    %4221 = vmatpush1.bf16.msra.mxu0 %v3212
    %4222 = vmatprep.subr.bf16.mxu0 %v3234
    %4223 = vmatpush1.bf16.msra.mxu0 %v3233
    %4224 = vmatprep.subr.bf16.mxu0 %v3255
    %4225 = vmatpush1.bf16.msra.mxu0 %v3254
    %4226 = vmatprep.subr.bf16.mxu0 %v3276
    %4227 = vmatpush1.bf16.msra.mxu0 %v3275
    %4228 = vmatprep.subr.bf16.mxu0 %v3297
    %4229 = vmatpush1.bf16.msra.mxu0 %v3296
    %4230 = vmatprep.subr.bf16.mxu0 %v3318
    %4231 = vmatpush1.bf16.msra.mxu0 %v3317
    %4232 = vmatprep.subr.bf16.mxu0 %v3339
    %4233 = vmatpush1.bf16.msra.mxu0 %v3338
    %4234 = vmatprep.subr.bf16.mxu0 %v3360
    %4235 = vmatpush1.bf16.msra.mxu0 %v3359
    %4236 = vmatprep.subr.bf16.mxu0 %v3381
    %4237 = vmatpush1.bf16.msra.mxu0 %v3380
    %4238 = vmatprep.subr.bf16.mxu0 %v3402
    %4239 = vmatpush1.bf16.msra.mxu0 %v3401
    %4240 = vmatprep.subr.bf16.mxu0 %v3423
    %4241 = vmatpush1.bf16.msra.mxu0 %v3422
    %4242 = vmatprep.subr.bf16.mxu0 %v3444
    %4243 = vmatpush1.bf16.msra.mxu0 %v3443
    %4244 = vmatprep.subr.bf16.mxu0 %v3465
    %4245 = vmatpush1.bf16.msra.mxu0 %v3464
    %4246 = vmatprep.subr.bf16.mxu0 %v3486
    %4247 = vmatpush1.bf16.msra.mxu0 %v3485
    %4248 = vmatprep.subr.bf16.mxu0 %v3507
    %4249 = vmatpush1.bf16.msra.mxu0 %v3506
    %4250 = vmatprep.subr.bf16.mxu0 %v3528
    %4251 = vmatpush1.bf16.msra.mxu0 %v3527
    %4252 = vmatprep.mubr.bf16.mxu0 %v1035
    %4253 = vmatmul.mubr.bf16.gmra.mrb[0].mxu0 %v1034
    %v4254 = vpop.f32.mrb[0].mxu0
    %v4255 = vadd.f32 %v1574, %v4254
    %v4256 = vpop.f32.mrb[0].mxu0
    %v4257 = vadd.f32 %v1578, %v4256
    %v4258 = vpop.f32.mrb[0].mxu0
    %v4259 = vpop.f32.mrb[0].mxu0
    %4260 = vdwg.mxu0
    %4261 = vmatprep.subr.bf16.mxu0 %v3549
    %4262 = vmatpush1.bf16.msra.mxu0 %v3548
    %4263 = vmatprep.subr.bf16.mxu0 %v3570
    %4264 = vmatpush1.bf16.msra.mxu0 %v3569
    %4265 = vmatprep.subr.bf16.mxu0 %v3591
    %4266 = vmatpush1.bf16.msra.mxu0 %v3590
    %4267 = vmatprep.subr.bf16.mxu0 %v3612
    %4268 = vmatpush1.bf16.msra.mxu0 %v3611
    %4269 = vmatprep.subr.bf16.mxu0 %v3633
    %4270 = vmatpush1.bf16.msra.mxu0 %v3632
    %4271 = vmatprep.subr.bf16.mxu0 %v3654
    %4272 = vmatpush1.bf16.msra.mxu0 %v3653
    %4273 = vmatprep.subr.bf16.mxu0 %v3675
    %4274 = vmatpush1.bf16.msra.mxu0 %v3674
    %4275 = vmatprep.subr.bf16.mxu0 %v3696
    %4276 = vmatpush1.bf16.msra.mxu0 %v3695
    %4277 = vmatprep.subr.bf16.mxu0 0
    %4278 = vmatpush1.bf16.msra.mxu0 0
    %4279 = vmatprep.subr.bf16.mxu0 0
    %4280 = vmatpush1.bf16.msra.mxu0 0
    %4281 = vmatprep.subr.bf16.mxu0 0
    %4282 = vmatpush1.bf16.msra.mxu0 0
    %4283 = vmatprep.subr.bf16.mxu0 0
    %4284 = vmatpush1.bf16.msra.mxu0 0
    %4285 = vmatprep.subr.bf16.mxu0 0
    %4286 = vmatpush1.bf16.msra.mxu0 0
    %4287 = vmatprep.subr.bf16.mxu0 0
    %4288 = vmatpush1.bf16.msra.mxu0 0
    %4289 = vmatprep.subr.bf16.mxu0 0
    %4290 = vmatpush1.bf16.msra.mxu0 0
    %4291 = vmatprep.subr.bf16.mxu0 0
    %4292 = vmatpush1.bf16.msra.mxu0 0
    %4293 = vmatprep.mubr.bf16.mxu0 0
    %4294 = vmatmul.mubr.bf16.gmra.mrb[0].mxu0 %v1036
    %v4295 = vpop.f32.mrb[0].mxu0
    %v4296 = vadd.f32 %v4255, %v4295
    %v4297 = vpop.f32.mrb[0].mxu0
    %v4298 = vadd.f32 %v4257, %v4297
    %v4299 = vpop.f32.mrb[0].mxu0
    %v4300 = vpop.f32.mrb[0].mxu0
    %4301 = vdwg.mxu0
    %4302 = vmatprep.subr.bf16.mxu0 %v3215
    %4303 = vmatpush1.bf16.msra.mxu0 %v3214
    %4304 = vmatprep.subr.bf16.mxu0 %v3236
    %4305 = vmatpush1.bf16.msra.mxu0 %v3235
    %4306 = vmatprep.subr.bf16.mxu0 %v3257
    %4307 = vmatpush1.bf16.msra.mxu0 %v3256
    %4308 = vmatprep.subr.bf16.mxu0 %v3278
    %4309 = vmatpush1.bf16.msra.mxu0 %v3277
    %4310 = vmatprep.subr.bf16.mxu0 %v3299
    %4311 = vmatpush1.bf16.msra.mxu0 %v3298
    %4312 = vmatprep.subr.bf16.mxu0 %v3320
    %4313 = vmatpush1.bf16.msra.mxu0 %v3319
    %4314 = vmatprep.subr.bf16.mxu0 %v3341
    %4315 = vmatpush1.bf16.msra.mxu0 %v3340
    %4316 = vmatprep.subr.bf16.mxu0 %v3362
    %4317 = vmatpush1.bf16.msra.mxu0 %v3361
    %4318 = vmatprep.subr.bf16.mxu0 %v3383
    %4319 = vmatpush1.bf16.msra.mxu0 %v3382
    %4320 = vmatprep.subr.bf16.mxu0 %v3404
    %4321 = vmatpush1.bf16.msra.mxu0 %v3403
    %4322 = vmatprep.subr.bf16.mxu0 %v3425
    %4323 = vmatpush1.bf16.msra.mxu0 %v3424
    %4324 = vmatprep.subr.bf16.mxu0 %v3446
    %4325 = vmatpush1.bf16.msra.mxu0 %v3445
    %4326 = vmatprep.subr.bf16.mxu0 %v3467
    %4327 = vmatpush1.bf16.msra.mxu0 %v3466
    %4328 = vmatprep.subr.bf16.mxu0 %v3488
    %4329 = vmatpush1.bf16.msra.mxu0 %v3487
    %4330 = vmatprep.subr.bf16.mxu0 %v3509
    %4331 = vmatpush1.bf16.msra.mxu0 %v3508
    %4332 = vmatprep.subr.bf16.mxu0 %v3530
    %4333 = vmatpush1.bf16.msra.mxu0 %v3529
    %4334 = vmatprep.mubr.bf16.mxu0 %v1035
    %4335 = vmatmul.mubr.bf16.gmra.mrb[0].mxu0 %v1034
    %v4336 = vpop.f32.mrb[0].mxu0
    %v4337 = vadd.f32 %v1582, %v4336
    %v4338 = vpop.f32.mrb[0].mxu0
    %v4339 = vadd.f32 %v1586, %v4338
    %v4340 = vpop.f32.mrb[0].mxu0
    %v4341 = vpop.f32.mrb[0].mxu0
    %4342 = vdwg.mxu0
    %4343 = vmatprep.subr.bf16.mxu0 %v3551
    %4344 = vmatpush1.bf16.msra.mxu0 %v3550
    %4345 = vmatprep.subr.bf16.mxu0 %v3572
    %4346 = vmatpush1.bf16.msra.mxu0 %v3571
    %4347 = vmatprep.subr.bf16.mxu0 %v3593
    %4348 = vmatpush1.bf16.msra.mxu0 %v3592
    %4349 = vmatprep.subr.bf16.mxu0 %v3614
    %4350 = vmatpush1.bf16.msra.mxu0 %v3613
    %4351 = vmatprep.subr.bf16.mxu0 %v3635
    %4352 = vmatpush1.bf16.msra.mxu0 %v3634
    %4353 = vmatprep.subr.bf16.mxu0 %v3656
    %4354 = vmatpush1.bf16.msra.mxu0 %v3655
    %4355 = vmatprep.subr.bf16.mxu0 %v3677
    %4356 = vmatpush1.bf16.msra.mxu0 %v3676
    %4357 = vmatprep.subr.bf16.mxu0 %v3698
    %4358 = vmatpush1.bf16.msra.mxu0 %v3697
    %4359 = vmatprep.subr.bf16.mxu0 0
    %4360 = vmatpush1.bf16.msra.mxu0 0
    %4361 = vmatprep.subr.bf16.mxu0 0
    %4362 = vmatpush1.bf16.msra.mxu0 0
    %4363 = vmatprep.subr.bf16.mxu0 0
    %4364 = vmatpush1.bf16.msra.mxu0 0
    %4365 = vmatprep.subr.bf16.mxu0 0
    %4366 = vmatpush1.bf16.msra.mxu0 0
    %4367 = vmatprep.subr.bf16.mxu0 0
    %4368 = vmatpush1.bf16.msra.mxu0 0
    %4369 = vmatprep.subr.bf16.mxu0 0
    %4370 = vmatpush1.bf16.msra.mxu0 0
    %4371 = vmatprep.subr.bf16.mxu0 0
    %4372 = vmatpush1.bf16.msra.mxu0 0
    %4373 = vmatprep.subr.bf16.mxu0 0
    %4374 = vmatpush1.bf16.msra.mxu0 0
    %4375 = vmatprep.mubr.bf16.mxu0 0
    %4376 = vmatmul.mubr.bf16.gmra.mrb[0].mxu0 %v1036
    %v4377 = vpop.f32.mrb[0].mxu0
    %v4378 = vadd.f32 %v4337, %v4377
    %v4379 = vpop.f32.mrb[0].mxu0
    %v4380 = vadd.f32 %v4339, %v4379
    %v4381 = vpop.f32.mrb[0].mxu0
    %v4382 = vpop.f32.mrb[0].mxu0
    %4383 = vdwg.mxu0
    %4384 = vmatprep.subr.bf16.mxu0 %v3217
    %4385 = vmatpush1.bf16.msra.mxu0 %v3216
    %4386 = vmatprep.subr.bf16.mxu0 %v3238
    %4387 = vmatpush1.bf16.msra.mxu0 %v3237
    %4388 = vmatprep.subr.bf16.mxu0 %v3259
    %4389 = vmatpush1.bf16.msra.mxu0 %v3258
    %4390 = vmatprep.subr.bf16.mxu0 %v3280
    %4391 = vmatpush1.bf16.msra.mxu0 %v3279
    %4392 = vmatprep.subr.bf16.mxu0 %v3301
    %4393 = vmatpush1.bf16.msra.mxu0 %v3300
    %4394 = vmatprep.subr.bf16.mxu0 %v3322
    %4395 = vmatpush1.bf16.msra.mxu0 %v3321
    %4396 = vmatprep.subr.bf16.mxu0 %v3343
    %4397 = vmatpush1.bf16.msra.mxu0 %v3342
    %4398 = vmatprep.subr.bf16.mxu0 %v3364
    %4399 = vmatpush1.bf16.msra.mxu0 %v3363
    %4400 = vmatprep.subr.bf16.mxu0 %v3385
    %4401 = vmatpush1.bf16.msra.mxu0 %v3384
    %4402 = vmatprep.subr.bf16.mxu0 %v3406
    %4403 = vmatpush1.bf16.msra.mxu0 %v3405
    %4404 = vmatprep.subr.bf16.mxu0 %v3427
    %4405 = vmatpush1.bf16.msra.mxu0 %v3426
    %4406 = vmatprep.subr.bf16.mxu0 %v3448
    %4407 = vmatpush1.bf16.msra.mxu0 %v3447
    %4408 = vmatprep.subr.bf16.mxu0 %v3469
    %4409 = vmatpush1.bf16.msra.mxu0 %v3468
    %4410 = vmatprep.subr.bf16.mxu0 %v3490
    %4411 = vmatpush1.bf16.msra.mxu0 %v3489
    %4412 = vmatprep.subr.bf16.mxu0 %v3511
    %4413 = vmatpush1.bf16.msra.mxu0 %v3510
    %4414 = vmatprep.subr.bf16.mxu0 %v3532
    %4415 = vmatpush1.bf16.msra.mxu0 %v3531
    %4416 = vmatprep.mubr.bf16.mxu0 %v1035
    %4417 = vmatmul.mubr.bf16.gmra.mrb[0].mxu0 %v1034
    %v4418 = vpop.f32.mrb[0].mxu0
    %v4419 = vadd.f32 %v1590, %v4418
    %v4420 = vpop.f32.mrb[0].mxu0
    %v4421 = vadd.f32 %v1594, %v4420
    %v4422 = vpop.f32.mrb[0].mxu0
    %v4423 = vpop.f32.mrb[0].mxu0
    %4424 = vdwg.mxu0
    %4425 = vmatprep.subr.bf16.mxu0 %v3553
    %4426 = vmatpush1.bf16.msra.mxu0 %v3552
    %4427 = vmatprep.subr.bf16.mxu0 %v3574
    %4428 = vmatpush1.bf16.msra.mxu0 %v3573
    %4429 = vmatprep.subr.bf16.mxu0 %v3595
    %4430 = vmatpush1.bf16.msra.mxu0 %v3594
    %4431 = vmatprep.subr.bf16.mxu0 %v3616
    %4432 = vmatpush1.bf16.msra.mxu0 %v3615
    %4433 = vmatprep.subr.bf16.mxu0 %v3637
    %4434 = vmatpush1.bf16.msra.mxu0 %v3636
    %4435 = vmatprep.subr.bf16.mxu0 %v3658
    %4436 = vmatpush1.bf16.msra.mxu0 %v3657
    %4437 = vmatprep.subr.bf16.mxu0 %v3679
    %4438 = vmatpush1.bf16.msra.mxu0 %v3678
    %4439 = vmatprep.subr.bf16.mxu0 %v3700
    %4440 = vmatpush1.bf16.msra.mxu0 %v3699
    %4441 = vmatprep.subr.bf16.mxu0 0
    %4442 = vmatpush1.bf16.msra.mxu0 0
    %4443 = vmatprep.subr.bf16.mxu0 0
    %4444 = vmatpush1.bf16.msra.mxu0 0
    %4445 = vmatprep.subr.bf16.mxu0 0
    %4446 = vmatpush1.bf16.msra.mxu0 0
    %4447 = vmatprep.subr.bf16.mxu0 0
    %4448 = vmatpush1.bf16.msra.mxu0 0
    %4449 = vmatprep.subr.bf16.mxu0 0
    %4450 = vmatpush1.bf16.msra.mxu0 0
    %4451 = vmatprep.subr.bf16.mxu0 0
    %4452 = vmatpush1.bf16.msra.mxu0 0
    %4453 = vmatprep.subr.bf16.mxu0 0
    %4454 = vmatpush1.bf16.msra.mxu0 0
    %4455 = vmatprep.subr.bf16.mxu0 0
    %4456 = vmatpush1.bf16.msra.mxu0 0
    %4457 = vmatprep.mubr.bf16.mxu0 0
    %4458 = vmatmul.mubr.bf16.gmra.mrb[0].mxu0 %v1036
    %v4459 = vpop.f32.mrb[0].mxu0
    %v4460 = vadd.f32 %v4419, %v4459
    %v4461 = vpop.f32.mrb[0].mxu0
    %v4462 = vadd.f32 %v4421, %v4461
    %v4463 = vpop.f32.mrb[0].mxu0
    %v4464 = vpop.f32.mrb[0].mxu0
    %4465 = vdwg.mxu0
    %4466 = vmatprep.subr.bf16.mxu0 %v3219
    %4467 = vmatpush1.bf16.msra.mxu0 %v3218
    %4468 = vmatprep.subr.bf16.mxu0 %v3240
    %4469 = vmatpush1.bf16.msra.mxu0 %v3239
    %4470 = vmatprep.subr.bf16.mxu0 %v3261
    %4471 = vmatpush1.bf16.msra.mxu0 %v3260
    %4472 = vmatprep.subr.bf16.mxu0 %v3282
    %4473 = vmatpush1.bf16.msra.mxu0 %v3281
    %4474 = vmatprep.subr.bf16.mxu0 %v3303
    %4475 = vmatpush1.bf16.msra.mxu0 %v3302
    %4476 = vmatprep.subr.bf16.mxu0 %v3324
    %4477 = vmatpush1.bf16.msra.mxu0 %v3323
    %4478 = vmatprep.subr.bf16.mxu0 %v3345
    %4479 = vmatpush1.bf16.msra.mxu0 %v3344
    %4480 = vmatprep.subr.bf16.mxu0 %v3366
    %4481 = vmatpush1.bf16.msra.mxu0 %v3365
    %4482 = vmatprep.subr.bf16.mxu0 %v3387
    %4483 = vmatpush1.bf16.msra.mxu0 %v3386
    %4484 = vmatprep.subr.bf16.mxu0 %v3408
    %4485 = vmatpush1.bf16.msra.mxu0 %v3407
    %4486 = vmatprep.subr.bf16.mxu0 %v3429
    %4487 = vmatpush1.bf16.msra.mxu0 %v3428
    %4488 = vmatprep.subr.bf16.mxu0 %v3450
    %4489 = vmatpush1.bf16.msra.mxu0 %v3449
    %4490 = vmatprep.subr.bf16.mxu0 %v3471
    %4491 = vmatpush1.bf16.msra.mxu0 %v3470
    %4492 = vmatprep.subr.bf16.mxu0 %v3492
    %4493 = vmatpush1.bf16.msra.mxu0 %v3491
    %4494 = vmatprep.subr.bf16.mxu0 %v3513
    %4495 = vmatpush1.bf16.msra.mxu0 %v3512
    %4496 = vmatprep.subr.bf16.mxu0 %v3534
    %4497 = vmatpush1.bf16.msra.mxu0 %v3533
    %4498 = vmatprep.mubr.bf16.mxu0 %v1035
    %4499 = vmatmul.mubr.bf16.gmra.mrb[0].mxu0 %v1034
    %v4500 = vpop.f32.mrb[0].mxu0
    %v4501 = vadd.f32 %v1598, %v4500
    %v4502 = vpop.f32.mrb[0].mxu0
    %v4503 = vadd.f32 %v1602, %v4502
    %v4504 = vpop.f32.mrb[0].mxu0
    %v4505 = vpop.f32.mrb[0].mxu0
    %4506 = vdwg.mxu0
    %4507 = vmatprep.subr.bf16.mxu0 %v3555
    %4508 = vmatpush1.bf16.msra.mxu0 %v3554
    %4509 = vmatprep.subr.bf16.mxu0 %v3576
    %4510 = vmatpush1.bf16.msra.mxu0 %v3575
    %4511 = vmatprep.subr.bf16.mxu0 %v3597
    %4512 = vmatpush1.bf16.msra.mxu0 %v3596
    %4513 = vmatprep.subr.bf16.mxu0 %v3618
    %4514 = vmatpush1.bf16.msra.mxu0 %v3617
    %4515 = vmatprep.subr.bf16.mxu0 %v3639
    %4516 = vmatpush1.bf16.msra.mxu0 %v3638
    %4517 = vmatprep.subr.bf16.mxu0 %v3660
    %4518 = vmatpush1.bf16.msra.mxu0 %v3659
    %4519 = vmatprep.subr.bf16.mxu0 %v3681
    %4520 = vmatpush1.bf16.msra.mxu0 %v3680
    %4521 = vmatprep.subr.bf16.mxu0 %v3702
    %4522 = vmatpush1.bf16.msra.mxu0 %v3701
    %4523 = vmatprep.subr.bf16.mxu0 0
    %4524 = vmatpush1.bf16.msra.mxu0 0
    %4525 = vmatprep.subr.bf16.mxu0 0
    %4526 = vmatpush1.bf16.msra.mxu0 0
    %4527 = vmatprep.subr.bf16.mxu0 0
    %4528 = vmatpush1.bf16.msra.mxu0 0
    %4529 = vmatprep.subr.bf16.mxu0 0
    %4530 = vmatpush1.bf16.msra.mxu0 0
    %4531 = vmatprep.subr.bf16.mxu0 0
    %4532 = vmatpush1.bf16.msra.mxu0 0
    %4533 = vmatprep.subr.bf16.mxu0 0
    %4534 = vmatpush1.bf16.msra.mxu0 0
    %4535 = vmatprep.subr.bf16.mxu0 0
    %4536 = vmatpush1.bf16.msra.mxu0 0
    %4537 = vmatprep.subr.bf16.mxu0 0
    %4538 = vmatpush1.bf16.msra.mxu0 0
    %4539 = vmatprep.mubr.bf16.mxu0 0
    %4540 = vmatmul.mubr.bf16.gmra.mrb[0].mxu0 %v1036
    %v4541 = vpop.f32.mrb[0].mxu0
    %v4542 = vadd.f32 %v4501, %v4541
    %v4543 = vpop.f32.mrb[0].mxu0
    %v4544 = vadd.f32 %v4503, %v4543
    %v4545 = vpop.f32.mrb[0].mxu0
    %v4546 = vpop.f32.mrb[0].mxu0
    %4547 = vdwg.mxu0
    %4548 = vmatprep.subr.bf16.mxu0 %v3221
    %4549 = vmatpush1.bf16.msra.mxu0 %v3220
    %4550 = vmatprep.subr.bf16.mxu0 %v3242
    %4551 = vmatpush1.bf16.msra.mxu0 %v3241
    %4552 = vmatprep.subr.bf16.mxu0 %v3263
    %4553 = vmatpush1.bf16.msra.mxu0 %v3262
    %4554 = vmatprep.subr.bf16.mxu0 %v3284
    %4555 = vmatpush1.bf16.msra.mxu0 %v3283
    %4556 = vmatprep.subr.bf16.mxu0 %v3305
    %4557 = vmatpush1.bf16.msra.mxu0 %v3304
    %4558 = vmatprep.subr.bf16.mxu0 %v3326
    %4559 = vmatpush1.bf16.msra.mxu0 %v3325
    %4560 = vmatprep.subr.bf16.mxu0 %v3347
    %4561 = vmatpush1.bf16.msra.mxu0 %v3346
    %4562 = vmatprep.subr.bf16.mxu0 %v3368
    %4563 = vmatpush1.bf16.msra.mxu0 %v3367
    %4564 = vmatprep.subr.bf16.mxu0 %v3389
    %4565 = vmatpush1.bf16.msra.mxu0 %v3388
    %4566 = vmatprep.subr.bf16.mxu0 %v3410
    %4567 = vmatpush1.bf16.msra.mxu0 %v3409
    %4568 = vmatprep.subr.bf16.mxu0 %v3431
    %4569 = vmatpush1.bf16.msra.mxu0 %v3430
    %4570 = vmatprep.subr.bf16.mxu0 %v3452
    %4571 = vmatpush1.bf16.msra.mxu0 %v3451
    %4572 = vmatprep.subr.bf16.mxu0 %v3473
    %4573 = vmatpush1.bf16.msra.mxu0 %v3472
    %4574 = vmatprep.subr.bf16.mxu0 %v3494
    %4575 = vmatpush1.bf16.msra.mxu0 %v3493
    %4576 = vmatprep.subr.bf16.mxu0 %v3515
    %4577 = vmatpush1.bf16.msra.mxu0 %v3514
    %4578 = vmatprep.subr.bf16.mxu0 %v3536
    %4579 = vmatpush1.bf16.msra.mxu0 %v3535
    %4580 = vmatprep.mubr.bf16.mxu0 %v1035
    %4581 = vmatmul.mubr.bf16.gmra.mrb[0].mxu0 %v1034
    %v4582 = vpop.f32.mrb[0].mxu0
    %v4583 = vadd.f32 %v1606, %v4582
    %v4584 = vpop.f32.mrb[0].mxu0
    %v4585 = vadd.f32 %v1610, %v4584
    %v4586 = vpop.f32.mrb[0].mxu0
    %v4587 = vpop.f32.mrb[0].mxu0
    %4588 = vdwg.mxu0
    %4589 = vmatprep.subr.bf16.mxu0 %v3557
    %4590 = vmatpush1.bf16.msra.mxu0 %v3556
    %4591 = vmatprep.subr.bf16.mxu0 %v3578
    %4592 = vmatpush1.bf16.msra.mxu0 %v3577
    %4593 = vmatprep.subr.bf16.mxu0 %v3599
    %4594 = vmatpush1.bf16.msra.mxu0 %v3598
    %4595 = vmatprep.subr.bf16.mxu0 %v3620
    %4596 = vmatpush1.bf16.msra.mxu0 %v3619
    %4597 = vmatprep.subr.bf16.mxu0 %v3641
    %4598 = vmatpush1.bf16.msra.mxu0 %v3640
    %4599 = vmatprep.subr.bf16.mxu0 %v3662
    %4600 = vmatpush1.bf16.msra.mxu0 %v3661
    %4601 = vmatprep.subr.bf16.mxu0 %v3683
    %4602 = vmatpush1.bf16.msra.mxu0 %v3682
    %4603 = vmatprep.subr.bf16.mxu0 %v3704
    %4604 = vmatpush1.bf16.msra.mxu0 %v3703
    %4605 = vmatprep.subr.bf16.mxu0 0
    %4606 = vmatpush1.bf16.msra.mxu0 0
    %4607 = vmatprep.subr.bf16.mxu0 0
    %4608 = vmatpush1.bf16.msra.mxu0 0
    %4609 = vmatprep.subr.bf16.mxu0 0
    %4610 = vmatpush1.bf16.msra.mxu0 0
    %4611 = vmatprep.subr.bf16.mxu0 0
    %4612 = vmatpush1.bf16.msra.mxu0 0
    %4613 = vmatprep.subr.bf16.mxu0 0
    %4614 = vmatpush1.bf16.msra.mxu0 0
    %4615 = vmatprep.subr.bf16.mxu0 0
    %4616 = vmatpush1.bf16.msra.mxu0 0
    %4617 = vmatprep.subr.bf16.mxu0 0
    %4618 = vmatpush1.bf16.msra.mxu0 0
    %4619 = vmatprep.subr.bf16.mxu0 0
    %4620 = vmatpush1.bf16.msra.mxu0 0
    %4621 = vmatprep.mubr.bf16.mxu0 0
    %4622 = vmatmul.mubr.bf16.gmra.mrb[0].mxu0 %v1036
    %v4623 = vpop.f32.mrb[0].mxu0
    %v4624 = vadd.f32 %v4583, %v4623
    %v4625 = vpop.f32.mrb[0].mxu0
    %v4626 = vadd.f32 %v4585, %v4625
    %v4627 = vpop.f32.mrb[0].mxu0
    %v4628 = vpop.f32.mrb[0].mxu0
    %4629 = vdwg.mxu0
    %4630 = vmatprep.subr.bf16.mxu0 %v3223
    %4631 = vmatpush1.bf16.msra.mxu0 %v3222
    %4632 = vmatprep.subr.bf16.mxu0 %v3244
    %4633 = vmatpush1.bf16.msra.mxu0 %v3243
    %4634 = vmatprep.subr.bf16.mxu0 %v3265
    %4635 = vmatpush1.bf16.msra.mxu0 %v3264
    %4636 = vmatprep.subr.bf16.mxu0 %v3286
    %4637 = vmatpush1.bf16.msra.mxu0 %v3285
    %4638 = vmatprep.subr.bf16.mxu0 %v3307
    %4639 = vmatpush1.bf16.msra.mxu0 %v3306
    %4640 = vmatprep.subr.bf16.mxu0 %v3328
    %4641 = vmatpush1.bf16.msra.mxu0 %v3327
    %4642 = vmatprep.subr.bf16.mxu0 %v3349
    %4643 = vmatpush1.bf16.msra.mxu0 %v3348
    %4644 = vmatprep.subr.bf16.mxu0 %v3370
    %4645 = vmatpush1.bf16.msra.mxu0 %v3369
    %4646 = vmatprep.subr.bf16.mxu0 %v3391
    %4647 = vmatpush1.bf16.msra.mxu0 %v3390
    %4648 = vmatprep.subr.bf16.mxu0 %v3412
    %4649 = vmatpush1.bf16.msra.mxu0 %v3411
    %4650 = vmatprep.subr.bf16.mxu0 %v3433
    %4651 = vmatpush1.bf16.msra.mxu0 %v3432
    %4652 = vmatprep.subr.bf16.mxu0 %v3454
    %4653 = vmatpush1.bf16.msra.mxu0 %v3453
    %4654 = vmatprep.subr.bf16.mxu0 %v3475
    %4655 = vmatpush1.bf16.msra.mxu0 %v3474
    %4656 = vmatprep.subr.bf16.mxu0 %v3496
    %4657 = vmatpush1.bf16.msra.mxu0 %v3495
    %4658 = vmatprep.subr.bf16.mxu0 %v3517
    %4659 = vmatpush1.bf16.msra.mxu0 %v3516
    %4660 = vmatprep.subr.bf16.mxu0 %v3538
    %4661 = vmatpush1.bf16.msra.mxu0 %v3537
    %4662 = vmatprep.mubr.bf16.mxu0 %v1035
    %4663 = vmatmul.mubr.bf16.gmra.mrb[0].mxu0 %v1034
    %v4664 = vpop.f32.mrb[0].mxu0
    %v4665 = vadd.f32 %v1614, %v4664
    %v4666 = vpop.f32.mrb[0].mxu0
    %v4667 = vadd.f32 %v1618, %v4666
    %v4668 = vpop.f32.mrb[0].mxu0
    %v4669 = vpop.f32.mrb[0].mxu0
    %4670 = vdwg.mxu0
    %4671 = vmatprep.subr.bf16.mxu0 %v3559
    %4672 = vmatpush1.bf16.msra.mxu0 %v3558
    %4673 = vmatprep.subr.bf16.mxu0 %v3580
    %4674 = vmatpush1.bf16.msra.mxu0 %v3579
    %4675 = vmatprep.subr.bf16.mxu0 %v3601
    %4676 = vmatpush1.bf16.msra.mxu0 %v3600
    %4677 = vmatprep.subr.bf16.mxu0 %v3622
    %4678 = vmatpush1.bf16.msra.mxu0 %v3621
    %4679 = vmatprep.subr.bf16.mxu0 %v3643
    %4680 = vmatpush1.bf16.msra.mxu0 %v3642
    %4681 = vmatprep.subr.bf16.mxu0 %v3664
    %4682 = vmatpush1.bf16.msra.mxu0 %v3663
    %4683 = vmatprep.subr.bf16.mxu0 %v3685
    %4684 = vmatpush1.bf16.msra.mxu0 %v3684
    %4685 = vmatprep.subr.bf16.mxu0 %v3706
    %4686 = vmatpush1.bf16.msra.mxu0 %v3705
    %4687 = vmatprep.subr.bf16.mxu0 0
    %4688 = vmatpush1.bf16.msra.mxu0 0
    %4689 = vmatprep.subr.bf16.mxu0 0
    %4690 = vmatpush1.bf16.msra.mxu0 0
    %4691 = vmatprep.subr.bf16.mxu0 0
    %4692 = vmatpush1.bf16.msra.mxu0 0
    %4693 = vmatprep.subr.bf16.mxu0 0
    %4694 = vmatpush1.bf16.msra.mxu0 0
    %4695 = vmatprep.subr.bf16.mxu0 0
    %4696 = vmatpush1.bf16.msra.mxu0 0
    %4697 = vmatprep.subr.bf16.mxu0 0
    %4698 = vmatpush1.bf16.msra.mxu0 0
    %4699 = vmatprep.subr.bf16.mxu0 0
    %4700 = vmatpush1.bf16.msra.mxu0 0
    %4701 = vmatprep.subr.bf16.mxu0 0
    %4702 = vmatpush1.bf16.msra.mxu0 0
    %4703 = vmatprep.mubr.bf16.mxu0 0
    %4704 = vmatmul.mubr.bf16.gmra.mrb[0].mxu0 %v1036
    %v4705 = vpop.f32.mrb[0].mxu0
    %v4706 = vadd.f32 %v4665, %v4705
    %v4707 = vpop.f32.mrb[0].mxu0
    %v4708 = vadd.f32 %v4667, %v4707
    %v4709 = vpop.f32.mrb[0].mxu0
    %v4710 = vpop.f32.mrb[0].mxu0
    %4711 = vdwg.mxu0
    %4712 = vmatprep.subr.bf16.mxu0 %v3225
    %4713 = vmatpush1.bf16.msra.mxu0 %v3224
    %4714 = vmatprep.subr.bf16.mxu0 %v3246
    %4715 = vmatpush1.bf16.msra.mxu0 %v3245
    %4716 = vmatprep.subr.bf16.mxu0 %v3267
    %4717 = vmatpush1.bf16.msra.mxu0 %v3266
    %4718 = vmatprep.subr.bf16.mxu0 %v3288
    %4719 = vmatpush1.bf16.msra.mxu0 %v3287
    %4720 = vmatprep.subr.bf16.mxu0 %v3309
    %4721 = vmatpush1.bf16.msra.mxu0 %v3308
    %4722 = vmatprep.subr.bf16.mxu0 %v3330
    %4723 = vmatpush1.bf16.msra.mxu0 %v3329
    %4724 = vmatprep.subr.bf16.mxu0 %v3351
    %4725 = vmatpush1.bf16.msra.mxu0 %v3350
    %4726 = vmatprep.subr.bf16.mxu0 %v3372
    %4727 = vmatpush1.bf16.msra.mxu0 %v3371
    %4728 = vmatprep.subr.bf16.mxu0 %v3393
    %4729 = vmatpush1.bf16.msra.mxu0 %v3392
    %4730 = vmatprep.subr.bf16.mxu0 %v3414
    %4731 = vmatpush1.bf16.msra.mxu0 %v3413
    %4732 = vmatprep.subr.bf16.mxu0 %v3435
    %4733 = vmatpush1.bf16.msra.mxu0 %v3434
    %4734 = vmatprep.subr.bf16.mxu0 %v3456
    %4735 = vmatpush1.bf16.msra.mxu0 %v3455
    %4736 = vmatprep.subr.bf16.mxu0 %v3477
    %4737 = vmatpush1.bf16.msra.mxu0 %v3476
    %4738 = vmatprep.subr.bf16.mxu0 %v3498
    %4739 = vmatpush1.bf16.msra.mxu0 %v3497
    %4740 = vmatprep.subr.bf16.mxu0 %v3519
    %4741 = vmatpush1.bf16.msra.mxu0 %v3518
    %4742 = vmatprep.subr.bf16.mxu0 %v3540
    %4743 = vmatpush1.bf16.msra.mxu0 %v3539
    %4744 = vmatprep.mubr.bf16.mxu0 %v1035
    %4745 = vmatmul.mubr.bf16.gmra.mrb[0].mxu0 %v1034
    %v4746 = vpop.f32.mrb[0].mxu0
    %v4747 = vadd.f32 %v1622, %v4746
    %v4748 = vpop.f32.mrb[0].mxu0
    %v4749 = vadd.f32 %v1626, %v4748
    %v4750 = vpop.f32.mrb[0].mxu0
    %v4751 = vpop.f32.mrb[0].mxu0
    %4752 = vdwg.mxu0
    %4753 = vmatprep.subr.bf16.mxu0 %v3561
    %4754 = vmatpush1.bf16.msra.mxu0 %v3560
    %4755 = vmatprep.subr.bf16.mxu0 %v3582
    %4756 = vmatpush1.bf16.msra.mxu0 %v3581
    %4757 = vmatprep.subr.bf16.mxu0 %v3603
    %4758 = vmatpush1.bf16.msra.mxu0 %v3602
    %4759 = vmatprep.subr.bf16.mxu0 %v3624
    %4760 = vmatpush1.bf16.msra.mxu0 %v3623
    %4761 = vmatprep.subr.bf16.mxu0 %v3645
    %4762 = vmatpush1.bf16.msra.mxu0 %v3644
    %4763 = vmatprep.subr.bf16.mxu0 %v3666
    %4764 = vmatpush1.bf16.msra.mxu0 %v3665
    %4765 = vmatprep.subr.bf16.mxu0 %v3687
    %4766 = vmatpush1.bf16.msra.mxu0 %v3686
    %4767 = vmatprep.subr.bf16.mxu0 %v3708
    %4768 = vmatpush1.bf16.msra.mxu0 %v3707
    %4769 = vmatprep.subr.bf16.mxu0 0
    %4770 = vmatpush1.bf16.msra.mxu0 0
    %4771 = vmatprep.subr.bf16.mxu0 0
    %4772 = vmatpush1.bf16.msra.mxu0 0
    %4773 = vmatprep.subr.bf16.mxu0 0
    %4774 = vmatpush1.bf16.msra.mxu0 0
    %4775 = vmatprep.subr.bf16.mxu0 0
    %4776 = vmatpush1.bf16.msra.mxu0 0
    %4777 = vmatprep.subr.bf16.mxu0 0
    %4778 = vmatpush1.bf16.msra.mxu0 0
    %4779 = vmatprep.subr.bf16.mxu0 0
    %4780 = vmatpush1.bf16.msra.mxu0 0
    %4781 = vmatprep.subr.bf16.mxu0 0
    %4782 = vmatpush1.bf16.msra.mxu0 0
    %4783 = vmatprep.subr.bf16.mxu0 0
    %4784 = vmatpush1.bf16.msra.mxu0 0
    %4785 = vmatprep.mubr.bf16.mxu0 0
    %4786 = vmatmul.mubr.bf16.gmra.mrb[0].mxu0 %v1036
    %v4787 = vpop.f32.mrb[0].mxu0
    %v4788 = vadd.f32 %v4747, %v4787
    %v4789 = vpop.f32.mrb[0].mxu0
    %v4790 = vadd.f32 %v4749, %v4789
    %v4791 = vpop.f32.mrb[0].mxu0
    %v4792 = vpop.f32.mrb[0].mxu0
    %4793 = vdwg.mxu0
    %4794 = vmatprep.subr.bf16.mxu0 %v3227
    %4795 = vmatpush1.bf16.msra.mxu0 %v3226
    %4796 = vmatprep.subr.bf16.mxu0 %v3248
    %4797 = vmatpush1.bf16.msra.mxu0 %v3247
    %4798 = vmatprep.subr.bf16.mxu0 %v3269
    %4799 = vmatpush1.bf16.msra.mxu0 %v3268
    %4800 = vmatprep.subr.bf16.mxu0 %v3290
    %4801 = vmatpush1.bf16.msra.mxu0 %v3289
    %4802 = vmatprep.subr.bf16.mxu0 %v3311
    %4803 = vmatpush1.bf16.msra.mxu0 %v3310
    %4804 = vmatprep.subr.bf16.mxu0 %v3332
    %4805 = vmatpush1.bf16.msra.mxu0 %v3331
    %4806 = vmatprep.subr.bf16.mxu0 %v3353
    %4807 = vmatpush1.bf16.msra.mxu0 %v3352
    %4808 = vmatprep.subr.bf16.mxu0 %v3374
    %4809 = vmatpush1.bf16.msra.mxu0 %v3373
    %4810 = vmatprep.subr.bf16.mxu0 %v3395
    %4811 = vmatpush1.bf16.msra.mxu0 %v3394
    %4812 = vmatprep.subr.bf16.mxu0 %v3416
    %4813 = vmatpush1.bf16.msra.mxu0 %v3415
    %4814 = vmatprep.subr.bf16.mxu0 %v3437
    %4815 = vmatpush1.bf16.msra.mxu0 %v3436
    %4816 = vmatprep.subr.bf16.mxu0 %v3458
    %4817 = vmatpush1.bf16.msra.mxu0 %v3457
    %4818 = vmatprep.subr.bf16.mxu0 %v3479
    %4819 = vmatpush1.bf16.msra.mxu0 %v3478
    %4820 = vmatprep.subr.bf16.mxu0 %v3500
    %4821 = vmatpush1.bf16.msra.mxu0 %v3499
    %4822 = vmatprep.subr.bf16.mxu0 %v3521
    %4823 = vmatpush1.bf16.msra.mxu0 %v3520
    %4824 = vmatprep.subr.bf16.mxu0 %v3542
    %4825 = vmatpush1.bf16.msra.mxu0 %v3541
    %4826 = vmatprep.mubr.bf16.mxu0 %v1035
    %4827 = vmatmul.mubr.bf16.gmra.mrb[0].mxu0 %v1034
    %v4828 = vpop.f32.mrb[0].mxu0
    %v4829 = vadd.f32 %v1630, %v4828
    %v4830 = vpop.f32.mrb[0].mxu0
    %v4831 = vadd.f32 %v1634, %v4830
    %v4832 = vpop.f32.mrb[0].mxu0
    %v4833 = vpop.f32.mrb[0].mxu0
    %4834 = vdwg.mxu0
    %4835 = vmatprep.subr.bf16.mxu0 %v3563
    %4836 = vmatpush1.bf16.msra.mxu0 %v3562
    %4837 = vmatprep.subr.bf16.mxu0 %v3584
    %4838 = vmatpush1.bf16.msra.mxu0 %v3583
    %4839 = vmatprep.subr.bf16.mxu0 %v3605
    %4840 = vmatpush1.bf16.msra.mxu0 %v3604
    %4841 = vmatprep.subr.bf16.mxu0 %v3626
    %4842 = vmatpush1.bf16.msra.mxu0 %v3625
    %4843 = vmatprep.subr.bf16.mxu0 %v3647
    %4844 = vmatpush1.bf16.msra.mxu0 %v3646
    %4845 = vmatprep.subr.bf16.mxu0 %v3668
    %4846 = vmatpush1.bf16.msra.mxu0 %v3667
    %4847 = vmatprep.subr.bf16.mxu0 %v3689
    %4848 = vmatpush1.bf16.msra.mxu0 %v3688
    %4849 = vmatprep.subr.bf16.mxu0 %v3710
    %4850 = vmatpush1.bf16.msra.mxu0 %v3709
    %4851 = vmatprep.subr.bf16.mxu0 0
    %4852 = vmatpush1.bf16.msra.mxu0 0
    %4853 = vmatprep.subr.bf16.mxu0 0
    %4854 = vmatpush1.bf16.msra.mxu0 0
    %4855 = vmatprep.subr.bf16.mxu0 0
    %4856 = vmatpush1.bf16.msra.mxu0 0
    %4857 = vmatprep.subr.bf16.mxu0 0
    %4858 = vmatpush1.bf16.msra.mxu0 0
    %4859 = vmatprep.subr.bf16.mxu0 0
    %4860 = vmatpush1.bf16.msra.mxu0 0
    %4861 = vmatprep.subr.bf16.mxu0 0
    %4862 = vmatpush1.bf16.msra.mxu0 0
    %4863 = vmatprep.subr.bf16.mxu0 0
    %4864 = vmatpush1.bf16.msra.mxu0 0
    %4865 = vmatprep.subr.bf16.mxu0 0
    %4866 = vmatpush1.bf16.msra.mxu0 0
    %4867 = vmatprep.mubr.bf16.mxu0 0
    %4868 = vmatmul.mubr.bf16.gmra.mrb[0].mxu0 %v1036
    %v4869 = vpop.f32.mrb[0].mxu0
    %v4870 = vadd.f32 %v4829, %v4869
    %v4871 = vpop.f32.mrb[0].mxu0
    %v4872 = vadd.f32 %v4831, %v4871
    %v4873 = vpop.f32.mrb[0].mxu0
    %v4874 = vpop.f32.mrb[0].mxu0
    %4875 = vdwg.mxu0
    %4876 = vmatprep.subr.bf16.mxu0 %v3229
    %4877 = vmatpush1.bf16.msra.mxu0 %v3228
    %4878 = vmatprep.subr.bf16.mxu0 %v3250
    %4879 = vmatpush1.bf16.msra.mxu0 %v3249
    %4880 = vmatprep.subr.bf16.mxu0 %v3271
    %4881 = vmatpush1.bf16.msra.mxu0 %v3270
    %4882 = vmatprep.subr.bf16.mxu0 %v3292
    %4883 = vmatpush1.bf16.msra.mxu0 %v3291
    %4884 = vmatprep.subr.bf16.mxu0 %v3313
    %4885 = vmatpush1.bf16.msra.mxu0 %v3312
    %4886 = vmatprep.subr.bf16.mxu0 %v3334
    %4887 = vmatpush1.bf16.msra.mxu0 %v3333
    %4888 = vmatprep.subr.bf16.mxu0 %v3355
    %4889 = vmatpush1.bf16.msra.mxu0 %v3354
    %4890 = vmatprep.subr.bf16.mxu0 %v3376
    %4891 = vmatpush1.bf16.msra.mxu0 %v3375
    %4892 = vmatprep.subr.bf16.mxu0 %v3397
    %4893 = vmatpush1.bf16.msra.mxu0 %v3396
    %4894 = vmatprep.subr.bf16.mxu0 %v3418
    %4895 = vmatpush1.bf16.msra.mxu0 %v3417
    %4896 = vmatprep.subr.bf16.mxu0 %v3439
    %4897 = vmatpush1.bf16.msra.mxu0 %v3438
    %4898 = vmatprep.subr.bf16.mxu0 %v3460
    %4899 = vmatpush1.bf16.msra.mxu0 %v3459
    %4900 = vmatprep.subr.bf16.mxu0 %v3481
    %4901 = vmatpush1.bf16.msra.mxu0 %v3480
    %4902 = vmatprep.subr.bf16.mxu0 %v3502
    %4903 = vmatpush1.bf16.msra.mxu0 %v3501
    %4904 = vmatprep.subr.bf16.mxu0 %v3523
    %4905 = vmatpush1.bf16.msra.mxu0 %v3522
    %4906 = vmatprep.subr.bf16.mxu0 %v3544
    %4907 = vmatpush1.bf16.msra.mxu0 %v3543
    %4908 = vmatprep.mubr.bf16.mxu0 %v1035
    %4909 = vmatmul.mubr.bf16.gmra.mrb[0].mxu0 %v1034
    %v4910 = vpop.f32.mrb[0].mxu0
    %v4911 = vadd.f32 %v1638, %v4910
    %v4912 = vpop.f32.mrb[0].mxu0
    %v4913 = vadd.f32 %v1642, %v4912
    %v4914 = vpop.f32.mrb[0].mxu0
    %v4915 = vpop.f32.mrb[0].mxu0
    %4916 = vdwg.mxu0
    %4917 = vmatprep.subr.bf16.mxu0 %v3565
    %4918 = vmatpush1.bf16.msra.mxu0 %v3564
    %4919 = vmatprep.subr.bf16.mxu0 %v3586
    %4920 = vmatpush1.bf16.msra.mxu0 %v3585
    %4921 = vmatprep.subr.bf16.mxu0 %v3607
    %4922 = vmatpush1.bf16.msra.mxu0 %v3606
    %4923 = vmatprep.subr.bf16.mxu0 %v3628
    %4924 = vmatpush1.bf16.msra.mxu0 %v3627
    %4925 = vmatprep.subr.bf16.mxu0 %v3649
    %4926 = vmatpush1.bf16.msra.mxu0 %v3648
    %4927 = vmatprep.subr.bf16.mxu0 %v3670
    %4928 = vmatpush1.bf16.msra.mxu0 %v3669
    %4929 = vmatprep.subr.bf16.mxu0 %v3691
    %4930 = vmatpush1.bf16.msra.mxu0 %v3690
    %4931 = vmatprep.subr.bf16.mxu0 %v3712
    %4932 = vmatpush1.bf16.msra.mxu0 %v3711
    %4933 = vmatprep.subr.bf16.mxu0 0
    %4934 = vmatpush1.bf16.msra.mxu0 0
    %4935 = vmatprep.subr.bf16.mxu0 0
    %4936 = vmatpush1.bf16.msra.mxu0 0
    %4937 = vmatprep.subr.bf16.mxu0 0
    %4938 = vmatpush1.bf16.msra.mxu0 0
    %4939 = vmatprep.subr.bf16.mxu0 0
    %4940 = vmatpush1.bf16.msra.mxu0 0
    %4941 = vmatprep.subr.bf16.mxu0 0
    %4942 = vmatpush1.bf16.msra.mxu0 0
    %4943 = vmatprep.subr.bf16.mxu0 0
    %4944 = vmatpush1.bf16.msra.mxu0 0
    %4945 = vmatprep.subr.bf16.mxu0 0
    %4946 = vmatpush1.bf16.msra.mxu0 0
    %4947 = vmatprep.subr.bf16.mxu0 0
    %4948 = vmatpush1.bf16.msra.mxu0 0
    %4949 = vmatprep.mubr.bf16.mxu0 0
    %4950 = vmatmul.mubr.bf16.gmra.mrb[0].mxu0 %v1036
    %v4951 = vpop.f32.mrb[0].mxu0
    %v4952 = vadd.f32 %v4911, %v4951
    %v4953 = vpop.f32.mrb[0].mxu0
    %v4954 = vadd.f32 %v4913, %v4953
    %v4955 = vpop.f32.mrb[0].mxu0
    %v4956 = vpop.f32.mrb[0].mxu0
    %4957 = vdwg.mxu0
    %4958 = vmatprep.subr.bf16.mxu0 %v3231
    %4959 = vmatpush1.bf16.msra.mxu0 %v3230
    %4960 = vmatprep.subr.bf16.mxu0 %v3252
    %4961 = vmatpush1.bf16.msra.mxu0 %v3251
    %4962 = vmatprep.subr.bf16.mxu0 %v3273
    %4963 = vmatpush1.bf16.msra.mxu0 %v3272
    %4964 = vmatprep.subr.bf16.mxu0 %v3294
    %4965 = vmatpush1.bf16.msra.mxu0 %v3293
    %4966 = vmatprep.subr.bf16.mxu0 %v3315
    %4967 = vmatpush1.bf16.msra.mxu0 %v3314
    %4968 = vmatprep.subr.bf16.mxu0 %v3336
    %4969 = vmatpush1.bf16.msra.mxu0 %v3335
    %4970 = vmatprep.subr.bf16.mxu0 %v3357
    %4971 = vmatpush1.bf16.msra.mxu0 %v3356
    %4972 = vmatprep.subr.bf16.mxu0 %v3378
    %4973 = vmatpush1.bf16.msra.mxu0 %v3377
    %4974 = vmatprep.subr.bf16.mxu0 %v3399
    %4975 = vmatpush1.bf16.msra.mxu0 %v3398
    %4976 = vmatprep.subr.bf16.mxu0 %v3420
    %4977 = vmatpush1.bf16.msra.mxu0 %v3419
    %4978 = vmatprep.subr.bf16.mxu0 %v3441
    %4979 = vmatpush1.bf16.msra.mxu0 %v3440
    %4980 = vmatprep.subr.bf16.mxu0 %v3462
    %4981 = vmatpush1.bf16.msra.mxu0 %v3461
    %4982 = vmatprep.subr.bf16.mxu0 %v3483
    %4983 = vmatpush1.bf16.msra.mxu0 %v3482
    %4984 = vmatprep.subr.bf16.mxu0 %v3504
    %4985 = vmatpush1.bf16.msra.mxu0 %v3503
    %4986 = vmatprep.subr.bf16.mxu0 %v3525
    %4987 = vmatpush1.bf16.msra.mxu0 %v3524
    %4988 = vmatprep.subr.bf16.mxu0 %v3546
    %4989 = vmatpush1.bf16.msra.mxu0 %v3545
    %4990 = vmatprep.mubr.bf16.mxu0 %v1035
    %4991 = vmatmul.mubr.bf16.gmra.mrb[0].mxu0 %v1034
    %v4992 = vpop.f32.mrb[0].mxu0
    %v4993 = vadd.f32 %v1646, %v4992
    %v4994 = vpop.f32.mrb[0].mxu0
    %v4995 = vadd.f32 %v1650, %v4994
    %v4996 = vpop.f32.mrb[0].mxu0
    %v4997 = vpop.f32.mrb[0].mxu0
    %4998 = vdwg.mxu0
    %4999 = vmatprep.subr.bf16.mxu0 %v3567
    %5000 = vmatpush1.bf16.msra.mxu0 %v3566
    %5001 = vmatprep.subr.bf16.mxu0 %v3588
    %5002 = vmatpush1.bf16.msra.mxu0 %v3587
    %5003 = vmatprep.subr.bf16.mxu0 %v3609
    %5004 = vmatpush1.bf16.msra.mxu0 %v3608
    %5005 = vmatprep.subr.bf16.mxu0 %v3630
    %5006 = vmatpush1.bf16.msra.mxu0 %v3629
    %5007 = vmatprep.subr.bf16.mxu0 %v3651
    %5008 = vmatpush1.bf16.msra.mxu0 %v3650
    %5009 = vmatprep.subr.bf16.mxu0 %v3672
    %5010 = vmatpush1.bf16.msra.mxu0 %v3671
    %5011 = vmatprep.subr.bf16.mxu0 %v3693
    %5012 = vmatpush1.bf16.msra.mxu0 %v3692
    %5013 = vmatprep.subr.bf16.mxu0 %v3714
    %5014 = vmatpush1.bf16.msra.mxu0 %v3713
    %5015 = vmatprep.subr.bf16.mxu0 0
    %5016 = vmatpush1.bf16.msra.mxu0 0
    %5017 = vmatprep.subr.bf16.mxu0 0
    %5018 = vmatpush1.bf16.msra.mxu0 0
    %5019 = vmatprep.subr.bf16.mxu0 0
    %5020 = vmatpush1.bf16.msra.mxu0 0
    %5021 = vmatprep.subr.bf16.mxu0 0
    %5022 = vmatpush1.bf16.msra.mxu0 0
    %5023 = vmatprep.subr.bf16.mxu0 0
    %5024 = vmatpush1.bf16.msra.mxu0 0
    %5025 = vmatprep.subr.bf16.mxu0 0
    %5026 = vmatpush1.bf16.msra.mxu0 0
    %5027 = vmatprep.subr.bf16.mxu0 0
    %5028 = vmatpush1.bf16.msra.mxu0 0
    %5029 = vmatprep.subr.bf16.mxu0 0
    %5030 = vmatpush1.bf16.msra.mxu0 0
    %5031 = vmatprep.mubr.bf16.mxu0 0
    %5032 = vmatmul.mubr.bf16.gmra.mrb[0].mxu0 %v1036
    %v5033 = vpop.f32.mrb[0].mxu0
    %v5034 = vadd.f32 %v4993, %v5033
    %v5035 = vpop.f32.mrb[0].mxu0
    %v5036 = vadd.f32 %v4995, %v5035
    %v5037 = vpop.f32.mrb[0].mxu0
    %v5038 = vpop.f32.mrb[0].mxu0
    %5039 = vdwg.mxu0
    %5040 = vmatprep.subr.bf16.mxu0 0
    %5041 = vmatpush1.bf16.msra.mxu0 %v3232
    %5042 = vmatprep.subr.bf16.mxu0 0
    %5043 = vmatpush1.bf16.msra.mxu0 %v3253
    %5044 = vmatprep.subr.bf16.mxu0 0
    %5045 = vmatpush1.bf16.msra.mxu0 %v3274
    %5046 = vmatprep.subr.bf16.mxu0 0
    %5047 = vmatpush1.bf16.msra.mxu0 %v3295
    %5048 = vmatprep.subr.bf16.mxu0 0
    %5049 = vmatpush1.bf16.msra.mxu0 %v3316
    %5050 = vmatprep.subr.bf16.mxu0 0
    %5051 = vmatpush1.bf16.msra.mxu0 %v3337
    %5052 = vmatprep.subr.bf16.mxu0 0
    %5053 = vmatpush1.bf16.msra.mxu0 %v3358
    %5054 = vmatprep.subr.bf16.mxu0 0
    %5055 = vmatpush1.bf16.msra.mxu0 %v3379
    %5056 = vmatprep.subr.bf16.mxu0 0
    %5057 = vmatpush1.bf16.msra.mxu0 %v3400
    %5058 = vmatprep.subr.bf16.mxu0 0
    %5059 = vmatpush1.bf16.msra.mxu0 %v3421
    %5060 = vmatprep.subr.bf16.mxu0 0
    %5061 = vmatpush1.bf16.msra.mxu0 %v3442
    %5062 = vmatprep.subr.bf16.mxu0 0
    %5063 = vmatpush1.bf16.msra.mxu0 %v3463
    %5064 = vmatprep.subr.bf16.mxu0 0
    %5065 = vmatpush1.bf16.msra.mxu0 %v3484
    %5066 = vmatprep.subr.bf16.mxu0 0
    %5067 = vmatpush1.bf16.msra.mxu0 %v3505
    %5068 = vmatprep.subr.bf16.mxu0 0
    %5069 = vmatpush1.bf16.msra.mxu0 %v3526
    %5070 = vmatprep.subr.bf16.mxu0 0
    %5071 = vmatpush1.bf16.msra.mxu0 %v3547
    %5072 = vmatprep.mubr.bf16.mxu0 %v1035
    %5073 = vmatmul.mubr.bf16.gmra.mrb[0].mxu0 %v1034
    %v5074 = vpop.f32.mrb[0].mxu0
    %v5075 = vadd.f32 %v1654, %v5074
    %v5076 = vpop.f32.mrb[0].mxu0
    %v5077 = vpop.f32.mrb[0].mxu0
    %v5078 = vpop.f32.mrb[0].mxu0
    %5079 = vdwg.mxu0
    %5080 = vmatprep.subr.bf16.mxu0 0
    %5081 = vmatpush1.bf16.msra.mxu0 %v3568
    %5082 = vmatprep.subr.bf16.mxu0 0
    %5083 = vmatpush1.bf16.msra.mxu0 %v3589
    %5084 = vmatprep.subr.bf16.mxu0 0
    %5085 = vmatpush1.bf16.msra.mxu0 %v3610
    %5086 = vmatprep.subr.bf16.mxu0 0
    %5087 = vmatpush1.bf16.msra.mxu0 %v3631
    %5088 = vmatprep.subr.bf16.mxu0 0
    %5089 = vmatpush1.bf16.msra.mxu0 %v3652
    %5090 = vmatprep.subr.bf16.mxu0 0
    %5091 = vmatpush1.bf16.msra.mxu0 %v3673
    %5092 = vmatprep.subr.bf16.mxu0 0
    %5093 = vmatpush1.bf16.msra.mxu0 %v3694
    %5094 = vmatprep.subr.bf16.mxu0 0
    %5095 = vmatpush1.bf16.msra.mxu0 %v3715
    %5096 = vmatprep.subr.bf16.mxu0 0
    %5097 = vmatpush1.bf16.msra.mxu0 0
    %5098 = vmatprep.subr.bf16.mxu0 0
    %5099 = vmatpush1.bf16.msra.mxu0 0
    %5100 = vmatprep.subr.bf16.mxu0 0
    %5101 = vmatpush1.bf16.msra.mxu0 0
    %5102 = vmatprep.subr.bf16.mxu0 0
    %5103 = vmatpush1.bf16.msra.mxu0 0
    %5104 = vmatprep.subr.bf16.mxu0 0
    %5105 = vmatpush1.bf16.msra.mxu0 0
    %5106 = vmatprep.subr.bf16.mxu0 0
    %5107 = vmatpush1.bf16.msra.mxu0 0
    %5108 = vmatprep.subr.bf16.mxu0 0
    %5109 = vmatpush1.bf16.msra.mxu0 0
    %5110 = vmatprep.subr.bf16.mxu0 0
    %5111 = vmatpush1.bf16.msra.mxu0 0
    %5112 = vmatprep.mubr.bf16.mxu0 0
    %5113 = vmatmul.mubr.bf16.gmra.mrb[0].mxu0 %v1036
    %v5114 = vpop.f32.mrb[0].mxu0
    %v5115 = vadd.f32 %v5075, %v5114
    %v5116 = vpop.f32.mrb[0].mxu0
    %v5117 = vpop.f32.mrb[0].mxu0
    %v5118 = vpop.f32.mrb[0].mxu0
    %5119 = vdwg.mxu0
    %5120 = vst [vmem:[#allocation22] sm:$0xff] %v4296
    %5121 = vst [vmem:[#allocation22 + $0x8] sm:$0xff] %v4298
    %5122 = vst [vmem:[#allocation22 + $0x10] sm:$0xff] %v4378
    %5123 = vst [vmem:[#allocation22 + $0x18] sm:$0xff] %v4380
    %5124 = vst [vmem:[#allocation22 + $0x20] sm:$0xff] %v4460
    %5125 = vst [vmem:[#allocation22 + $0x28] sm:$0xff] %v4462
    %5126 = vst [vmem:[#allocation22 + $0x30] sm:$0xff] %v4542
    %5127 = vst [vmem:[#allocation22 + $0x38] sm:$0xff] %v4544
    %5128 = vst [vmem:[#allocation22 + $0x40] sm:$0xff] %v4624
    %5129 = vst [vmem:[#allocation22 + $0x48] sm:$0xff] %v4626
    %5130 = vst [vmem:[#allocation22 + $0x50] sm:$0xff] %v4706
    %5131 = vst [vmem:[#allocation22 + $0x58] sm:$0xff] %v4708
    %5132 = vst [vmem:[#allocation22 + $0x60] sm:$0xff] %v4788
    %5133 = vst [vmem:[#allocation22 + $0x68] sm:$0xff] %v4790
    %5134 = vst [vmem:[#allocation22 + $0x70] sm:$0xff] %v4870
    %5135 = vst [vmem:[#allocation22 + $0x78] sm:$0xff] %v4872
    %5136 = vst [vmem:[#allocation22 + $0x80] sm:$0xff] %v4952
    %5137 = vst [vmem:[#allocation22 + $0x88] sm:$0xff] %v4954
    %5138 = vst [vmem:[#allocation22 + $0x90] sm:$0xff] %v5034
    %5139 = vst [vmem:[#allocation22 + $0x98] sm:$0xff] %v5036
    %5140 = vst [vmem:[#allocation22 + $0xa0] sm:$0xff] %v5115
    // Predicated region
    $region102: #{tpu_custom_call.1} parent=1 // pred_check
      _
    $region103: #{tpu_custom_call.1} parent=1 // pred_check_branch
      %5142 = sbr.rel (0) target = $region105
    $region104: #{tpu_custom_call.1} parent=1 // pred_region
      %s5144 = ssub.s32 2688, 2688
      %5145 = vsyncadd [#allocation4], %s5144
      %s5147 = sshll.u32 [#allocation22], 4
      %s5148 = int_to_ptr.vmem [resolvable:$true] %s5147
      %5150 = dma.vmem_to_hbm [thread:$0]  %s5148, 2688, %s13, [#allocation4]
    $region105: #{tpu_custom_call.1} parent=1 // pred_fallthru
      _
    // Predicated region
    $region106: #{tpu_custom_call.1} parent=1 // pred_check
      _
    $region107: #{tpu_custom_call.1} parent=1 // pred_check_branch
      %5152 = sbr.rel (0) target = $region109
    $region108: #{tpu_custom_call.1} parent=1 // pred_region
      %5153 = dma.done [#allocation4], 2688
    $region109: #{tpu_custom_call.1} parent=1 // pred_fallthru
      _
    %5154 = vsyncpa [#allocation3], 1
    %5155 = vsyncpa [#allocation6], 1
    %5156 = vsyncpa [#allocation9], 1
    %5157 = vsyncpa [#allocation12], 1
    %5158 = vsyncpa [#allocation15], 1
    %5159 = vsyncpa [#allocation18], 1
    %5160 = vsyncpa [#allocation21], 1
    %5161 = vsyncpa [#allocation4], 1

</llo_original>
